<compile_context>
chip_gen: v7x
topology: tpu7x:2x2x1
jax: 0.10.0
libtpu: 0.0.40
codegen_flags: <defaults>
</compile_context>

<pallas_src>
import math

import jax
import jax.numpy as jnp
from jax import lax
from jax.experimental import pallas as pl
from jax.experimental.pallas import tpu as pltpu

D_MODEL = 128
NHEAD = 4
D_FF = 2048            # nn.Transformer default dim_feedforward
HEAD_DIM = D_MODEL // NHEAD
EPS = 1e-5             # nn.LayerNorm default


def _layernorm(x, gamma, beta):
    mu = jnp.mean(x, axis=-1, keepdims=True)
    var = jnp.mean((x - mu) ** 2, axis=-1, keepdims=True)
    return (x - mu) * lax.rsqrt(var + EPS) * gamma + beta


def gpt_block_kernel(x_ref, wqkv_ref, bqkv_ref, wo_ref, bo_ref,
                     g1_ref, be1_ref, w1_ref, bf1_ref, w2_ref, bf2_ref,
                     g2_ref, be2_ref, out_ref):
    # One batch-block per grid step: x_ref is (TB, L, E) f32; matmul weights
    # are bf16; biases / LN params are f32.
    TB, L, E = x_ref.shape
    R = TB * L
    x = x_ref[...].reshape(R, E)                       # (R, E) f32 rows

    # ---- fused QKV projection (bf16 MXU, f32 accumulate) ----
    # 1/sqrt(head_dim) is pre-folded into the Q columns of wqkv/bqkv.
    qkv = jnp.dot(x.astype(jnp.bfloat16), wqkv_ref[...],
                  preferred_element_type=jnp.float32) + bqkv_ref[...]
    q = qkv[:, 0 * E:1 * E]
    k = qkv[:, 1 * E:2 * E]
    v = qkv[:, 2 * E:3 * E]

    # ---- multi-head attention, batched over (TB * NHEAD,) ----
    def to_heads(t):   # (R, E) -> (TB*NHEAD, L, HEAD_DIM)
        t3 = t.reshape(TB, L, E)
        hs = jnp.stack(
            [t3[:, :, h * HEAD_DIM:(h + 1) * HEAD_DIM] for h in range(NHEAD)],
            axis=1)                                    # (TB, H, L, Dh)
        return hs.reshape(TB * NHEAD, L, HEAD_DIM).astype(jnp.bfloat16)

    qh, kh, vh = to_heads(q), to_heads(k), to_heads(v)
    s = jnp.einsum('bqd,bkd->bqk', qh, kh,
                   preferred_element_type=jnp.float32)     # (TB*H, L, L) f32
    s = s - jnp.max(s, axis=-1, keepdims=True)
    p = jnp.exp(s)
    p = p * pl.reciprocal(jnp.sum(p, axis=-1, keepdims=True), approx=True)
    oh = jnp.einsum('bqk,bkd->bqd', p.astype(jnp.bfloat16), vh,
                    preferred_element_type=jnp.float32)    # (TB*H, L, Dh)

    # Re-concatenate heads on the lane axis -> single K=128 out-projection.
    oh = oh.reshape(TB, NHEAD, L, HEAD_DIM)
    o = jnp.concatenate([oh[:, h] for h in range(NHEAD)], axis=-1)  # (TB,L,E)
    o = o.reshape(R, E)
    attn = jnp.dot(o.astype(jnp.bfloat16), wo_ref[...],
                   preferred_element_type=jnp.float32) + bo_ref[...]

    # ---- residual + LayerNorm 1 (f32) ----
    x1 = _layernorm(x + attn, g1_ref[...], be1_ref[...])

    # ---- feed-forward: Linear(E -> D_FF) + ReLU + Linear(D_FF -> E) ----
    h1 = jnp.maximum(
        jnp.dot(x1.astype(jnp.bfloat16), w1_ref[...],
                preferred_element_type=jnp.float32) + bf1_ref[...], 0.0)
    ff = jnp.dot(h1.astype(jnp.bfloat16), w2_ref[...],
                 preferred_element_type=jnp.float32) + bf2_ref[...]

    # ---- residual + LayerNorm 2 (f32) ----
    x2 = _layernorm(x1 + ff, g2_ref[...], be2_ref[...])
    out_ref[...] = x2.reshape(TB, L, E).astype(out_ref.dtype)


def _pick_tb(n, seq_len, target_rows=512):
    """Largest batch-block TB dividing n with TB*L <= target_rows, preferring
    a grid of >= 2 steps (so v7x's 2 TensorCores both get work)."""
    best = 1
    for d in range(1, n + 1):
        if n % d:
            continue
        if d * seq_len <= target_rows and (d < n or n == 1):
            best = d
    return best


def prepare_params(params):
    """One-time host-side prep: bf16 matmul weights, fold 1/sqrt(head_dim)
    into the Q slice of the fused QKV projection."""
    (wqkv_t, bqkv, wo_t, bo, g1, be1, w1_t, bf1, w2_t, bf2, g2, be2) = params
    scale = jnp.concatenate([
        jnp.full((D_MODEL,), 1.0 / math.sqrt(HEAD_DIM), jnp.float32),
        jnp.ones((2 * D_MODEL,), jnp.float32)])
    wqkv_s = (wqkv_t * scale[None, :]).astype(jnp.bfloat16)
    bqkv_s = bqkv * scale[None, :]
    return (wqkv_s, bqkv_s,
            wo_t.astype(jnp.bfloat16), bo,
            g1, be1,
            w1_t.astype(jnp.bfloat16), bf1,
            w2_t.astype(jnp.bfloat16), bf2,
            g2, be2)


def gpt_block(x_nle, kparams, *, target_rows=512):
    """x_nle: (N, L, d_model) float32 (batch-first, as SimpleGPT feeds its
    transformer).  kparams: output of prepare_params()."""
    N, L, E = x_nle.shape
    tb = _pick_tb(N, L, target_rows)

    args = (x_nle,) + tuple(kparams)

    def resident(a):
        # Whole tensor, same block index every grid step -> DMA'd once and
        # kept VMEM-resident across the grid.
        return pl.BlockSpec(a.shape, lambda b: (0,) * a.ndim)

    in_specs = [pl.BlockSpec((tb, L, E), lambda b: (b, 0, 0))] + \
               [resident(a) for a in args[1:]]

    weight_bytes = int(sum(a.size * a.dtype.itemsize for a in args[1:]))
    flops = (2 * N * L * E * (3 * E + E + 2 * D_FF)       # projections + FFN
             + 4 * N * NHEAD * L * L * HEAD_DIM)          # scores + PV
    cost = pl.CostEstimate(
        flops=flops,
        transcendentals=N * NHEAD * L * L,                # softmax exp
        bytes_accessed=2 * N * L * E * 4 + weight_bytes)

    return pl.pallas_call(
        gpt_block_kernel,
        out_shape=jax.ShapeDtypeStruct((N, L, E), jnp.float32),
        grid=(N // tb,),
        in_specs=in_specs,
        out_specs=pl.BlockSpec((tb, L, E), lambda b: (b, 0, 0)),
        compiler_params=pltpu.CompilerParams(
            dimension_semantics=("parallel",),
            vmem_limit_bytes=32 * 1024 * 1024),
        cost_estimate=cost,
    )(*args)


def init_params(key):
    ks = jax.random.split(key, 12)

    def w(k, shape, scale=0.02):
        return (scale * jax.random.normal(k, shape)).astype(jnp.float32)

    wqkv_t = w(ks[0], (D_MODEL, 3 * D_MODEL))        # in_proj_weight.T
    bqkv = w(ks[1], (1, 3 * D_MODEL), 0.01)          # in_proj_bias
    wo_t = w(ks[2], (D_MODEL, D_MODEL))              # out_proj.weight.T
    bo = w(ks[3], (1, D_MODEL), 0.01)                # out_proj.bias
    g1 = 1.0 + w(ks[4], (1, D_MODEL), 0.01)          # norm1.weight
    be1 = w(ks[5], (1, D_MODEL), 0.01)               # norm1.bias
    w1_t = w(ks[6], (D_MODEL, D_FF))                 # linear1.weight.T
    bf1 = w(ks[7], (1, D_FF), 0.01)                  # linear1.bias
    w2_t = w(ks[8], (D_FF, D_MODEL))                 # linear2.weight.T
    bf2 = w(ks[9], (1, D_MODEL), 0.01)               # linear2.bias
    g2 = 1.0 + w(ks[10], (1, D_MODEL), 0.01)         # norm2.weight
    be2 = w(ks[11], (1, D_MODEL), 0.01)              # norm2.bias
    return (wqkv_t, bqkv, wo_t, bo, g1, be1, w1_t, bf1, w2_t, bf2, g2, be2)


def gpt_block_ref(x_nle, params):
    """Pure-JAX f32 reference mirroring PyTorch's encoder layer (mask=None)."""
    (wqkv_t, bqkv, wo_t, bo, g1, be1, w1_t, bf1, w2_t, bf2, g2, be2) = params
    N, L, E = x_nle.shape
    x = x_nle
    qkv = jnp.einsum('nle,ef->nlf', x, wqkv_t) + bqkv[0]
    q, k, v = jnp.split(qkv, 3, axis=-1)
    hsplit = lambda t: t.reshape(N, L, NHEAD, HEAD_DIM)
    qh, kh, vh = hsplit(q), hsplit(k), hsplit(v)
    s = jnp.einsum('nlhd,nmhd->nhlm', qh / math.sqrt(HEAD_DIM), kh)
    p = jax.nn.softmax(s, axis=-1)
    o = jnp.einsum('nhlm,nmhd->nlhd', p, vh).reshape(N, L, E)
    attn = jnp.einsum('nle,ef->nlf', o, wo_t) + bo[0]

    def ln(y, g, b):
        mu = jnp.mean(y, -1, keepdims=True)
        var = jnp.mean((y - mu) ** 2, -1, keepdims=True)
        return (y - mu) / jnp.sqrt(var + EPS) * g[0] + b[0]

    x = ln(x + attn, g1, be1)
    h1 = jnp.maximum(jnp.einsum('nle,ef->nlf', x, w1_t) + bf1[0], 0.0)
    ff = jnp.einsum('nlf,fe->nle', h1, w2_t) + bf2[0]
    return ln(x + ff, g2, be2)


if __name__ == "__main__":
    key = jax.random.PRNGKey(0)
    kx, kp = jax.random.split(key)
    N, L = 8, 16  # small batch / seq; d_model=128, nhead=4, d_ff=2048 (defaults)
    x = jax.random.normal(kx, (N, L, D_MODEL), dtype=jnp.float32)
    params = init_params(kp)
    kparams = prepare_params(params)   # one-time bf16 cast + Q-scale fold

    y = jax.block_until_ready(gpt_block(x, kparams))
    y_ref = gpt_block_ref(x, params)

    assert y.shape == (N, L, D_MODEL)
    max_err = float(jnp.max(jnp.abs(y - y_ref)))
    # bf16 matmuls + approx reciprocal vs. the pure-f32 reference.
    assert jnp.allclose(y, y_ref, atol=3e-2, rtol=3e-2), max_err
    print("KERNEL_OK")
</pallas_src>

<mosaic_0001>
module attributes {stable_mosaic.version = 11 : i64} {
  func.func @gpt_block_kernel(%arg0: i32, %arg1: memref<4x16x128xf32, #tpu.memory_space<vmem>>, %arg2: memref<128x384xbf16, #tpu.memory_space<vmem>>, %arg3: memref<1x384xf32, #tpu.memory_space<vmem>>, %arg4: memref<128x128xbf16, #tpu.memory_space<vmem>>, %arg5: memref<1x128xf32, #tpu.memory_space<vmem>>, %arg6: memref<1x128xf32, #tpu.memory_space<vmem>>, %arg7: memref<1x128xf32, #tpu.memory_space<vmem>>, %arg8: memref<128x2048xbf16, #tpu.memory_space<vmem>>, %arg9: memref<1x2048xf32, #tpu.memory_space<vmem>>, %arg10: memref<2048x128xbf16, #tpu.memory_space<vmem>>, %arg11: memref<1x128xf32, #tpu.memory_space<vmem>>, %arg12: memref<1x128xf32, #tpu.memory_space<vmem>>, %arg13: memref<1x128xf32, #tpu.memory_space<vmem>>, %arg14: memref<4x16x128xf32, #tpu.memory_space<vmem>>) attributes {dimension_semantics = [#tpu.dimension_semantics<parallel>], iteration_bounds = array<i64: 2>, scalar_prefetch = 0 : i64, scratch_operands = 0 : i64, tpu.core_type = #tpu.core_type<tc>, window_params = [{transform_indices = @transform_0, window_bounds = array<i64: 4, 16, 128>}, {pipeline_mode = #tpu.pipeline_mode<synchronous>, transform_indices = @transform_1, window_bounds = array<i64: 128, 384>}, {pipeline_mode = #tpu.pipeline_mode<synchronous>, transform_indices = @transform_2, window_bounds = array<i64: 1, 384>}, {pipeline_mode = #tpu.pipeline_mode<synchronous>, transform_indices = @transform_3, window_bounds = array<i64: 128, 128>}, {pipeline_mode = #tpu.pipeline_mode<synchronous>, transform_indices = @transform_4, window_bounds = array<i64: 1, 128>}, {pipeline_mode = #tpu.pipeline_mode<synchronous>, transform_indices = @transform_5, window_bounds = array<i64: 1, 128>}, {pipeline_mode = #tpu.pipeline_mode<synchronous>, transform_indices = @transform_6, window_bounds = array<i64: 1, 128>}, {pipeline_mode = #tpu.pipeline_mode<synchronous>, transform_indices = @transform_7, window_bounds = array<i64: 128, 2048>}, {pipeline_mode = #tpu.pipeline_mode<synchronous>, transform_indices = @transform_8, window_bounds = array<i64: 1, 2048>}, {pipeline_mode = #tpu.pipeline_mode<synchronous>, transform_indices = @transform_9, window_bounds = array<i64: 2048, 128>}, {pipeline_mode = #tpu.pipeline_mode<synchronous>, transform_indices = @transform_10, window_bounds = array<i64: 1, 128>}, {pipeline_mode = #tpu.pipeline_mode<synchronous>, transform_indices = @transform_11, window_bounds = array<i64: 1, 128>}, {pipeline_mode = #tpu.pipeline_mode<synchronous>, transform_indices = @transform_12, window_bounds = array<i64: 1, 128>}, {transform_indices = @transform_13, window_bounds = array<i64: 4, 16, 128>}]} {
    %c0 = arith.constant 0 : index
    %c0_0 = arith.constant 0 : index
    %c0_1 = arith.constant 0 : index
    %0 = vector.load %arg1[%c0, %c0_0, %c0_1] : memref<4x16x128xf32, #tpu.memory_space<vmem>>, vector<4x16x128xf32>
    %1 = vector.shape_cast %0 : vector<4x16x128xf32> to vector<64x128xf32>
    %2 = arith.truncf %1 : vector<64x128xf32> to vector<64x128xbf16>
    %c0_2 = arith.constant 0 : index
    %c0_3 = arith.constant 0 : index
    %3 = vector.load %arg2[%c0_2, %c0_3] : memref<128x384xbf16, #tpu.memory_space<vmem>>, vector<128x384xbf16>
    %cst = arith.constant dense<0.000000e+00> : vector<64x384xf32>
    %4 = tpu.matmul %2, %3, %cst {dimension_numbers = #tpu.dot_dimension_numbers<[1], [0], [0], [1], [0, 0, 1, 1], [], []>} : vector<64x128xbf16>, vector<128x384xbf16>, vector<64x384xf32> -> vector<64x384xf32>
    %c0_4 = arith.constant 0 : index
    %c0_5 = arith.constant 0 : index
    %5 = vector.load %arg3[%c0_4, %c0_5] : memref<1x384xf32, #tpu.memory_space<vmem>>, vector<1x384xf32>
    %6 = vector.broadcast %5 : vector<1x384xf32> to vector<64x384xf32>
    %7 = arith.addf %4, %6 : vector<64x384xf32>
    %8 = vector.extract_strided_slice %7 {offsets = [0, 0], sizes = [64, 128], strides = [1, 1]} : vector<64x384xf32> to vector<64x128xf32>
    %9 = vector.extract_strided_slice %7 {offsets = [0, 128], sizes = [64, 128], strides = [1, 1]} : vector<64x384xf32> to vector<64x128xf32>
    %10 = vector.extract_strided_slice %7 {offsets = [0, 256], sizes = [64, 128], strides = [1, 1]} : vector<64x384xf32> to vector<64x128xf32>
    %11 = vector.shape_cast %8 : vector<64x128xf32> to vector<4x16x128xf32>
    %12 = vector.extract_strided_slice %11 {offsets = [0, 0, 0], sizes = [4, 16, 32], strides = [1, 1, 1]} : vector<4x16x128xf32> to vector<4x16x32xf32>
    %13 = vector.extract_strided_slice %11 {offsets = [0, 0, 32], sizes = [4, 16, 32], strides = [1, 1, 1]} : vector<4x16x128xf32> to vector<4x16x32xf32>
    %14 = vector.extract_strided_slice %11 {offsets = [0, 0, 64], sizes = [4, 16, 32], strides = [1, 1, 1]} : vector<4x16x128xf32> to vector<4x16x32xf32>
    %15 = vector.extract_strided_slice %11 {offsets = [0, 0, 96], sizes = [4, 16, 32], strides = [1, 1, 1]} : vector<4x16x128xf32> to vector<4x16x32xf32>
    %16 = vector.shape_cast %12 : vector<4x16x32xf32> to vector<4x1x16x32xf32>
    %17 = vector.shape_cast %13 : vector<4x16x32xf32> to vector<4x1x16x32xf32>
    %18 = vector.shape_cast %14 : vector<4x16x32xf32> to vector<4x1x16x32xf32>
    %19 = vector.shape_cast %15 : vector<4x16x32xf32> to vector<4x1x16x32xf32>
    %20 = tpu.concatenate %16, %17, %18, %19 in 1 : vector<4x1x16x32xf32>, vector<4x1x16x32xf32>, vector<4x1x16x32xf32>, vector<4x1x16x32xf32> -> vector<4x4x16x32xf32>
    %21 = vector.shape_cast %20 : vector<4x4x16x32xf32> to vector<16x16x32xf32>
    %22 = arith.truncf %21 : vector<16x16x32xf32> to vector<16x16x32xbf16>
    %23 = vector.shape_cast %9 : vector<64x128xf32> to vector<4x16x128xf32>
    %24 = vector.extract_strided_slice %23 {offsets = [0, 0, 0], sizes = [4, 16, 32], strides = [1, 1, 1]} : vector<4x16x128xf32> to vector<4x16x32xf32>
    %25 = vector.extract_strided_slice %23 {offsets = [0, 0, 32], sizes = [4, 16, 32], strides = [1, 1, 1]} : vector<4x16x128xf32> to vector<4x16x32xf32>
    %26 = vector.extract_strided_slice %23 {offsets = [0, 0, 64], sizes = [4, 16, 32], strides = [1, 1, 1]} : vector<4x16x128xf32> to vector<4x16x32xf32>
    %27 = vector.extract_strided_slice %23 {offsets = [0, 0, 96], sizes = [4, 16, 32], strides = [1, 1, 1]} : vector<4x16x128xf32> to vector<4x16x32xf32>
    %28 = vector.shape_cast %24 : vector<4x16x32xf32> to vector<4x1x16x32xf32>
    %29 = vector.shape_cast %25 : vector<4x16x32xf32> to vector<4x1x16x32xf32>
    %30 = vector.shape_cast %26 : vector<4x16x32xf32> to vector<4x1x16x32xf32>
    %31 = vector.shape_cast %27 : vector<4x16x32xf32> to vector<4x1x16x32xf32>
    %32 = tpu.concatenate %28, %29, %30, %31 in 1 : vector<4x1x16x32xf32>, vector<4x1x16x32xf32>, vector<4x1x16x32xf32>, vector<4x1x16x32xf32> -> vector<4x4x16x32xf32>
    %33 = vector.shape_cast %32 : vector<4x4x16x32xf32> to vector<16x16x32xf32>
    %34 = arith.truncf %33 : vector<16x16x32xf32> to vector<16x16x32xbf16>
    %35 = vector.shape_cast %10 : vector<64x128xf32> to vector<4x16x128xf32>
    %36 = vector.extract_strided_slice %35 {offsets = [0, 0, 0], sizes = [4, 16, 32], strides = [1, 1, 1]} : vector<4x16x128xf32> to vector<4x16x32xf32>
    %37 = vector.extract_strided_slice %35 {offsets = [0, 0, 32], sizes = [4, 16, 32], strides = [1, 1, 1]} : vector<4x16x128xf32> to vector<4x16x32xf32>
    %38 = vector.extract_strided_slice %35 {offsets = [0, 0, 64], sizes = [4, 16, 32], strides = [1, 1, 1]} : vector<4x16x128xf32> to vector<4x16x32xf32>
    %39 = vector.extract_strided_slice %35 {offsets = [0, 0, 96], sizes = [4, 16, 32], strides = [1, 1, 1]} : vector<4x16x128xf32> to vector<4x16x32xf32>
    %40 = vector.shape_cast %36 : vector<4x16x32xf32> to vector<4x1x16x32xf32>
    %41 = vector.shape_cast %37 : vector<4x16x32xf32> to vector<4x1x16x32xf32>
    %42 = vector.shape_cast %38 : vector<4x16x32xf32> to vector<4x1x16x32xf32>
    %43 = vector.shape_cast %39 : vector<4x16x32xf32> to vector<4x1x16x32xf32>
    %44 = tpu.concatenate %40, %41, %42, %43 in 1 : vector<4x1x16x32xf32>, vector<4x1x16x32xf32>, vector<4x1x16x32xf32>, vector<4x1x16x32xf32> -> vector<4x4x16x32xf32>
    %45 = vector.shape_cast %44 : vector<4x4x16x32xf32> to vector<16x16x32xf32>
    %46 = arith.truncf %45 : vector<16x16x32xf32> to vector<16x16x32xbf16>
    "tpu.trace_start"() <{level = 10 : i32, message = "bqd,bkd->bqk"}> : () -> ()
    %cst_6 = arith.constant dense<0.000000e+00> : vector<16x16x16xf32>
    %47 = tpu.matmul %22, %34, %cst_6 {dimension_numbers = #tpu.dot_dimension_numbers<[2], [2], [1], [1], [0, 0, 0, 1, 1, 1], [0], [0]>} : vector<16x16x32xbf16>, vector<16x16x32xbf16>, vector<16x16x16xf32> -> vector<16x16x16xf32>
    "tpu.trace_stop"() : () -> ()
    %cst_7 = arith.constant dense<0xFF800000> : vector<16x16xf32>
    %48 = vector.multi_reduction <maximumf>, %47, %cst_7 [2] : vector<16x16x16xf32> to vector<16x16xf32>
    %49 = vector.shape_cast %48 : vector<16x16xf32> to vector<16x16x1xf32>
    %50 = vector.broadcast %49 : vector<16x16x1xf32> to vector<16x16x16xf32>
    %51 = arith.subf %47, %50 : vector<16x16x16xf32>
    %52 = math.exp %51 : vector<16x16x16xf32>
    %cst_8 = arith.constant dense<0.000000e+00> : vector<16x16xf32>
    %53 = vector.multi_reduction <add>, %52, %cst_8 [2] : vector<16x16x16xf32> to vector<16x16xf32>
    %54 = vector.shape_cast %53 : vector<16x16xf32> to vector<16x16x1xf32>
    %55 = tpu.reciprocal %54 {approx = true} : vector<16x16x1xf32> -> vector<16x16x1xf32>
    %56 = vector.broadcast %55 : vector<16x16x1xf32> to vector<16x16x16xf32>
    %57 = arith.mulf %52, %56 : vector<16x16x16xf32>
    %58 = arith.truncf %57 : vector<16x16x16xf32> to vector<16x16x16xbf16>
    "tpu.trace_start"() <{level = 10 : i32, message = "bqk,bkd->bqd"}> : () -> ()
    %cst_9 = arith.constant dense<0.000000e+00> : vector<16x16x32xf32>
    %59 = tpu.matmul %58, %46, %cst_9 {dimension_numbers = #tpu.dot_dimension_numbers<[2], [1], [1], [2], [0, 0, 0, 1, 1, 2], [0], [0]>} : vector<16x16x16xbf16>, vector<16x16x32xbf16>, vector<16x16x32xf32> -> vector<16x16x32xf32>
    "tpu.trace_stop"() : () -> ()
    %60 = vector.shape_cast %59 : vector<16x16x32xf32> to vector<4x4x16x32xf32>
    %61 = vector.extract_strided_slice %60 {offsets = [0, 0, 0, 0], sizes = [4, 1, 16, 32], strides = [1, 1, 1, 1]} : vector<4x4x16x32xf32> to vector<4x1x16x32xf32>
    %62 = vector.shape_cast %61 : vector<4x1x16x32xf32> to vector<4x16x32xf32>
    %63 = vector.extract_strided_slice %60 {offsets = [0, 1, 0, 0], sizes = [4, 1, 16, 32], strides = [1, 1, 1, 1]} : vector<4x4x16x32xf32> to vector<4x1x16x32xf32>
    %64 = vector.shape_cast %63 : vector<4x1x16x32xf32> to vector<4x16x32xf32>
    %65 = vector.extract_strided_slice %60 {offsets = [0, 2, 0, 0], sizes = [4, 1, 16, 32], strides = [1, 1, 1, 1]} : vector<4x4x16x32xf32> to vector<4x1x16x32xf32>
    %66 = vector.shape_cast %65 : vector<4x1x16x32xf32> to vector<4x16x32xf32>
    %67 = vector.extract_strided_slice %60 {offsets = [0, 3, 0, 0], sizes = [4, 1, 16, 32], strides = [1, 1, 1, 1]} : vector<4x4x16x32xf32> to vector<4x1x16x32xf32>
    %68 = vector.shape_cast %67 : vector<4x1x16x32xf32> to vector<4x16x32xf32>
    %69 = tpu.concatenate %62, %64, %66, %68 in 2 : vector<4x16x32xf32>, vector<4x16x32xf32>, vector<4x16x32xf32>, vector<4x16x32xf32> -> vector<4x16x128xf32>
    %70 = vector.shape_cast %69 : vector<4x16x128xf32> to vector<64x128xf32>
    %71 = arith.truncf %70 : vector<64x128xf32> to vector<64x128xbf16>
    %c0_10 = arith.constant 0 : index
    %c0_11 = arith.constant 0 : index
    %72 = vector.load %arg4[%c0_10, %c0_11] : memref<128x128xbf16, #tpu.memory_space<vmem>>, vector<128x128xbf16>
    %cst_12 = arith.constant dense<0.000000e+00> : vector<64x128xf32>
    %73 = tpu.matmul %71, %72, %cst_12 {dimension_numbers = #tpu.dot_dimension_numbers<[1], [0], [0], [1], [0, 0, 1, 1], [], []>} : vector<64x128xbf16>, vector<128x128xbf16>, vector<64x128xf32> -> vector<64x128xf32>
    %c0_13 = arith.constant 0 : index
    %c0_14 = arith.constant 0 : index
    %74 = vector.load %arg5[%c0_13, %c0_14] : memref<1x128xf32, #tpu.memory_space<vmem>>, vector<1x128xf32>
    %75 = vector.broadcast %74 : vector<1x128xf32> to vector<64x128xf32>
    %76 = arith.addf %73, %75 : vector<64x128xf32>
    %77 = arith.addf %1, %76 : vector<64x128xf32>
    %c0_15 = arith.constant 0 : index
    %c0_16 = arith.constant 0 : index
    %78 = vector.load %arg6[%c0_15, %c0_16] : memref<1x128xf32, #tpu.memory_space<vmem>>, vector<1x128xf32>
    %c0_17 = arith.constant 0 : index
    %c0_18 = arith.constant 0 : index
    %79 = vector.load %arg7[%c0_17, %c0_18] : memref<1x128xf32, #tpu.memory_space<vmem>>, vector<1x128xf32>
    %cst_19 = arith.constant dense<0.000000e+00> : vector<64xf32>
    %80 = vector.multi_reduction <add>, %77, %cst_19 [1] : vector<64x128xf32> to vector<64xf32>
    %81 = vector.shape_cast %80 : vector<64xf32> to vector<64x1xf32>
    %cst_20 = arith.constant 1.280000e+02 : f32
    %82 = vector.broadcast %cst_20 : f32 to vector<64x1xf32>
    %83 = arith.divf %81, %82 : vector<64x1xf32>
    %84 = vector.broadcast %83 : vector<64x1xf32> to vector<64x128xf32>
    %85 = arith.subf %77, %84 : vector<64x128xf32>
    %86 = arith.mulf %85, %85 : vector<64x128xf32>
    %cst_21 = arith.constant dense<0.000000e+00> : vector<64xf32>
    %87 = vector.multi_reduction <add>, %86, %cst_21 [1] : vector<64x128xf32> to vector<64xf32>
    %88 = vector.shape_cast %87 : vector<64xf32> to vector<64x1xf32>
    %cst_22 = arith.constant 1.280000e+02 : f32
    %89 = vector.broadcast %cst_22 : f32 to vector<64x1xf32>
    %90 = arith.divf %88, %89 : vector<64x1xf32>
    %91 = vector.broadcast %83 : vector<64x1xf32> to vector<64x128xf32>
    %92 = arith.subf %77, %91 : vector<64x128xf32>
    %cst_23 = arith.constant 9.99999974E-6 : f32
    %93 = vector.broadcast %cst_23 : f32 to vector<64x1xf32>
    %94 = arith.addf %90, %93 : vector<64x1xf32>
    %95 = math.rsqrt %94 : vector<64x1xf32>
    %96 = vector.broadcast %95 : vector<64x1xf32> to vector<64x128xf32>
    %97 = arith.mulf %92, %96 : vector<64x128xf32>
    %98 = vector.broadcast %78 : vector<1x128xf32> to vector<64x128xf32>
    %99 = arith.mulf %97, %98 : vector<64x128xf32>
    %100 = vector.broadcast %79 : vector<1x128xf32> to vector<64x128xf32>
    %101 = arith.addf %99, %100 : vector<64x128xf32>
    %102 = arith.truncf %101 : vector<64x128xf32> to vector<64x128xbf16>
    %c0_24 = arith.constant 0 : index
    %c0_25 = arith.constant 0 : index
    %103 = vector.load %arg8[%c0_24, %c0_25] : memref<128x2048xbf16, #tpu.memory_space<vmem>>, vector<128x2048xbf16>
    %cst_26 = arith.constant dense<0.000000e+00> : vector<64x2048xf32>
    %104 = tpu.matmul %102, %103, %cst_26 {dimension_numbers = #tpu.dot_dimension_numbers<[1], [0], [0], [1], [0, 0, 1, 1], [], []>} : vector<64x128xbf16>, vector<128x2048xbf16>, vector<64x2048xf32> -> vector<64x2048xf32>
    %c0_27 = arith.constant 0 : index
    %c0_28 = arith.constant 0 : index
    %105 = vector.load %arg9[%c0_27, %c0_28] : memref<1x2048xf32, #tpu.memory_space<vmem>>, vector<1x2048xf32>
    %106 = vector.broadcast %105 : vector<1x2048xf32> to vector<64x2048xf32>
    %107 = arith.addf %104, %106 : vector<64x2048xf32>
    %cst_29 = arith.constant 0.000000e+00 : f32
    %108 = vector.broadcast %cst_29 : f32 to vector<64x2048xf32>
    %109 = arith.maximumf %107, %108 : vector<64x2048xf32>
    %110 = arith.truncf %109 : vector<64x2048xf32> to vector<64x2048xbf16>
    %c0_30 = arith.constant 0 : index
    %c0_31 = arith.constant 0 : index
    %111 = vector.load %arg10[%c0_30, %c0_31] : memref<2048x128xbf16, #tpu.memory_space<vmem>>, vector<2048x128xbf16>
    %cst_32 = arith.constant dense<0.000000e+00> : vector<64x128xf32>
    %112 = tpu.matmul %110, %111, %cst_32 {dimension_numbers = #tpu.dot_dimension_numbers<[1], [0], [0], [1], [0, 0, 1, 1], [], []>} : vector<64x2048xbf16>, vector<2048x128xbf16>, vector<64x128xf32> -> vector<64x128xf32>
    %c0_33 = arith.constant 0 : index
    %c0_34 = arith.constant 0 : index
    %113 = vector.load %arg11[%c0_33, %c0_34] : memref<1x128xf32, #tpu.memory_space<vmem>>, vector<1x128xf32>
    %114 = vector.broadcast %113 : vector<1x128xf32> to vector<64x128xf32>
    %115 = arith.addf %112, %114 : vector<64x128xf32>
    %116 = arith.addf %101, %115 : vector<64x128xf32>
    %c0_35 = arith.constant 0 : index
    %c0_36 = arith.constant 0 : index
    %117 = vector.load %arg12[%c0_35, %c0_36] : memref<1x128xf32, #tpu.memory_space<vmem>>, vector<1x128xf32>
    %c0_37 = arith.constant 0 : index
    %c0_38 = arith.constant 0 : index
    %118 = vector.load %arg13[%c0_37, %c0_38] : memref<1x128xf32, #tpu.memory_space<vmem>>, vector<1x128xf32>
    %cst_39 = arith.constant dense<0.000000e+00> : vector<64xf32>
    %119 = vector.multi_reduction <add>, %116, %cst_39 [1] : vector<64x128xf32> to vector<64xf32>
    %120 = vector.shape_cast %119 : vector<64xf32> to vector<64x1xf32>
    %cst_40 = arith.constant 1.280000e+02 : f32
    %121 = vector.broadcast %cst_40 : f32 to vector<64x1xf32>
    %122 = arith.divf %120, %121 : vector<64x1xf32>
    %123 = vector.broadcast %122 : vector<64x1xf32> to vector<64x128xf32>
    %124 = arith.subf %116, %123 : vector<64x128xf32>
    %125 = arith.mulf %124, %124 : vector<64x128xf32>
    %cst_41 = arith.constant dense<0.000000e+00> : vector<64xf32>
    %126 = vector.multi_reduction <add>, %125, %cst_41 [1] : vector<64x128xf32> to vector<64xf32>
    %127 = vector.shape_cast %126 : vector<64xf32> to vector<64x1xf32>
    %cst_42 = arith.constant 1.280000e+02 : f32
    %128 = vector.broadcast %cst_42 : f32 to vector<64x1xf32>
    %129 = arith.divf %127, %128 : vector<64x1xf32>
    %130 = vector.broadcast %122 : vector<64x1xf32> to vector<64x128xf32>
    %131 = arith.subf %116, %130 : vector<64x128xf32>
    %cst_43 = arith.constant 9.99999974E-6 : f32
    %132 = vector.broadcast %cst_43 : f32 to vector<64x1xf32>
    %133 = arith.addf %129, %132 : vector<64x1xf32>
    %134 = math.rsqrt %133 : vector<64x1xf32>
    %135 = vector.broadcast %134 : vector<64x1xf32> to vector<64x128xf32>
    %136 = arith.mulf %131, %135 : vector<64x128xf32>
    %137 = vector.broadcast %117 : vector<1x128xf32> to vector<64x128xf32>
    %138 = arith.mulf %136, %137 : vector<64x128xf32>
    %139 = vector.broadcast %118 : vector<1x128xf32> to vector<64x128xf32>
    %140 = arith.addf %138, %139 : vector<64x128xf32>
    %141 = vector.shape_cast %140 : vector<64x128xf32> to vector<4x16x128xf32>
    %c0_44 = arith.constant 0 : index
    %c0_45 = arith.constant 0 : index
    %c0_46 = arith.constant 0 : index
    %142 = vector.load %arg14[%c0_44, %c0_45, %c0_46] : memref<4x16x128xf32, #tpu.memory_space<vmem>>, vector<4x16x128xf32>
    tpu.vector_store %arg14[%c0_44, %c0_45, %c0_46], %141 {strides = array<i32>} : memref<4x16x128xf32, #tpu.memory_space<vmem>>, vector<4x16x128xf32>,
    return
  }
  func.func @transform_0(%arg0: i32) -> (i32, i32, i32) {
    %c0_i32 = arith.constant 0 : i32
    %c0_i32_0 = arith.constant 0 : i32
    %c0_i32_1 = arith.constant 0 : i32
    return %arg0, %c0_i32, %c0_i32_0 : i32, i32, i32
  }
  func.func @transform_1(%arg0: i32) -> (i32, i32) {
    %c0_i32 = arith.constant 0 : i32
    %c0_i32_0 = arith.constant 0 : i32
    %c0_i32_1 = arith.constant 0 : i32
    return %c0_i32, %c0_i32_0 : i32, i32
  }
  func.func @transform_2(%arg0: i32) -> (i32, i32) {
    %c0_i32 = arith.constant 0 : i32
    %c0_i32_0 = arith.constant 0 : i32
    %c0_i32_1 = arith.constant 0 : i32
    return %c0_i32, %c0_i32_0 : i32, i32
  }
  func.func @transform_3(%arg0: i32) -> (i32, i32) {
    %c0_i32 = arith.constant 0 : i32
    %c0_i32_0 = arith.constant 0 : i32
    %c0_i32_1 = arith.constant 0 : i32
    return %c0_i32, %c0_i32_0 : i32, i32
  }
  func.func @transform_4(%arg0: i32) -> (i32, i32) {
    %c0_i32 = arith.constant 0 : i32
    %c0_i32_0 = arith.constant 0 : i32
    %c0_i32_1 = arith.constant 0 : i32
    return %c0_i32, %c0_i32_0 : i32, i32
  }
  func.func @transform_5(%arg0: i32) -> (i32, i32) {
    %c0_i32 = arith.constant 0 : i32
    %c0_i32_0 = arith.constant 0 : i32
    %c0_i32_1 = arith.constant 0 : i32
    return %c0_i32, %c0_i32_0 : i32, i32
  }
  func.func @transform_6(%arg0: i32) -> (i32, i32) {
    %c0_i32 = arith.constant 0 : i32
    %c0_i32_0 = arith.constant 0 : i32
    %c0_i32_1 = arith.constant 0 : i32
    return %c0_i32, %c0_i32_0 : i32, i32
  }
  func.func @transform_7(%arg0: i32) -> (i32, i32) {
    %c0_i32 = arith.constant 0 : i32
    %c0_i32_0 = arith.constant 0 : i32
    %c0_i32_1 = arith.constant 0 : i32
    return %c0_i32, %c0_i32_0 : i32, i32
  }
  func.func @transform_8(%arg0: i32) -> (i32, i32) {
    %c0_i32 = arith.constant 0 : i32
    %c0_i32_0 = arith.constant 0 : i32
    %c0_i32_1 = arith.constant 0 : i32
    return %c0_i32, %c0_i32_0 : i32, i32
  }
  func.func @transform_9(%arg0: i32) -> (i32, i32) {
    %c0_i32 = arith.constant 0 : i32
    %c0_i32_0 = arith.constant 0 : i32
    %c0_i32_1 = arith.constant 0 : i32
    return %c0_i32, %c0_i32_0 : i32, i32
  }
  func.func @transform_10(%arg0: i32) -> (i32, i32) {
    %c0_i32 = arith.constant 0 : i32
    %c0_i32_0 = arith.constant 0 : i32
    %c0_i32_1 = arith.constant 0 : i32
    return %c0_i32, %c0_i32_0 : i32, i32
  }
  func.func @transform_11(%arg0: i32) -> (i32, i32) {
    %c0_i32 = arith.constant 0 : i32
    %c0_i32_0 = arith.constant 0 : i32
    %c0_i32_1 = arith.constant 0 : i32
    return %c0_i32, %c0_i32_0 : i32, i32
  }
  func.func @transform_12(%arg0: i32) -> (i32, i32) {
    %c0_i32 = arith.constant 0 : i32
    %c0_i32_0 = arith.constant 0 : i32
    %c0_i32_1 = arith.constant 0 : i32
    return %c0_i32, %c0_i32_0 : i32, i32
  }
  func.func @transform_13(%arg0: i32) -> (i32, i32, i32) {
    %c0_i32 = arith.constant 0 : i32
    %c0_i32_0 = arith.constant 0 : i32
    %c0_i32_1 = arith.constant 0 : i32
    return %arg0, %c0_i32, %c0_i32_0 : i32, i32, i32
  }
}

</mosaic_0001>

<llo_original>
// kernel: tpu_custom_call.1
$region0: #{tpu_custom_call.1}
  #allocation0 [shape = 'u32[]', space=smem, size = 0x4, offset = 0x4, fixed_abs, tag = 'smem constant byte address 0x4 - core index']
  #allocation1 [shape = 'u32[144,128]{1,0:T(1,128)}', space=vmem, size = 0x12000, scoped, tag = 'internal scratch']
  %s0 = inlined_call_operand.hbm [shape: f32[8,16,128], index: 0, kind: input, shape index: {}]
  %s1 = inlined_call_operand.hbm [shape: bf16[128,384], index: 1, kind: input, shape index: {}]
  %s2 = inlined_call_operand.vmem [shape: f32[1,384], index: 2, kind: input, shape index: {}]
  %s3 = inlined_call_operand.hbm [shape: bf16[128,128], index: 3, kind: input, shape index: {}]
  %s4 = inlined_call_operand.vmem [shape: f32[1,128], index: 4, kind: input, shape index: {}]
  %s5 = inlined_call_operand.vmem [shape: f32[1,128], index: 5, kind: input, shape index: {}]
  %s6 = inlined_call_operand.vmem [shape: f32[1,128], index: 6, kind: input, shape index: {}]
  %s7 = inlined_call_operand.hbm [shape: bf16[128,2048], index: 7, kind: input, shape index: {}]
  %s8 = inlined_call_operand.vmem [shape: f32[1,2048], index: 8, kind: input, shape index: {}]
  %s9 = inlined_call_operand.hbm [shape: bf16[2048,128], index: 9, kind: input, shape index: {}]
  %s10 = inlined_call_operand.vmem [shape: f32[1,128], index: 10, kind: input, shape index: {}]
  %s11 = inlined_call_operand.vmem [shape: f32[1,128], index: 11, kind: input, shape index: {}]
  %s12 = inlined_call_operand.vmem [shape: f32[1,128], index: 12, kind: input, shape index: {}]
  %s13 = inlined_call_operand.hbm [shape: f32[8,16,128], index: 13, kind: output, shape index: {}]
  %s14 = sld [smem:[#allocation0]]
  $region105: #{tpu_custom_call.1} parent=0
    _
  %s16 = ssub.s32 1, %s14
  %s17 = scalar_select 0, %s16, %s14
  $region1: #{tpu_custom_call.1} parent=0
    #allocation2 [shape = 'u8[65536]{0}', space=vmem, size = 0x10000, scoped, tag = 'input window, operand 0']
    #allocation3 [shape = 's32[2]{0}', space=sflag, size = 0x8, scoped, tag = 'scoped memory for tpu_custom_call.1']
    #allocation4 [shape = 's32[2]{0}', space=sflag, size = 0x8, scoped, tag = 'scoped memory for tpu_custom_call.1']
    #allocation5 [shape = 'u8[98304]{0}', space=vmem, size = 0x18000, scoped, tag = 'input window, operand 1, single buffered']
    #allocation6 [shape = 's32[1]{0}', space=sflag, size = 0x4, scoped, tag = 'scoped memory for tpu_custom_call.1']
    #allocation7 [shape = 'u8[32768]{0}', space=vmem, size = 0x8000, scoped, tag = 'input window, operand 3, single buffered']
    #allocation8 [shape = 'u8[524288]{0}', space=vmem, size = 0x80000, scoped, tag = 'input window, operand 7, single buffered']
    #allocation9 [shape = 's32[1]{0}', space=sflag, size = 0x4, scoped, tag = 'scoped memory for tpu_custom_call.1']
    #allocation10 [shape = 'u8[524288]{0}', space=vmem, size = 0x80000, scoped, tag = 'input window, operand 9, single buffered']
    #allocation11 [shape = 'u8[65536]{0}', space=vmem, size = 0x10000, scoped, tag = 'output window, operand 0']
    %18 = vsyncpa [#allocation3], 0
    %s19 = scalar_lea.sflag [#allocation3], 1
    %20 = vsyncpa %s19, 0
    %21 = vsyncpa [#allocation6], 0
    %22 = vsyncpa [#allocation9], 0
    %23 = vsyncpa [#allocation4], 0
    %s24 = scalar_lea.sflag [#allocation4], 1
    %25 = vsyncpa %s24, 0
    loop: start=0, step=1, limit=4
    $region2: #{tpu_custom_call.1} parent=1 // loop_pre_header
      _
    $region3: #{tpu_custom_call.1} parent=1 // loop_header
      %s27 = sphi 0, %s31
      %p28 = scmp.ge.s32.totalorder %s27, 4
      %s37 = sphi 0, %s39
      %s40 = sphi 0, %s37
      %s41 = sphi 0, %s40
      %s57 = sphi 0, %s41
      %s61 = sphi 0, %s61
      %s63 = sphi 0, %s61
      %s64 = sphi 0, %s63
      %s78 = sphi 0, %s64
      %s82 = sphi 0, %s82
      %s84 = sphi 0, %s82
      %s85 = sphi 0, %s84
      %s99 = sphi 0, %s85
      %s103 = sphi 0, %s103
      %s105 = sphi 0, %s103
      %s106 = sphi 0, %s105
      %s120 = sphi 0, %s106
      %s124 = sphi 0, %s124
      %s126 = sphi 0, %s124
      %s127 = sphi 0, %s126
      %s141 = sphi 0, %s127
      %s145 = sphi 0, %s145
      %s147 = sphi 0, %s145
      %s148 = sphi 0, %s147
      %s162 = sphi 0, %s148
      %s166 = sphi 0, %s166
      %s168 = sphi 0, %s166
      %s169 = sphi 0, %s168
      %s183 = sphi 0, %s169
      %s187 = sphi 0, %s187
      %s189 = sphi 0, %s187
      %s190 = sphi 0, %s189
      %s204 = sphi 0, %s190
      %s208 = sphi 0, %s208
      %s210 = sphi 0, %s208
      %s211 = sphi 0, %s210
      %s225 = sphi 0, %s211
      %s229 = sphi 0, %s229
      %s231 = sphi 0, %s229
      %s232 = sphi 0, %s231
      %s246 = sphi 0, %s232
      %s250 = sphi 0, %s250
      %s252 = sphi 0, %s250
      %s253 = sphi 0, %s252
      %s267 = sphi 0, %s253
      %s271 = sphi 0, %s271
      %s273 = sphi 0, %s271
      %s274 = sphi 0, %s273
      %s288 = sphi 0, %s274
      %s292 = sphi 0, %s292
      %s294 = sphi 0, %s292
      %s295 = sphi 0, %s294
      %s309 = sphi 0, %s295
      %s315 = sphi 0, %s317
      %s318 = sphi 0, %s315
      %s319 = sphi 0, %s318
      %s335 = sphi 0, %s319
    $region4: #{tpu_custom_call.1} parent=1 // loop_header_branch
      %30 = sbr.rel (%p28) target = $region8
    $region5: #{tpu_custom_call.1} parent=1 // loop_body
      %s32 = ssub.s32 %s27, 1
      %s33 = ssub.s32 %s27, 2
      %s34 = sadd.s32 %s27, 1
      %s35 = ssub.s32 %s27, %s34
      %p36 = scmp.eq.s32.totalorder %s35, 0
      %s38 = sadd.s32 %s37, 1
      %s39 = scalar_select %p36, %s37, %s38
      %p42 = pneg %p36
      %p43 = scmp.eq.s32.totalorder %s27, 1
      %p44 = por %p42, %p43
      %p45 = scmp.ne.s32.totalorder %s37, %s40
      %p46 = scmp.eq.s32.totalorder %s27, 0
      %p47 = por %p45, %p46
      %p48 = scmp.ne.s32.totalorder %s37, %s40
      %p49 = scmp.eq.s32.totalorder %s32, 1
      %p50 = por %p48, %p49
      %p51 = scmp.ne.s32.totalorder %s40, %s41
      %p52 = scmp.eq.s32.totalorder %s32, 0
      %p53 = por %p51, %p52
      %p54 = scmp.ne.s32.totalorder %s40, %s41
      %p55 = scmp.eq.s32.totalorder %s33, 1
      %p56 = por %p54, %p55
      %p58 = scmp.ne.s32.totalorder %s41, %s57
      %p59 = scmp.eq.s32.totalorder %s33, 0
      %p60 = por %p58, %p59
      %s62 = sadd.s32 %s61, 1
      %p65 = scmp.eq.s32.totalorder %s27, 1
      %p66 = scmp.ne.s32.totalorder %s61, %s63
      %p67 = scmp.eq.s32.totalorder %s27, 0
      %p68 = por %p66, %p67
      %p69 = scmp.ne.s32.totalorder %s61, %s63
      %p70 = scmp.eq.s32.totalorder %s32, 1
      %p71 = por %p69, %p70
      %p72 = scmp.ne.s32.totalorder %s63, %s64
      %p73 = scmp.eq.s32.totalorder %s32, 0
      %p74 = por %p72, %p73
      %p75 = scmp.ne.s32.totalorder %s63, %s64
      %p76 = scmp.eq.s32.totalorder %s33, 1
      %p77 = por %p75, %p76
      %p79 = scmp.ne.s32.totalorder %s64, %s78
      %p80 = scmp.eq.s32.totalorder %s33, 0
      %p81 = por %p79, %p80
      %s83 = sadd.s32 %s82, 1
      %p86 = scmp.eq.s32.totalorder %s27, 1
      %p87 = scmp.ne.s32.totalorder %s82, %s84
      %p88 = scmp.eq.s32.totalorder %s27, 0
      %p89 = por %p87, %p88
      %p90 = scmp.ne.s32.totalorder %s82, %s84
      %p91 = scmp.eq.s32.totalorder %s32, 1
      %p92 = por %p90, %p91
      %p93 = scmp.ne.s32.totalorder %s84, %s85
      %p94 = scmp.eq.s32.totalorder %s32, 0
      %p95 = por %p93, %p94
      %p96 = scmp.ne.s32.totalorder %s84, %s85
      %p97 = scmp.eq.s32.totalorder %s33, 1
      %p98 = por %p96, %p97
      %p100 = scmp.ne.s32.totalorder %s85, %s99
      %p101 = scmp.eq.s32.totalorder %s33, 0
      %p102 = por %p100, %p101
      %s104 = sadd.s32 %s103, 1
      %p107 = scmp.eq.s32.totalorder %s27, 1
      %p108 = scmp.ne.s32.totalorder %s103, %s105
      %p109 = scmp.eq.s32.totalorder %s27, 0
      %p110 = por %p108, %p109
      %p111 = scmp.ne.s32.totalorder %s103, %s105
      %p112 = scmp.eq.s32.totalorder %s32, 1
      %p113 = por %p111, %p112
      %p114 = scmp.ne.s32.totalorder %s105, %s106
      %p115 = scmp.eq.s32.totalorder %s32, 0
      %p116 = por %p114, %p115
      %p117 = scmp.ne.s32.totalorder %s105, %s106
      %p118 = scmp.eq.s32.totalorder %s33, 1
      %p119 = por %p117, %p118
      %p121 = scmp.ne.s32.totalorder %s106, %s120
      %p122 = scmp.eq.s32.totalorder %s33, 0
      %p123 = por %p121, %p122
      %s125 = sadd.s32 %s124, 1
      %p128 = scmp.eq.s32.totalorder %s27, 1
      %p129 = scmp.ne.s32.totalorder %s124, %s126
      %p130 = scmp.eq.s32.totalorder %s27, 0
      %p131 = por %p129, %p130
      %p132 = scmp.ne.s32.totalorder %s124, %s126
      %p133 = scmp.eq.s32.totalorder %s32, 1
      %p134 = por %p132, %p133
      %p135 = scmp.ne.s32.totalorder %s126, %s127
      %p136 = scmp.eq.s32.totalorder %s32, 0
      %p137 = por %p135, %p136
      %p138 = scmp.ne.s32.totalorder %s126, %s127
      %p139 = scmp.eq.s32.totalorder %s33, 1
      %p140 = por %p138, %p139
      %p142 = scmp.ne.s32.totalorder %s127, %s141
      %p143 = scmp.eq.s32.totalorder %s33, 0
      %p144 = por %p142, %p143
      %s146 = sadd.s32 %s145, 1
      %p149 = scmp.eq.s32.totalorder %s27, 1
      %p150 = scmp.ne.s32.totalorder %s145, %s147
      %p151 = scmp.eq.s32.totalorder %s27, 0
      %p152 = por %p150, %p151
      %p153 = scmp.ne.s32.totalorder %s145, %s147
      %p154 = scmp.eq.s32.totalorder %s32, 1
      %p155 = por %p153, %p154
      %p156 = scmp.ne.s32.totalorder %s147, %s148
      %p157 = scmp.eq.s32.totalorder %s32, 0
      %p158 = por %p156, %p157
      %p159 = scmp.ne.s32.totalorder %s147, %s148
      %p160 = scmp.eq.s32.totalorder %s33, 1
      %p161 = por %p159, %p160
      %p163 = scmp.ne.s32.totalorder %s148, %s162
      %p164 = scmp.eq.s32.totalorder %s33, 0
      %p165 = por %p163, %p164
      %s167 = sadd.s32 %s166, 1
      %p170 = scmp.eq.s32.totalorder %s27, 1
      %p171 = scmp.ne.s32.totalorder %s166, %s168
      %p172 = scmp.eq.s32.totalorder %s27, 0
      %p173 = por %p171, %p172
      %p174 = scmp.ne.s32.totalorder %s166, %s168
      %p175 = scmp.eq.s32.totalorder %s32, 1
      %p176 = por %p174, %p175
      %p177 = scmp.ne.s32.totalorder %s168, %s169
      %p178 = scmp.eq.s32.totalorder %s32, 0
      %p179 = por %p177, %p178
      %p180 = scmp.ne.s32.totalorder %s168, %s169
      %p181 = scmp.eq.s32.totalorder %s33, 1
      %p182 = por %p180, %p181
      %p184 = scmp.ne.s32.totalorder %s169, %s183
      %p185 = scmp.eq.s32.totalorder %s33, 0
      %p186 = por %p184, %p185
      %s188 = sadd.s32 %s187, 1
      %p191 = scmp.eq.s32.totalorder %s27, 1
      %p192 = scmp.ne.s32.totalorder %s187, %s189
      %p193 = scmp.eq.s32.totalorder %s27, 0
      %p194 = por %p192, %p193
      %p195 = scmp.ne.s32.totalorder %s187, %s189
      %p196 = scmp.eq.s32.totalorder %s32, 1
      %p197 = por %p195, %p196
      %p198 = scmp.ne.s32.totalorder %s189, %s190
      %p199 = scmp.eq.s32.totalorder %s32, 0
      %p200 = por %p198, %p199
      %p201 = scmp.ne.s32.totalorder %s189, %s190
      %p202 = scmp.eq.s32.totalorder %s33, 1
      %p203 = por %p201, %p202
      %p205 = scmp.ne.s32.totalorder %s190, %s204
      %p206 = scmp.eq.s32.totalorder %s33, 0
      %p207 = por %p205, %p206
      %s209 = sadd.s32 %s208, 1
      %p212 = scmp.eq.s32.totalorder %s27, 1
      %p213 = scmp.ne.s32.totalorder %s208, %s210
      %p214 = scmp.eq.s32.totalorder %s27, 0
      %p215 = por %p213, %p214
      %p216 = scmp.ne.s32.totalorder %s208, %s210
      %p217 = scmp.eq.s32.totalorder %s32, 1
      %p218 = por %p216, %p217
      %p219 = scmp.ne.s32.totalorder %s210, %s211
      %p220 = scmp.eq.s32.totalorder %s32, 0
      %p221 = por %p219, %p220
      %p222 = scmp.ne.s32.totalorder %s210, %s211
      %p223 = scmp.eq.s32.totalorder %s33, 1
      %p224 = por %p222, %p223
      %p226 = scmp.ne.s32.totalorder %s211, %s225
      %p227 = scmp.eq.s32.totalorder %s33, 0
      %p228 = por %p226, %p227
      %s230 = sadd.s32 %s229, 1
      %p233 = scmp.eq.s32.totalorder %s27, 1
      %p234 = scmp.ne.s32.totalorder %s229, %s231
      %p235 = scmp.eq.s32.totalorder %s27, 0
      %p236 = por %p234, %p235
      %p237 = scmp.ne.s32.totalorder %s229, %s231
      %p238 = scmp.eq.s32.totalorder %s32, 1
      %p239 = por %p237, %p238
      %p240 = scmp.ne.s32.totalorder %s231, %s232
      %p241 = scmp.eq.s32.totalorder %s32, 0
      %p242 = por %p240, %p241
      %p243 = scmp.ne.s32.totalorder %s231, %s232
      %p244 = scmp.eq.s32.totalorder %s33, 1
      %p245 = por %p243, %p244
      %p247 = scmp.ne.s32.totalorder %s232, %s246
      %p248 = scmp.eq.s32.totalorder %s33, 0
      %p249 = por %p247, %p248
      %s251 = sadd.s32 %s250, 1
      %p254 = scmp.eq.s32.totalorder %s27, 1
      %p255 = scmp.ne.s32.totalorder %s250, %s252
      %p256 = scmp.eq.s32.totalorder %s27, 0
      %p257 = por %p255, %p256
      %p258 = scmp.ne.s32.totalorder %s250, %s252
      %p259 = scmp.eq.s32.totalorder %s32, 1
      %p260 = por %p258, %p259
      %p261 = scmp.ne.s32.totalorder %s252, %s253
      %p262 = scmp.eq.s32.totalorder %s32, 0
      %p263 = por %p261, %p262
      %p264 = scmp.ne.s32.totalorder %s252, %s253
      %p265 = scmp.eq.s32.totalorder %s33, 1
      %p266 = por %p264, %p265
      %p268 = scmp.ne.s32.totalorder %s253, %s267
      %p269 = scmp.eq.s32.totalorder %s33, 0
      %p270 = por %p268, %p269
      %s272 = sadd.s32 %s271, 1
      %p275 = scmp.eq.s32.totalorder %s27, 1
      %p276 = scmp.ne.s32.totalorder %s271, %s273
      %p277 = scmp.eq.s32.totalorder %s27, 0
      %p278 = por %p276, %p277
      %p279 = scmp.ne.s32.totalorder %s271, %s273
      %p280 = scmp.eq.s32.totalorder %s32, 1
      %p281 = por %p279, %p280
      %p282 = scmp.ne.s32.totalorder %s273, %s274
      %p283 = scmp.eq.s32.totalorder %s32, 0
      %p284 = por %p282, %p283
      %p285 = scmp.ne.s32.totalorder %s273, %s274
      %p286 = scmp.eq.s32.totalorder %s33, 1
      %p287 = por %p285, %p286
      %p289 = scmp.ne.s32.totalorder %s274, %s288
      %p290 = scmp.eq.s32.totalorder %s33, 0
      %p291 = por %p289, %p290
      %s293 = sadd.s32 %s292, 1
      %p296 = scmp.eq.s32.totalorder %s27, 1
      %p297 = scmp.ne.s32.totalorder %s292, %s294
      %p298 = scmp.eq.s32.totalorder %s27, 0
      %p299 = por %p297, %p298
      %p300 = scmp.ne.s32.totalorder %s292, %s294
      %p301 = scmp.eq.s32.totalorder %s32, 1
      %p302 = por %p300, %p301
      %p303 = scmp.ne.s32.totalorder %s294, %s295
      %p304 = scmp.eq.s32.totalorder %s32, 0
      %p305 = por %p303, %p304
      %p306 = scmp.ne.s32.totalorder %s294, %s295
      %p307 = scmp.eq.s32.totalorder %s33, 1
      %p308 = por %p306, %p307
      %p310 = scmp.ne.s32.totalorder %s295, %s309
      %p311 = scmp.eq.s32.totalorder %s33, 0
      %p312 = por %p310, %p311
      %s313 = ssub.s32 %s27, %s34
      %p314 = scmp.eq.s32.totalorder %s313, 0
      %s316 = sadd.s32 %s315, 1
      %s317 = scalar_select %p314, %s315, %s316
      %p320 = pneg %p314
      %p321 = scmp.eq.s32.totalorder %s27, 1
      %p322 = por %p320, %p321
      %p323 = scmp.ne.s32.totalorder %s315, %s318
      %p324 = scmp.eq.s32.totalorder %s27, 0
      %p325 = por %p323, %p324
      %p326 = scmp.ne.s32.totalorder %s315, %s318
      %p327 = scmp.eq.s32.totalorder %s32, 1
      %p328 = por %p326, %p327
      %p329 = scmp.ne.s32.totalorder %s318, %s319
      %p330 = scmp.eq.s32.totalorder %s32, 0
      %p331 = por %p329, %p330
      %p332 = scmp.ne.s32.totalorder %s318, %s319
      %p333 = scmp.eq.s32.totalorder %s33, 1
      %p334 = por %p332, %p333
      %p336 = scmp.ne.s32.totalorder %s319, %s335
      %p337 = scmp.eq.s32.totalorder %s33, 0
      %p338 = por %p336, %p337
      %p339 = scmp.le.s32.totalorder 1, %s27
      %p340 = scmp.lt.s32.totalorder %s27, 3
      %p341 = pnand %p339, %p340
      %p342 = pneg %p341
      // Predicated region
      $region9: #{tpu_custom_call.1} parent=5 // pred_check
        _
      $region10: #{tpu_custom_call.1} parent=5 // pred_check_branch
        %344 = sbr.rel (%p341) target = $region12
      $region11: #{tpu_custom_call.1} parent=5 // pred_region
        %s345 = ssub.s32 %s27, 1
        // Predicated region
        $region13: #{tpu_custom_call.1} parent=11 // pred_check
          %p346 = pneg %p74
        $region14: #{tpu_custom_call.1} parent=11 // pred_check_branch
          %348 = sbr.rel (%p346) target = $region16
        $region15: #{tpu_custom_call.1} parent=11 // pred_region
          %s350 = ssub.s32 3072, 3072
          %351 = vsyncadd [#allocation6], %s350
          %s352 = sshll.u32 [#allocation5], 4
          %s353 = int_to_ptr.vmem [resolvable:$true] %s352
          %358 = dma.hbm_to_vmem [thread:$0]  %s1, 3072, %s353, [#allocation6], 192, 192, 12
        $region16: #{tpu_custom_call.1} parent=11 // pred_fallthru
          _
        // Predicated region
        $region17: #{tpu_custom_call.1} parent=11 // pred_check
          %p359 = pneg %p95
        $region18: #{tpu_custom_call.1} parent=11 // pred_check_branch
          %361 = sbr.rel (%p359) target = $region20
        $region19: #{tpu_custom_call.1} parent=11 // pred_region
          _
        $region20: #{tpu_custom_call.1} parent=11 // pred_fallthru
          _
        // Predicated region
        $region21: #{tpu_custom_call.1} parent=11 // pred_check
          %p362 = pneg %p116
        $region22: #{tpu_custom_call.1} parent=11 // pred_check_branch
          %364 = sbr.rel (%p362) target = $region24
        $region23: #{tpu_custom_call.1} parent=11 // pred_region
          %s366 = ssub.s32 1024, 1024
          %367 = vsyncadd [#allocation6], %s366
          %s368 = sshll.u32 [#allocation7], 4
          %s369 = int_to_ptr.vmem [resolvable:$true] %s368
          %374 = dma.hbm_to_vmem [thread:$0]  %s3, 1024, %s369, [#allocation6], 64, 64, 4
        $region24: #{tpu_custom_call.1} parent=11 // pred_fallthru
          _
        // Predicated region
        $region25: #{tpu_custom_call.1} parent=11 // pred_check
          %p375 = pneg %p137
        $region26: #{tpu_custom_call.1} parent=11 // pred_check_branch
          %377 = sbr.rel (%p375) target = $region28
        $region27: #{tpu_custom_call.1} parent=11 // pred_region
          _
        $region28: #{tpu_custom_call.1} parent=11 // pred_fallthru
          _
        // Predicated region
        $region29: #{tpu_custom_call.1} parent=11 // pred_check
          %p378 = pneg %p158
        $region30: #{tpu_custom_call.1} parent=11 // pred_check_branch
          %380 = sbr.rel (%p378) target = $region32
        $region31: #{tpu_custom_call.1} parent=11 // pred_region
          _
        $region32: #{tpu_custom_call.1} parent=11 // pred_fallthru
          _
        // Predicated region
        $region33: #{tpu_custom_call.1} parent=11 // pred_check
          %p381 = pneg %p179
        $region34: #{tpu_custom_call.1} parent=11 // pred_check_branch
          %383 = sbr.rel (%p381) target = $region36
        $region35: #{tpu_custom_call.1} parent=11 // pred_region
          _
        $region36: #{tpu_custom_call.1} parent=11 // pred_fallthru
          _
        // Predicated region
        $region37: #{tpu_custom_call.1} parent=11 // pred_check
          %p384 = pneg %p200
        $region38: #{tpu_custom_call.1} parent=11 // pred_check_branch
          %386 = sbr.rel (%p384) target = $region40
        $region39: #{tpu_custom_call.1} parent=11 // pred_region
          %s388 = ssub.s32 16384, 16384
          %389 = vsyncadd [#allocation9], %s388
          %s390 = sshll.u32 [#allocation8], 4
          %s391 = int_to_ptr.vmem [resolvable:$true] %s390
          %396 = dma.hbm_to_vmem [thread:$0]  %s7, 16384, %s391, [#allocation9], 1024, 1024, 64
        $region40: #{tpu_custom_call.1} parent=11 // pred_fallthru
          _
        // Predicated region
        $region41: #{tpu_custom_call.1} parent=11 // pred_check
          %p397 = pneg %p221
        $region42: #{tpu_custom_call.1} parent=11 // pred_check_branch
          %399 = sbr.rel (%p397) target = $region44
        $region43: #{tpu_custom_call.1} parent=11 // pred_region
          _
        $region44: #{tpu_custom_call.1} parent=11 // pred_fallthru
          _
        // Predicated region
        $region45: #{tpu_custom_call.1} parent=11 // pred_check
          %p400 = pneg %p242
        $region46: #{tpu_custom_call.1} parent=11 // pred_check_branch
          %402 = sbr.rel (%p400) target = $region48
        $region47: #{tpu_custom_call.1} parent=11 // pred_region
          %s404 = ssub.s32 16384, 16384
          %405 = vsyncadd [#allocation9], %s404
          %s406 = sshll.u32 [#allocation10], 4
          %s407 = int_to_ptr.vmem [resolvable:$true] %s406
          %412 = dma.hbm_to_vmem [thread:$0]  %s9, 16384, %s407, [#allocation9], 64, 64, 4
        $region48: #{tpu_custom_call.1} parent=11 // pred_fallthru
          _
        // Predicated region
        $region49: #{tpu_custom_call.1} parent=11 // pred_check
          %p413 = pneg %p263
        $region50: #{tpu_custom_call.1} parent=11 // pred_check_branch
          %415 = sbr.rel (%p413) target = $region52
        $region51: #{tpu_custom_call.1} parent=11 // pred_region
          _
        $region52: #{tpu_custom_call.1} parent=11 // pred_fallthru
          _
        // Predicated region
        $region53: #{tpu_custom_call.1} parent=11 // pred_check
          %p416 = pneg %p284
        $region54: #{tpu_custom_call.1} parent=11 // pred_check_branch
          %418 = sbr.rel (%p416) target = $region56
        $region55: #{tpu_custom_call.1} parent=11 // pred_region
          _
        $region56: #{tpu_custom_call.1} parent=11 // pred_fallthru
          _
        // Predicated region
        $region57: #{tpu_custom_call.1} parent=11 // pred_check
          %p419 = pneg %p305
        $region58: #{tpu_custom_call.1} parent=11 // pred_check_branch
          %421 = sbr.rel (%p419) target = $region60
        $region59: #{tpu_custom_call.1} parent=11 // pred_region
          _
        $region60: #{tpu_custom_call.1} parent=11 // pred_fallthru
          _
      $region12: #{tpu_custom_call.1} parent=5 // pred_fallthru
        _
      %p422 = scmp.lt.s32.totalorder %s27, 2
      // Predicated region
      $region61: #{tpu_custom_call.1} parent=5 // pred_check
        %p423 = pneg %p422
      $region62: #{tpu_custom_call.1} parent=5 // pred_check_branch
        %425 = sbr.rel (%p423) target = $region64
      $region63: #{tpu_custom_call.1} parent=5 // pred_region
        // Predicated region
        $region65: #{tpu_custom_call.1} parent=63 // pred_check
          %p426 = pneg %p47
        $region66: #{tpu_custom_call.1} parent=63 // pred_check_branch
          %428 = sbr.rel (%p426) target = $region68
        $region67: #{tpu_custom_call.1} parent=63 // pred_region
          %s429 = sand.u32 %s37, 1
          %s430 = scalar_lea.sflag [#allocation3], %s429
          %s431 = sand.u32 %s37, 1
          %s432 = smul.addr %s431, 64
          %s433 = scalar_lea.vmem [#allocation2], %s432
          %s434 = smul.u32 4, %s27
          %s436 = ssub.s32 1024, 1024
          %437 = vsyncadd %s430, %s436
          %s438 = smul.addr %s434, 2
          %s439 = smul.addr %s438, 128
          %s440 = scalar_lea.hbm %s0, %s439
          %s441 = sshll.u32 %s433, 4
          %s442 = int_to_ptr.vmem [resolvable:$true] %s441
          %447 = dma.hbm_to_vmem [thread:$0]  %s440, 1024, %s442, %s430, 128, 128, 8
        $region68: #{tpu_custom_call.1} parent=63 // pred_fallthru
          _
      $region64: #{tpu_custom_call.1} parent=5 // pred_fallthru
        _
      %p448 = scmp.le.s32.totalorder 1, %s27
      %p449 = scmp.lt.s32.totalorder %s27, 3
      %p450 = pnand %p448, %p449
      %p451 = pneg %p450
      // Predicated region
      $region69: #{tpu_custom_call.1} parent=5 // pred_check
        _
      $region70: #{tpu_custom_call.1} parent=5 // pred_check_branch
        %453 = sbr.rel (%p450) target = $region72
      $region71: #{tpu_custom_call.1} parent=5 // pred_region
        %s454 = ssub.s32 %s27, 1
        %s455 = sand.u32 %s40, 1
        %s456 = scalar_lea.sflag [#allocation3], %s455
        %s457 = sand.u32 %s40, 1
        %s458 = smul.addr %s457, 64
        %s459 = scalar_lea.vmem [#allocation2], %s458
        // Predicated region
        $region73: #{tpu_custom_call.1} parent=71 // pred_check
          %p460 = pneg %p53
        $region74: #{tpu_custom_call.1} parent=71 // pred_check_branch
          %462 = sbr.rel (%p460) target = $region76
        $region75: #{tpu_custom_call.1} parent=71 // pred_region
          %463 = dma.done %s456, 1024
        $region76: #{tpu_custom_call.1} parent=71 // pred_fallthru
          _
        // Predicated region
        $region77: #{tpu_custom_call.1} parent=71 // pred_check
          %p464 = pneg %p74
        $region78: #{tpu_custom_call.1} parent=71 // pred_check_branch
          %466 = sbr.rel (%p464) target = $region80
        $region79: #{tpu_custom_call.1} parent=71 // pred_region
          %467 = dma.done [#allocation6], 3072
        $region80: #{tpu_custom_call.1} parent=71 // pred_fallthru
          _
        // Predicated region
        $region81: #{tpu_custom_call.1} parent=71 // pred_check
          %p468 = pneg %p116
        $region82: #{tpu_custom_call.1} parent=71 // pred_check_branch
          %470 = sbr.rel (%p468) target = $region84
        $region83: #{tpu_custom_call.1} parent=71 // pred_region
          %471 = dma.done [#allocation6], 1024
        $region84: #{tpu_custom_call.1} parent=71 // pred_fallthru
          _
        // Predicated region
        $region85: #{tpu_custom_call.1} parent=71 // pred_check
          %p472 = pneg %p200
        $region86: #{tpu_custom_call.1} parent=71 // pred_check_branch
          %474 = sbr.rel (%p472) target = $region88
        $region87: #{tpu_custom_call.1} parent=71 // pred_region
          %475 = dma.done [#allocation9], 16384
        $region88: #{tpu_custom_call.1} parent=71 // pred_fallthru
          _
        // Predicated region
        $region89: #{tpu_custom_call.1} parent=71 // pred_check
          %p476 = pneg %p242
        $region90: #{tpu_custom_call.1} parent=71 // pred_check_branch
          %478 = sbr.rel (%p476) target = $region92
        $region91: #{tpu_custom_call.1} parent=71 // pred_region
          %479 = dma.done [#allocation9], 16384
        $region92: #{tpu_custom_call.1} parent=71 // pred_fallthru
          _
        %s480 = sand.u32 %s40, 1
        %s481 = scalar_lea.sflag [#allocation3], %s480
        %s482 = sand.u32 %s40, 1
        %s483 = smul.addr %s482, 64
        %s484 = scalar_lea.vmem [#allocation2], %s483
        %p485 = pneg %p53
        %p486 = pneg %p50
        %p487 = pneg %p74
        %p488 = pneg %p71
        %p489 = pneg %p95
        %p490 = pneg %p92
        %p491 = pneg %p116
        %p492 = pneg %p113
        %p493 = pneg %p137
        %p494 = pneg %p134
        %p495 = pneg %p158
        %p496 = pneg %p155
        %p497 = pneg %p179
        %p498 = pneg %p176
        %p499 = pneg %p200
        %p500 = pneg %p197
        %p501 = pneg %p221
        %p502 = pneg %p218
        %p503 = pneg %p242
        %p504 = pneg %p239
        %p505 = pneg %p263
        %p506 = pneg %p260
        %p507 = pneg %p284
        %p508 = pneg %p281
        %p509 = pneg %p305
        %p510 = pneg %p302
        %p511 = pneg %p331
        %p512 = pneg %p328
        %s513 = sand.u32 %s318, 1
        %s514 = scalar_lea.sflag [#allocation4], %s513
        %s515 = sand.u32 %s318, 1
        %s516 = smul.addr %s515, 64
        %s517 = scalar_lea.vmem [#allocation11], %s516
        %s518 = smul.u32 4, %s32
        %s519 = smul.u32 4, %s32
        %v521 = vld [vmem:[%s459] sm:$0xff]
        %v522 = vld [vmem:[%s459 + $0x8] sm:$0xff]
        %v523 = vld [vmem:[%s459 + $0x10] sm:$0xff]
        %v524 = vld [vmem:[%s459 + $0x18] sm:$0xff]
        %v525 = vld [vmem:[%s459 + $0x20] sm:$0xff]
        %v526 = vld [vmem:[%s459 + $0x28] sm:$0xff]
        %v527 = vld [vmem:[%s459 + $0x30] sm:$0xff]
        %v528 = vld [vmem:[%s459 + $0x38] sm:$0xff]
        %v529 = vpack.c.bf16 %v522, %v521
        %v530 = vpack.c.bf16 %v524, %v523
        %v531 = vpack.c.bf16 %v526, %v525
        %v532 = vpack.c.bf16 %v528, %v527
        %v533 = vld [vmem:[#allocation5] sm:$0xff]
        %v534 = vld [vmem:[#allocation5 + $0x8] sm:$0xf]
        %v535 = vld [vmem:[#allocation5 + $0xc] sm:$0xff]
        %v536 = vld [vmem:[#allocation5 + $0x14] sm:$0xf]
        %v537 = vld [vmem:[#allocation5 + $0x18] sm:$0xff]
        %v538 = vld [vmem:[#allocation5 + $0x20] sm:$0xf]
        %v539 = vld [vmem:[#allocation5 + $0x24] sm:$0xff]
        %v540 = vld [vmem:[#allocation5 + $0x2c] sm:$0xf]
        %v541 = vld [vmem:[#allocation5 + $0x30] sm:$0xff]
        %v542 = vld [vmem:[#allocation5 + $0x38] sm:$0xf]
        %v543 = vld [vmem:[#allocation5 + $0x3c] sm:$0xff]
        %v544 = vld [vmem:[#allocation5 + $0x44] sm:$0xf]
        %v545 = vld [vmem:[#allocation5 + $0x48] sm:$0xff]
        %v546 = vld [vmem:[#allocation5 + $0x50] sm:$0xf]
        %v547 = vld [vmem:[#allocation5 + $0x54] sm:$0xff]
        %v548 = vld [vmem:[#allocation5 + $0x5c] sm:$0xf]
        %v549 = vld [vmem:[#allocation5 + $0x60] sm:$0xff]
        %v550 = vld [vmem:[#allocation5 + $0x68] sm:$0xf]
        %v551 = vld [vmem:[#allocation5 + $0x6c] sm:$0xff]
        %v552 = vld [vmem:[#allocation5 + $0x74] sm:$0xf]
        %v553 = vld [vmem:[#allocation5 + $0x78] sm:$0xff]
        %v554 = vld [vmem:[#allocation5 + $0x80] sm:$0xf]
        %v555 = vld [vmem:[#allocation5 + $0x84] sm:$0xff]
        %v556 = vld [vmem:[#allocation5 + $0x8c] sm:$0xf]
        %v557 = vld [vmem:[#allocation5 + $0x90] sm:$0xff]
        %v558 = vld [vmem:[#allocation5 + $0x98] sm:$0xf]
        %v559 = vld [vmem:[#allocation5 + $0x9c] sm:$0xff]
        %v560 = vld [vmem:[#allocation5 + $0xa4] sm:$0xf]
        %v561 = vld [vmem:[#allocation5 + $0xa8] sm:$0xff]
        %v562 = vld [vmem:[#allocation5 + $0xb0] sm:$0xf]
        %v563 = vld [vmem:[#allocation5 + $0xb4] sm:$0xff]
        %v564 = vld [vmem:[#allocation5 + $0xbc] sm:$0xf]
        %v565 = vld [vmem:[%s2] sm:$0x7]
        %v567 = vlaneseq
        %v568 = vshrl.u32 %v567, 7
        %v569 = vsub.s32 0, %v568
        %v570 = vrot.slane %v565, %v569
        %v571 = vlaneseq
        %v572 = vshrl.u32 %v571, 7
        %v573 = vsub.s32 1, %v572
        %v574 = vrot.slane %v565, %v573
        %v575 = vlaneseq
        %v576 = vshrl.u32 %v575, 7
        %v577 = vsub.s32 2, %v576
        %v578 = vrot.slane %v565, %v577
        %v614 = vunpack.c.l.b16 %v533
        %v615 = vunpack.c.h.b16 %v533
        %v616 = vunpack.c.l.b16 %v534
        %v617 = vunpack.c.l.b16 %v535
        %v618 = vunpack.c.h.b16 %v535
        %v619 = vunpack.c.l.b16 %v536
        %v620 = vunpack.c.l.b16 %v537
        %v621 = vunpack.c.h.b16 %v537
        %v622 = vunpack.c.l.b16 %v538
        %v623 = vunpack.c.l.b16 %v539
        %v624 = vunpack.c.h.b16 %v539
        %v625 = vunpack.c.l.b16 %v540
        %v626 = vunpack.c.l.b16 %v541
        %v627 = vunpack.c.h.b16 %v541
        %v628 = vunpack.c.l.b16 %v542
        %v629 = vunpack.c.l.b16 %v543
        %v630 = vunpack.c.h.b16 %v543
        %v631 = vunpack.c.l.b16 %v544
        %v632 = vunpack.c.l.b16 %v545
        %v633 = vunpack.c.h.b16 %v545
        %v634 = vunpack.c.l.b16 %v546
        %v635 = vunpack.c.l.b16 %v547
        %v636 = vunpack.c.h.b16 %v547
        %v637 = vunpack.c.l.b16 %v548
        %v638 = vunpack.c.l.b16 %v549
        %v639 = vunpack.c.h.b16 %v549
        %v640 = vunpack.c.l.b16 %v550
        %v641 = vunpack.c.l.b16 %v551
        %v642 = vunpack.c.h.b16 %v551
        %v643 = vunpack.c.l.b16 %v552
        %v644 = vunpack.c.l.b16 %v553
        %v645 = vunpack.c.h.b16 %v553
        %v646 = vunpack.c.l.b16 %v554
        %v647 = vunpack.c.l.b16 %v555
        %v648 = vunpack.c.h.b16 %v555
        %v649 = vunpack.c.l.b16 %v556
        %v650 = vunpack.c.l.b16 %v557
        %v651 = vunpack.c.h.b16 %v557
        %v652 = vunpack.c.l.b16 %v558
        %v653 = vunpack.c.l.b16 %v559
        %v654 = vunpack.c.h.b16 %v559
        %v655 = vunpack.c.l.b16 %v560
        %v656 = vunpack.c.l.b16 %v561
        %v657 = vunpack.c.h.b16 %v561
        %v658 = vunpack.c.l.b16 %v562
        %v659 = vunpack.c.l.b16 %v563
        %v660 = vunpack.c.h.b16 %v563
        %v661 = vunpack.c.l.b16 %v564
        %v662 = vpack.c.b16 %v617, %v614
        %v663 = vpack.c.b16 %v618, %v615
        %v664 = vpack.c.b16 %v619, %v616
        %v665 = vpack.c.b16 %v623, %v620
        %v666 = vpack.c.b16 %v624, %v621
        %v667 = vpack.c.b16 %v625, %v622
        %v668 = vpack.c.b16 %v629, %v626
        %v669 = vpack.c.b16 %v630, %v627
        %v670 = vpack.c.b16 %v631, %v628
        %v671 = vpack.c.b16 %v635, %v632
        %v672 = vpack.c.b16 %v636, %v633
        %v673 = vpack.c.b16 %v637, %v634
        %v674 = vpack.c.b16 %v641, %v638
        %v675 = vpack.c.b16 %v642, %v639
        %v676 = vpack.c.b16 %v643, %v640
        %v677 = vpack.c.b16 %v647, %v644
        %v678 = vpack.c.b16 %v648, %v645
        %v679 = vpack.c.b16 %v649, %v646
        %v680 = vpack.c.b16 %v653, %v650
        %v681 = vpack.c.b16 %v654, %v651
        %v682 = vpack.c.b16 %v655, %v652
        %v683 = vpack.c.b16 %v659, %v656
        %v684 = vpack.c.b16 %v660, %v657
        %v685 = vpack.c.b16 %v661, %v658
        %710 = vmatprep.subr.bf16.mxu0 %v663
        %711 = vmatpush1.bf16.msra.mxu0 %v662
        %712 = vmatprep.subr.bf16.mxu0 %v666
        %713 = vmatpush1.bf16.msra.mxu0 %v665
        %714 = vmatprep.subr.bf16.mxu0 %v669
        %715 = vmatpush1.bf16.msra.mxu0 %v668
        %716 = vmatprep.subr.bf16.mxu0 %v672
        %717 = vmatpush1.bf16.msra.mxu0 %v671
        %718 = vmatprep.subr.bf16.mxu0 %v675
        %719 = vmatpush1.bf16.msra.mxu0 %v674
        %720 = vmatprep.subr.bf16.mxu0 %v678
        %721 = vmatpush1.bf16.msra.mxu0 %v677
        %722 = vmatprep.subr.bf16.mxu0 %v681
        %723 = vmatpush1.bf16.msra.mxu0 %v680
        %724 = vmatprep.subr.bf16.mxu0 %v684
        %725 = vmatpush1.bf16.msra.mxu0 %v683
        %726 = vmatprep.subr.bf16.mxu0 0
        %727 = vmatpush1.bf16.msra.mxu0 0
        %728 = vmatprep.subr.bf16.mxu0 0
        %729 = vmatpush1.bf16.msra.mxu0 0
        %730 = vmatprep.subr.bf16.mxu0 0
        %731 = vmatpush1.bf16.msra.mxu0 0
        %732 = vmatprep.subr.bf16.mxu0 0
        %733 = vmatpush1.bf16.msra.mxu0 0
        %734 = vmatprep.subr.bf16.mxu0 0
        %735 = vmatpush1.bf16.msra.mxu0 0
        %736 = vmatprep.subr.bf16.mxu0 0
        %737 = vmatpush1.bf16.msra.mxu0 0
        %738 = vmatprep.subr.bf16.mxu0 0
        %739 = vmatpush1.bf16.msra.mxu0 0
        %740 = vmatprep.subr.bf16.mxu0 0
        %741 = vmatpush1.bf16.msra.mxu0 0
        %742 = vmatprep.mubr.bf16.mxu0 0
        %743 = vmatmul.mubr.bf16.gmra.mrb[0].mxu0 %v529
        %v744 = vpop.f32.mrb[0].mxu0
        %v745 = vadd.f32 %v570, %v744
        %v746 = vpop.f32.mrb[0].mxu0
        %v747 = vadd.f32 %v574, %v746
        %v748 = vpop.f32.mrb[0].mxu0
        %v749 = vadd.f32 %v570, %v748
        %v750 = vpop.f32.mrb[0].mxu0
        %v751 = vadd.f32 %v574, %v750
        %752 = vmatprep.mubr.bf16.mxu0 0
        %753 = vmatmul.mubr.bf16.gmra.mrb[0].mxu0 %v530
        %v754 = vpop.f32.mrb[0].mxu0
        %v755 = vadd.f32 %v570, %v754
        %v756 = vpop.f32.mrb[0].mxu0
        %v757 = vadd.f32 %v574, %v756
        %v758 = vpop.f32.mrb[0].mxu0
        %v759 = vadd.f32 %v570, %v758
        %v760 = vpop.f32.mrb[0].mxu0
        %v761 = vadd.f32 %v574, %v760
        %762 = vmatprep.mubr.bf16.mxu0 0
        %763 = vmatmul.mubr.bf16.gmra.mrb[0].mxu0 %v531
        %v764 = vpop.f32.mrb[0].mxu0
        %v765 = vadd.f32 %v570, %v764
        %v766 = vpop.f32.mrb[0].mxu0
        %v767 = vadd.f32 %v574, %v766
        %v768 = vpop.f32.mrb[0].mxu0
        %v769 = vadd.f32 %v570, %v768
        %v770 = vpop.f32.mrb[0].mxu0
        %v771 = vadd.f32 %v574, %v770
        %772 = vmatprep.mubr.bf16.mxu0 0
        %773 = vmatmul.mubr.bf16.gmra.mrb[0].mxu0 %v532
        %v774 = vpop.f32.mrb[0].mxu0
        %v775 = vadd.f32 %v570, %v774
        %v776 = vpop.f32.mrb[0].mxu0
        %v777 = vadd.f32 %v574, %v776
        %v778 = vpop.f32.mrb[0].mxu0
        %v779 = vadd.f32 %v570, %v778
        %v780 = vpop.f32.mrb[0].mxu0
        %v781 = vadd.f32 %v574, %v780
        %782 = vdwg.mxu0
        %783 = vmatprep.subr.bf16.mxu0 0
        %784 = vmatpush1.bf16.msra.mxu0 %v664
        %785 = vmatprep.subr.bf16.mxu0 0
        %786 = vmatpush1.bf16.msra.mxu0 %v667
        %787 = vmatprep.subr.bf16.mxu0 0
        %788 = vmatpush1.bf16.msra.mxu0 %v670
        %789 = vmatprep.subr.bf16.mxu0 0
        %790 = vmatpush1.bf16.msra.mxu0 %v673
        %791 = vmatprep.subr.bf16.mxu0 0
        %792 = vmatpush1.bf16.msra.mxu0 %v676
        %793 = vmatprep.subr.bf16.mxu0 0
        %794 = vmatpush1.bf16.msra.mxu0 %v679
        %795 = vmatprep.subr.bf16.mxu0 0
        %796 = vmatpush1.bf16.msra.mxu0 %v682
        %797 = vmatprep.subr.bf16.mxu0 0
        %798 = vmatpush1.bf16.msra.mxu0 %v685
        %799 = vmatprep.subr.bf16.mxu0 0
        %800 = vmatpush1.bf16.msra.mxu0 0
        %801 = vmatprep.subr.bf16.mxu0 0
        %802 = vmatpush1.bf16.msra.mxu0 0
        %803 = vmatprep.subr.bf16.mxu0 0
        %804 = vmatpush1.bf16.msra.mxu0 0
        %805 = vmatprep.subr.bf16.mxu0 0
        %806 = vmatpush1.bf16.msra.mxu0 0
        %807 = vmatprep.subr.bf16.mxu0 0
        %808 = vmatpush1.bf16.msra.mxu0 0
        %809 = vmatprep.subr.bf16.mxu0 0
        %810 = vmatpush1.bf16.msra.mxu0 0
        %811 = vmatprep.subr.bf16.mxu0 0
        %812 = vmatpush1.bf16.msra.mxu0 0
        %813 = vmatprep.subr.bf16.mxu0 0
        %814 = vmatpush1.bf16.msra.mxu0 0
        %815 = vmatprep.mubr.bf16.mxu0 0
        %816 = vmatmul.mubr.bf16.gmra.mrb[0].mxu0 %v529
        %v817 = vpop.f32.mrb[0].mxu0
        %v818 = vadd.f32 %v578, %v817
        %v819 = vpop.f32.mrb[0].mxu0
        %v820 = vpop.f32.mrb[0].mxu0
        %v821 = vadd.f32 %v578, %v820
        %v822 = vpop.f32.mrb[0].mxu0
        %823 = vmatprep.mubr.bf16.mxu0 0
        %824 = vmatmul.mubr.bf16.gmra.mrb[0].mxu0 %v530
        %v825 = vpop.f32.mrb[0].mxu0
        %v826 = vadd.f32 %v578, %v825
        %v827 = vpop.f32.mrb[0].mxu0
        %v828 = vpop.f32.mrb[0].mxu0
        %v829 = vadd.f32 %v578, %v828
        %v830 = vpop.f32.mrb[0].mxu0
        %831 = vmatprep.mubr.bf16.mxu0 0
        %832 = vmatmul.mubr.bf16.gmra.mrb[0].mxu0 %v531
        %v833 = vpop.f32.mrb[0].mxu0
        %v834 = vadd.f32 %v578, %v833
        %v835 = vpop.f32.mrb[0].mxu0
        %v836 = vpop.f32.mrb[0].mxu0
        %v837 = vadd.f32 %v578, %v836
        %v838 = vpop.f32.mrb[0].mxu0
        %839 = vmatprep.mubr.bf16.mxu0 0
        %840 = vmatmul.mubr.bf16.gmra.mrb[0].mxu0 %v532
        %v841 = vpop.f32.mrb[0].mxu0
        %v842 = vadd.f32 %v578, %v841
        %v843 = vpop.f32.mrb[0].mxu0
        %v844 = vpop.f32.mrb[0].mxu0
        %v845 = vadd.f32 %v578, %v844
        %v846 = vpop.f32.mrb[0].mxu0
        %847 = vdwg.mxu0
        %856 = vrot.lane.b32.xlu0 %v745, 96
        %v857 = vpop.permute.xlu0 %856
        %858 = vrot.lane.b32.xlu0 %v749, 96
        %v859 = vpop.permute.xlu0 %858
        %860 = vrot.lane.b32.xlu0 %v755, 96
        %v861 = vpop.permute.xlu0 %860
        %862 = vrot.lane.b32.xlu0 %v759, 96
        %v863 = vpop.permute.xlu0 %862
        %864 = vrot.lane.b32.xlu0 %v765, 96
        %v865 = vpop.permute.xlu0 %864
        %866 = vrot.lane.b32.xlu0 %v769, 96
        %v867 = vpop.permute.xlu0 %866
        %868 = vrot.lane.b32.xlu0 %v775, 96
        %v869 = vpop.permute.xlu0 %868
        %870 = vrot.lane.b32.xlu0 %v779, 96
        %v871 = vpop.permute.xlu0 %870
        %880 = vrot.lane.b32.xlu0 %v745, 64
        %v881 = vpop.permute.xlu0 %880
        %882 = vrot.lane.b32.xlu0 %v749, 64
        %v883 = vpop.permute.xlu0 %882
        %884 = vrot.lane.b32.xlu0 %v755, 64
        %v885 = vpop.permute.xlu0 %884
        %886 = vrot.lane.b32.xlu0 %v759, 64
        %v887 = vpop.permute.xlu0 %886
        %888 = vrot.lane.b32.xlu0 %v765, 64
        %v889 = vpop.permute.xlu0 %888
        %890 = vrot.lane.b32.xlu0 %v769, 64
        %v891 = vpop.permute.xlu0 %890
        %892 = vrot.lane.b32.xlu0 %v775, 64
        %v893 = vpop.permute.xlu0 %892
        %894 = vrot.lane.b32.xlu0 %v779, 64
        %v895 = vpop.permute.xlu0 %894
        %904 = vrot.lane.b32.xlu0 %v745, 32
        %v905 = vpop.permute.xlu0 %904
        %906 = vrot.lane.b32.xlu0 %v749, 32
        %v907 = vpop.permute.xlu0 %906
        %908 = vrot.lane.b32.xlu0 %v755, 32
        %v909 = vpop.permute.xlu0 %908
        %910 = vrot.lane.b32.xlu0 %v759, 32
        %v911 = vpop.permute.xlu0 %910
        %912 = vrot.lane.b32.xlu0 %v765, 32
        %v913 = vpop.permute.xlu0 %912
        %914 = vrot.lane.b32.xlu0 %v769, 32
        %v915 = vpop.permute.xlu0 %914
        %916 = vrot.lane.b32.xlu0 %v775, 32
        %v917 = vpop.permute.xlu0 %916
        %918 = vrot.lane.b32.xlu0 %v779, 32
        %v919 = vpop.permute.xlu0 %918
        %v928 = vpack.c.bf16 %v749, %v745
        %v929 = vpack.c.bf16 %v859, %v857
        %v930 = vpack.c.bf16 %v883, %v881
        %v931 = vpack.c.bf16 %v907, %v905
        %v932 = vpack.c.bf16 %v759, %v755
        %v933 = vpack.c.bf16 %v863, %v861
        %v934 = vpack.c.bf16 %v887, %v885
        %v935 = vpack.c.bf16 %v911, %v909
        %v936 = vpack.c.bf16 %v769, %v765
        %v937 = vpack.c.bf16 %v867, %v865
        %v938 = vpack.c.bf16 %v891, %v889
        %v939 = vpack.c.bf16 %v915, %v913
        %v940 = vpack.c.bf16 %v779, %v775
        %v941 = vpack.c.bf16 %v871, %v869
        %v942 = vpack.c.bf16 %v895, %v893
        %v943 = vpack.c.bf16 %v919, %v917
        %952 = vrot.lane.b32.xlu0 %v747, 96
        %v953 = vpop.permute.xlu0 %952
        %954 = vrot.lane.b32.xlu0 %v751, 96
        %v955 = vpop.permute.xlu0 %954
        %956 = vrot.lane.b32.xlu0 %v757, 96
        %v957 = vpop.permute.xlu0 %956
        %958 = vrot.lane.b32.xlu0 %v761, 96
        %v959 = vpop.permute.xlu0 %958
        %960 = vrot.lane.b32.xlu0 %v767, 96
        %v961 = vpop.permute.xlu0 %960
        %962 = vrot.lane.b32.xlu0 %v771, 96
        %v963 = vpop.permute.xlu0 %962
        %964 = vrot.lane.b32.xlu0 %v777, 96
        %v965 = vpop.permute.xlu0 %964
        %966 = vrot.lane.b32.xlu0 %v781, 96
        %v967 = vpop.permute.xlu0 %966
        %976 = vrot.lane.b32.xlu0 %v747, 64
        %v977 = vpop.permute.xlu0 %976
        %978 = vrot.lane.b32.xlu0 %v751, 64
        %v979 = vpop.permute.xlu0 %978
        %980 = vrot.lane.b32.xlu0 %v757, 64
        %v981 = vpop.permute.xlu0 %980
        %982 = vrot.lane.b32.xlu0 %v761, 64
        %v983 = vpop.permute.xlu0 %982
        %984 = vrot.lane.b32.xlu0 %v767, 64
        %v985 = vpop.permute.xlu0 %984
        %986 = vrot.lane.b32.xlu0 %v771, 64
        %v987 = vpop.permute.xlu0 %986
        %988 = vrot.lane.b32.xlu0 %v777, 64
        %v989 = vpop.permute.xlu0 %988
        %990 = vrot.lane.b32.xlu0 %v781, 64
        %v991 = vpop.permute.xlu0 %990
        %1000 = vrot.lane.b32.xlu0 %v747, 32
        %v1001 = vpop.permute.xlu0 %1000
        %1002 = vrot.lane.b32.xlu0 %v751, 32
        %v1003 = vpop.permute.xlu0 %1002
        %1004 = vrot.lane.b32.xlu0 %v757, 32
        %v1005 = vpop.permute.xlu0 %1004
        %1006 = vrot.lane.b32.xlu0 %v761, 32
        %v1007 = vpop.permute.xlu0 %1006
        %1008 = vrot.lane.b32.xlu0 %v767, 32
        %v1009 = vpop.permute.xlu0 %1008
        %1010 = vrot.lane.b32.xlu0 %v771, 32
        %v1011 = vpop.permute.xlu0 %1010
        %1012 = vrot.lane.b32.xlu0 %v777, 32
        %v1013 = vpop.permute.xlu0 %1012
        %1014 = vrot.lane.b32.xlu0 %v781, 32
        %v1015 = vpop.permute.xlu0 %1014
        %v1024 = vpack.c.bf16 %v751, %v747
        %v1025 = vpack.c.bf16 %v955, %v953
        %v1026 = vpack.c.bf16 %v979, %v977
        %v1027 = vpack.c.bf16 %v1003, %v1001
        %v1028 = vpack.c.bf16 %v761, %v757
        %v1029 = vpack.c.bf16 %v959, %v957
        %v1030 = vpack.c.bf16 %v983, %v981
        %v1031 = vpack.c.bf16 %v1007, %v1005
        %v1032 = vpack.c.bf16 %v771, %v767
        %v1033 = vpack.c.bf16 %v963, %v961
        %v1034 = vpack.c.bf16 %v987, %v985
        %v1035 = vpack.c.bf16 %v1011, %v1009
        %v1036 = vpack.c.bf16 %v781, %v777
        %v1037 = vpack.c.bf16 %v967, %v965
        %v1038 = vpack.c.bf16 %v991, %v989
        %v1039 = vpack.c.bf16 %v1015, %v1013
        %1048 = vrot.lane.b32.xlu0 %v818, 96
        %v1049 = vpop.permute.xlu0 %1048
        %1050 = vrot.lane.b32.xlu0 %v821, 96
        %v1051 = vpop.permute.xlu0 %1050
        %1052 = vrot.lane.b32.xlu0 %v826, 96
        %v1053 = vpop.permute.xlu0 %1052
        %1054 = vrot.lane.b32.xlu0 %v829, 96
        %v1055 = vpop.permute.xlu0 %1054
        %1056 = vrot.lane.b32.xlu0 %v834, 96
        %v1057 = vpop.permute.xlu0 %1056
        %1058 = vrot.lane.b32.xlu0 %v837, 96
        %v1059 = vpop.permute.xlu0 %1058
        %1060 = vrot.lane.b32.xlu0 %v842, 96
        %v1061 = vpop.permute.xlu0 %1060
        %1062 = vrot.lane.b32.xlu0 %v845, 96
        %v1063 = vpop.permute.xlu0 %1062
        %1072 = vrot.lane.b32.xlu0 %v818, 64
        %v1073 = vpop.permute.xlu0 %1072
        %1074 = vrot.lane.b32.xlu0 %v821, 64
        %v1075 = vpop.permute.xlu0 %1074
        %1076 = vrot.lane.b32.xlu0 %v826, 64
        %v1077 = vpop.permute.xlu0 %1076
        %1078 = vrot.lane.b32.xlu0 %v829, 64
        %v1079 = vpop.permute.xlu0 %1078
        %1080 = vrot.lane.b32.xlu0 %v834, 64
        %v1081 = vpop.permute.xlu0 %1080
        %1082 = vrot.lane.b32.xlu0 %v837, 64
        %v1083 = vpop.permute.xlu0 %1082
        %1084 = vrot.lane.b32.xlu0 %v842, 64
        %v1085 = vpop.permute.xlu0 %1084
        %1086 = vrot.lane.b32.xlu0 %v845, 64
        %v1087 = vpop.permute.xlu0 %1086
        %1096 = vrot.lane.b32.xlu0 %v818, 32
        %v1097 = vpop.permute.xlu0 %1096
        %1098 = vrot.lane.b32.xlu0 %v821, 32
        %v1099 = vpop.permute.xlu0 %1098
        %1100 = vrot.lane.b32.xlu0 %v826, 32
        %v1101 = vpop.permute.xlu0 %1100
        %1102 = vrot.lane.b32.xlu0 %v829, 32
        %v1103 = vpop.permute.xlu0 %1102
        %1104 = vrot.lane.b32.xlu0 %v834, 32
        %v1105 = vpop.permute.xlu0 %1104
        %1106 = vrot.lane.b32.xlu0 %v837, 32
        %v1107 = vpop.permute.xlu0 %1106
        %1108 = vrot.lane.b32.xlu0 %v842, 32
        %v1109 = vpop.permute.xlu0 %1108
        %1110 = vrot.lane.b32.xlu0 %v845, 32
        %v1111 = vpop.permute.xlu0 %1110
        %v1120 = vpack.c.bf16 %v821, %v818
        %v1121 = vpack.c.bf16 %v1051, %v1049
        %v1122 = vpack.c.bf16 %v1075, %v1073
        %v1123 = vpack.c.bf16 %v1099, %v1097
        %v1124 = vpack.c.bf16 %v829, %v826
        %v1125 = vpack.c.bf16 %v1055, %v1053
        %v1126 = vpack.c.bf16 %v1079, %v1077
        %v1127 = vpack.c.bf16 %v1103, %v1101
        %v1128 = vpack.c.bf16 %v837, %v834
        %v1129 = vpack.c.bf16 %v1059, %v1057
        %v1130 = vpack.c.bf16 %v1083, %v1081
        %v1131 = vpack.c.bf16 %v1107, %v1105
        %v1132 = vpack.c.bf16 %v845, %v842
        %v1133 = vpack.c.bf16 %v1063, %v1061
        %v1134 = vpack.c.bf16 %v1087, %v1085
        %v1135 = vpack.c.bf16 %v1111, %v1109
        %vm1136 = vcmask 261120
        %v1138 = vsel %vm1136, %v928, 0
        %v1141 = vsel %vm1136, %v1024, 0
        %1143 = vmatprep.subr.bf16.mxu0 0
        %1144 = vmatpush1.bf16.xpose.msra.mxu0 %v1141
        %1145 = vmatprep.subr.bf16.mxu0 0
        %1146 = vmatpush1.bf16.xpose.msra.mxu0 0
        %1147 = vmatprep.subr.bf16.mxu0 0
        %1148 = vmatpush1.bf16.xpose.msra.mxu0 0
        %1149 = vmatprep.subr.bf16.mxu0 0
        %1150 = vmatpush1.bf16.xpose.msra.mxu0 0
        %1151 = vmatprep.subr.bf16.mxu0 0
        %1152 = vmatpush1.bf16.xpose.msra.mxu0 0
        %1153 = vmatprep.subr.bf16.mxu0 0
        %1154 = vmatpush1.bf16.xpose.msra.mxu0 0
        %1155 = vmatprep.subr.bf16.mxu0 0
        %1156 = vmatpush1.bf16.xpose.msra.mxu0 0
        %1157 = vmatprep.subr.bf16.mxu0 0
        %1158 = vmatpush1.bf16.xpose.msra.mxu0 0
        %1159 = vmatprep.subr.bf16.mxu0 0
        %1160 = vmatpush1.bf16.xpose.msra.mxu0 0
        %1161 = vmatprep.subr.bf16.mxu0 0
        %1162 = vmatpush1.bf16.xpose.msra.mxu0 0
        %1163 = vmatprep.subr.bf16.mxu0 0
        %1164 = vmatpush1.bf16.xpose.msra.mxu0 0
        %1165 = vmatprep.subr.bf16.mxu0 0
        %1166 = vmatpush1.bf16.xpose.msra.mxu0 0
        %1167 = vmatprep.subr.bf16.mxu0 0
        %1168 = vmatpush1.bf16.xpose.msra.mxu0 0
        %1169 = vmatprep.subr.bf16.mxu0 0
        %1170 = vmatpush1.bf16.xpose.msra.mxu0 0
        %1171 = vmatprep.subr.bf16.mxu0 0
        %1172 = vmatpush1.bf16.xpose.msra.mxu0 0
        %1173 = vmatprep.subr.bf16.mxu0 0
        %1174 = vmatpush1.bf16.xpose.msra.mxu0 0
        %1175 = vmatprep.mubr.bf16.mxu0 0
        %1176 = vmatmul.mubr.bf16.gmra.mrb[0].mxu0 %v1138
        %v1177 = vpop.f32.mrb[0].mxu0
        %v1178 = vadd.f32 0.0, %v1177
        %v1179 = vpop.f32.mrb[0].mxu0
        %v1180 = vpop.f32.mrb[0].mxu0
        %v1181 = vadd.f32 0.0, %v1180
        %v1182 = vpop.f32.mrb[0].mxu0
        %1183 = vdwg.mxu0
        %v1185 = vsel %vm1136, %v929, 0
        %v1188 = vsel %vm1136, %v1025, 0
        %1190 = vmatprep.subr.bf16.mxu0 0
        %1191 = vmatpush1.bf16.xpose.msra.mxu0 %v1188
        %1192 = vmatprep.subr.bf16.mxu0 0
        %1193 = vmatpush1.bf16.xpose.msra.mxu0 0
        %1194 = vmatprep.subr.bf16.mxu0 0
        %1195 = vmatpush1.bf16.xpose.msra.mxu0 0
        %1196 = vmatprep.subr.bf16.mxu0 0
        %1197 = vmatpush1.bf16.xpose.msra.mxu0 0
        %1198 = vmatprep.subr.bf16.mxu0 0
        %1199 = vmatpush1.bf16.xpose.msra.mxu0 0
        %1200 = vmatprep.subr.bf16.mxu0 0
        %1201 = vmatpush1.bf16.xpose.msra.mxu0 0
        %1202 = vmatprep.subr.bf16.mxu0 0
        %1203 = vmatpush1.bf16.xpose.msra.mxu0 0
        %1204 = vmatprep.subr.bf16.mxu0 0
        %1205 = vmatpush1.bf16.xpose.msra.mxu0 0
        %1206 = vmatprep.subr.bf16.mxu0 0
        %1207 = vmatpush1.bf16.xpose.msra.mxu0 0
        %1208 = vmatprep.subr.bf16.mxu0 0
        %1209 = vmatpush1.bf16.xpose.msra.mxu0 0
        %1210 = vmatprep.subr.bf16.mxu0 0
        %1211 = vmatpush1.bf16.xpose.msra.mxu0 0
        %1212 = vmatprep.subr.bf16.mxu0 0
        %1213 = vmatpush1.bf16.xpose.msra.mxu0 0
        %1214 = vmatprep.subr.bf16.mxu0 0
        %1215 = vmatpush1.bf16.xpose.msra.mxu0 0
        %1216 = vmatprep.subr.bf16.mxu0 0
        %1217 = vmatpush1.bf16.xpose.msra.mxu0 0
        %1218 = vmatprep.subr.bf16.mxu0 0
        %1219 = vmatpush1.bf16.xpose.msra.mxu0 0
        %1220 = vmatprep.subr.bf16.mxu0 0
        %1221 = vmatpush1.bf16.xpose.msra.mxu0 0
        %1222 = vmatprep.mubr.bf16.mxu0 0
        %1223 = vmatmul.mubr.bf16.gmra.mrb[0].mxu0 %v1185
        %v1224 = vpop.f32.mrb[0].mxu0
        %v1225 = vadd.f32 0.0, %v1224
        %v1226 = vpop.f32.mrb[0].mxu0
        %v1227 = vpop.f32.mrb[0].mxu0
        %v1228 = vadd.f32 0.0, %v1227
        %v1229 = vpop.f32.mrb[0].mxu0
        %1230 = vdwg.mxu0
        %v1232 = vsel %vm1136, %v930, 0
        %v1235 = vsel %vm1136, %v1026, 0
        %1237 = vmatprep.subr.bf16.mxu0 0
        %1238 = vmatpush1.bf16.xpose.msra.mxu0 %v1235
        %1239 = vmatprep.subr.bf16.mxu0 0
        %1240 = vmatpush1.bf16.xpose.msra.mxu0 0
        %1241 = vmatprep.subr.bf16.mxu0 0
        %1242 = vmatpush1.bf16.xpose.msra.mxu0 0
        %1243 = vmatprep.subr.bf16.mxu0 0
        %1244 = vmatpush1.bf16.xpose.msra.mxu0 0
        %1245 = vmatprep.subr.bf16.mxu0 0
        %1246 = vmatpush1.bf16.xpose.msra.mxu0 0
        %1247 = vmatprep.subr.bf16.mxu0 0
        %1248 = vmatpush1.bf16.xpose.msra.mxu0 0
        %1249 = vmatprep.subr.bf16.mxu0 0
        %1250 = vmatpush1.bf16.xpose.msra.mxu0 0
        %1251 = vmatprep.subr.bf16.mxu0 0
        %1252 = vmatpush1.bf16.xpose.msra.mxu0 0
        %1253 = vmatprep.subr.bf16.mxu0 0
        %1254 = vmatpush1.bf16.xpose.msra.mxu0 0
        %1255 = vmatprep.subr.bf16.mxu0 0
        %1256 = vmatpush1.bf16.xpose.msra.mxu0 0
        %1257 = vmatprep.subr.bf16.mxu0 0
        %1258 = vmatpush1.bf16.xpose.msra.mxu0 0
        %1259 = vmatprep.subr.bf16.mxu0 0
        %1260 = vmatpush1.bf16.xpose.msra.mxu0 0
        %1261 = vmatprep.subr.bf16.mxu0 0
        %1262 = vmatpush1.bf16.xpose.msra.mxu0 0
        %1263 = vmatprep.subr.bf16.mxu0 0
        %1264 = vmatpush1.bf16.xpose.msra.mxu0 0
        %1265 = vmatprep.subr.bf16.mxu0 0
        %1266 = vmatpush1.bf16.xpose.msra.mxu0 0
        %1267 = vmatprep.subr.bf16.mxu0 0
        %1268 = vmatpush1.bf16.xpose.msra.mxu0 0
        %1269 = vmatprep.mubr.bf16.mxu0 0
        %1270 = vmatmul.mubr.bf16.gmra.mrb[0].mxu0 %v1232
        %v1271 = vpop.f32.mrb[0].mxu0
        %v1272 = vadd.f32 0.0, %v1271
        %v1273 = vpop.f32.mrb[0].mxu0
        %v1274 = vpop.f32.mrb[0].mxu0
        %v1275 = vadd.f32 0.0, %v1274
        %v1276 = vpop.f32.mrb[0].mxu0
        %1277 = vdwg.mxu0
        %v1279 = vsel %vm1136, %v931, 0
        %v1282 = vsel %vm1136, %v1027, 0
        %1284 = vmatprep.subr.bf16.mxu0 0
        %1285 = vmatpush1.bf16.xpose.msra.mxu0 %v1282
        %1286 = vmatprep.subr.bf16.mxu0 0
        %1287 = vmatpush1.bf16.xpose.msra.mxu0 0
        %1288 = vmatprep.subr.bf16.mxu0 0
        %1289 = vmatpush1.bf16.xpose.msra.mxu0 0
        %1290 = vmatprep.subr.bf16.mxu0 0
        %1291 = vmatpush1.bf16.xpose.msra.mxu0 0
        %1292 = vmatprep.subr.bf16.mxu0 0
        %1293 = vmatpush1.bf16.xpose.msra.mxu0 0
        %1294 = vmatprep.subr.bf16.mxu0 0
        %1295 = vmatpush1.bf16.xpose.msra.mxu0 0
        %1296 = vmatprep.subr.bf16.mxu0 0
        %1297 = vmatpush1.bf16.xpose.msra.mxu0 0
        %1298 = vmatprep.subr.bf16.mxu0 0
        %1299 = vmatpush1.bf16.xpose.msra.mxu0 0
        %1300 = vmatprep.subr.bf16.mxu0 0
        %1301 = vmatpush1.bf16.xpose.msra.mxu0 0
        %1302 = vmatprep.subr.bf16.mxu0 0
        %1303 = vmatpush1.bf16.xpose.msra.mxu0 0
        %1304 = vmatprep.subr.bf16.mxu0 0
        %1305 = vmatpush1.bf16.xpose.msra.mxu0 0
        %1306 = vmatprep.subr.bf16.mxu0 0
        %1307 = vmatpush1.bf16.xpose.msra.mxu0 0
        %1308 = vmatprep.subr.bf16.mxu0 0
        %1309 = vmatpush1.bf16.xpose.msra.mxu0 0
        %1310 = vmatprep.subr.bf16.mxu0 0
        %1311 = vmatpush1.bf16.xpose.msra.mxu0 0
        %1312 = vmatprep.subr.bf16.mxu0 0
        %1313 = vmatpush1.bf16.xpose.msra.mxu0 0
        %1314 = vmatprep.subr.bf16.mxu0 0
        %1315 = vmatpush1.bf16.xpose.msra.mxu0 0
        %1316 = vmatprep.mubr.bf16.mxu0 0
        %1317 = vmatmul.mubr.bf16.gmra.mrb[0].mxu0 %v1279
        %v1318 = vpop.f32.mrb[0].mxu0
        %v1319 = vadd.f32 0.0, %v1318
        %v1320 = vpop.f32.mrb[0].mxu0
        %v1321 = vpop.f32.mrb[0].mxu0
        %v1322 = vadd.f32 0.0, %v1321
        %v1323 = vpop.f32.mrb[0].mxu0
        %1324 = vdwg.mxu0
        %v1326 = vsel %vm1136, %v932, 0
        %v1329 = vsel %vm1136, %v1028, 0
        %1331 = vmatprep.subr.bf16.mxu0 0
        %1332 = vmatpush1.bf16.xpose.msra.mxu0 %v1329
        %1333 = vmatprep.subr.bf16.mxu0 0
        %1334 = vmatpush1.bf16.xpose.msra.mxu0 0
        %1335 = vmatprep.subr.bf16.mxu0 0
        %1336 = vmatpush1.bf16.xpose.msra.mxu0 0
        %1337 = vmatprep.subr.bf16.mxu0 0
        %1338 = vmatpush1.bf16.xpose.msra.mxu0 0
        %1339 = vmatprep.subr.bf16.mxu0 0
        %1340 = vmatpush1.bf16.xpose.msra.mxu0 0
        %1341 = vmatprep.subr.bf16.mxu0 0
        %1342 = vmatpush1.bf16.xpose.msra.mxu0 0
        %1343 = vmatprep.subr.bf16.mxu0 0
        %1344 = vmatpush1.bf16.xpose.msra.mxu0 0
        %1345 = vmatprep.subr.bf16.mxu0 0
        %1346 = vmatpush1.bf16.xpose.msra.mxu0 0
        %1347 = vmatprep.subr.bf16.mxu0 0
        %1348 = vmatpush1.bf16.xpose.msra.mxu0 0
        %1349 = vmatprep.subr.bf16.mxu0 0
        %1350 = vmatpush1.bf16.xpose.msra.mxu0 0
        %1351 = vmatprep.subr.bf16.mxu0 0
        %1352 = vmatpush1.bf16.xpose.msra.mxu0 0
        %1353 = vmatprep.subr.bf16.mxu0 0
        %1354 = vmatpush1.bf16.xpose.msra.mxu0 0
        %1355 = vmatprep.subr.bf16.mxu0 0
        %1356 = vmatpush1.bf16.xpose.msra.mxu0 0
        %1357 = vmatprep.subr.bf16.mxu0 0
        %1358 = vmatpush1.bf16.xpose.msra.mxu0 0
        %1359 = vmatprep.subr.bf16.mxu0 0
        %1360 = vmatpush1.bf16.xpose.msra.mxu0 0
        %1361 = vmatprep.subr.bf16.mxu0 0
        %1362 = vmatpush1.bf16.xpose.msra.mxu0 0
        %1363 = vmatprep.mubr.bf16.mxu0 0
        %1364 = vmatmul.mubr.bf16.gmra.mrb[0].mxu0 %v1326
        %v1365 = vpop.f32.mrb[0].mxu0
        %v1366 = vadd.f32 0.0, %v1365
        %v1367 = vpop.f32.mrb[0].mxu0
        %v1368 = vpop.f32.mrb[0].mxu0
        %v1369 = vadd.f32 0.0, %v1368
        %v1370 = vpop.f32.mrb[0].mxu0
        %1371 = vdwg.mxu0
        %v1373 = vsel %vm1136, %v933, 0
        %v1376 = vsel %vm1136, %v1029, 0
        %1378 = vmatprep.subr.bf16.mxu0 0
        %1379 = vmatpush1.bf16.xpose.msra.mxu0 %v1376
        %1380 = vmatprep.subr.bf16.mxu0 0
        %1381 = vmatpush1.bf16.xpose.msra.mxu0 0
        %1382 = vmatprep.subr.bf16.mxu0 0
        %1383 = vmatpush1.bf16.xpose.msra.mxu0 0
        %1384 = vmatprep.subr.bf16.mxu0 0
        %1385 = vmatpush1.bf16.xpose.msra.mxu0 0
        %1386 = vmatprep.subr.bf16.mxu0 0
        %1387 = vmatpush1.bf16.xpose.msra.mxu0 0
        %1388 = vmatprep.subr.bf16.mxu0 0
        %1389 = vmatpush1.bf16.xpose.msra.mxu0 0
        %1390 = vmatprep.subr.bf16.mxu0 0
        %1391 = vmatpush1.bf16.xpose.msra.mxu0 0
        %1392 = vmatprep.subr.bf16.mxu0 0
        %1393 = vmatpush1.bf16.xpose.msra.mxu0 0
        %1394 = vmatprep.subr.bf16.mxu0 0
        %1395 = vmatpush1.bf16.xpose.msra.mxu0 0
        %1396 = vmatprep.subr.bf16.mxu0 0
        %1397 = vmatpush1.bf16.xpose.msra.mxu0 0
        %1398 = vmatprep.subr.bf16.mxu0 0
        %1399 = vmatpush1.bf16.xpose.msra.mxu0 0
        %1400 = vmatprep.subr.bf16.mxu0 0
        %1401 = vmatpush1.bf16.xpose.msra.mxu0 0
        %1402 = vmatprep.subr.bf16.mxu0 0
        %1403 = vmatpush1.bf16.xpose.msra.mxu0 0
        %1404 = vmatprep.subr.bf16.mxu0 0
        %1405 = vmatpush1.bf16.xpose.msra.mxu0 0
        %1406 = vmatprep.subr.bf16.mxu0 0
        %1407 = vmatpush1.bf16.xpose.msra.mxu0 0
        %1408 = vmatprep.subr.bf16.mxu0 0
        %1409 = vmatpush1.bf16.xpose.msra.mxu0 0
        %1410 = vmatprep.mubr.bf16.mxu0 0
        %1411 = vmatmul.mubr.bf16.gmra.mrb[0].mxu0 %v1373
        %v1412 = vpop.f32.mrb[0].mxu0
        %v1413 = vadd.f32 0.0, %v1412
        %v1414 = vpop.f32.mrb[0].mxu0
        %v1415 = vpop.f32.mrb[0].mxu0
        %v1416 = vadd.f32 0.0, %v1415
        %v1417 = vpop.f32.mrb[0].mxu0
        %1418 = vdwg.mxu0
        %v1420 = vsel %vm1136, %v934, 0
        %v1423 = vsel %vm1136, %v1030, 0
        %1425 = vmatprep.subr.bf16.mxu0 0
        %1426 = vmatpush1.bf16.xpose.msra.mxu0 %v1423
        %1427 = vmatprep.subr.bf16.mxu0 0
        %1428 = vmatpush1.bf16.xpose.msra.mxu0 0
        %1429 = vmatprep.subr.bf16.mxu0 0
        %1430 = vmatpush1.bf16.xpose.msra.mxu0 0
        %1431 = vmatprep.subr.bf16.mxu0 0
        %1432 = vmatpush1.bf16.xpose.msra.mxu0 0
        %1433 = vmatprep.subr.bf16.mxu0 0
        %1434 = vmatpush1.bf16.xpose.msra.mxu0 0
        %1435 = vmatprep.subr.bf16.mxu0 0
        %1436 = vmatpush1.bf16.xpose.msra.mxu0 0
        %1437 = vmatprep.subr.bf16.mxu0 0
        %1438 = vmatpush1.bf16.xpose.msra.mxu0 0
        %1439 = vmatprep.subr.bf16.mxu0 0
        %1440 = vmatpush1.bf16.xpose.msra.mxu0 0
        %1441 = vmatprep.subr.bf16.mxu0 0
        %1442 = vmatpush1.bf16.xpose.msra.mxu0 0
        %1443 = vmatprep.subr.bf16.mxu0 0
        %1444 = vmatpush1.bf16.xpose.msra.mxu0 0
        %1445 = vmatprep.subr.bf16.mxu0 0
        %1446 = vmatpush1.bf16.xpose.msra.mxu0 0
        %1447 = vmatprep.subr.bf16.mxu0 0
        %1448 = vmatpush1.bf16.xpose.msra.mxu0 0
        %1449 = vmatprep.subr.bf16.mxu0 0
        %1450 = vmatpush1.bf16.xpose.msra.mxu0 0
        %1451 = vmatprep.subr.bf16.mxu0 0
        %1452 = vmatpush1.bf16.xpose.msra.mxu0 0
        %1453 = vmatprep.subr.bf16.mxu0 0
        %1454 = vmatpush1.bf16.xpose.msra.mxu0 0
        %1455 = vmatprep.subr.bf16.mxu0 0
        %1456 = vmatpush1.bf16.xpose.msra.mxu0 0
        %1457 = vmatprep.mubr.bf16.mxu0 0
        %1458 = vmatmul.mubr.bf16.gmra.mrb[0].mxu0 %v1420
        %v1459 = vpop.f32.mrb[0].mxu0
        %v1460 = vadd.f32 0.0, %v1459
        %v1461 = vpop.f32.mrb[0].mxu0
        %v1462 = vpop.f32.mrb[0].mxu0
        %v1463 = vadd.f32 0.0, %v1462
        %v1464 = vpop.f32.mrb[0].mxu0
        %1465 = vdwg.mxu0
        %v1467 = vsel %vm1136, %v935, 0
        %v1470 = vsel %vm1136, %v1031, 0
        %1472 = vmatprep.subr.bf16.mxu0 0
        %1473 = vmatpush1.bf16.xpose.msra.mxu0 %v1470
        %1474 = vmatprep.subr.bf16.mxu0 0
        %1475 = vmatpush1.bf16.xpose.msra.mxu0 0
        %1476 = vmatprep.subr.bf16.mxu0 0
        %1477 = vmatpush1.bf16.xpose.msra.mxu0 0
        %1478 = vmatprep.subr.bf16.mxu0 0
        %1479 = vmatpush1.bf16.xpose.msra.mxu0 0
        %1480 = vmatprep.subr.bf16.mxu0 0
        %1481 = vmatpush1.bf16.xpose.msra.mxu0 0
        %1482 = vmatprep.subr.bf16.mxu0 0
        %1483 = vmatpush1.bf16.xpose.msra.mxu0 0
        %1484 = vmatprep.subr.bf16.mxu0 0
        %1485 = vmatpush1.bf16.xpose.msra.mxu0 0
        %1486 = vmatprep.subr.bf16.mxu0 0
        %1487 = vmatpush1.bf16.xpose.msra.mxu0 0
        %1488 = vmatprep.subr.bf16.mxu0 0
        %1489 = vmatpush1.bf16.xpose.msra.mxu0 0
        %1490 = vmatprep.subr.bf16.mxu0 0
        %1491 = vmatpush1.bf16.xpose.msra.mxu0 0
        %1492 = vmatprep.subr.bf16.mxu0 0
        %1493 = vmatpush1.bf16.xpose.msra.mxu0 0
        %1494 = vmatprep.subr.bf16.mxu0 0
        %1495 = vmatpush1.bf16.xpose.msra.mxu0 0
        %1496 = vmatprep.subr.bf16.mxu0 0
        %1497 = vmatpush1.bf16.xpose.msra.mxu0 0
        %1498 = vmatprep.subr.bf16.mxu0 0
        %1499 = vmatpush1.bf16.xpose.msra.mxu0 0
        %1500 = vmatprep.subr.bf16.mxu0 0
        %1501 = vmatpush1.bf16.xpose.msra.mxu0 0
        %1502 = vmatprep.subr.bf16.mxu0 0
        %1503 = vmatpush1.bf16.xpose.msra.mxu0 0
        %1504 = vmatprep.mubr.bf16.mxu0 0
        %1505 = vmatmul.mubr.bf16.gmra.mrb[0].mxu0 %v1467
        %v1506 = vpop.f32.mrb[0].mxu0
        %v1507 = vadd.f32 0.0, %v1506
        %v1508 = vpop.f32.mrb[0].mxu0
        %v1509 = vpop.f32.mrb[0].mxu0
        %v1510 = vadd.f32 0.0, %v1509
        %v1511 = vpop.f32.mrb[0].mxu0
        %1512 = vdwg.mxu0
        %v1514 = vsel %vm1136, %v936, 0
        %v1517 = vsel %vm1136, %v1032, 0
        %1519 = vmatprep.subr.bf16.mxu0 0
        %1520 = vmatpush1.bf16.xpose.msra.mxu0 %v1517
        %1521 = vmatprep.subr.bf16.mxu0 0
        %1522 = vmatpush1.bf16.xpose.msra.mxu0 0
        %1523 = vmatprep.subr.bf16.mxu0 0
        %1524 = vmatpush1.bf16.xpose.msra.mxu0 0
        %1525 = vmatprep.subr.bf16.mxu0 0
        %1526 = vmatpush1.bf16.xpose.msra.mxu0 0
        %1527 = vmatprep.subr.bf16.mxu0 0
        %1528 = vmatpush1.bf16.xpose.msra.mxu0 0
        %1529 = vmatprep.subr.bf16.mxu0 0
        %1530 = vmatpush1.bf16.xpose.msra.mxu0 0
        %1531 = vmatprep.subr.bf16.mxu0 0
        %1532 = vmatpush1.bf16.xpose.msra.mxu0 0
        %1533 = vmatprep.subr.bf16.mxu0 0
        %1534 = vmatpush1.bf16.xpose.msra.mxu0 0
        %1535 = vmatprep.subr.bf16.mxu0 0
        %1536 = vmatpush1.bf16.xpose.msra.mxu0 0
        %1537 = vmatprep.subr.bf16.mxu0 0
        %1538 = vmatpush1.bf16.xpose.msra.mxu0 0
        %1539 = vmatprep.subr.bf16.mxu0 0
        %1540 = vmatpush1.bf16.xpose.msra.mxu0 0
        %1541 = vmatprep.subr.bf16.mxu0 0
        %1542 = vmatpush1.bf16.xpose.msra.mxu0 0
        %1543 = vmatprep.subr.bf16.mxu0 0
        %1544 = vmatpush1.bf16.xpose.msra.mxu0 0
        %1545 = vmatprep.subr.bf16.mxu0 0
        %1546 = vmatpush1.bf16.xpose.msra.mxu0 0
        %1547 = vmatprep.subr.bf16.mxu0 0
        %1548 = vmatpush1.bf16.xpose.msra.mxu0 0
        %1549 = vmatprep.subr.bf16.mxu0 0
        %1550 = vmatpush1.bf16.xpose.msra.mxu0 0
        %1551 = vmatprep.mubr.bf16.mxu0 0
        %1552 = vmatmul.mubr.bf16.gmra.mrb[0].mxu0 %v1514
        %v1553 = vpop.f32.mrb[0].mxu0
        %v1554 = vadd.f32 0.0, %v1553
        %v1555 = vpop.f32.mrb[0].mxu0
        %v1556 = vpop.f32.mrb[0].mxu0
        %v1557 = vadd.f32 0.0, %v1556
        %v1558 = vpop.f32.mrb[0].mxu0
        %1559 = vdwg.mxu0
        %v1561 = vsel %vm1136, %v937, 0
        %v1564 = vsel %vm1136, %v1033, 0
        %1566 = vmatprep.subr.bf16.mxu0 0
        %1567 = vmatpush1.bf16.xpose.msra.mxu0 %v1564
        %1568 = vmatprep.subr.bf16.mxu0 0
        %1569 = vmatpush1.bf16.xpose.msra.mxu0 0
        %1570 = vmatprep.subr.bf16.mxu0 0
        %1571 = vmatpush1.bf16.xpose.msra.mxu0 0
        %1572 = vmatprep.subr.bf16.mxu0 0
        %1573 = vmatpush1.bf16.xpose.msra.mxu0 0
        %1574 = vmatprep.subr.bf16.mxu0 0
        %1575 = vmatpush1.bf16.xpose.msra.mxu0 0
        %1576 = vmatprep.subr.bf16.mxu0 0
        %1577 = vmatpush1.bf16.xpose.msra.mxu0 0
        %1578 = vmatprep.subr.bf16.mxu0 0
        %1579 = vmatpush1.bf16.xpose.msra.mxu0 0
        %1580 = vmatprep.subr.bf16.mxu0 0
        %1581 = vmatpush1.bf16.xpose.msra.mxu0 0
        %1582 = vmatprep.subr.bf16.mxu0 0
        %1583 = vmatpush1.bf16.xpose.msra.mxu0 0
        %1584 = vmatprep.subr.bf16.mxu0 0
        %1585 = vmatpush1.bf16.xpose.msra.mxu0 0
        %1586 = vmatprep.subr.bf16.mxu0 0
        %1587 = vmatpush1.bf16.xpose.msra.mxu0 0
        %1588 = vmatprep.subr.bf16.mxu0 0
        %1589 = vmatpush1.bf16.xpose.msra.mxu0 0
        %1590 = vmatprep.subr.bf16.mxu0 0
        %1591 = vmatpush1.bf16.xpose.msra.mxu0 0
        %1592 = vmatprep.subr.bf16.mxu0 0
        %1593 = vmatpush1.bf16.xpose.msra.mxu0 0
        %1594 = vmatprep.subr.bf16.mxu0 0
        %1595 = vmatpush1.bf16.xpose.msra.mxu0 0
        %1596 = vmatprep.subr.bf16.mxu0 0
        %1597 = vmatpush1.bf16.xpose.msra.mxu0 0
        %1598 = vmatprep.mubr.bf16.mxu0 0
        %1599 = vmatmul.mubr.bf16.gmra.mrb[0].mxu0 %v1561
        %v1600 = vpop.f32.mrb[0].mxu0
        %v1601 = vadd.f32 0.0, %v1600
        %v1602 = vpop.f32.mrb[0].mxu0
        %v1603 = vpop.f32.mrb[0].mxu0
        %v1604 = vadd.f32 0.0, %v1603
        %v1605 = vpop.f32.mrb[0].mxu0
        %1606 = vdwg.mxu0
        %v1608 = vsel %vm1136, %v938, 0
        %v1611 = vsel %vm1136, %v1034, 0
        %1613 = vmatprep.subr.bf16.mxu0 0
        %1614 = vmatpush1.bf16.xpose.msra.mxu0 %v1611
        %1615 = vmatprep.subr.bf16.mxu0 0
        %1616 = vmatpush1.bf16.xpose.msra.mxu0 0
        %1617 = vmatprep.subr.bf16.mxu0 0
        %1618 = vmatpush1.bf16.xpose.msra.mxu0 0
        %1619 = vmatprep.subr.bf16.mxu0 0
        %1620 = vmatpush1.bf16.xpose.msra.mxu0 0
        %1621 = vmatprep.subr.bf16.mxu0 0
        %1622 = vmatpush1.bf16.xpose.msra.mxu0 0
        %1623 = vmatprep.subr.bf16.mxu0 0
        %1624 = vmatpush1.bf16.xpose.msra.mxu0 0
        %1625 = vmatprep.subr.bf16.mxu0 0
        %1626 = vmatpush1.bf16.xpose.msra.mxu0 0
        %1627 = vmatprep.subr.bf16.mxu0 0
        %1628 = vmatpush1.bf16.xpose.msra.mxu0 0
        %1629 = vmatprep.subr.bf16.mxu0 0
        %1630 = vmatpush1.bf16.xpose.msra.mxu0 0
        %1631 = vmatprep.subr.bf16.mxu0 0
        %1632 = vmatpush1.bf16.xpose.msra.mxu0 0
        %1633 = vmatprep.subr.bf16.mxu0 0
        %1634 = vmatpush1.bf16.xpose.msra.mxu0 0
        %1635 = vmatprep.subr.bf16.mxu0 0
        %1636 = vmatpush1.bf16.xpose.msra.mxu0 0
        %1637 = vmatprep.subr.bf16.mxu0 0
        %1638 = vmatpush1.bf16.xpose.msra.mxu0 0
        %1639 = vmatprep.subr.bf16.mxu0 0
        %1640 = vmatpush1.bf16.xpose.msra.mxu0 0
        %1641 = vmatprep.subr.bf16.mxu0 0
        %1642 = vmatpush1.bf16.xpose.msra.mxu0 0
        %1643 = vmatprep.subr.bf16.mxu0 0
        %1644 = vmatpush1.bf16.xpose.msra.mxu0 0
        %1645 = vmatprep.mubr.bf16.mxu0 0
        %1646 = vmatmul.mubr.bf16.gmra.mrb[0].mxu0 %v1608
        %v1647 = vpop.f32.mrb[0].mxu0
        %v1648 = vadd.f32 0.0, %v1647
        %v1649 = vpop.f32.mrb[0].mxu0
        %v1650 = vpop.f32.mrb[0].mxu0
        %v1651 = vadd.f32 0.0, %v1650
        %v1652 = vpop.f32.mrb[0].mxu0
        %1653 = vdwg.mxu0
        %v1655 = vsel %vm1136, %v939, 0
        %v1658 = vsel %vm1136, %v1035, 0
        %1660 = vmatprep.subr.bf16.mxu0 0
        %1661 = vmatpush1.bf16.xpose.msra.mxu0 %v1658
        %1662 = vmatprep.subr.bf16.mxu0 0
        %1663 = vmatpush1.bf16.xpose.msra.mxu0 0
        %1664 = vmatprep.subr.bf16.mxu0 0
        %1665 = vmatpush1.bf16.xpose.msra.mxu0 0
        %1666 = vmatprep.subr.bf16.mxu0 0
        %1667 = vmatpush1.bf16.xpose.msra.mxu0 0
        %1668 = vmatprep.subr.bf16.mxu0 0
        %1669 = vmatpush1.bf16.xpose.msra.mxu0 0
        %1670 = vmatprep.subr.bf16.mxu0 0
        %1671 = vmatpush1.bf16.xpose.msra.mxu0 0
        %1672 = vmatprep.subr.bf16.mxu0 0
        %1673 = vmatpush1.bf16.xpose.msra.mxu0 0
        %1674 = vmatprep.subr.bf16.mxu0 0
        %1675 = vmatpush1.bf16.xpose.msra.mxu0 0
        %1676 = vmatprep.subr.bf16.mxu0 0
        %1677 = vmatpush1.bf16.xpose.msra.mxu0 0
        %1678 = vmatprep.subr.bf16.mxu0 0
        %1679 = vmatpush1.bf16.xpose.msra.mxu0 0
        %1680 = vmatprep.subr.bf16.mxu0 0
        %1681 = vmatpush1.bf16.xpose.msra.mxu0 0
        %1682 = vmatprep.subr.bf16.mxu0 0
        %1683 = vmatpush1.bf16.xpose.msra.mxu0 0
        %1684 = vmatprep.subr.bf16.mxu0 0
        %1685 = vmatpush1.bf16.xpose.msra.mxu0 0
        %1686 = vmatprep.subr.bf16.mxu0 0
        %1687 = vmatpush1.bf16.xpose.msra.mxu0 0
        %1688 = vmatprep.subr.bf16.mxu0 0
        %1689 = vmatpush1.bf16.xpose.msra.mxu0 0
        %1690 = vmatprep.subr.bf16.mxu0 0
        %1691 = vmatpush1.bf16.xpose.msra.mxu0 0
        %1692 = vmatprep.mubr.bf16.mxu0 0
        %1693 = vmatmul.mubr.bf16.gmra.mrb[0].mxu0 %v1655
        %v1694 = vpop.f32.mrb[0].mxu0
        %v1695 = vadd.f32 0.0, %v1694
        %v1696 = vpop.f32.mrb[0].mxu0
        %v1697 = vpop.f32.mrb[0].mxu0
        %v1698 = vadd.f32 0.0, %v1697
        %v1699 = vpop.f32.mrb[0].mxu0
        %1700 = vdwg.mxu0
        %v1702 = vsel %vm1136, %v940, 0
        %v1705 = vsel %vm1136, %v1036, 0
        %1707 = vmatprep.subr.bf16.mxu0 0
        %1708 = vmatpush1.bf16.xpose.msra.mxu0 %v1705
        %1709 = vmatprep.subr.bf16.mxu0 0
        %1710 = vmatpush1.bf16.xpose.msra.mxu0 0
        %1711 = vmatprep.subr.bf16.mxu0 0
        %1712 = vmatpush1.bf16.xpose.msra.mxu0 0
        %1713 = vmatprep.subr.bf16.mxu0 0
        %1714 = vmatpush1.bf16.xpose.msra.mxu0 0
        %1715 = vmatprep.subr.bf16.mxu0 0
        %1716 = vmatpush1.bf16.xpose.msra.mxu0 0
        %1717 = vmatprep.subr.bf16.mxu0 0
        %1718 = vmatpush1.bf16.xpose.msra.mxu0 0
        %1719 = vmatprep.subr.bf16.mxu0 0
        %1720 = vmatpush1.bf16.xpose.msra.mxu0 0
        %1721 = vmatprep.subr.bf16.mxu0 0
        %1722 = vmatpush1.bf16.xpose.msra.mxu0 0
        %1723 = vmatprep.subr.bf16.mxu0 0
        %1724 = vmatpush1.bf16.xpose.msra.mxu0 0
        %1725 = vmatprep.subr.bf16.mxu0 0
        %1726 = vmatpush1.bf16.xpose.msra.mxu0 0
        %1727 = vmatprep.subr.bf16.mxu0 0
        %1728 = vmatpush1.bf16.xpose.msra.mxu0 0
        %1729 = vmatprep.subr.bf16.mxu0 0
        %1730 = vmatpush1.bf16.xpose.msra.mxu0 0
        %1731 = vmatprep.subr.bf16.mxu0 0
        %1732 = vmatpush1.bf16.xpose.msra.mxu0 0
        %1733 = vmatprep.subr.bf16.mxu0 0
        %1734 = vmatpush1.bf16.xpose.msra.mxu0 0
        %1735 = vmatprep.subr.bf16.mxu0 0
        %1736 = vmatpush1.bf16.xpose.msra.mxu0 0
        %1737 = vmatprep.subr.bf16.mxu0 0
        %1738 = vmatpush1.bf16.xpose.msra.mxu0 0
        %1739 = vmatprep.mubr.bf16.mxu0 0
        %1740 = vmatmul.mubr.bf16.gmra.mrb[0].mxu0 %v1702
        %v1741 = vpop.f32.mrb[0].mxu0
        %v1742 = vadd.f32 0.0, %v1741
        %v1743 = vpop.f32.mrb[0].mxu0
        %v1744 = vpop.f32.mrb[0].mxu0
        %v1745 = vadd.f32 0.0, %v1744
        %v1746 = vpop.f32.mrb[0].mxu0
        %1747 = vdwg.mxu0
        %v1749 = vsel %vm1136, %v941, 0
        %v1752 = vsel %vm1136, %v1037, 0
        %1754 = vmatprep.subr.bf16.mxu0 0
        %1755 = vmatpush1.bf16.xpose.msra.mxu0 %v1752
        %1756 = vmatprep.subr.bf16.mxu0 0
        %1757 = vmatpush1.bf16.xpose.msra.mxu0 0
        %1758 = vmatprep.subr.bf16.mxu0 0
        %1759 = vmatpush1.bf16.xpose.msra.mxu0 0
        %1760 = vmatprep.subr.bf16.mxu0 0
        %1761 = vmatpush1.bf16.xpose.msra.mxu0 0
        %1762 = vmatprep.subr.bf16.mxu0 0
        %1763 = vmatpush1.bf16.xpose.msra.mxu0 0
        %1764 = vmatprep.subr.bf16.mxu0 0
        %1765 = vmatpush1.bf16.xpose.msra.mxu0 0
        %1766 = vmatprep.subr.bf16.mxu0 0
        %1767 = vmatpush1.bf16.xpose.msra.mxu0 0
        %1768 = vmatprep.subr.bf16.mxu0 0
        %1769 = vmatpush1.bf16.xpose.msra.mxu0 0
        %1770 = vmatprep.subr.bf16.mxu0 0
        %1771 = vmatpush1.bf16.xpose.msra.mxu0 0
        %1772 = vmatprep.subr.bf16.mxu0 0
        %1773 = vmatpush1.bf16.xpose.msra.mxu0 0
        %1774 = vmatprep.subr.bf16.mxu0 0
        %1775 = vmatpush1.bf16.xpose.msra.mxu0 0
        %1776 = vmatprep.subr.bf16.mxu0 0
        %1777 = vmatpush1.bf16.xpose.msra.mxu0 0
        %1778 = vmatprep.subr.bf16.mxu0 0
        %1779 = vmatpush1.bf16.xpose.msra.mxu0 0
        %1780 = vmatprep.subr.bf16.mxu0 0
        %1781 = vmatpush1.bf16.xpose.msra.mxu0 0
        %1782 = vmatprep.subr.bf16.mxu0 0
        %1783 = vmatpush1.bf16.xpose.msra.mxu0 0
        %1784 = vmatprep.subr.bf16.mxu0 0
        %1785 = vmatpush1.bf16.xpose.msra.mxu0 0
        %1786 = vmatprep.mubr.bf16.mxu0 0
        %1787 = vmatmul.mubr.bf16.gmra.mrb[0].mxu0 %v1749
        %v1788 = vpop.f32.mrb[0].mxu0
        %v1789 = vadd.f32 0.0, %v1788
        %v1790 = vpop.f32.mrb[0].mxu0
        %v1791 = vpop.f32.mrb[0].mxu0
        %v1792 = vadd.f32 0.0, %v1791
        %v1793 = vpop.f32.mrb[0].mxu0
        %1794 = vdwg.mxu0
        %v1796 = vsel %vm1136, %v942, 0
        %v1799 = vsel %vm1136, %v1038, 0
        %1801 = vmatprep.subr.bf16.mxu0 0
        %1802 = vmatpush1.bf16.xpose.msra.mxu0 %v1799
        %1803 = vmatprep.subr.bf16.mxu0 0
        %1804 = vmatpush1.bf16.xpose.msra.mxu0 0
        %1805 = vmatprep.subr.bf16.mxu0 0
        %1806 = vmatpush1.bf16.xpose.msra.mxu0 0
        %1807 = vmatprep.subr.bf16.mxu0 0
        %1808 = vmatpush1.bf16.xpose.msra.mxu0 0
        %1809 = vmatprep.subr.bf16.mxu0 0
        %1810 = vmatpush1.bf16.xpose.msra.mxu0 0
        %1811 = vmatprep.subr.bf16.mxu0 0
        %1812 = vmatpush1.bf16.xpose.msra.mxu0 0
        %1813 = vmatprep.subr.bf16.mxu0 0
        %1814 = vmatpush1.bf16.xpose.msra.mxu0 0
        %1815 = vmatprep.subr.bf16.mxu0 0
        %1816 = vmatpush1.bf16.xpose.msra.mxu0 0
        %1817 = vmatprep.subr.bf16.mxu0 0
        %1818 = vmatpush1.bf16.xpose.msra.mxu0 0
        %1819 = vmatprep.subr.bf16.mxu0 0
        %1820 = vmatpush1.bf16.xpose.msra.mxu0 0
        %1821 = vmatprep.subr.bf16.mxu0 0
        %1822 = vmatpush1.bf16.xpose.msra.mxu0 0
        %1823 = vmatprep.subr.bf16.mxu0 0
        %1824 = vmatpush1.bf16.xpose.msra.mxu0 0
        %1825 = vmatprep.subr.bf16.mxu0 0
        %1826 = vmatpush1.bf16.xpose.msra.mxu0 0
        %1827 = vmatprep.subr.bf16.mxu0 0
        %1828 = vmatpush1.bf16.xpose.msra.mxu0 0
        %1829 = vmatprep.subr.bf16.mxu0 0
        %1830 = vmatpush1.bf16.xpose.msra.mxu0 0
        %1831 = vmatprep.subr.bf16.mxu0 0
        %1832 = vmatpush1.bf16.xpose.msra.mxu0 0
        %1833 = vmatprep.mubr.bf16.mxu0 0
        %1834 = vmatmul.mubr.bf16.gmra.mrb[0].mxu0 %v1796
        %v1835 = vpop.f32.mrb[0].mxu0
        %v1836 = vadd.f32 0.0, %v1835
        %v1837 = vpop.f32.mrb[0].mxu0
        %v1838 = vpop.f32.mrb[0].mxu0
        %v1839 = vadd.f32 0.0, %v1838
        %v1840 = vpop.f32.mrb[0].mxu0
        %1841 = vdwg.mxu0
        %v1843 = vsel %vm1136, %v943, 0
        %v1846 = vsel %vm1136, %v1039, 0
        %1848 = vmatprep.subr.bf16.mxu0 0
        %1849 = vmatpush1.bf16.xpose.msra.mxu0 %v1846
        %1850 = vmatprep.subr.bf16.mxu0 0
        %1851 = vmatpush1.bf16.xpose.msra.mxu0 0
        %1852 = vmatprep.subr.bf16.mxu0 0
        %1853 = vmatpush1.bf16.xpose.msra.mxu0 0
        %1854 = vmatprep.subr.bf16.mxu0 0
        %1855 = vmatpush1.bf16.xpose.msra.mxu0 0
        %1856 = vmatprep.subr.bf16.mxu0 0
        %1857 = vmatpush1.bf16.xpose.msra.mxu0 0
        %1858 = vmatprep.subr.bf16.mxu0 0
        %1859 = vmatpush1.bf16.xpose.msra.mxu0 0
        %1860 = vmatprep.subr.bf16.mxu0 0
        %1861 = vmatpush1.bf16.xpose.msra.mxu0 0
        %1862 = vmatprep.subr.bf16.mxu0 0
        %1863 = vmatpush1.bf16.xpose.msra.mxu0 0
        %1864 = vmatprep.subr.bf16.mxu0 0
        %1865 = vmatpush1.bf16.xpose.msra.mxu0 0
        %1866 = vmatprep.subr.bf16.mxu0 0
        %1867 = vmatpush1.bf16.xpose.msra.mxu0 0
        %1868 = vmatprep.subr.bf16.mxu0 0
        %1869 = vmatpush1.bf16.xpose.msra.mxu0 0
        %1870 = vmatprep.subr.bf16.mxu0 0
        %1871 = vmatpush1.bf16.xpose.msra.mxu0 0
        %1872 = vmatprep.subr.bf16.mxu0 0
        %1873 = vmatpush1.bf16.xpose.msra.mxu0 0
        %1874 = vmatprep.subr.bf16.mxu0 0
        %1875 = vmatpush1.bf16.xpose.msra.mxu0 0
        %1876 = vmatprep.subr.bf16.mxu0 0
        %1877 = vmatpush1.bf16.xpose.msra.mxu0 0
        %1878 = vmatprep.subr.bf16.mxu0 0
        %1879 = vmatpush1.bf16.xpose.msra.mxu0 0
        %1880 = vmatprep.mubr.bf16.mxu0 0
        %1881 = vmatmul.mubr.bf16.gmra.mrb[0].mxu0 %v1843
        %v1882 = vpop.f32.mrb[0].mxu0
        %v1883 = vadd.f32 0.0, %v1882
        %v1884 = vpop.f32.mrb[0].mxu0
        %v1885 = vpop.f32.mrb[0].mxu0
        %v1886 = vadd.f32 0.0, %v1885
        %v1887 = vpop.f32.mrb[0].mxu0
        %1888 = vdwg.mxu0
        %vm1889 = vcmask 130048
        %v1890 = vsel %vm1889, %v1178, -inf
        %1891 = vmax.xlane.f32.xlu0 %v1890
        %v1892 = vpop.xlane.xlu0 %1891
        %v1893 = vsel %vm1889, %v1181, -inf
        %1894 = vmax.xlane.f32.xlu0 %v1893
        %v1895 = vpop.xlane.xlu0 %1894
        %v1896 = vsel %vm1889, %v1225, -inf
        %1897 = vmax.xlane.f32.xlu0 %v1896
        %v1898 = vpop.xlane.xlu0 %1897
        %v1899 = vsel %vm1889, %v1228, -inf
        %1900 = vmax.xlane.f32.xlu0 %v1899
        %v1901 = vpop.xlane.xlu0 %1900
        %v1902 = vsel %vm1889, %v1272, -inf
        %1903 = vmax.xlane.f32.xlu0 %v1902
        %v1904 = vpop.xlane.xlu0 %1903
        %v1905 = vsel %vm1889, %v1275, -inf
        %1906 = vmax.xlane.f32.xlu0 %v1905
        %v1907 = vpop.xlane.xlu0 %1906
        %v1908 = vsel %vm1889, %v1319, -inf
        %1909 = vmax.xlane.f32.xlu0 %v1908
        %v1910 = vpop.xlane.xlu0 %1909
        %v1911 = vsel %vm1889, %v1322, -inf
        %1912 = vmax.xlane.f32.xlu0 %v1911
        %v1913 = vpop.xlane.xlu0 %1912
        %v1914 = vsel %vm1889, %v1366, -inf
        %1915 = vmax.xlane.f32.xlu0 %v1914
        %v1916 = vpop.xlane.xlu0 %1915
        %v1917 = vsel %vm1889, %v1369, -inf
        %1918 = vmax.xlane.f32.xlu0 %v1917
        %v1919 = vpop.xlane.xlu0 %1918
        %v1920 = vsel %vm1889, %v1413, -inf
        %1921 = vmax.xlane.f32.xlu0 %v1920
        %v1922 = vpop.xlane.xlu0 %1921
        %v1923 = vsel %vm1889, %v1416, -inf
        %1924 = vmax.xlane.f32.xlu0 %v1923
        %v1925 = vpop.xlane.xlu0 %1924
        %v1926 = vsel %vm1889, %v1460, -inf
        %1927 = vmax.xlane.f32.xlu0 %v1926
        %v1928 = vpop.xlane.xlu0 %1927
        %v1929 = vsel %vm1889, %v1463, -inf
        %1930 = vmax.xlane.f32.xlu0 %v1929
        %v1931 = vpop.xlane.xlu0 %1930
        %v1932 = vsel %vm1889, %v1507, -inf
        %1933 = vmax.xlane.f32.xlu0 %v1932
        %v1934 = vpop.xlane.xlu0 %1933
        %v1935 = vsel %vm1889, %v1510, -inf
        %1936 = vmax.xlane.f32.xlu0 %v1935
        %v1937 = vpop.xlane.xlu0 %1936
        %v1938 = vsel %vm1889, %v1554, -inf
        %1939 = vmax.xlane.f32.xlu0 %v1938
        %v1940 = vpop.xlane.xlu0 %1939
        %v1941 = vsel %vm1889, %v1557, -inf
        %1942 = vmax.xlane.f32.xlu0 %v1941
        %v1943 = vpop.xlane.xlu0 %1942
        %v1944 = vsel %vm1889, %v1601, -inf
        %1945 = vmax.xlane.f32.xlu0 %v1944
        %v1946 = vpop.xlane.xlu0 %1945
        %v1947 = vsel %vm1889, %v1604, -inf
        %1948 = vmax.xlane.f32.xlu0 %v1947
        %v1949 = vpop.xlane.xlu0 %1948
        %v1950 = vsel %vm1889, %v1648, -inf
        %1951 = vmax.xlane.f32.xlu0 %v1950
        %v1952 = vpop.xlane.xlu0 %1951
        %v1953 = vsel %vm1889, %v1651, -inf
        %1954 = vmax.xlane.f32.xlu0 %v1953
        %v1955 = vpop.xlane.xlu0 %1954
        %v1956 = vsel %vm1889, %v1695, -inf
        %1957 = vmax.xlane.f32.xlu0 %v1956
        %v1958 = vpop.xlane.xlu0 %1957
        %v1959 = vsel %vm1889, %v1698, -inf
        %1960 = vmax.xlane.f32.xlu0 %v1959
        %v1961 = vpop.xlane.xlu0 %1960
        %v1962 = vsel %vm1889, %v1742, -inf
        %1963 = vmax.xlane.f32.xlu0 %v1962
        %v1964 = vpop.xlane.xlu0 %1963
        %v1965 = vsel %vm1889, %v1745, -inf
        %1966 = vmax.xlane.f32.xlu0 %v1965
        %v1967 = vpop.xlane.xlu0 %1966
        %v1968 = vsel %vm1889, %v1789, -inf
        %1969 = vmax.xlane.f32.xlu0 %v1968
        %v1970 = vpop.xlane.xlu0 %1969
        %v1971 = vsel %vm1889, %v1792, -inf
        %1972 = vmax.xlane.f32.xlu0 %v1971
        %v1973 = vpop.xlane.xlu0 %1972
        %v1974 = vsel %vm1889, %v1836, -inf
        %1975 = vmax.xlane.f32.xlu0 %v1974
        %v1976 = vpop.xlane.xlu0 %1975
        %v1977 = vsel %vm1889, %v1839, -inf
        %1978 = vmax.xlane.f32.xlu0 %v1977
        %v1979 = vpop.xlane.xlu0 %1978
        %v1980 = vsel %vm1889, %v1883, -inf
        %1981 = vmax.xlane.f32.xlu0 %v1980
        %v1982 = vpop.xlane.xlu0 %1981
        %v1983 = vsel %vm1889, %v1886, -inf
        %1984 = vmax.xlane.f32.xlu0 %v1983
        %v1985 = vpop.xlane.xlu0 %1984
        %v1986 = vsub.f32 %v1178, %v1892
        %v1987 = vsub.f32 %v1181, %v1895
        %v1988 = vsub.f32 %v1225, %v1898
        %v1989 = vsub.f32 %v1228, %v1901
        %v1990 = vsub.f32 %v1272, %v1904
        %v1991 = vsub.f32 %v1275, %v1907
        %v1992 = vsub.f32 %v1319, %v1910
        %v1993 = vsub.f32 %v1322, %v1913
        %v1994 = vsub.f32 %v1366, %v1916
        %v1995 = vsub.f32 %v1369, %v1919
        %v1996 = vsub.f32 %v1413, %v1922
        %v1997 = vsub.f32 %v1416, %v1925
        %v1998 = vsub.f32 %v1460, %v1928
        %v1999 = vsub.f32 %v1463, %v1931
        %v2000 = vsub.f32 %v1507, %v1934
        %v2001 = vsub.f32 %v1510, %v1937
        %v2002 = vsub.f32 %v1554, %v1940
        %v2003 = vsub.f32 %v1557, %v1943
        %v2004 = vsub.f32 %v1601, %v1946
        %v2005 = vsub.f32 %v1604, %v1949
        %v2006 = vsub.f32 %v1648, %v1952
        %v2007 = vsub.f32 %v1651, %v1955
        %v2008 = vsub.f32 %v1695, %v1958
        %v2009 = vsub.f32 %v1698, %v1961
        %v2010 = vsub.f32 %v1742, %v1964
        %v2011 = vsub.f32 %v1745, %v1967
        %v2012 = vsub.f32 %v1789, %v1970
        %v2013 = vsub.f32 %v1792, %v1973
        %v2014 = vsub.f32 %v1836, %v1976
        %v2015 = vsub.f32 %v1839, %v1979
        %v2016 = vsub.f32 %v1883, %v1982
        %v2017 = vsub.f32 %v1886, %v1985
        %v2018 = vmul.f32 %v1986, 1.442695
        %v2019 = vpow.pop %v2018
        %v2020 = vmul.f32 %v1987, 1.442695
        %v2021 = vpow.pop %v2020
        %v2022 = vmul.f32 %v1988, 1.442695
        %v2023 = vpow.pop %v2022
        %v2024 = vmul.f32 %v1989, 1.442695
        %v2025 = vpow.pop %v2024
        %v2026 = vmul.f32 %v1990, 1.442695
        %v2027 = vpow.pop %v2026
        %v2028 = vmul.f32 %v1991, 1.442695
        %v2029 = vpow.pop %v2028
        %v2030 = vmul.f32 %v1992, 1.442695
        %v2031 = vpow.pop %v2030
        %v2032 = vmul.f32 %v1993, 1.442695
        %v2033 = vpow.pop %v2032
        %v2034 = vmul.f32 %v1994, 1.442695
        %v2035 = vpow.pop %v2034
        %v2036 = vmul.f32 %v1995, 1.442695
        %v2037 = vpow.pop %v2036
        %v2038 = vmul.f32 %v1996, 1.442695
        %v2039 = vpow.pop %v2038
        %v2040 = vmul.f32 %v1997, 1.442695
        %v2041 = vpow.pop %v2040
        %v2042 = vmul.f32 %v1998, 1.442695
        %v2043 = vpow.pop %v2042
        %v2044 = vmul.f32 %v1999, 1.442695
        %v2045 = vpow.pop %v2044
        %v2046 = vmul.f32 %v2000, 1.442695
        %v2047 = vpow.pop %v2046
        %v2048 = vmul.f32 %v2001, 1.442695
        %v2049 = vpow.pop %v2048
        %v2050 = vmul.f32 %v2002, 1.442695
        %v2051 = vpow.pop %v2050
        %v2052 = vmul.f32 %v2003, 1.442695
        %v2053 = vpow.pop %v2052
        %v2054 = vmul.f32 %v2004, 1.442695
        %v2055 = vpow.pop %v2054
        %v2056 = vmul.f32 %v2005, 1.442695
        %v2057 = vpow.pop %v2056
        %v2058 = vmul.f32 %v2006, 1.442695
        %v2059 = vpow.pop %v2058
        %v2060 = vmul.f32 %v2007, 1.442695
        %v2061 = vpow.pop %v2060
        %v2062 = vmul.f32 %v2008, 1.442695
        %v2063 = vpow.pop %v2062
        %v2064 = vmul.f32 %v2009, 1.442695
        %v2065 = vpow.pop %v2064
        %v2066 = vmul.f32 %v2010, 1.442695
        %v2067 = vpow.pop %v2066
        %v2068 = vmul.f32 %v2011, 1.442695
        %v2069 = vpow.pop %v2068
        %v2070 = vmul.f32 %v2012, 1.442695
        %v2071 = vpow.pop %v2070
        %v2072 = vmul.f32 %v2013, 1.442695
        %v2073 = vpow.pop %v2072
        %v2074 = vmul.f32 %v2014, 1.442695
        %v2075 = vpow.pop %v2074
        %v2076 = vmul.f32 %v2015, 1.442695
        %v2077 = vpow.pop %v2076
        %v2078 = vmul.f32 %v2016, 1.442695
        %v2079 = vpow.pop %v2078
        %v2080 = vmul.f32 %v2017, 1.442695
        %v2081 = vpow.pop %v2080
        %v2082 = vsel %vm1889, %v2019, 0.0
        %2083 = vadd.xlane.f32.xlu0 %v2082
        %v2084 = vpop.xlane.xlu0 %2083
        %v2085 = vsel %vm1889, %v2021, 0.0
        %2086 = vadd.xlane.f32.xlu0 %v2085
        %v2087 = vpop.xlane.xlu0 %2086
        %v2088 = vsel %vm1889, %v2023, 0.0
        %2089 = vadd.xlane.f32.xlu0 %v2088
        %v2090 = vpop.xlane.xlu0 %2089
        %v2091 = vsel %vm1889, %v2025, 0.0
        %2092 = vadd.xlane.f32.xlu0 %v2091
        %v2093 = vpop.xlane.xlu0 %2092
        %v2094 = vsel %vm1889, %v2027, 0.0
        %2095 = vadd.xlane.f32.xlu0 %v2094
        %v2096 = vpop.xlane.xlu0 %2095
        %v2097 = vsel %vm1889, %v2029, 0.0
        %2098 = vadd.xlane.f32.xlu0 %v2097
        %v2099 = vpop.xlane.xlu0 %2098
        %v2100 = vsel %vm1889, %v2031, 0.0
        %2101 = vadd.xlane.f32.xlu0 %v2100
        %v2102 = vpop.xlane.xlu0 %2101
        %v2103 = vsel %vm1889, %v2033, 0.0
        %2104 = vadd.xlane.f32.xlu0 %v2103
        %v2105 = vpop.xlane.xlu0 %2104
        %v2106 = vsel %vm1889, %v2035, 0.0
        %2107 = vadd.xlane.f32.xlu0 %v2106
        %v2108 = vpop.xlane.xlu0 %2107
        %v2109 = vsel %vm1889, %v2037, 0.0
        %2110 = vadd.xlane.f32.xlu0 %v2109
        %v2111 = vpop.xlane.xlu0 %2110
        %v2112 = vsel %vm1889, %v2039, 0.0
        %2113 = vadd.xlane.f32.xlu0 %v2112
        %v2114 = vpop.xlane.xlu0 %2113
        %v2115 = vsel %vm1889, %v2041, 0.0
        %2116 = vadd.xlane.f32.xlu0 %v2115
        %v2117 = vpop.xlane.xlu0 %2116
        %v2118 = vsel %vm1889, %v2043, 0.0
        %2119 = vadd.xlane.f32.xlu0 %v2118
        %v2120 = vpop.xlane.xlu0 %2119
        %v2121 = vsel %vm1889, %v2045, 0.0
        %2122 = vadd.xlane.f32.xlu0 %v2121
        %v2123 = vpop.xlane.xlu0 %2122
        %v2124 = vsel %vm1889, %v2047, 0.0
        %2125 = vadd.xlane.f32.xlu0 %v2124
        %v2126 = vpop.xlane.xlu0 %2125
        %v2127 = vsel %vm1889, %v2049, 0.0
        %2128 = vadd.xlane.f32.xlu0 %v2127
        %v2129 = vpop.xlane.xlu0 %2128
        %v2130 = vsel %vm1889, %v2051, 0.0
        %2131 = vadd.xlane.f32.xlu0 %v2130
        %v2132 = vpop.xlane.xlu0 %2131
        %v2133 = vsel %vm1889, %v2053, 0.0
        %2134 = vadd.xlane.f32.xlu0 %v2133
        %v2135 = vpop.xlane.xlu0 %2134
        %v2136 = vsel %vm1889, %v2055, 0.0
        %2137 = vadd.xlane.f32.xlu0 %v2136
        %v2138 = vpop.xlane.xlu0 %2137
        %v2139 = vsel %vm1889, %v2057, 0.0
        %2140 = vadd.xlane.f32.xlu0 %v2139
        %v2141 = vpop.xlane.xlu0 %2140
        %v2142 = vsel %vm1889, %v2059, 0.0
        %2143 = vadd.xlane.f32.xlu0 %v2142
        %v2144 = vpop.xlane.xlu0 %2143
        %v2145 = vsel %vm1889, %v2061, 0.0
        %2146 = vadd.xlane.f32.xlu0 %v2145
        %v2147 = vpop.xlane.xlu0 %2146
        %v2148 = vsel %vm1889, %v2063, 0.0
        %2149 = vadd.xlane.f32.xlu0 %v2148
        %v2150 = vpop.xlane.xlu0 %2149
        %v2151 = vsel %vm1889, %v2065, 0.0
        %2152 = vadd.xlane.f32.xlu0 %v2151
        %v2153 = vpop.xlane.xlu0 %2152
        %v2154 = vsel %vm1889, %v2067, 0.0
        %2155 = vadd.xlane.f32.xlu0 %v2154
        %v2156 = vpop.xlane.xlu0 %2155
        %v2157 = vsel %vm1889, %v2069, 0.0
        %2158 = vadd.xlane.f32.xlu0 %v2157
        %v2159 = vpop.xlane.xlu0 %2158
        %v2160 = vsel %vm1889, %v2071, 0.0
        %2161 = vadd.xlane.f32.xlu0 %v2160
        %v2162 = vpop.xlane.xlu0 %2161
        %v2163 = vsel %vm1889, %v2073, 0.0
        %2164 = vadd.xlane.f32.xlu0 %v2163
        %v2165 = vpop.xlane.xlu0 %2164
        %v2166 = vsel %vm1889, %v2075, 0.0
        %2167 = vadd.xlane.f32.xlu0 %v2166
        %v2168 = vpop.xlane.xlu0 %2167
        %v2169 = vsel %vm1889, %v2077, 0.0
        %2170 = vadd.xlane.f32.xlu0 %v2169
        %v2171 = vpop.xlane.xlu0 %2170
        %v2172 = vsel %vm1889, %v2079, 0.0
        %2173 = vadd.xlane.f32.xlu0 %v2172
        %v2174 = vpop.xlane.xlu0 %2173
        %v2175 = vsel %vm1889, %v2081, 0.0
        %2176 = vadd.xlane.f32.xlu0 %v2175
        %v2177 = vpop.xlane.xlu0 %2176
        %v2178 = vrcp.pop %v2084
        %v2179 = vrcp.pop %v2087
        %v2180 = vrcp.pop %v2090
        %v2181 = vrcp.pop %v2093
        %v2182 = vrcp.pop %v2096
        %v2183 = vrcp.pop %v2099
        %v2184 = vrcp.pop %v2102
        %v2185 = vrcp.pop %v2105
        %v2186 = vrcp.pop %v2108
        %v2187 = vrcp.pop %v2111
        %v2188 = vrcp.pop %v2114
        %v2189 = vrcp.pop %v2117
        %v2190 = vrcp.pop %v2120
        %v2191 = vrcp.pop %v2123
        %v2192 = vrcp.pop %v2126
        %v2193 = vrcp.pop %v2129
        %v2194 = vrcp.pop %v2132
        %v2195 = vrcp.pop %v2135
        %v2196 = vrcp.pop %v2138
        %v2197 = vrcp.pop %v2141
        %v2198 = vrcp.pop %v2144
        %v2199 = vrcp.pop %v2147
        %v2200 = vrcp.pop %v2150
        %v2201 = vrcp.pop %v2153
        %v2202 = vrcp.pop %v2156
        %v2203 = vrcp.pop %v2159
        %v2204 = vrcp.pop %v2162
        %v2205 = vrcp.pop %v2165
        %v2206 = vrcp.pop %v2168
        %v2207 = vrcp.pop %v2171
        %v2208 = vrcp.pop %v2174
        %v2209 = vrcp.pop %v2177
        %v2210 = vmul.f32 %v2019, %v2178
        %v2211 = vmul.f32 %v2021, %v2179
        %v2212 = vmul.f32 %v2023, %v2180
        %v2213 = vmul.f32 %v2025, %v2181
        %v2214 = vmul.f32 %v2027, %v2182
        %v2215 = vmul.f32 %v2029, %v2183
        %v2216 = vmul.f32 %v2031, %v2184
        %v2217 = vmul.f32 %v2033, %v2185
        %v2218 = vmul.f32 %v2035, %v2186
        %v2219 = vmul.f32 %v2037, %v2187
        %v2220 = vmul.f32 %v2039, %v2188
        %v2221 = vmul.f32 %v2041, %v2189
        %v2222 = vmul.f32 %v2043, %v2190
        %v2223 = vmul.f32 %v2045, %v2191
        %v2224 = vmul.f32 %v2047, %v2192
        %v2225 = vmul.f32 %v2049, %v2193
        %v2226 = vmul.f32 %v2051, %v2194
        %v2227 = vmul.f32 %v2053, %v2195
        %v2228 = vmul.f32 %v2055, %v2196
        %v2229 = vmul.f32 %v2057, %v2197
        %v2230 = vmul.f32 %v2059, %v2198
        %v2231 = vmul.f32 %v2061, %v2199
        %v2232 = vmul.f32 %v2063, %v2200
        %v2233 = vmul.f32 %v2065, %v2201
        %v2234 = vmul.f32 %v2067, %v2202
        %v2235 = vmul.f32 %v2069, %v2203
        %v2236 = vmul.f32 %v2071, %v2204
        %v2237 = vmul.f32 %v2073, %v2205
        %v2238 = vmul.f32 %v2075, %v2206
        %v2239 = vmul.f32 %v2077, %v2207
        %v2240 = vmul.f32 %v2079, %v2208
        %v2241 = vmul.f32 %v2081, %v2209
        %v2242 = vpack.c.bf16 %v2211, %v2210
        %v2243 = vpack.c.bf16 %v2213, %v2212
        %v2244 = vpack.c.bf16 %v2215, %v2214
        %v2245 = vpack.c.bf16 %v2217, %v2216
        %v2246 = vpack.c.bf16 %v2219, %v2218
        %v2247 = vpack.c.bf16 %v2221, %v2220
        %v2248 = vpack.c.bf16 %v2223, %v2222
        %v2249 = vpack.c.bf16 %v2225, %v2224
        %v2250 = vpack.c.bf16 %v2227, %v2226
        %v2251 = vpack.c.bf16 %v2229, %v2228
        %v2252 = vpack.c.bf16 %v2231, %v2230
        %v2253 = vpack.c.bf16 %v2233, %v2232
        %v2254 = vpack.c.bf16 %v2235, %v2234
        %v2255 = vpack.c.bf16 %v2237, %v2236
        %v2256 = vpack.c.bf16 %v2239, %v2238
        %v2257 = vpack.c.bf16 %v2241, %v2240
        %v2259 = vsel %vm1889, %v2242, 0
        %2261 = vmatprep.subr.bf16.mxu0 0
        %2262 = vmatpush1.bf16.msra.mxu0 %v1120
        %2263 = vmatprep.subr.bf16.mxu0 0
        %2264 = vmatpush1.bf16.msra.mxu0 0
        %2265 = vmatprep.subr.bf16.mxu0 0
        %2266 = vmatpush1.bf16.msra.mxu0 0
        %2267 = vmatprep.subr.bf16.mxu0 0
        %2268 = vmatpush1.bf16.msra.mxu0 0
        %2269 = vmatprep.subr.bf16.mxu0 0
        %2270 = vmatpush1.bf16.msra.mxu0 0
        %2271 = vmatprep.subr.bf16.mxu0 0
        %2272 = vmatpush1.bf16.msra.mxu0 0
        %2273 = vmatprep.subr.bf16.mxu0 0
        %2274 = vmatpush1.bf16.msra.mxu0 0
        %2275 = vmatprep.subr.bf16.mxu0 0
        %2276 = vmatpush1.bf16.msra.mxu0 0
        %2277 = vmatprep.subr.bf16.mxu0 0
        %2278 = vmatpush1.bf16.msra.mxu0 0
        %2279 = vmatprep.subr.bf16.mxu0 0
        %2280 = vmatpush1.bf16.msra.mxu0 0
        %2281 = vmatprep.subr.bf16.mxu0 0
        %2282 = vmatpush1.bf16.msra.mxu0 0
        %2283 = vmatprep.subr.bf16.mxu0 0
        %2284 = vmatpush1.bf16.msra.mxu0 0
        %2285 = vmatprep.subr.bf16.mxu0 0
        %2286 = vmatpush1.bf16.msra.mxu0 0
        %2287 = vmatprep.subr.bf16.mxu0 0
        %2288 = vmatpush1.bf16.msra.mxu0 0
        %2289 = vmatprep.subr.bf16.mxu0 0
        %2290 = vmatpush1.bf16.msra.mxu0 0
        %2291 = vmatprep.subr.bf16.mxu0 0
        %2292 = vmatpush1.bf16.msra.mxu0 0
        %2293 = vmatprep.mubr.bf16.mxu0 0
        %2294 = vmatmul.mubr.bf16.gmra.mrb[0].mxu0 %v2259
        %v2295 = vpop.f32.mrb[0].mxu0
        %v2296 = vadd.f32 0.0, %v2295
        %v2297 = vpop.f32.mrb[0].mxu0
        %v2298 = vpop.f32.mrb[0].mxu0
        %v2299 = vadd.f32 0.0, %v2298
        %v2300 = vpop.f32.mrb[0].mxu0
        %2301 = vdwg.mxu0
        %v2303 = vsel %vm1889, %v2243, 0
        %2305 = vmatprep.subr.bf16.mxu0 0
        %2306 = vmatpush1.bf16.msra.mxu0 %v1121
        %2307 = vmatprep.subr.bf16.mxu0 0
        %2308 = vmatpush1.bf16.msra.mxu0 0
        %2309 = vmatprep.subr.bf16.mxu0 0
        %2310 = vmatpush1.bf16.msra.mxu0 0
        %2311 = vmatprep.subr.bf16.mxu0 0
        %2312 = vmatpush1.bf16.msra.mxu0 0
        %2313 = vmatprep.subr.bf16.mxu0 0
        %2314 = vmatpush1.bf16.msra.mxu0 0
        %2315 = vmatprep.subr.bf16.mxu0 0
        %2316 = vmatpush1.bf16.msra.mxu0 0
        %2317 = vmatprep.subr.bf16.mxu0 0
        %2318 = vmatpush1.bf16.msra.mxu0 0
        %2319 = vmatprep.subr.bf16.mxu0 0
        %2320 = vmatpush1.bf16.msra.mxu0 0
        %2321 = vmatprep.subr.bf16.mxu0 0
        %2322 = vmatpush1.bf16.msra.mxu0 0
        %2323 = vmatprep.subr.bf16.mxu0 0
        %2324 = vmatpush1.bf16.msra.mxu0 0
        %2325 = vmatprep.subr.bf16.mxu0 0
        %2326 = vmatpush1.bf16.msra.mxu0 0
        %2327 = vmatprep.subr.bf16.mxu0 0
        %2328 = vmatpush1.bf16.msra.mxu0 0
        %2329 = vmatprep.subr.bf16.mxu0 0
        %2330 = vmatpush1.bf16.msra.mxu0 0
        %2331 = vmatprep.subr.bf16.mxu0 0
        %2332 = vmatpush1.bf16.msra.mxu0 0
        %2333 = vmatprep.subr.bf16.mxu0 0
        %2334 = vmatpush1.bf16.msra.mxu0 0
        %2335 = vmatprep.subr.bf16.mxu0 0
        %2336 = vmatpush1.bf16.msra.mxu0 0
        %2337 = vmatprep.mubr.bf16.mxu0 0
        %2338 = vmatmul.mubr.bf16.gmra.mrb[0].mxu0 %v2303
        %v2339 = vpop.f32.mrb[0].mxu0
        %v2340 = vadd.f32 0.0, %v2339
        %v2341 = vpop.f32.mrb[0].mxu0
        %v2342 = vpop.f32.mrb[0].mxu0
        %v2343 = vadd.f32 0.0, %v2342
        %v2344 = vpop.f32.mrb[0].mxu0
        %2345 = vdwg.mxu0
        %v2347 = vsel %vm1889, %v2244, 0
        %2349 = vmatprep.subr.bf16.mxu0 0
        %2350 = vmatpush1.bf16.msra.mxu0 %v1122
        %2351 = vmatprep.subr.bf16.mxu0 0
        %2352 = vmatpush1.bf16.msra.mxu0 0
        %2353 = vmatprep.subr.bf16.mxu0 0
        %2354 = vmatpush1.bf16.msra.mxu0 0
        %2355 = vmatprep.subr.bf16.mxu0 0
        %2356 = vmatpush1.bf16.msra.mxu0 0
        %2357 = vmatprep.subr.bf16.mxu0 0
        %2358 = vmatpush1.bf16.msra.mxu0 0
        %2359 = vmatprep.subr.bf16.mxu0 0
        %2360 = vmatpush1.bf16.msra.mxu0 0
        %2361 = vmatprep.subr.bf16.mxu0 0
        %2362 = vmatpush1.bf16.msra.mxu0 0
        %2363 = vmatprep.subr.bf16.mxu0 0
        %2364 = vmatpush1.bf16.msra.mxu0 0
        %2365 = vmatprep.subr.bf16.mxu0 0
        %2366 = vmatpush1.bf16.msra.mxu0 0
        %2367 = vmatprep.subr.bf16.mxu0 0
        %2368 = vmatpush1.bf16.msra.mxu0 0
        %2369 = vmatprep.subr.bf16.mxu0 0
        %2370 = vmatpush1.bf16.msra.mxu0 0
        %2371 = vmatprep.subr.bf16.mxu0 0
        %2372 = vmatpush1.bf16.msra.mxu0 0
        %2373 = vmatprep.subr.bf16.mxu0 0
        %2374 = vmatpush1.bf16.msra.mxu0 0
        %2375 = vmatprep.subr.bf16.mxu0 0
        %2376 = vmatpush1.bf16.msra.mxu0 0
        %2377 = vmatprep.subr.bf16.mxu0 0
        %2378 = vmatpush1.bf16.msra.mxu0 0
        %2379 = vmatprep.subr.bf16.mxu0 0
        %2380 = vmatpush1.bf16.msra.mxu0 0
        %2381 = vmatprep.mubr.bf16.mxu0 0
        %2382 = vmatmul.mubr.bf16.gmra.mrb[0].mxu0 %v2347
        %v2383 = vpop.f32.mrb[0].mxu0
        %v2384 = vadd.f32 0.0, %v2383
        %v2385 = vpop.f32.mrb[0].mxu0
        %v2386 = vpop.f32.mrb[0].mxu0
        %v2387 = vadd.f32 0.0, %v2386
        %v2388 = vpop.f32.mrb[0].mxu0
        %2389 = vdwg.mxu0
        %v2391 = vsel %vm1889, %v2245, 0
        %2393 = vmatprep.subr.bf16.mxu0 0
        %2394 = vmatpush1.bf16.msra.mxu0 %v1123
        %2395 = vmatprep.subr.bf16.mxu0 0
        %2396 = vmatpush1.bf16.msra.mxu0 0
        %2397 = vmatprep.subr.bf16.mxu0 0
        %2398 = vmatpush1.bf16.msra.mxu0 0
        %2399 = vmatprep.subr.bf16.mxu0 0
        %2400 = vmatpush1.bf16.msra.mxu0 0
        %2401 = vmatprep.subr.bf16.mxu0 0
        %2402 = vmatpush1.bf16.msra.mxu0 0
        %2403 = vmatprep.subr.bf16.mxu0 0
        %2404 = vmatpush1.bf16.msra.mxu0 0
        %2405 = vmatprep.subr.bf16.mxu0 0
        %2406 = vmatpush1.bf16.msra.mxu0 0
        %2407 = vmatprep.subr.bf16.mxu0 0
        %2408 = vmatpush1.bf16.msra.mxu0 0
        %2409 = vmatprep.subr.bf16.mxu0 0
        %2410 = vmatpush1.bf16.msra.mxu0 0
        %2411 = vmatprep.subr.bf16.mxu0 0
        %2412 = vmatpush1.bf16.msra.mxu0 0
        %2413 = vmatprep.subr.bf16.mxu0 0
        %2414 = vmatpush1.bf16.msra.mxu0 0
        %2415 = vmatprep.subr.bf16.mxu0 0
        %2416 = vmatpush1.bf16.msra.mxu0 0
        %2417 = vmatprep.subr.bf16.mxu0 0
        %2418 = vmatpush1.bf16.msra.mxu0 0
        %2419 = vmatprep.subr.bf16.mxu0 0
        %2420 = vmatpush1.bf16.msra.mxu0 0
        %2421 = vmatprep.subr.bf16.mxu0 0
        %2422 = vmatpush1.bf16.msra.mxu0 0
        %2423 = vmatprep.subr.bf16.mxu0 0
        %2424 = vmatpush1.bf16.msra.mxu0 0
        %2425 = vmatprep.mubr.bf16.mxu0 0
        %2426 = vmatmul.mubr.bf16.gmra.mrb[0].mxu0 %v2391
        %v2427 = vpop.f32.mrb[0].mxu0
        %v2428 = vadd.f32 0.0, %v2427
        %v2429 = vpop.f32.mrb[0].mxu0
        %v2430 = vpop.f32.mrb[0].mxu0
        %v2431 = vadd.f32 0.0, %v2430
        %v2432 = vpop.f32.mrb[0].mxu0
        %2433 = vdwg.mxu0
        %v2435 = vsel %vm1889, %v2246, 0
        %2437 = vmatprep.subr.bf16.mxu0 0
        %2438 = vmatpush1.bf16.msra.mxu0 %v1124
        %2439 = vmatprep.subr.bf16.mxu0 0
        %2440 = vmatpush1.bf16.msra.mxu0 0
        %2441 = vmatprep.subr.bf16.mxu0 0
        %2442 = vmatpush1.bf16.msra.mxu0 0
        %2443 = vmatprep.subr.bf16.mxu0 0
        %2444 = vmatpush1.bf16.msra.mxu0 0
        %2445 = vmatprep.subr.bf16.mxu0 0
        %2446 = vmatpush1.bf16.msra.mxu0 0
        %2447 = vmatprep.subr.bf16.mxu0 0
        %2448 = vmatpush1.bf16.msra.mxu0 0
        %2449 = vmatprep.subr.bf16.mxu0 0
        %2450 = vmatpush1.bf16.msra.mxu0 0
        %2451 = vmatprep.subr.bf16.mxu0 0
        %2452 = vmatpush1.bf16.msra.mxu0 0
        %2453 = vmatprep.subr.bf16.mxu0 0
        %2454 = vmatpush1.bf16.msra.mxu0 0
        %2455 = vmatprep.subr.bf16.mxu0 0
        %2456 = vmatpush1.bf16.msra.mxu0 0
        %2457 = vmatprep.subr.bf16.mxu0 0
        %2458 = vmatpush1.bf16.msra.mxu0 0
        %2459 = vmatprep.subr.bf16.mxu0 0
        %2460 = vmatpush1.bf16.msra.mxu0 0
        %2461 = vmatprep.subr.bf16.mxu0 0
        %2462 = vmatpush1.bf16.msra.mxu0 0
        %2463 = vmatprep.subr.bf16.mxu0 0
        %2464 = vmatpush1.bf16.msra.mxu0 0
        %2465 = vmatprep.subr.bf16.mxu0 0
        %2466 = vmatpush1.bf16.msra.mxu0 0
        %2467 = vmatprep.subr.bf16.mxu0 0
        %2468 = vmatpush1.bf16.msra.mxu0 0
        %2469 = vmatprep.mubr.bf16.mxu0 0
        %2470 = vmatmul.mubr.bf16.gmra.mrb[0].mxu0 %v2435
        %v2471 = vpop.f32.mrb[0].mxu0
        %v2472 = vadd.f32 0.0, %v2471
        %v2473 = vpop.f32.mrb[0].mxu0
        %v2474 = vpop.f32.mrb[0].mxu0
        %v2475 = vadd.f32 0.0, %v2474
        %v2476 = vpop.f32.mrb[0].mxu0
        %2477 = vdwg.mxu0
        %v2479 = vsel %vm1889, %v2247, 0
        %2481 = vmatprep.subr.bf16.mxu0 0
        %2482 = vmatpush1.bf16.msra.mxu0 %v1125
        %2483 = vmatprep.subr.bf16.mxu0 0
        %2484 = vmatpush1.bf16.msra.mxu0 0
        %2485 = vmatprep.subr.bf16.mxu0 0
        %2486 = vmatpush1.bf16.msra.mxu0 0
        %2487 = vmatprep.subr.bf16.mxu0 0
        %2488 = vmatpush1.bf16.msra.mxu0 0
        %2489 = vmatprep.subr.bf16.mxu0 0
        %2490 = vmatpush1.bf16.msra.mxu0 0
        %2491 = vmatprep.subr.bf16.mxu0 0
        %2492 = vmatpush1.bf16.msra.mxu0 0
        %2493 = vmatprep.subr.bf16.mxu0 0
        %2494 = vmatpush1.bf16.msra.mxu0 0
        %2495 = vmatprep.subr.bf16.mxu0 0
        %2496 = vmatpush1.bf16.msra.mxu0 0
        %2497 = vmatprep.subr.bf16.mxu0 0
        %2498 = vmatpush1.bf16.msra.mxu0 0
        %2499 = vmatprep.subr.bf16.mxu0 0
        %2500 = vmatpush1.bf16.msra.mxu0 0
        %2501 = vmatprep.subr.bf16.mxu0 0
        %2502 = vmatpush1.bf16.msra.mxu0 0
        %2503 = vmatprep.subr.bf16.mxu0 0
        %2504 = vmatpush1.bf16.msra.mxu0 0
        %2505 = vmatprep.subr.bf16.mxu0 0
        %2506 = vmatpush1.bf16.msra.mxu0 0
        %2507 = vmatprep.subr.bf16.mxu0 0
        %2508 = vmatpush1.bf16.msra.mxu0 0
        %2509 = vmatprep.subr.bf16.mxu0 0
        %2510 = vmatpush1.bf16.msra.mxu0 0
        %2511 = vmatprep.subr.bf16.mxu0 0
        %2512 = vmatpush1.bf16.msra.mxu0 0
        %2513 = vmatprep.mubr.bf16.mxu0 0
        %2514 = vmatmul.mubr.bf16.gmra.mrb[0].mxu0 %v2479
        %v2515 = vpop.f32.mrb[0].mxu0
        %v2516 = vadd.f32 0.0, %v2515
        %v2517 = vpop.f32.mrb[0].mxu0
        %v2518 = vpop.f32.mrb[0].mxu0
        %v2519 = vadd.f32 0.0, %v2518
        %v2520 = vpop.f32.mrb[0].mxu0
        %2521 = vdwg.mxu0
        %v2523 = vsel %vm1889, %v2248, 0
        %2525 = vmatprep.subr.bf16.mxu0 0
        %2526 = vmatpush1.bf16.msra.mxu0 %v1126
        %2527 = vmatprep.subr.bf16.mxu0 0
        %2528 = vmatpush1.bf16.msra.mxu0 0
        %2529 = vmatprep.subr.bf16.mxu0 0
        %2530 = vmatpush1.bf16.msra.mxu0 0
        %2531 = vmatprep.subr.bf16.mxu0 0
        %2532 = vmatpush1.bf16.msra.mxu0 0
        %2533 = vmatprep.subr.bf16.mxu0 0
        %2534 = vmatpush1.bf16.msra.mxu0 0
        %2535 = vmatprep.subr.bf16.mxu0 0
        %2536 = vmatpush1.bf16.msra.mxu0 0
        %2537 = vmatprep.subr.bf16.mxu0 0
        %2538 = vmatpush1.bf16.msra.mxu0 0
        %2539 = vmatprep.subr.bf16.mxu0 0
        %2540 = vmatpush1.bf16.msra.mxu0 0
        %2541 = vmatprep.subr.bf16.mxu0 0
        %2542 = vmatpush1.bf16.msra.mxu0 0
        %2543 = vmatprep.subr.bf16.mxu0 0
        %2544 = vmatpush1.bf16.msra.mxu0 0
        %2545 = vmatprep.subr.bf16.mxu0 0
        %2546 = vmatpush1.bf16.msra.mxu0 0
        %2547 = vmatprep.subr.bf16.mxu0 0
        %2548 = vmatpush1.bf16.msra.mxu0 0
        %2549 = vmatprep.subr.bf16.mxu0 0
        %2550 = vmatpush1.bf16.msra.mxu0 0
        %2551 = vmatprep.subr.bf16.mxu0 0
        %2552 = vmatpush1.bf16.msra.mxu0 0
        %2553 = vmatprep.subr.bf16.mxu0 0
        %2554 = vmatpush1.bf16.msra.mxu0 0
        %2555 = vmatprep.subr.bf16.mxu0 0
        %2556 = vmatpush1.bf16.msra.mxu0 0
        %2557 = vmatprep.mubr.bf16.mxu0 0
        %2558 = vmatmul.mubr.bf16.gmra.mrb[0].mxu0 %v2523
        %v2559 = vpop.f32.mrb[0].mxu0
        %v2560 = vadd.f32 0.0, %v2559
        %v2561 = vpop.f32.mrb[0].mxu0
        %v2562 = vpop.f32.mrb[0].mxu0
        %v2563 = vadd.f32 0.0, %v2562
        %v2564 = vpop.f32.mrb[0].mxu0
        %2565 = vdwg.mxu0
        %v2567 = vsel %vm1889, %v2249, 0
        %2569 = vmatprep.subr.bf16.mxu0 0
        %2570 = vmatpush1.bf16.msra.mxu0 %v1127
        %2571 = vmatprep.subr.bf16.mxu0 0
        %2572 = vmatpush1.bf16.msra.mxu0 0
        %2573 = vmatprep.subr.bf16.mxu0 0
        %2574 = vmatpush1.bf16.msra.mxu0 0
        %2575 = vmatprep.subr.bf16.mxu0 0
        %2576 = vmatpush1.bf16.msra.mxu0 0
        %2577 = vmatprep.subr.bf16.mxu0 0
        %2578 = vmatpush1.bf16.msra.mxu0 0
        %2579 = vmatprep.subr.bf16.mxu0 0
        %2580 = vmatpush1.bf16.msra.mxu0 0
        %2581 = vmatprep.subr.bf16.mxu0 0
        %2582 = vmatpush1.bf16.msra.mxu0 0
        %2583 = vmatprep.subr.bf16.mxu0 0
        %2584 = vmatpush1.bf16.msra.mxu0 0
        %2585 = vmatprep.subr.bf16.mxu0 0
        %2586 = vmatpush1.bf16.msra.mxu0 0
        %2587 = vmatprep.subr.bf16.mxu0 0
        %2588 = vmatpush1.bf16.msra.mxu0 0
        %2589 = vmatprep.subr.bf16.mxu0 0
        %2590 = vmatpush1.bf16.msra.mxu0 0
        %2591 = vmatprep.subr.bf16.mxu0 0
        %2592 = vmatpush1.bf16.msra.mxu0 0
        %2593 = vmatprep.subr.bf16.mxu0 0
        %2594 = vmatpush1.bf16.msra.mxu0 0
        %2595 = vmatprep.subr.bf16.mxu0 0
        %2596 = vmatpush1.bf16.msra.mxu0 0
        %2597 = vmatprep.subr.bf16.mxu0 0
        %2598 = vmatpush1.bf16.msra.mxu0 0
        %2599 = vmatprep.subr.bf16.mxu0 0
        %2600 = vmatpush1.bf16.msra.mxu0 0
        %2601 = vmatprep.mubr.bf16.mxu0 0
        %2602 = vmatmul.mubr.bf16.gmra.mrb[0].mxu0 %v2567
        %v2603 = vpop.f32.mrb[0].mxu0
        %v2604 = vadd.f32 0.0, %v2603
        %v2605 = vpop.f32.mrb[0].mxu0
        %v2606 = vpop.f32.mrb[0].mxu0
        %v2607 = vadd.f32 0.0, %v2606
        %v2608 = vpop.f32.mrb[0].mxu0
        %2609 = vdwg.mxu0
        %v2611 = vsel %vm1889, %v2250, 0
        %2613 = vmatprep.subr.bf16.mxu0 0
        %2614 = vmatpush1.bf16.msra.mxu0 %v1128
        %2615 = vmatprep.subr.bf16.mxu0 0
        %2616 = vmatpush1.bf16.msra.mxu0 0
        %2617 = vmatprep.subr.bf16.mxu0 0
        %2618 = vmatpush1.bf16.msra.mxu0 0
        %2619 = vmatprep.subr.bf16.mxu0 0
        %2620 = vmatpush1.bf16.msra.mxu0 0
        %2621 = vmatprep.subr.bf16.mxu0 0
        %2622 = vmatpush1.bf16.msra.mxu0 0
        %2623 = vmatprep.subr.bf16.mxu0 0
        %2624 = vmatpush1.bf16.msra.mxu0 0
        %2625 = vmatprep.subr.bf16.mxu0 0
        %2626 = vmatpush1.bf16.msra.mxu0 0
        %2627 = vmatprep.subr.bf16.mxu0 0
        %2628 = vmatpush1.bf16.msra.mxu0 0
        %2629 = vmatprep.subr.bf16.mxu0 0
        %2630 = vmatpush1.bf16.msra.mxu0 0
        %2631 = vmatprep.subr.bf16.mxu0 0
        %2632 = vmatpush1.bf16.msra.mxu0 0
        %2633 = vmatprep.subr.bf16.mxu0 0
        %2634 = vmatpush1.bf16.msra.mxu0 0
        %2635 = vmatprep.subr.bf16.mxu0 0
        %2636 = vmatpush1.bf16.msra.mxu0 0
        %2637 = vmatprep.subr.bf16.mxu0 0
        %2638 = vmatpush1.bf16.msra.mxu0 0
        %2639 = vmatprep.subr.bf16.mxu0 0
        %2640 = vmatpush1.bf16.msra.mxu0 0
        %2641 = vmatprep.subr.bf16.mxu0 0
        %2642 = vmatpush1.bf16.msra.mxu0 0
        %2643 = vmatprep.subr.bf16.mxu0 0
        %2644 = vmatpush1.bf16.msra.mxu0 0
        %2645 = vmatprep.mubr.bf16.mxu0 0
        %2646 = vmatmul.mubr.bf16.gmra.mrb[0].mxu0 %v2611
        %v2647 = vpop.f32.mrb[0].mxu0
        %v2648 = vadd.f32 0.0, %v2647
        %v2649 = vpop.f32.mrb[0].mxu0
        %v2650 = vpop.f32.mrb[0].mxu0
        %v2651 = vadd.f32 0.0, %v2650
        %v2652 = vpop.f32.mrb[0].mxu0
        %2653 = vdwg.mxu0
        %v2655 = vsel %vm1889, %v2251, 0
        %2657 = vmatprep.subr.bf16.mxu0 0
        %2658 = vmatpush1.bf16.msra.mxu0 %v1129
        %2659 = vmatprep.subr.bf16.mxu0 0
        %2660 = vmatpush1.bf16.msra.mxu0 0
        %2661 = vmatprep.subr.bf16.mxu0 0
        %2662 = vmatpush1.bf16.msra.mxu0 0
        %2663 = vmatprep.subr.bf16.mxu0 0
        %2664 = vmatpush1.bf16.msra.mxu0 0
        %2665 = vmatprep.subr.bf16.mxu0 0
        %2666 = vmatpush1.bf16.msra.mxu0 0
        %2667 = vmatprep.subr.bf16.mxu0 0
        %2668 = vmatpush1.bf16.msra.mxu0 0
        %2669 = vmatprep.subr.bf16.mxu0 0
        %2670 = vmatpush1.bf16.msra.mxu0 0
        %2671 = vmatprep.subr.bf16.mxu0 0
        %2672 = vmatpush1.bf16.msra.mxu0 0
        %2673 = vmatprep.subr.bf16.mxu0 0
        %2674 = vmatpush1.bf16.msra.mxu0 0
        %2675 = vmatprep.subr.bf16.mxu0 0
        %2676 = vmatpush1.bf16.msra.mxu0 0
        %2677 = vmatprep.subr.bf16.mxu0 0
        %2678 = vmatpush1.bf16.msra.mxu0 0
        %2679 = vmatprep.subr.bf16.mxu0 0
        %2680 = vmatpush1.bf16.msra.mxu0 0
        %2681 = vmatprep.subr.bf16.mxu0 0
        %2682 = vmatpush1.bf16.msra.mxu0 0
        %2683 = vmatprep.subr.bf16.mxu0 0
        %2684 = vmatpush1.bf16.msra.mxu0 0
        %2685 = vmatprep.subr.bf16.mxu0 0
        %2686 = vmatpush1.bf16.msra.mxu0 0
        %2687 = vmatprep.subr.bf16.mxu0 0
        %2688 = vmatpush1.bf16.msra.mxu0 0
        %2689 = vmatprep.mubr.bf16.mxu0 0
        %2690 = vmatmul.mubr.bf16.gmra.mrb[0].mxu0 %v2655
        %v2691 = vpop.f32.mrb[0].mxu0
        %v2692 = vadd.f32 0.0, %v2691
        %v2693 = vpop.f32.mrb[0].mxu0
        %v2694 = vpop.f32.mrb[0].mxu0
        %v2695 = vadd.f32 0.0, %v2694
        %v2696 = vpop.f32.mrb[0].mxu0
        %2697 = vdwg.mxu0
        %v2699 = vsel %vm1889, %v2252, 0
        %2701 = vmatprep.subr.bf16.mxu0 0
        %2702 = vmatpush1.bf16.msra.mxu0 %v1130
        %2703 = vmatprep.subr.bf16.mxu0 0
        %2704 = vmatpush1.bf16.msra.mxu0 0
        %2705 = vmatprep.subr.bf16.mxu0 0
        %2706 = vmatpush1.bf16.msra.mxu0 0
        %2707 = vmatprep.subr.bf16.mxu0 0
        %2708 = vmatpush1.bf16.msra.mxu0 0
        %2709 = vmatprep.subr.bf16.mxu0 0
        %2710 = vmatpush1.bf16.msra.mxu0 0
        %2711 = vmatprep.subr.bf16.mxu0 0
        %2712 = vmatpush1.bf16.msra.mxu0 0
        %2713 = vmatprep.subr.bf16.mxu0 0
        %2714 = vmatpush1.bf16.msra.mxu0 0
        %2715 = vmatprep.subr.bf16.mxu0 0
        %2716 = vmatpush1.bf16.msra.mxu0 0
        %2717 = vmatprep.subr.bf16.mxu0 0
        %2718 = vmatpush1.bf16.msra.mxu0 0
        %2719 = vmatprep.subr.bf16.mxu0 0
        %2720 = vmatpush1.bf16.msra.mxu0 0
        %2721 = vmatprep.subr.bf16.mxu0 0
        %2722 = vmatpush1.bf16.msra.mxu0 0
        %2723 = vmatprep.subr.bf16.mxu0 0
        %2724 = vmatpush1.bf16.msra.mxu0 0
        %2725 = vmatprep.subr.bf16.mxu0 0
        %2726 = vmatpush1.bf16.msra.mxu0 0
        %2727 = vmatprep.subr.bf16.mxu0 0
        %2728 = vmatpush1.bf16.msra.mxu0 0
        %2729 = vmatprep.subr.bf16.mxu0 0
        %2730 = vmatpush1.bf16.msra.mxu0 0
        %2731 = vmatprep.subr.bf16.mxu0 0
        %2732 = vmatpush1.bf16.msra.mxu0 0
        %2733 = vmatprep.mubr.bf16.mxu0 0
        %2734 = vmatmul.mubr.bf16.gmra.mrb[0].mxu0 %v2699
        %v2735 = vpop.f32.mrb[0].mxu0
        %v2736 = vadd.f32 0.0, %v2735
        %v2737 = vpop.f32.mrb[0].mxu0
        %v2738 = vpop.f32.mrb[0].mxu0
        %v2739 = vadd.f32 0.0, %v2738
        %v2740 = vpop.f32.mrb[0].mxu0
        %2741 = vdwg.mxu0
        %v2743 = vsel %vm1889, %v2253, 0
        %2745 = vmatprep.subr.bf16.mxu0 0
        %2746 = vmatpush1.bf16.msra.mxu0 %v1131
        %2747 = vmatprep.subr.bf16.mxu0 0
        %2748 = vmatpush1.bf16.msra.mxu0 0
        %2749 = vmatprep.subr.bf16.mxu0 0
        %2750 = vmatpush1.bf16.msra.mxu0 0
        %2751 = vmatprep.subr.bf16.mxu0 0
        %2752 = vmatpush1.bf16.msra.mxu0 0
        %2753 = vmatprep.subr.bf16.mxu0 0
        %2754 = vmatpush1.bf16.msra.mxu0 0
        %2755 = vmatprep.subr.bf16.mxu0 0
        %2756 = vmatpush1.bf16.msra.mxu0 0
        %2757 = vmatprep.subr.bf16.mxu0 0
        %2758 = vmatpush1.bf16.msra.mxu0 0
        %2759 = vmatprep.subr.bf16.mxu0 0
        %2760 = vmatpush1.bf16.msra.mxu0 0
        %2761 = vmatprep.subr.bf16.mxu0 0
        %2762 = vmatpush1.bf16.msra.mxu0 0
        %2763 = vmatprep.subr.bf16.mxu0 0
        %2764 = vmatpush1.bf16.msra.mxu0 0
        %2765 = vmatprep.subr.bf16.mxu0 0
        %2766 = vmatpush1.bf16.msra.mxu0 0
        %2767 = vmatprep.subr.bf16.mxu0 0
        %2768 = vmatpush1.bf16.msra.mxu0 0
        %2769 = vmatprep.subr.bf16.mxu0 0
        %2770 = vmatpush1.bf16.msra.mxu0 0
        %2771 = vmatprep.subr.bf16.mxu0 0
        %2772 = vmatpush1.bf16.msra.mxu0 0
        %2773 = vmatprep.subr.bf16.mxu0 0
        %2774 = vmatpush1.bf16.msra.mxu0 0
        %2775 = vmatprep.subr.bf16.mxu0 0
        %2776 = vmatpush1.bf16.msra.mxu0 0
        %2777 = vmatprep.mubr.bf16.mxu0 0
        %2778 = vmatmul.mubr.bf16.gmra.mrb[0].mxu0 %v2743
        %v2779 = vpop.f32.mrb[0].mxu0
        %v2780 = vadd.f32 0.0, %v2779
        %v2781 = vpop.f32.mrb[0].mxu0
        %v2782 = vpop.f32.mrb[0].mxu0
        %v2783 = vadd.f32 0.0, %v2782
        %v2784 = vpop.f32.mrb[0].mxu0
        %2785 = vdwg.mxu0
        %v2787 = vsel %vm1889, %v2254, 0
        %2789 = vmatprep.subr.bf16.mxu0 0
        %2790 = vmatpush1.bf16.msra.mxu0 %v1132
        %2791 = vmatprep.subr.bf16.mxu0 0
        %2792 = vmatpush1.bf16.msra.mxu0 0
        %2793 = vmatprep.subr.bf16.mxu0 0
        %2794 = vmatpush1.bf16.msra.mxu0 0
        %2795 = vmatprep.subr.bf16.mxu0 0
        %2796 = vmatpush1.bf16.msra.mxu0 0
        %2797 = vmatprep.subr.bf16.mxu0 0
        %2798 = vmatpush1.bf16.msra.mxu0 0
        %2799 = vmatprep.subr.bf16.mxu0 0
        %2800 = vmatpush1.bf16.msra.mxu0 0
        %2801 = vmatprep.subr.bf16.mxu0 0
        %2802 = vmatpush1.bf16.msra.mxu0 0
        %2803 = vmatprep.subr.bf16.mxu0 0
        %2804 = vmatpush1.bf16.msra.mxu0 0
        %2805 = vmatprep.subr.bf16.mxu0 0
        %2806 = vmatpush1.bf16.msra.mxu0 0
        %2807 = vmatprep.subr.bf16.mxu0 0
        %2808 = vmatpush1.bf16.msra.mxu0 0
        %2809 = vmatprep.subr.bf16.mxu0 0
        %2810 = vmatpush1.bf16.msra.mxu0 0
        %2811 = vmatprep.subr.bf16.mxu0 0
        %2812 = vmatpush1.bf16.msra.mxu0 0
        %2813 = vmatprep.subr.bf16.mxu0 0
        %2814 = vmatpush1.bf16.msra.mxu0 0
        %2815 = vmatprep.subr.bf16.mxu0 0
        %2816 = vmatpush1.bf16.msra.mxu0 0
        %2817 = vmatprep.subr.bf16.mxu0 0
        %2818 = vmatpush1.bf16.msra.mxu0 0
        %2819 = vmatprep.subr.bf16.mxu0 0
        %2820 = vmatpush1.bf16.msra.mxu0 0
        %2821 = vmatprep.mubr.bf16.mxu0 0
        %2822 = vmatmul.mubr.bf16.gmra.mrb[0].mxu0 %v2787
        %v2823 = vpop.f32.mrb[0].mxu0
        %v2824 = vadd.f32 0.0, %v2823
        %v2825 = vpop.f32.mrb[0].mxu0
        %v2826 = vpop.f32.mrb[0].mxu0
        %v2827 = vadd.f32 0.0, %v2826
        %v2828 = vpop.f32.mrb[0].mxu0
        %2829 = vdwg.mxu0
        %v2831 = vsel %vm1889, %v2255, 0
        %2833 = vmatprep.subr.bf16.mxu0 0
        %2834 = vmatpush1.bf16.msra.mxu0 %v1133
        %2835 = vmatprep.subr.bf16.mxu0 0
        %2836 = vmatpush1.bf16.msra.mxu0 0
        %2837 = vmatprep.subr.bf16.mxu0 0
        %2838 = vmatpush1.bf16.msra.mxu0 0
        %2839 = vmatprep.subr.bf16.mxu0 0
        %2840 = vmatpush1.bf16.msra.mxu0 0
        %2841 = vmatprep.subr.bf16.mxu0 0
        %2842 = vmatpush1.bf16.msra.mxu0 0
        %2843 = vmatprep.subr.bf16.mxu0 0
        %2844 = vmatpush1.bf16.msra.mxu0 0
        %2845 = vmatprep.subr.bf16.mxu0 0
        %2846 = vmatpush1.bf16.msra.mxu0 0
        %2847 = vmatprep.subr.bf16.mxu0 0
        %2848 = vmatpush1.bf16.msra.mxu0 0
        %2849 = vmatprep.subr.bf16.mxu0 0
        %2850 = vmatpush1.bf16.msra.mxu0 0
        %2851 = vmatprep.subr.bf16.mxu0 0
        %2852 = vmatpush1.bf16.msra.mxu0 0
        %2853 = vmatprep.subr.bf16.mxu0 0
        %2854 = vmatpush1.bf16.msra.mxu0 0
        %2855 = vmatprep.subr.bf16.mxu0 0
        %2856 = vmatpush1.bf16.msra.mxu0 0
        %2857 = vmatprep.subr.bf16.mxu0 0
        %2858 = vmatpush1.bf16.msra.mxu0 0
        %2859 = vmatprep.subr.bf16.mxu0 0
        %2860 = vmatpush1.bf16.msra.mxu0 0
        %2861 = vmatprep.subr.bf16.mxu0 0
        %2862 = vmatpush1.bf16.msra.mxu0 0
        %2863 = vmatprep.subr.bf16.mxu0 0
        %2864 = vmatpush1.bf16.msra.mxu0 0
        %2865 = vmatprep.mubr.bf16.mxu0 0
        %2866 = vmatmul.mubr.bf16.gmra.mrb[0].mxu0 %v2831
        %v2867 = vpop.f32.mrb[0].mxu0
        %v2868 = vadd.f32 0.0, %v2867
        %v2869 = vpop.f32.mrb[0].mxu0
        %v2870 = vpop.f32.mrb[0].mxu0
        %v2871 = vadd.f32 0.0, %v2870
        %v2872 = vpop.f32.mrb[0].mxu0
        %2873 = vdwg.mxu0
        %v2875 = vsel %vm1889, %v2256, 0
        %2877 = vmatprep.subr.bf16.mxu0 0
        %2878 = vmatpush1.bf16.msra.mxu0 %v1134
        %2879 = vmatprep.subr.bf16.mxu0 0
        %2880 = vmatpush1.bf16.msra.mxu0 0
        %2881 = vmatprep.subr.bf16.mxu0 0
        %2882 = vmatpush1.bf16.msra.mxu0 0
        %2883 = vmatprep.subr.bf16.mxu0 0
        %2884 = vmatpush1.bf16.msra.mxu0 0
        %2885 = vmatprep.subr.bf16.mxu0 0
        %2886 = vmatpush1.bf16.msra.mxu0 0
        %2887 = vmatprep.subr.bf16.mxu0 0
        %2888 = vmatpush1.bf16.msra.mxu0 0
        %2889 = vmatprep.subr.bf16.mxu0 0
        %2890 = vmatpush1.bf16.msra.mxu0 0
        %2891 = vmatprep.subr.bf16.mxu0 0
        %2892 = vmatpush1.bf16.msra.mxu0 0
        %2893 = vmatprep.subr.bf16.mxu0 0
        %2894 = vmatpush1.bf16.msra.mxu0 0
        %2895 = vmatprep.subr.bf16.mxu0 0
        %2896 = vmatpush1.bf16.msra.mxu0 0
        %2897 = vmatprep.subr.bf16.mxu0 0
        %2898 = vmatpush1.bf16.msra.mxu0 0
        %2899 = vmatprep.subr.bf16.mxu0 0
        %2900 = vmatpush1.bf16.msra.mxu0 0
        %2901 = vmatprep.subr.bf16.mxu0 0
        %2902 = vmatpush1.bf16.msra.mxu0 0
        %2903 = vmatprep.subr.bf16.mxu0 0
        %2904 = vmatpush1.bf16.msra.mxu0 0
        %2905 = vmatprep.subr.bf16.mxu0 0
        %2906 = vmatpush1.bf16.msra.mxu0 0
        %2907 = vmatprep.subr.bf16.mxu0 0
        %2908 = vmatpush1.bf16.msra.mxu0 0
        %2909 = vmatprep.mubr.bf16.mxu0 0
        %2910 = vmatmul.mubr.bf16.gmra.mrb[0].mxu0 %v2875
        %v2911 = vpop.f32.mrb[0].mxu0
        %v2912 = vadd.f32 0.0, %v2911
        %v2913 = vpop.f32.mrb[0].mxu0
        %v2914 = vpop.f32.mrb[0].mxu0
        %v2915 = vadd.f32 0.0, %v2914
        %v2916 = vpop.f32.mrb[0].mxu0
        %2917 = vdwg.mxu0
        %v2919 = vsel %vm1889, %v2257, 0
        %2921 = vmatprep.subr.bf16.mxu0 0
        %2922 = vmatpush1.bf16.msra.mxu0 %v1135
        %2923 = vmatprep.subr.bf16.mxu0 0
        %2924 = vmatpush1.bf16.msra.mxu0 0
        %2925 = vmatprep.subr.bf16.mxu0 0
        %2926 = vmatpush1.bf16.msra.mxu0 0
        %2927 = vmatprep.subr.bf16.mxu0 0
        %2928 = vmatpush1.bf16.msra.mxu0 0
        %2929 = vmatprep.subr.bf16.mxu0 0
        %2930 = vmatpush1.bf16.msra.mxu0 0
        %2931 = vmatprep.subr.bf16.mxu0 0
        %2932 = vmatpush1.bf16.msra.mxu0 0
        %2933 = vmatprep.subr.bf16.mxu0 0
        %2934 = vmatpush1.bf16.msra.mxu0 0
        %2935 = vmatprep.subr.bf16.mxu0 0
        %2936 = vmatpush1.bf16.msra.mxu0 0
        %2937 = vmatprep.subr.bf16.mxu0 0
        %2938 = vmatpush1.bf16.msra.mxu0 0
        %2939 = vmatprep.subr.bf16.mxu0 0
        %2940 = vmatpush1.bf16.msra.mxu0 0
        %2941 = vmatprep.subr.bf16.mxu0 0
        %2942 = vmatpush1.bf16.msra.mxu0 0
        %2943 = vmatprep.subr.bf16.mxu0 0
        %2944 = vmatpush1.bf16.msra.mxu0 0
        %2945 = vmatprep.subr.bf16.mxu0 0
        %2946 = vmatpush1.bf16.msra.mxu0 0
        %2947 = vmatprep.subr.bf16.mxu0 0
        %2948 = vmatpush1.bf16.msra.mxu0 0
        %2949 = vmatprep.subr.bf16.mxu0 0
        %2950 = vmatpush1.bf16.msra.mxu0 0
        %2951 = vmatprep.subr.bf16.mxu0 0
        %2952 = vmatpush1.bf16.msra.mxu0 0
        %2953 = vmatprep.mubr.bf16.mxu0 0
        %2954 = vmatmul.mubr.bf16.gmra.mrb[0].mxu0 %v2919
        %v2955 = vpop.f32.mrb[0].mxu0
        %v2956 = vadd.f32 0.0, %v2955
        %v2957 = vpop.f32.mrb[0].mxu0
        %v2958 = vpop.f32.mrb[0].mxu0
        %v2959 = vadd.f32 0.0, %v2958
        %v2960 = vpop.f32.mrb[0].mxu0
        %2961 = vdwg.mxu0
        %2970 = vrot.lane.b32.xlu0 %v2340, 32
        %v2971 = vpop.permute.xlu0 %2970
        %2972 = vrot.lane.b32.xlu0 %v2343, 32
        %v2973 = vpop.permute.xlu0 %2972
        %2974 = vrot.lane.b32.xlu0 %v2516, 32
        %v2975 = vpop.permute.xlu0 %2974
        %2976 = vrot.lane.b32.xlu0 %v2519, 32
        %v2977 = vpop.permute.xlu0 %2976
        %2978 = vrot.lane.b32.xlu0 %v2692, 32
        %v2979 = vpop.permute.xlu0 %2978
        %2980 = vrot.lane.b32.xlu0 %v2695, 32
        %v2981 = vpop.permute.xlu0 %2980
        %2982 = vrot.lane.b32.xlu0 %v2868, 32
        %v2983 = vpop.permute.xlu0 %2982
        %2984 = vrot.lane.b32.xlu0 %v2871, 32
        %v2985 = vpop.permute.xlu0 %2984
        %3002 = vrot.lane.b32.xlu0 %v2384, 64
        %v3003 = vpop.permute.xlu0 %3002
        %3004 = vrot.lane.b32.xlu0 %v2387, 64
        %v3005 = vpop.permute.xlu0 %3004
        %3006 = vrot.lane.b32.xlu0 %v2560, 64
        %v3007 = vpop.permute.xlu0 %3006
        %3008 = vrot.lane.b32.xlu0 %v2563, 64
        %v3009 = vpop.permute.xlu0 %3008
        %3010 = vrot.lane.b32.xlu0 %v2736, 64
        %v3011 = vpop.permute.xlu0 %3010
        %3012 = vrot.lane.b32.xlu0 %v2739, 64
        %v3013 = vpop.permute.xlu0 %3012
        %3014 = vrot.lane.b32.xlu0 %v2912, 64
        %v3015 = vpop.permute.xlu0 %3014
        %3016 = vrot.lane.b32.xlu0 %v2915, 64
        %v3017 = vpop.permute.xlu0 %3016
        %3034 = vrot.lane.b32.xlu0 %v2428, 96
        %v3035 = vpop.permute.xlu0 %3034
        %3036 = vrot.lane.b32.xlu0 %v2431, 96
        %v3037 = vpop.permute.xlu0 %3036
        %3038 = vrot.lane.b32.xlu0 %v2604, 96
        %v3039 = vpop.permute.xlu0 %3038
        %3040 = vrot.lane.b32.xlu0 %v2607, 96
        %v3041 = vpop.permute.xlu0 %3040
        %3042 = vrot.lane.b32.xlu0 %v2780, 96
        %v3043 = vpop.permute.xlu0 %3042
        %3044 = vrot.lane.b32.xlu0 %v2783, 96
        %v3045 = vpop.permute.xlu0 %3044
        %3046 = vrot.lane.b32.xlu0 %v2956, 96
        %v3047 = vpop.permute.xlu0 %3046
        %3048 = vrot.lane.b32.xlu0 %v2959, 96
        %v3049 = vpop.permute.xlu0 %3048
        %v3058 = vsel %vm1136, %v2296, %v2971
        %v3059 = vsel %vm1136, %v2299, %v2973
        %v3060 = vsel %vm1136, %v2472, %v2975
        %v3061 = vsel %vm1136, %v2475, %v2977
        %v3062 = vsel %vm1136, %v2648, %v2979
        %v3063 = vsel %vm1136, %v2651, %v2981
        %v3064 = vsel %vm1136, %v2824, %v2983
        %v3065 = vsel %vm1136, %v2827, %v2985
        %vm3066 = vcmask 523264
        %v3067 = vsel %vm3066, %v3058, %v3003
        %v3068 = vsel %vm3066, %v3059, %v3005
        %v3069 = vsel %vm3066, %v3060, %v3007
        %v3070 = vsel %vm3066, %v3061, %v3009
        %v3071 = vsel %vm3066, %v3062, %v3011
        %v3072 = vsel %vm3066, %v3063, %v3013
        %v3073 = vsel %vm3066, %v3064, %v3015
        %v3074 = vsel %vm3066, %v3065, %v3017
        %vm3075 = vcmask 785408
        %v3076 = vsel %vm3075, %v3067, %v3035
        %v3077 = vsel %vm3075, %v3068, %v3037
        %v3078 = vsel %vm3075, %v3069, %v3039
        %v3079 = vsel %vm3075, %v3070, %v3041
        %v3080 = vsel %vm3075, %v3071, %v3043
        %v3081 = vsel %vm3075, %v3072, %v3045
        %v3082 = vsel %vm3075, %v3073, %v3047
        %v3083 = vsel %vm3075, %v3074, %v3049
        %v3084 = vpack.c.bf16 %v3077, %v3076
        %v3085 = vpack.c.bf16 %v3079, %v3078
        %v3086 = vpack.c.bf16 %v3081, %v3080
        %v3087 = vpack.c.bf16 %v3083, %v3082
        %v3088 = vld [vmem:[#allocation7] sm:$0xf]
        %v3089 = vld [vmem:[#allocation7 + $0x4] sm:$0xf]
        %v3090 = vld [vmem:[#allocation7 + $0x8] sm:$0xf]
        %v3091 = vld [vmem:[#allocation7 + $0xc] sm:$0xf]
        %v3092 = vld [vmem:[#allocation7 + $0x10] sm:$0xf]
        %v3093 = vld [vmem:[#allocation7 + $0x14] sm:$0xf]
        %v3094 = vld [vmem:[#allocation7 + $0x18] sm:$0xf]
        %v3095 = vld [vmem:[#allocation7 + $0x1c] sm:$0xf]
        %v3096 = vld [vmem:[#allocation7 + $0x20] sm:$0xf]
        %v3097 = vld [vmem:[#allocation7 + $0x24] sm:$0xf]
        %v3098 = vld [vmem:[#allocation7 + $0x28] sm:$0xf]
        %v3099 = vld [vmem:[#allocation7 + $0x2c] sm:$0xf]
        %v3100 = vld [vmem:[#allocation7 + $0x30] sm:$0xf]
        %v3101 = vld [vmem:[#allocation7 + $0x34] sm:$0xf]
        %v3102 = vld [vmem:[#allocation7 + $0x38] sm:$0xf]
        %v3103 = vld [vmem:[#allocation7 + $0x3c] sm:$0xf]
        %v3104 = vld [vmem:[%s4] sm:$0x1]
        %v3106 = vlaneseq
        %v3107 = vshrl.u32 %v3106, 7
        %v3108 = vsub.s32 0, %v3107
        %v3109 = vrot.slane %v3104, %v3108
        %v3127 = vunpack.c.l.b16 %v3088
        %v3128 = vunpack.c.l.b16 %v3089
        %v3129 = vunpack.c.l.b16 %v3090
        %v3130 = vunpack.c.l.b16 %v3091
        %v3131 = vunpack.c.l.b16 %v3092
        %v3132 = vunpack.c.l.b16 %v3093
        %v3133 = vunpack.c.l.b16 %v3094
        %v3134 = vunpack.c.l.b16 %v3095
        %v3135 = vunpack.c.l.b16 %v3096
        %v3136 = vunpack.c.l.b16 %v3097
        %v3137 = vunpack.c.l.b16 %v3098
        %v3138 = vunpack.c.l.b16 %v3099
        %v3139 = vunpack.c.l.b16 %v3100
        %v3140 = vunpack.c.l.b16 %v3101
        %v3141 = vunpack.c.l.b16 %v3102
        %v3142 = vunpack.c.l.b16 %v3103
        %v3143 = vpack.c.b16 %v3128, %v3127
        %v3144 = vpack.c.b16 %v3130, %v3129
        %v3145 = vpack.c.b16 %v3132, %v3131
        %v3146 = vpack.c.b16 %v3134, %v3133
        %v3147 = vpack.c.b16 %v3136, %v3135
        %v3148 = vpack.c.b16 %v3138, %v3137
        %v3149 = vpack.c.b16 %v3140, %v3139
        %v3150 = vpack.c.b16 %v3142, %v3141
        %3159 = vmatprep.subr.bf16.mxu0 0
        %3160 = vmatpush1.bf16.msra.mxu0 %v3143
        %3161 = vmatprep.subr.bf16.mxu0 0
        %3162 = vmatpush1.bf16.msra.mxu0 %v3144
        %3163 = vmatprep.subr.bf16.mxu0 0
        %3164 = vmatpush1.bf16.msra.mxu0 %v3145
        %3165 = vmatprep.subr.bf16.mxu0 0
        %3166 = vmatpush1.bf16.msra.mxu0 %v3146
        %3167 = vmatprep.subr.bf16.mxu0 0
        %3168 = vmatpush1.bf16.msra.mxu0 %v3147
        %3169 = vmatprep.subr.bf16.mxu0 0
        %3170 = vmatpush1.bf16.msra.mxu0 %v3148
        %3171 = vmatprep.subr.bf16.mxu0 0
        %3172 = vmatpush1.bf16.msra.mxu0 %v3149
        %3173 = vmatprep.subr.bf16.mxu0 0
        %3174 = vmatpush1.bf16.msra.mxu0 %v3150
        %3175 = vmatprep.subr.bf16.mxu0 0
        %3176 = vmatpush1.bf16.msra.mxu0 0
        %3177 = vmatprep.subr.bf16.mxu0 0
        %3178 = vmatpush1.bf16.msra.mxu0 0
        %3179 = vmatprep.subr.bf16.mxu0 0
        %3180 = vmatpush1.bf16.msra.mxu0 0
        %3181 = vmatprep.subr.bf16.mxu0 0
        %3182 = vmatpush1.bf16.msra.mxu0 0
        %3183 = vmatprep.subr.bf16.mxu0 0
        %3184 = vmatpush1.bf16.msra.mxu0 0
        %3185 = vmatprep.subr.bf16.mxu0 0
        %3186 = vmatpush1.bf16.msra.mxu0 0
        %3187 = vmatprep.subr.bf16.mxu0 0
        %3188 = vmatpush1.bf16.msra.mxu0 0
        %3189 = vmatprep.subr.bf16.mxu0 0
        %3190 = vmatpush1.bf16.msra.mxu0 0
        %3191 = vmatprep.mubr.bf16.mxu0 0
        %3192 = vmatmul.mubr.bf16.gmra.mrb[0].mxu0 %v3084
        %v3193 = vpop.f32.mrb[0].mxu0
        %v3194 = vadd.f32 %v3109, %v3193
        %v3195 = vpop.f32.mrb[0].mxu0
        %v3196 = vpop.f32.mrb[0].mxu0
        %v3197 = vadd.f32 %v3109, %v3196
        %v3198 = vpop.f32.mrb[0].mxu0
        %3199 = vmatprep.mubr.bf16.mxu0 0
        %3200 = vmatmul.mubr.bf16.gmra.mrb[0].mxu0 %v3085
        %v3201 = vpop.f32.mrb[0].mxu0
        %v3202 = vadd.f32 %v3109, %v3201
        %v3203 = vpop.f32.mrb[0].mxu0
        %v3204 = vpop.f32.mrb[0].mxu0
        %v3205 = vadd.f32 %v3109, %v3204
        %v3206 = vpop.f32.mrb[0].mxu0
        %3207 = vmatprep.mubr.bf16.mxu0 0
        %3208 = vmatmul.mubr.bf16.gmra.mrb[0].mxu0 %v3086
        %v3209 = vpop.f32.mrb[0].mxu0
        %v3210 = vadd.f32 %v3109, %v3209
        %v3211 = vpop.f32.mrb[0].mxu0
        %v3212 = vpop.f32.mrb[0].mxu0
        %v3213 = vadd.f32 %v3109, %v3212
        %v3214 = vpop.f32.mrb[0].mxu0
        %3215 = vmatprep.mubr.bf16.mxu0 0
        %3216 = vmatmul.mubr.bf16.gmra.mrb[0].mxu0 %v3087
        %v3217 = vpop.f32.mrb[0].mxu0
        %v3218 = vadd.f32 %v3109, %v3217
        %v3219 = vpop.f32.mrb[0].mxu0
        %v3220 = vpop.f32.mrb[0].mxu0
        %v3221 = vadd.f32 %v3109, %v3220
        %v3222 = vpop.f32.mrb[0].mxu0
        %3223 = vdwg.mxu0
        %v3224 = vadd.f32 %v521, %v3194
        %v3225 = vadd.f32 %v522, %v3197
        %v3226 = vadd.f32 %v523, %v3202
        %v3227 = vadd.f32 %v524, %v3205
        %v3228 = vadd.f32 %v525, %v3210
        %v3229 = vadd.f32 %v526, %v3213
        %v3230 = vadd.f32 %v527, %v3218
        %v3231 = vadd.f32 %v528, %v3221
        %v3232 = vld [vmem:[%s5] sm:$0x1]
        %v3233 = vld [vmem:[%s6] sm:$0x1]
        %3234 = vadd.xlane.f32.xlu0 %v3224
        %v3235 = vpop.xlane.xlu0 %3234
        %3236 = vadd.xlane.f32.xlu0 %v3225
        %v3237 = vpop.xlane.xlu0 %3236
        %3238 = vadd.xlane.f32.xlu0 %v3226
        %v3239 = vpop.xlane.xlu0 %3238
        %3240 = vadd.xlane.f32.xlu0 %v3227
        %v3241 = vpop.xlane.xlu0 %3240
        %3242 = vadd.xlane.f32.xlu0 %v3228
        %v3243 = vpop.xlane.xlu0 %3242
        %3244 = vadd.xlane.f32.xlu0 %v3229
        %v3245 = vpop.xlane.xlu0 %3244
        %3246 = vadd.xlane.f32.xlu0 %v3230
        %v3247 = vpop.xlane.xlu0 %3246
        %3248 = vadd.xlane.f32.xlu0 %v3231
        %v3249 = vpop.xlane.xlu0 %3248
        %v3250 = vrcp.pop 128.0
        %v3251 = vmul.f32 %v3235, %v3250
        %v3252 = vmul.f32 %v3237, %v3250
        %v3253 = vmul.f32 %v3239, %v3250
        %v3254 = vmul.f32 %v3241, %v3250
        %v3255 = vmul.f32 %v3243, %v3250
        %v3256 = vmul.f32 %v3245, %v3250
        %v3257 = vmul.f32 %v3247, %v3250
        %v3258 = vmul.f32 %v3249, %v3250
        %v3259 = vsub.f32 %v3224, %v3251
        %v3260 = vsub.f32 %v3225, %v3252
        %v3261 = vsub.f32 %v3226, %v3253
        %v3262 = vsub.f32 %v3227, %v3254
        %v3263 = vsub.f32 %v3228, %v3255
        %v3264 = vsub.f32 %v3229, %v3256
        %v3265 = vsub.f32 %v3230, %v3257
        %v3266 = vsub.f32 %v3231, %v3258
        %v3267 = vmul.f32 %v3259, %v3259
        %v3268 = vmul.f32 %v3260, %v3260
        %v3269 = vmul.f32 %v3261, %v3261
        %v3270 = vmul.f32 %v3262, %v3262
        %v3271 = vmul.f32 %v3263, %v3263
        %v3272 = vmul.f32 %v3264, %v3264
        %v3273 = vmul.f32 %v3265, %v3265
        %v3274 = vmul.f32 %v3266, %v3266
        %3275 = vadd.xlane.f32.xlu0 %v3267
        %v3276 = vpop.xlane.xlu0 %3275
        %3277 = vadd.xlane.f32.xlu0 %v3268
        %v3278 = vpop.xlane.xlu0 %3277
        %3279 = vadd.xlane.f32.xlu0 %v3269
        %v3280 = vpop.xlane.xlu0 %3279
        %3281 = vadd.xlane.f32.xlu0 %v3270
        %v3282 = vpop.xlane.xlu0 %3281
        %3283 = vadd.xlane.f32.xlu0 %v3271
        %v3284 = vpop.xlane.xlu0 %3283
        %3285 = vadd.xlane.f32.xlu0 %v3272
        %v3286 = vpop.xlane.xlu0 %3285
        %3287 = vadd.xlane.f32.xlu0 %v3273
        %v3288 = vpop.xlane.xlu0 %3287
        %3289 = vadd.xlane.f32.xlu0 %v3274
        %v3290 = vpop.xlane.xlu0 %3289
        %v3291 = vmul.f32 %v3276, %v3250
        %v3292 = vmul.f32 %v3278, %v3250
        %v3293 = vmul.f32 %v3280, %v3250
        %v3294 = vmul.f32 %v3282, %v3250
        %v3295 = vmul.f32 %v3284, %v3250
        %v3296 = vmul.f32 %v3286, %v3250
        %v3297 = vmul.f32 %v3288, %v3250
        %v3298 = vmul.f32 %v3290, %v3250
        %v3299 = vadd.f32 %v3291, 1e-05
        %v3300 = vadd.f32 %v3292, 1e-05
        %v3301 = vadd.f32 %v3293, 1e-05
        %v3302 = vadd.f32 %v3294, 1e-05
        %v3303 = vadd.f32 %v3295, 1e-05
        %v3304 = vadd.f32 %v3296, 1e-05
        %v3305 = vadd.f32 %v3297, 1e-05
        %v3306 = vadd.f32 %v3298, 1e-05
        %v3307 = vrsqrt.pop %v3299
        %v3308 = vrsqrt.pop %v3300
        %v3309 = vrsqrt.pop %v3301
        %v3310 = vrsqrt.pop %v3302
        %v3311 = vrsqrt.pop %v3303
        %v3312 = vrsqrt.pop %v3304
        %v3313 = vrsqrt.pop %v3305
        %v3314 = vrsqrt.pop %v3306
        %v3315 = vmul.f32 %v3259, %v3307
        %v3316 = vmul.f32 %v3260, %v3308
        %v3317 = vmul.f32 %v3261, %v3309
        %v3318 = vmul.f32 %v3262, %v3310
        %v3319 = vmul.f32 %v3263, %v3311
        %v3320 = vmul.f32 %v3264, %v3312
        %v3321 = vmul.f32 %v3265, %v3313
        %v3322 = vmul.f32 %v3266, %v3314
        %v3324 = vlaneseq
        %v3325 = vshrl.u32 %v3324, 7
        %v3326 = vsub.s32 0, %v3325
        %v3327 = vrot.slane %v3232, %v3326
        %v3329 = vmul.f32 %v3315, %v3327
        %v3330 = vmul.f32 %v3316, %v3327
        %v3331 = vmul.f32 %v3317, %v3327
        %v3332 = vmul.f32 %v3318, %v3327
        %v3333 = vmul.f32 %v3319, %v3327
        %v3334 = vmul.f32 %v3320, %v3327
        %v3335 = vmul.f32 %v3321, %v3327
        %v3336 = vmul.f32 %v3322, %v3327
        %v3338 = vlaneseq
        %v3339 = vshrl.u32 %v3338, 7
        %v3340 = vsub.s32 0, %v3339
        %v3341 = vrot.slane %v3233, %v3340
        %v3343 = vadd.f32 %v3329, %v3341
        %v3344 = vadd.f32 %v3330, %v3341
        %v3345 = vadd.f32 %v3331, %v3341
        %v3346 = vadd.f32 %v3332, %v3341
        %v3347 = vadd.f32 %v3333, %v3341
        %v3348 = vadd.f32 %v3334, %v3341
        %v3349 = vadd.f32 %v3335, %v3341
        %v3350 = vadd.f32 %v3336, %v3341
        %v3351 = vpack.c.bf16 %v3344, %v3343
        %v3352 = vpack.c.bf16 %v3346, %v3345
        %v3353 = vpack.c.bf16 %v3348, %v3347
        %v3354 = vpack.c.bf16 %v3350, %v3349
        %v3355 = vld [vmem:[#allocation8] sm:$0xff]
        %v3356 = vld [vmem:[#allocation8 + $0x8] sm:$0xff]
        %v3357 = vld [vmem:[#allocation8 + $0x10] sm:$0xff]
        %v3358 = vld [vmem:[#allocation8 + $0x18] sm:$0xff]
        %v3359 = vld [vmem:[#allocation8 + $0x20] sm:$0xff]
        %v3360 = vld [vmem:[#allocation8 + $0x28] sm:$0xff]
        %v3361 = vld [vmem:[#allocation8 + $0x30] sm:$0xff]
        %v3362 = vld [vmem:[#allocation8 + $0x38] sm:$0xff]
        %v3363 = vld [vmem:[#allocation8 + $0x40] sm:$0xff]
        %v3364 = vld [vmem:[#allocation8 + $0x48] sm:$0xff]
        %v3365 = vld [vmem:[#allocation8 + $0x50] sm:$0xff]
        %v3366 = vld [vmem:[#allocation8 + $0x58] sm:$0xff]
        %v3367 = vld [vmem:[#allocation8 + $0x60] sm:$0xff]
        %v3368 = vld [vmem:[#allocation8 + $0x68] sm:$0xff]
        %v3369 = vld [vmem:[#allocation8 + $0x70] sm:$0xff]
        %v3370 = vld [vmem:[#allocation8 + $0x78] sm:$0xff]
        %v3371 = vld [vmem:[#allocation8 + $0x80] sm:$0xff]
        %v3372 = vld [vmem:[#allocation8 + $0x88] sm:$0xff]
        %v3373 = vld [vmem:[#allocation8 + $0x90] sm:$0xff]
        %v3374 = vld [vmem:[#allocation8 + $0x98] sm:$0xff]
        %v3375 = vld [vmem:[#allocation8 + $0xa0] sm:$0xff]
        %v3376 = vld [vmem:[#allocation8 + $0xa8] sm:$0xff]
        %v3377 = vld [vmem:[#allocation8 + $0xb0] sm:$0xff]
        %v3378 = vld [vmem:[#allocation8 + $0xb8] sm:$0xff]
        %v3379 = vld [vmem:[#allocation8 + $0xc0] sm:$0xff]
        %v3380 = vld [vmem:[#allocation8 + $0xc8] sm:$0xff]
        %v3381 = vld [vmem:[#allocation8 + $0xd0] sm:$0xff]
        %v3382 = vld [vmem:[#allocation8 + $0xd8] sm:$0xff]
        %v3383 = vld [vmem:[#allocation8 + $0xe0] sm:$0xff]
        %v3384 = vld [vmem:[#allocation8 + $0xe8] sm:$0xff]
        %v3385 = vld [vmem:[#allocation8 + $0xf0] sm:$0xff]
        %v3386 = vld [vmem:[#allocation8 + $0xf8] sm:$0xff]
        %v3387 = vld [vmem:[#allocation8 + $0x100] sm:$0xff]
        %v3388 = vld [vmem:[#allocation8 + $0x108] sm:$0xff]
        %v3389 = vld [vmem:[#allocation8 + $0x110] sm:$0xff]
        %v3390 = vld [vmem:[#allocation8 + $0x118] sm:$0xff]
        %v3391 = vld [vmem:[#allocation8 + $0x120] sm:$0xff]
        %v3392 = vld [vmem:[#allocation8 + $0x128] sm:$0xff]
        %v3393 = vld [vmem:[#allocation8 + $0x130] sm:$0xff]
        %v3394 = vld [vmem:[#allocation8 + $0x138] sm:$0xff]
        %v3395 = vld [vmem:[#allocation8 + $0x140] sm:$0xff]
        %v3396 = vld [vmem:[#allocation8 + $0x148] sm:$0xff]
        %v3397 = vld [vmem:[#allocation8 + $0x150] sm:$0xff]
        %v3398 = vld [vmem:[#allocation8 + $0x158] sm:$0xff]
        %v3399 = vld [vmem:[#allocation8 + $0x160] sm:$0xff]
        %v3400 = vld [vmem:[#allocation8 + $0x168] sm:$0xff]
        %v3401 = vld [vmem:[#allocation8 + $0x170] sm:$0xff]
        %v3402 = vld [vmem:[#allocation8 + $0x178] sm:$0xff]
        %v3403 = vld [vmem:[#allocation8 + $0x180] sm:$0xff]
        %v3404 = vld [vmem:[#allocation8 + $0x188] sm:$0xff]
        %v3405 = vld [vmem:[#allocation8 + $0x190] sm:$0xff]
        %v3406 = vld [vmem:[#allocation8 + $0x198] sm:$0xff]
        %v3407 = vld [vmem:[#allocation8 + $0x1a0] sm:$0xff]
        %v3408 = vld [vmem:[#allocation8 + $0x1a8] sm:$0xff]
        %v3409 = vld [vmem:[#allocation8 + $0x1b0] sm:$0xff]
        %v3410 = vld [vmem:[#allocation8 + $0x1b8] sm:$0xff]
        %v3411 = vld [vmem:[#allocation8 + $0x1c0] sm:$0xff]
        %v3412 = vld [vmem:[#allocation8 + $0x1c8] sm:$0xff]
        %v3413 = vld [vmem:[#allocation8 + $0x1d0] sm:$0xff]
        %v3414 = vld [vmem:[#allocation8 + $0x1d8] sm:$0xff]
        %v3415 = vld [vmem:[#allocation8 + $0x1e0] sm:$0xff]
        %v3416 = vld [vmem:[#allocation8 + $0x1e8] sm:$0xff]
        %v3417 = vld [vmem:[#allocation8 + $0x1f0] sm:$0xff]
        %v3418 = vld [vmem:[#allocation8 + $0x1f8] sm:$0xff]
        %v3419 = vld [vmem:[#allocation8 + $0x200] sm:$0xff]
        %v3420 = vld [vmem:[#allocation8 + $0x208] sm:$0xff]
        %v3421 = vld [vmem:[#allocation8 + $0x210] sm:$0xff]
        %v3422 = vld [vmem:[#allocation8 + $0x218] sm:$0xff]
        %v3423 = vld [vmem:[#allocation8 + $0x220] sm:$0xff]
        %v3424 = vld [vmem:[#allocation8 + $0x228] sm:$0xff]
        %v3425 = vld [vmem:[#allocation8 + $0x230] sm:$0xff]
        %v3426 = vld [vmem:[#allocation8 + $0x238] sm:$0xff]
        %v3427 = vld [vmem:[#allocation8 + $0x240] sm:$0xff]
        %v3428 = vld [vmem:[#allocation8 + $0x248] sm:$0xff]
        %v3429 = vld [vmem:[#allocation8 + $0x250] sm:$0xff]
        %v3430 = vld [vmem:[#allocation8 + $0x258] sm:$0xff]
        %v3431 = vld [vmem:[#allocation8 + $0x260] sm:$0xff]
        %v3432 = vld [vmem:[#allocation8 + $0x268] sm:$0xff]
        %v3433 = vld [vmem:[#allocation8 + $0x270] sm:$0xff]
        %v3434 = vld [vmem:[#allocation8 + $0x278] sm:$0xff]
        %v3435 = vld [vmem:[#allocation8 + $0x280] sm:$0xff]
        %v3436 = vld [vmem:[#allocation8 + $0x288] sm:$0xff]
        %v3437 = vld [vmem:[#allocation8 + $0x290] sm:$0xff]
        %v3438 = vld [vmem:[#allocation8 + $0x298] sm:$0xff]
        %v3439 = vld [vmem:[#allocation8 + $0x2a0] sm:$0xff]
        %v3440 = vld [vmem:[#allocation8 + $0x2a8] sm:$0xff]
        %v3441 = vld [vmem:[#allocation8 + $0x2b0] sm:$0xff]
        %v3442 = vld [vmem:[#allocation8 + $0x2b8] sm:$0xff]
        %v3443 = vld [vmem:[#allocation8 + $0x2c0] sm:$0xff]
        %v3444 = vld [vmem:[#allocation8 + $0x2c8] sm:$0xff]
        %v3445 = vld [vmem:[#allocation8 + $0x2d0] sm:$0xff]
        %v3446 = vld [vmem:[#allocation8 + $0x2d8] sm:$0xff]
        %v3447 = vld [vmem:[#allocation8 + $0x2e0] sm:$0xff]
        %v3448 = vld [vmem:[#allocation8 + $0x2e8] sm:$0xff]
        %v3449 = vld [vmem:[#allocation8 + $0x2f0] sm:$0xff]
        %v3450 = vld [vmem:[#allocation8 + $0x2f8] sm:$0xff]
        %v3451 = vld [vmem:[#allocation8 + $0x300] sm:$0xff]
        %v3452 = vld [vmem:[#allocation8 + $0x308] sm:$0xff]
        %v3453 = vld [vmem:[#allocation8 + $0x310] sm:$0xff]
        %v3454 = vld [vmem:[#allocation8 + $0x318] sm:$0xff]
        %v3455 = vld [vmem:[#allocation8 + $0x320] sm:$0xff]
        %v3456 = vld [vmem:[#allocation8 + $0x328] sm:$0xff]
        %v3457 = vld [vmem:[#allocation8 + $0x330] sm:$0xff]
        %v3458 = vld [vmem:[#allocation8 + $0x338] sm:$0xff]
        %v3459 = vld [vmem:[#allocation8 + $0x340] sm:$0xff]
        %v3460 = vld [vmem:[#allocation8 + $0x348] sm:$0xff]
        %v3461 = vld [vmem:[#allocation8 + $0x350] sm:$0xff]
        %v3462 = vld [vmem:[#allocation8 + $0x358] sm:$0xff]
        %v3463 = vld [vmem:[#allocation8 + $0x360] sm:$0xff]
        %v3464 = vld [vmem:[#allocation8 + $0x368] sm:$0xff]
        %v3465 = vld [vmem:[#allocation8 + $0x370] sm:$0xff]
        %v3466 = vld [vmem:[#allocation8 + $0x378] sm:$0xff]
        %v3467 = vld [vmem:[#allocation8 + $0x380] sm:$0xff]
        %v3468 = vld [vmem:[#allocation8 + $0x388] sm:$0xff]
        %v3469 = vld [vmem:[#allocation8 + $0x390] sm:$0xff]
        %v3470 = vld [vmem:[#allocation8 + $0x398] sm:$0xff]
        %v3471 = vld [vmem:[#allocation8 + $0x3a0] sm:$0xff]
        %v3472 = vld [vmem:[#allocation8 + $0x3a8] sm:$0xff]
        %v3473 = vld [vmem:[#allocation8 + $0x3b0] sm:$0xff]
        %v3474 = vld [vmem:[#allocation8 + $0x3b8] sm:$0xff]
        %v3475 = vld [vmem:[#allocation8 + $0x3c0] sm:$0xff]
        %v3476 = vld [vmem:[#allocation8 + $0x3c8] sm:$0xff]
        %v3477 = vld [vmem:[#allocation8 + $0x3d0] sm:$0xff]
        %v3478 = vld [vmem:[#allocation8 + $0x3d8] sm:$0xff]
        %v3479 = vld [vmem:[#allocation8 + $0x3e0] sm:$0xff]
        %v3480 = vld [vmem:[#allocation8 + $0x3e8] sm:$0xff]
        %v3481 = vld [vmem:[#allocation8 + $0x3f0] sm:$0xff]
        %v3482 = vld [vmem:[#allocation8 + $0x3f8] sm:$0xff]
        %v3483 = vld [vmem:[%s8] sm:$0xff]
        %v3484 = vld [vmem:[%s8 + $0x8] sm:$0xff]
        %v3487 = vlaneseq
        %v3488 = vshrl.u32 %v3487, 7
        %v3489 = vsub.s32 0, %v3488
        %v3490 = vrot.slane %v3483, %v3489
        %v3491 = vlaneseq
        %v3492 = vshrl.u32 %v3491, 7
        %v3493 = vsub.s32 1, %v3492
        %v3494 = vrot.slane %v3483, %v3493
        %v3495 = vlaneseq
        %v3496 = vshrl.u32 %v3495, 7
        %v3497 = vsub.s32 2, %v3496
        %v3498 = vrot.slane %v3483, %v3497
        %v3499 = vlaneseq
        %v3500 = vshrl.u32 %v3499, 7
        %v3501 = vsub.s32 3, %v3500
        %v3502 = vrot.slane %v3483, %v3501
        %v3503 = vlaneseq
        %v3504 = vshrl.u32 %v3503, 7
        %v3505 = vsub.s32 4, %v3504
        %v3506 = vrot.slane %v3483, %v3505
        %v3507 = vlaneseq
        %v3508 = vshrl.u32 %v3507, 7
        %v3509 = vsub.s32 5, %v3508
        %v3510 = vrot.slane %v3483, %v3509
        %v3511 = vlaneseq
        %v3512 = vshrl.u32 %v3511, 7
        %v3513 = vsub.s32 6, %v3512
        %v3514 = vrot.slane %v3483, %v3513
        %v3515 = vlaneseq
        %v3516 = vshrl.u32 %v3515, 7
        %v3517 = vsub.s32 7, %v3516
        %v3518 = vrot.slane %v3483, %v3517
        %v3519 = vlaneseq
        %v3520 = vshrl.u32 %v3519, 7
        %v3521 = vsub.s32 0, %v3520
        %v3522 = vrot.slane %v3484, %v3521
        %v3523 = vlaneseq
        %v3524 = vshrl.u32 %v3523, 7
        %v3525 = vsub.s32 1, %v3524
        %v3526 = vrot.slane %v3484, %v3525
        %v3527 = vlaneseq
        %v3528 = vshrl.u32 %v3527, 7
        %v3529 = vsub.s32 2, %v3528
        %v3530 = vrot.slane %v3484, %v3529
        %v3531 = vlaneseq
        %v3532 = vshrl.u32 %v3531, 7
        %v3533 = vsub.s32 3, %v3532
        %v3534 = vrot.slane %v3484, %v3533
        %v3535 = vlaneseq
        %v3536 = vshrl.u32 %v3535, 7
        %v3537 = vsub.s32 4, %v3536
        %v3538 = vrot.slane %v3484, %v3537
        %v3539 = vlaneseq
        %v3540 = vshrl.u32 %v3539, 7
        %v3541 = vsub.s32 5, %v3540
        %v3542 = vrot.slane %v3484, %v3541
        %v3543 = vlaneseq
        %v3544 = vshrl.u32 %v3543, 7
        %v3545 = vsub.s32 6, %v3544
        %v3546 = vrot.slane %v3484, %v3545
        %v3547 = vlaneseq
        %v3548 = vshrl.u32 %v3547, 7
        %v3549 = vsub.s32 7, %v3548
        %v3550 = vrot.slane %v3484, %v3549
        %v3695 = vunpack.c.l.b16 %v3355
        %v3696 = vunpack.c.h.b16 %v3355
        %v3697 = vunpack.c.l.b16 %v3356
        %v3698 = vunpack.c.h.b16 %v3356
        %v3699 = vunpack.c.l.b16 %v3357
        %v3700 = vunpack.c.h.b16 %v3357
        %v3701 = vunpack.c.l.b16 %v3358
        %v3702 = vunpack.c.h.b16 %v3358
        %v3703 = vunpack.c.l.b16 %v3359
        %v3704 = vunpack.c.h.b16 %v3359
        %v3705 = vunpack.c.l.b16 %v3360
        %v3706 = vunpack.c.h.b16 %v3360
        %v3707 = vunpack.c.l.b16 %v3361
        %v3708 = vunpack.c.h.b16 %v3361
        %v3709 = vunpack.c.l.b16 %v3362
        %v3710 = vunpack.c.h.b16 %v3362
        %v3711 = vunpack.c.l.b16 %v3363
        %v3712 = vunpack.c.h.b16 %v3363
        %v3713 = vunpack.c.l.b16 %v3364
        %v3714 = vunpack.c.h.b16 %v3364
        %v3715 = vunpack.c.l.b16 %v3365
        %v3716 = vunpack.c.h.b16 %v3365
        %v3717 = vunpack.c.l.b16 %v3366
        %v3718 = vunpack.c.h.b16 %v3366
        %v3719 = vunpack.c.l.b16 %v3367
        %v3720 = vunpack.c.h.b16 %v3367
        %v3721 = vunpack.c.l.b16 %v3368
        %v3722 = vunpack.c.h.b16 %v3368
        %v3723 = vunpack.c.l.b16 %v3369
        %v3724 = vunpack.c.h.b16 %v3369
        %v3725 = vunpack.c.l.b16 %v3370
        %v3726 = vunpack.c.h.b16 %v3370
        %v3727 = vunpack.c.l.b16 %v3371
        %v3728 = vunpack.c.h.b16 %v3371
        %v3729 = vunpack.c.l.b16 %v3372
        %v3730 = vunpack.c.h.b16 %v3372
        %v3731 = vunpack.c.l.b16 %v3373
        %v3732 = vunpack.c.h.b16 %v3373
        %v3733 = vunpack.c.l.b16 %v3374
        %v3734 = vunpack.c.h.b16 %v3374
        %v3735 = vunpack.c.l.b16 %v3375
        %v3736 = vunpack.c.h.b16 %v3375
        %v3737 = vunpack.c.l.b16 %v3376
        %v3738 = vunpack.c.h.b16 %v3376
        %v3739 = vunpack.c.l.b16 %v3377
        %v3740 = vunpack.c.h.b16 %v3377
        %v3741 = vunpack.c.l.b16 %v3378
        %v3742 = vunpack.c.h.b16 %v3378
        %v3743 = vunpack.c.l.b16 %v3379
        %v3744 = vunpack.c.h.b16 %v3379
        %v3745 = vunpack.c.l.b16 %v3380
        %v3746 = vunpack.c.h.b16 %v3380
        %v3747 = vunpack.c.l.b16 %v3381
        %v3748 = vunpack.c.h.b16 %v3381
        %v3749 = vunpack.c.l.b16 %v3382
        %v3750 = vunpack.c.h.b16 %v3382
        %v3751 = vunpack.c.l.b16 %v3383
        %v3752 = vunpack.c.h.b16 %v3383
        %v3753 = vunpack.c.l.b16 %v3384
        %v3754 = vunpack.c.h.b16 %v3384
        %v3755 = vunpack.c.l.b16 %v3385
        %v3756 = vunpack.c.h.b16 %v3385
        %v3757 = vunpack.c.l.b16 %v3386
        %v3758 = vunpack.c.h.b16 %v3386
        %v3759 = vunpack.c.l.b16 %v3387
        %v3760 = vunpack.c.h.b16 %v3387
        %v3761 = vunpack.c.l.b16 %v3388
        %v3762 = vunpack.c.h.b16 %v3388
        %v3763 = vunpack.c.l.b16 %v3389
        %v3764 = vunpack.c.h.b16 %v3389
        %v3765 = vunpack.c.l.b16 %v3390
        %v3766 = vunpack.c.h.b16 %v3390
        %v3767 = vunpack.c.l.b16 %v3391
        %v3768 = vunpack.c.h.b16 %v3391
        %v3769 = vunpack.c.l.b16 %v3392
        %v3770 = vunpack.c.h.b16 %v3392
        %v3771 = vunpack.c.l.b16 %v3393
        %v3772 = vunpack.c.h.b16 %v3393
        %v3773 = vunpack.c.l.b16 %v3394
        %v3774 = vunpack.c.h.b16 %v3394
        %v3775 = vunpack.c.l.b16 %v3395
        %v3776 = vunpack.c.h.b16 %v3395
        %v3777 = vunpack.c.l.b16 %v3396
        %v3778 = vunpack.c.h.b16 %v3396
        %v3779 = vunpack.c.l.b16 %v3397
        %v3780 = vunpack.c.h.b16 %v3397
        %v3781 = vunpack.c.l.b16 %v3398
        %v3782 = vunpack.c.h.b16 %v3398
        %v3783 = vunpack.c.l.b16 %v3399
        %v3784 = vunpack.c.h.b16 %v3399
        %v3785 = vunpack.c.l.b16 %v3400
        %v3786 = vunpack.c.h.b16 %v3400
        %v3787 = vunpack.c.l.b16 %v3401
        %v3788 = vunpack.c.h.b16 %v3401
        %v3789 = vunpack.c.l.b16 %v3402
        %v3790 = vunpack.c.h.b16 %v3402
        %v3791 = vunpack.c.l.b16 %v3403
        %v3792 = vunpack.c.h.b16 %v3403
        %v3793 = vunpack.c.l.b16 %v3404
        %v3794 = vunpack.c.h.b16 %v3404
        %v3795 = vunpack.c.l.b16 %v3405
        %v3796 = vunpack.c.h.b16 %v3405
        %v3797 = vunpack.c.l.b16 %v3406
        %v3798 = vunpack.c.h.b16 %v3406
        %v3799 = vunpack.c.l.b16 %v3407
        %v3800 = vunpack.c.h.b16 %v3407
        %v3801 = vunpack.c.l.b16 %v3408
        %v3802 = vunpack.c.h.b16 %v3408
        %v3803 = vunpack.c.l.b16 %v3409
        %v3804 = vunpack.c.h.b16 %v3409
        %v3805 = vunpack.c.l.b16 %v3410
        %v3806 = vunpack.c.h.b16 %v3410
        %v3807 = vunpack.c.l.b16 %v3411
        %v3808 = vunpack.c.h.b16 %v3411
        %v3809 = vunpack.c.l.b16 %v3412
        %v3810 = vunpack.c.h.b16 %v3412
        %v3811 = vunpack.c.l.b16 %v3413
        %v3812 = vunpack.c.h.b16 %v3413
        %v3813 = vunpack.c.l.b16 %v3414
        %v3814 = vunpack.c.h.b16 %v3414
        %v3815 = vunpack.c.l.b16 %v3415
        %v3816 = vunpack.c.h.b16 %v3415
        %v3817 = vunpack.c.l.b16 %v3416
        %v3818 = vunpack.c.h.b16 %v3416
        %v3819 = vunpack.c.l.b16 %v3417
        %v3820 = vunpack.c.h.b16 %v3417
        %v3821 = vunpack.c.l.b16 %v3418
        %v3822 = vunpack.c.h.b16 %v3418
        %v3823 = vunpack.c.l.b16 %v3419
        %v3824 = vunpack.c.h.b16 %v3419
        %v3825 = vunpack.c.l.b16 %v3420
        %v3826 = vunpack.c.h.b16 %v3420
        %v3827 = vunpack.c.l.b16 %v3421
        %v3828 = vunpack.c.h.b16 %v3421
        %v3829 = vunpack.c.l.b16 %v3422
        %v3830 = vunpack.c.h.b16 %v3422
        %v3831 = vunpack.c.l.b16 %v3423
        %v3832 = vunpack.c.h.b16 %v3423
        %v3833 = vunpack.c.l.b16 %v3424
        %v3834 = vunpack.c.h.b16 %v3424
        %v3835 = vunpack.c.l.b16 %v3425
        %v3836 = vunpack.c.h.b16 %v3425
        %v3837 = vunpack.c.l.b16 %v3426
        %v3838 = vunpack.c.h.b16 %v3426
        %v3839 = vunpack.c.l.b16 %v3427
        %v3840 = vunpack.c.h.b16 %v3427
        %v3841 = vunpack.c.l.b16 %v3428
        %v3842 = vunpack.c.h.b16 %v3428
        %v3843 = vunpack.c.l.b16 %v3429
        %v3844 = vunpack.c.h.b16 %v3429
        %v3845 = vunpack.c.l.b16 %v3430
        %v3846 = vunpack.c.h.b16 %v3430
        %v3847 = vunpack.c.l.b16 %v3431
        %v3848 = vunpack.c.h.b16 %v3431
        %v3849 = vunpack.c.l.b16 %v3432
        %v3850 = vunpack.c.h.b16 %v3432
        %v3851 = vunpack.c.l.b16 %v3433
        %v3852 = vunpack.c.h.b16 %v3433
        %v3853 = vunpack.c.l.b16 %v3434
        %v3854 = vunpack.c.h.b16 %v3434
        %v3855 = vunpack.c.l.b16 %v3435
        %v3856 = vunpack.c.h.b16 %v3435
        %v3857 = vunpack.c.l.b16 %v3436
        %v3858 = vunpack.c.h.b16 %v3436
        %v3859 = vunpack.c.l.b16 %v3437
        %v3860 = vunpack.c.h.b16 %v3437
        %v3861 = vunpack.c.l.b16 %v3438
        %v3862 = vunpack.c.h.b16 %v3438
        %v3863 = vunpack.c.l.b16 %v3439
        %v3864 = vunpack.c.h.b16 %v3439
        %v3865 = vunpack.c.l.b16 %v3440
        %v3866 = vunpack.c.h.b16 %v3440
        %v3867 = vunpack.c.l.b16 %v3441
        %v3868 = vunpack.c.h.b16 %v3441
        %v3869 = vunpack.c.l.b16 %v3442
        %v3870 = vunpack.c.h.b16 %v3442
        %v3871 = vunpack.c.l.b16 %v3443
        %v3872 = vunpack.c.h.b16 %v3443
        %v3873 = vunpack.c.l.b16 %v3444
        %v3874 = vunpack.c.h.b16 %v3444
        %v3875 = vunpack.c.l.b16 %v3445
        %v3876 = vunpack.c.h.b16 %v3445
        %v3877 = vunpack.c.l.b16 %v3446
        %v3878 = vunpack.c.h.b16 %v3446
        %v3879 = vunpack.c.l.b16 %v3447
        %v3880 = vunpack.c.h.b16 %v3447
        %v3881 = vunpack.c.l.b16 %v3448
        %v3882 = vunpack.c.h.b16 %v3448
        %v3883 = vunpack.c.l.b16 %v3449
        %v3884 = vunpack.c.h.b16 %v3449
        %v3885 = vunpack.c.l.b16 %v3450
        %v3886 = vunpack.c.h.b16 %v3450
        %v3887 = vunpack.c.l.b16 %v3451
        %v3888 = vunpack.c.h.b16 %v3451
        %v3889 = vunpack.c.l.b16 %v3452
        %v3890 = vunpack.c.h.b16 %v3452
        %v3891 = vunpack.c.l.b16 %v3453
        %v3892 = vunpack.c.h.b16 %v3453
        %v3893 = vunpack.c.l.b16 %v3454
        %v3894 = vunpack.c.h.b16 %v3454
        %v3895 = vunpack.c.l.b16 %v3455
        %v3896 = vunpack.c.h.b16 %v3455
        %v3897 = vunpack.c.l.b16 %v3456
        %v3898 = vunpack.c.h.b16 %v3456
        %v3899 = vunpack.c.l.b16 %v3457
        %v3900 = vunpack.c.h.b16 %v3457
        %v3901 = vunpack.c.l.b16 %v3458
        %v3902 = vunpack.c.h.b16 %v3458
        %v3903 = vunpack.c.l.b16 %v3459
        %v3904 = vunpack.c.h.b16 %v3459
        %v3905 = vunpack.c.l.b16 %v3460
        %v3906 = vunpack.c.h.b16 %v3460
        %v3907 = vunpack.c.l.b16 %v3461
        %v3908 = vunpack.c.h.b16 %v3461
        %v3909 = vunpack.c.l.b16 %v3462
        %v3910 = vunpack.c.h.b16 %v3462
        %v3911 = vunpack.c.l.b16 %v3463
        %v3912 = vunpack.c.h.b16 %v3463
        %v3913 = vunpack.c.l.b16 %v3464
        %v3914 = vunpack.c.h.b16 %v3464
        %v3915 = vunpack.c.l.b16 %v3465
        %v3916 = vunpack.c.h.b16 %v3465
        %v3917 = vunpack.c.l.b16 %v3466
        %v3918 = vunpack.c.h.b16 %v3466
        %v3919 = vunpack.c.l.b16 %v3467
        %v3920 = vunpack.c.h.b16 %v3467
        %v3921 = vunpack.c.l.b16 %v3468
        %v3922 = vunpack.c.h.b16 %v3468
        %v3923 = vunpack.c.l.b16 %v3469
        %v3924 = vunpack.c.h.b16 %v3469
        %v3925 = vunpack.c.l.b16 %v3470
        %v3926 = vunpack.c.h.b16 %v3470
        %v3927 = vunpack.c.l.b16 %v3471
        %v3928 = vunpack.c.h.b16 %v3471
        %v3929 = vunpack.c.l.b16 %v3472
        %v3930 = vunpack.c.h.b16 %v3472
        %v3931 = vunpack.c.l.b16 %v3473
        %v3932 = vunpack.c.h.b16 %v3473
        %v3933 = vunpack.c.l.b16 %v3474
        %v3934 = vunpack.c.h.b16 %v3474
        %v3935 = vunpack.c.l.b16 %v3475
        %v3936 = vunpack.c.h.b16 %v3475
        %v3937 = vunpack.c.l.b16 %v3476
        %v3938 = vunpack.c.h.b16 %v3476
        %v3939 = vunpack.c.l.b16 %v3477
        %v3940 = vunpack.c.h.b16 %v3477
        %v3941 = vunpack.c.l.b16 %v3478
        %v3942 = vunpack.c.h.b16 %v3478
        %v3943 = vunpack.c.l.b16 %v3479
        %v3944 = vunpack.c.h.b16 %v3479
        %v3945 = vunpack.c.l.b16 %v3480
        %v3946 = vunpack.c.h.b16 %v3480
        %v3947 = vunpack.c.l.b16 %v3481
        %v3948 = vunpack.c.h.b16 %v3481
        %v3949 = vunpack.c.l.b16 %v3482
        %v3950 = vunpack.c.h.b16 %v3482
        %v3951 = vpack.c.b16 %v3711, %v3695
        %v3952 = vpack.c.b16 %v3712, %v3696
        %v3953 = vpack.c.b16 %v3713, %v3697
        %v3954 = vpack.c.b16 %v3714, %v3698
        %v3955 = vpack.c.b16 %v3715, %v3699
        %v3956 = vpack.c.b16 %v3716, %v3700
        %v3957 = vpack.c.b16 %v3717, %v3701
        %v3958 = vpack.c.b16 %v3718, %v3702
        %v3959 = vpack.c.b16 %v3719, %v3703
        %v3960 = vpack.c.b16 %v3720, %v3704
        %v3961 = vpack.c.b16 %v3721, %v3705
        %v3962 = vpack.c.b16 %v3722, %v3706
        %v3963 = vpack.c.b16 %v3723, %v3707
        %v3964 = vpack.c.b16 %v3724, %v3708
        %v3965 = vpack.c.b16 %v3725, %v3709
        %v3966 = vpack.c.b16 %v3726, %v3710
        %v3967 = vpack.c.b16 %v3743, %v3727
        %v3968 = vpack.c.b16 %v3744, %v3728
        %v3969 = vpack.c.b16 %v3745, %v3729
        %v3970 = vpack.c.b16 %v3746, %v3730
        %v3971 = vpack.c.b16 %v3747, %v3731
        %v3972 = vpack.c.b16 %v3748, %v3732
        %v3973 = vpack.c.b16 %v3749, %v3733
        %v3974 = vpack.c.b16 %v3750, %v3734
        %v3975 = vpack.c.b16 %v3751, %v3735
        %v3976 = vpack.c.b16 %v3752, %v3736
        %v3977 = vpack.c.b16 %v3753, %v3737
        %v3978 = vpack.c.b16 %v3754, %v3738
        %v3979 = vpack.c.b16 %v3755, %v3739
        %v3980 = vpack.c.b16 %v3756, %v3740
        %v3981 = vpack.c.b16 %v3757, %v3741
        %v3982 = vpack.c.b16 %v3758, %v3742
        %v3983 = vpack.c.b16 %v3775, %v3759
        %v3984 = vpack.c.b16 %v3776, %v3760
        %v3985 = vpack.c.b16 %v3777, %v3761
        %v3986 = vpack.c.b16 %v3778, %v3762
        %v3987 = vpack.c.b16 %v3779, %v3763
        %v3988 = vpack.c.b16 %v3780, %v3764
        %v3989 = vpack.c.b16 %v3781, %v3765
        %v3990 = vpack.c.b16 %v3782, %v3766
        %v3991 = vpack.c.b16 %v3783, %v3767
        %v3992 = vpack.c.b16 %v3784, %v3768
        %v3993 = vpack.c.b16 %v3785, %v3769
        %v3994 = vpack.c.b16 %v3786, %v3770
        %v3995 = vpack.c.b16 %v3787, %v3771
        %v3996 = vpack.c.b16 %v3788, %v3772
        %v3997 = vpack.c.b16 %v3789, %v3773
        %v3998 = vpack.c.b16 %v3790, %v3774
        %v3999 = vpack.c.b16 %v3807, %v3791
        %v4000 = vpack.c.b16 %v3808, %v3792
        %v4001 = vpack.c.b16 %v3809, %v3793
        %v4002 = vpack.c.b16 %v3810, %v3794
        %v4003 = vpack.c.b16 %v3811, %v3795
        %v4004 = vpack.c.b16 %v3812, %v3796
        %v4005 = vpack.c.b16 %v3813, %v3797
        %v4006 = vpack.c.b16 %v3814, %v3798
        %v4007 = vpack.c.b16 %v3815, %v3799
        %v4008 = vpack.c.b16 %v3816, %v3800
        %v4009 = vpack.c.b16 %v3817, %v3801
        %v4010 = vpack.c.b16 %v3818, %v3802
        %v4011 = vpack.c.b16 %v3819, %v3803
        %v4012 = vpack.c.b16 %v3820, %v3804
        %v4013 = vpack.c.b16 %v3821, %v3805
        %v4014 = vpack.c.b16 %v3822, %v3806
        %v4015 = vpack.c.b16 %v3839, %v3823
        %v4016 = vpack.c.b16 %v3840, %v3824
        %v4017 = vpack.c.b16 %v3841, %v3825
        %v4018 = vpack.c.b16 %v3842, %v3826
        %v4019 = vpack.c.b16 %v3843, %v3827
        %v4020 = vpack.c.b16 %v3844, %v3828
        %v4021 = vpack.c.b16 %v3845, %v3829
        %v4022 = vpack.c.b16 %v3846, %v3830
        %v4023 = vpack.c.b16 %v3847, %v3831
        %v4024 = vpack.c.b16 %v3848, %v3832
        %v4025 = vpack.c.b16 %v3849, %v3833
        %v4026 = vpack.c.b16 %v3850, %v3834
        %v4027 = vpack.c.b16 %v3851, %v3835
        %v4028 = vpack.c.b16 %v3852, %v3836
        %v4029 = vpack.c.b16 %v3853, %v3837
        %v4030 = vpack.c.b16 %v3854, %v3838
        %v4031 = vpack.c.b16 %v3871, %v3855
        %v4032 = vpack.c.b16 %v3872, %v3856
        %v4033 = vpack.c.b16 %v3873, %v3857
        %v4034 = vpack.c.b16 %v3874, %v3858
        %v4035 = vpack.c.b16 %v3875, %v3859
        %v4036 = vpack.c.b16 %v3876, %v3860
        %v4037 = vpack.c.b16 %v3877, %v3861
        %v4038 = vpack.c.b16 %v3878, %v3862
        %v4039 = vpack.c.b16 %v3879, %v3863
        %v4040 = vpack.c.b16 %v3880, %v3864
        %v4041 = vpack.c.b16 %v3881, %v3865
        %v4042 = vpack.c.b16 %v3882, %v3866
        %v4043 = vpack.c.b16 %v3883, %v3867
        %v4044 = vpack.c.b16 %v3884, %v3868
        %v4045 = vpack.c.b16 %v3885, %v3869
        %v4046 = vpack.c.b16 %v3886, %v3870
        %v4047 = vpack.c.b16 %v3903, %v3887
        %v4048 = vpack.c.b16 %v3904, %v3888
        %v4049 = vpack.c.b16 %v3905, %v3889
        %v4050 = vpack.c.b16 %v3906, %v3890
        %v4051 = vpack.c.b16 %v3907, %v3891
        %v4052 = vpack.c.b16 %v3908, %v3892
        %v4053 = vpack.c.b16 %v3909, %v3893
        %v4054 = vpack.c.b16 %v3910, %v3894
        %v4055 = vpack.c.b16 %v3911, %v3895
        %v4056 = vpack.c.b16 %v3912, %v3896
        %v4057 = vpack.c.b16 %v3913, %v3897
        %v4058 = vpack.c.b16 %v3914, %v3898
        %v4059 = vpack.c.b16 %v3915, %v3899
        %v4060 = vpack.c.b16 %v3916, %v3900
        %v4061 = vpack.c.b16 %v3917, %v3901
        %v4062 = vpack.c.b16 %v3918, %v3902
        %v4063 = vpack.c.b16 %v3935, %v3919
        %v4064 = vpack.c.b16 %v3936, %v3920
        %v4065 = vpack.c.b16 %v3937, %v3921
        %v4066 = vpack.c.b16 %v3938, %v3922
        %v4067 = vpack.c.b16 %v3939, %v3923
        %v4068 = vpack.c.b16 %v3940, %v3924
        %v4069 = vpack.c.b16 %v3941, %v3925
        %v4070 = vpack.c.b16 %v3942, %v3926
        %v4071 = vpack.c.b16 %v3943, %v3927
        %v4072 = vpack.c.b16 %v3944, %v3928
        %v4073 = vpack.c.b16 %v3945, %v3929
        %v4074 = vpack.c.b16 %v3946, %v3930
        %v4075 = vpack.c.b16 %v3947, %v3931
        %v4076 = vpack.c.b16 %v3948, %v3932
        %v4077 = vpack.c.b16 %v3949, %v3933
        %v4078 = vpack.c.b16 %v3950, %v3934
        %4207 = vmatprep.subr.bf16.mxu0 %v3952
        %4208 = vmatpush1.bf16.msra.mxu0 %v3951
        %4209 = vmatprep.subr.bf16.mxu0 %v3968
        %4210 = vmatpush1.bf16.msra.mxu0 %v3967
        %4211 = vmatprep.subr.bf16.mxu0 %v3984
        %4212 = vmatpush1.bf16.msra.mxu0 %v3983
        %4213 = vmatprep.subr.bf16.mxu0 %v4000
        %4214 = vmatpush1.bf16.msra.mxu0 %v3999
        %4215 = vmatprep.subr.bf16.mxu0 %v4016
        %4216 = vmatpush1.bf16.msra.mxu0 %v4015
        %4217 = vmatprep.subr.bf16.mxu0 %v4032
        %4218 = vmatpush1.bf16.msra.mxu0 %v4031
        %4219 = vmatprep.subr.bf16.mxu0 %v4048
        %4220 = vmatpush1.bf16.msra.mxu0 %v4047
        %4221 = vmatprep.subr.bf16.mxu0 %v4064
        %4222 = vmatpush1.bf16.msra.mxu0 %v4063
        %4223 = vmatprep.subr.bf16.mxu0 0
        %4224 = vmatpush1.bf16.msra.mxu0 0
        %4225 = vmatprep.subr.bf16.mxu0 0
        %4226 = vmatpush1.bf16.msra.mxu0 0
        %4227 = vmatprep.subr.bf16.mxu0 0
        %4228 = vmatpush1.bf16.msra.mxu0 0
        %4229 = vmatprep.subr.bf16.mxu0 0
        %4230 = vmatpush1.bf16.msra.mxu0 0
        %4231 = vmatprep.subr.bf16.mxu0 0
        %4232 = vmatpush1.bf16.msra.mxu0 0
        %4233 = vmatprep.subr.bf16.mxu0 0
        %4234 = vmatpush1.bf16.msra.mxu0 0
        %4235 = vmatprep.subr.bf16.mxu0 0
        %4236 = vmatpush1.bf16.msra.mxu0 0
        %4237 = vmatprep.subr.bf16.mxu0 0
        %4238 = vmatpush1.bf16.msra.mxu0 0
        %4239 = vmatprep.mubr.bf16.mxu0 0
        %4240 = vmatmul.mubr.bf16.gmra.mrb[0].mxu0 %v3351
        %v4241 = vpop.f32.mrb[0].mxu0
        %v4242 = vadd.f32 %v3490, %v4241
        %v4243 = vpop.f32.mrb[0].mxu0
        %v4244 = vadd.f32 %v3494, %v4243
        %v4245 = vpop.f32.mrb[0].mxu0
        %v4246 = vadd.f32 %v3490, %v4245
        %v4247 = vpop.f32.mrb[0].mxu0
        %v4248 = vadd.f32 %v3494, %v4247
        %4249 = vmatprep.mubr.bf16.mxu0 0
        %4250 = vmatmul.mubr.bf16.gmra.mrb[0].mxu0 %v3352
        %v4251 = vpop.f32.mrb[0].mxu0
        %v4252 = vadd.f32 %v3490, %v4251
        %v4253 = vpop.f32.mrb[0].mxu0
        %v4254 = vadd.f32 %v3494, %v4253
        %v4255 = vpop.f32.mrb[0].mxu0
        %v4256 = vadd.f32 %v3490, %v4255
        %v4257 = vpop.f32.mrb[0].mxu0
        %v4258 = vadd.f32 %v3494, %v4257
        %4259 = vmatprep.mubr.bf16.mxu0 0
        %4260 = vmatmul.mubr.bf16.gmra.mrb[0].mxu0 %v3353
        %v4261 = vpop.f32.mrb[0].mxu0
        %v4262 = vadd.f32 %v3490, %v4261
        %v4263 = vpop.f32.mrb[0].mxu0
        %v4264 = vadd.f32 %v3494, %v4263
        %v4265 = vpop.f32.mrb[0].mxu0
        %v4266 = vadd.f32 %v3490, %v4265
        %v4267 = vpop.f32.mrb[0].mxu0
        %v4268 = vadd.f32 %v3494, %v4267
        %4269 = vmatprep.mubr.bf16.mxu0 0
        %4270 = vmatmul.mubr.bf16.gmra.mrb[0].mxu0 %v3354
        %v4271 = vpop.f32.mrb[0].mxu0
        %v4272 = vadd.f32 %v3490, %v4271
        %v4273 = vpop.f32.mrb[0].mxu0
        %v4274 = vadd.f32 %v3494, %v4273
        %v4275 = vpop.f32.mrb[0].mxu0
        %v4276 = vadd.f32 %v3490, %v4275
        %v4277 = vpop.f32.mrb[0].mxu0
        %v4278 = vadd.f32 %v3494, %v4277
        %4279 = vdwg.mxu0
        %4280 = vmatprep.subr.bf16.mxu0 %v3954
        %4281 = vmatpush1.bf16.msra.mxu0 %v3953
        %4282 = vmatprep.subr.bf16.mxu0 %v3970
        %4283 = vmatpush1.bf16.msra.mxu0 %v3969
        %4284 = vmatprep.subr.bf16.mxu0 %v3986
        %4285 = vmatpush1.bf16.msra.mxu0 %v3985
        %4286 = vmatprep.subr.bf16.mxu0 %v4002
        %4287 = vmatpush1.bf16.msra.mxu0 %v4001
        %4288 = vmatprep.subr.bf16.mxu0 %v4018
        %4289 = vmatpush1.bf16.msra.mxu0 %v4017
        %4290 = vmatprep.subr.bf16.mxu0 %v4034
        %4291 = vmatpush1.bf16.msra.mxu0 %v4033
        %4292 = vmatprep.subr.bf16.mxu0 %v4050
        %4293 = vmatpush1.bf16.msra.mxu0 %v4049
        %4294 = vmatprep.subr.bf16.mxu0 %v4066
        %4295 = vmatpush1.bf16.msra.mxu0 %v4065
        %4296 = vmatprep.subr.bf16.mxu0 0
        %4297 = vmatpush1.bf16.msra.mxu0 0
        %4298 = vmatprep.subr.bf16.mxu0 0
        %4299 = vmatpush1.bf16.msra.mxu0 0
        %4300 = vmatprep.subr.bf16.mxu0 0
        %4301 = vmatpush1.bf16.msra.mxu0 0
        %4302 = vmatprep.subr.bf16.mxu0 0
        %4303 = vmatpush1.bf16.msra.mxu0 0
        %4304 = vmatprep.subr.bf16.mxu0 0
        %4305 = vmatpush1.bf16.msra.mxu0 0
        %4306 = vmatprep.subr.bf16.mxu0 0
        %4307 = vmatpush1.bf16.msra.mxu0 0
        %4308 = vmatprep.subr.bf16.mxu0 0
        %4309 = vmatpush1.bf16.msra.mxu0 0
        %4310 = vmatprep.subr.bf16.mxu0 0
        %4311 = vmatpush1.bf16.msra.mxu0 0
        %4312 = vmatprep.mubr.bf16.mxu0 0
        %4313 = vmatmul.mubr.bf16.gmra.mrb[0].mxu0 %v3351
        %v4314 = vpop.f32.mrb[0].mxu0
        %v4315 = vadd.f32 %v3498, %v4314
        %v4316 = vpop.f32.mrb[0].mxu0
        %v4317 = vadd.f32 %v3502, %v4316
        %v4318 = vpop.f32.mrb[0].mxu0
        %v4319 = vadd.f32 %v3498, %v4318
        %v4320 = vpop.f32.mrb[0].mxu0
        %v4321 = vadd.f32 %v3502, %v4320
        %4322 = vmatprep.mubr.bf16.mxu0 0
        %4323 = vmatmul.mubr.bf16.gmra.mrb[0].mxu0 %v3352
        %v4324 = vpop.f32.mrb[0].mxu0
        %v4325 = vadd.f32 %v3498, %v4324
        %v4326 = vpop.f32.mrb[0].mxu0
        %v4327 = vadd.f32 %v3502, %v4326
        %v4328 = vpop.f32.mrb[0].mxu0
        %v4329 = vadd.f32 %v3498, %v4328
        %v4330 = vpop.f32.mrb[0].mxu0
        %v4331 = vadd.f32 %v3502, %v4330
        %4332 = vmatprep.mubr.bf16.mxu0 0
        %4333 = vmatmul.mubr.bf16.gmra.mrb[0].mxu0 %v3353
        %v4334 = vpop.f32.mrb[0].mxu0
        %v4335 = vadd.f32 %v3498, %v4334
        %v4336 = vpop.f32.mrb[0].mxu0
        %v4337 = vadd.f32 %v3502, %v4336
        %v4338 = vpop.f32.mrb[0].mxu0
        %v4339 = vadd.f32 %v3498, %v4338
        %v4340 = vpop.f32.mrb[0].mxu0
        %v4341 = vadd.f32 %v3502, %v4340
        %4342 = vmatprep.mubr.bf16.mxu0 0
        %4343 = vmatmul.mubr.bf16.gmra.mrb[0].mxu0 %v3354
        %v4344 = vpop.f32.mrb[0].mxu0
        %v4345 = vadd.f32 %v3498, %v4344
        %v4346 = vpop.f32.mrb[0].mxu0
        %v4347 = vadd.f32 %v3502, %v4346
        %v4348 = vpop.f32.mrb[0].mxu0
        %v4349 = vadd.f32 %v3498, %v4348
        %v4350 = vpop.f32.mrb[0].mxu0
        %v4351 = vadd.f32 %v3502, %v4350
        %4352 = vdwg.mxu0
        %4353 = vmatprep.subr.bf16.mxu0 %v3956
        %4354 = vmatpush1.bf16.msra.mxu0 %v3955
        %4355 = vmatprep.subr.bf16.mxu0 %v3972
        %4356 = vmatpush1.bf16.msra.mxu0 %v3971
        %4357 = vmatprep.subr.bf16.mxu0 %v3988
        %4358 = vmatpush1.bf16.msra.mxu0 %v3987
        %4359 = vmatprep.subr.bf16.mxu0 %v4004
        %4360 = vmatpush1.bf16.msra.mxu0 %v4003
        %4361 = vmatprep.subr.bf16.mxu0 %v4020
        %4362 = vmatpush1.bf16.msra.mxu0 %v4019
        %4363 = vmatprep.subr.bf16.mxu0 %v4036
        %4364 = vmatpush1.bf16.msra.mxu0 %v4035
        %4365 = vmatprep.subr.bf16.mxu0 %v4052
        %4366 = vmatpush1.bf16.msra.mxu0 %v4051
        %4367 = vmatprep.subr.bf16.mxu0 %v4068
        %4368 = vmatpush1.bf16.msra.mxu0 %v4067
        %4369 = vmatprep.subr.bf16.mxu0 0
        %4370 = vmatpush1.bf16.msra.mxu0 0
        %4371 = vmatprep.subr.bf16.mxu0 0
        %4372 = vmatpush1.bf16.msra.mxu0 0
        %4373 = vmatprep.subr.bf16.mxu0 0
        %4374 = vmatpush1.bf16.msra.mxu0 0
        %4375 = vmatprep.subr.bf16.mxu0 0
        %4376 = vmatpush1.bf16.msra.mxu0 0
        %4377 = vmatprep.subr.bf16.mxu0 0
        %4378 = vmatpush1.bf16.msra.mxu0 0
        %4379 = vmatprep.subr.bf16.mxu0 0
        %4380 = vmatpush1.bf16.msra.mxu0 0
        %4381 = vmatprep.subr.bf16.mxu0 0
        %4382 = vmatpush1.bf16.msra.mxu0 0
        %4383 = vmatprep.subr.bf16.mxu0 0
        %4384 = vmatpush1.bf16.msra.mxu0 0
        %4385 = vmatprep.mubr.bf16.mxu0 0
        %4386 = vmatmul.mubr.bf16.gmra.mrb[0].mxu0 %v3351
        %v4387 = vpop.f32.mrb[0].mxu0
        %v4388 = vadd.f32 %v3506, %v4387
        %v4389 = vpop.f32.mrb[0].mxu0
        %v4390 = vadd.f32 %v3510, %v4389
        %v4391 = vpop.f32.mrb[0].mxu0
        %v4392 = vadd.f32 %v3506, %v4391
        %v4393 = vpop.f32.mrb[0].mxu0
        %v4394 = vadd.f32 %v3510, %v4393
        %4395 = vmatprep.mubr.bf16.mxu0 0
        %4396 = vmatmul.mubr.bf16.gmra.mrb[0].mxu0 %v3352
        %v4397 = vpop.f32.mrb[0].mxu0
        %v4398 = vadd.f32 %v3506, %v4397
        %v4399 = vpop.f32.mrb[0].mxu0
        %v4400 = vadd.f32 %v3510, %v4399
        %v4401 = vpop.f32.mrb[0].mxu0
        %v4402 = vadd.f32 %v3506, %v4401
        %v4403 = vpop.f32.mrb[0].mxu0
        %v4404 = vadd.f32 %v3510, %v4403
        %4405 = vmatprep.mubr.bf16.mxu0 0
        %4406 = vmatmul.mubr.bf16.gmra.mrb[0].mxu0 %v3353
        %v4407 = vpop.f32.mrb[0].mxu0
        %v4408 = vadd.f32 %v3506, %v4407
        %v4409 = vpop.f32.mrb[0].mxu0
        %v4410 = vadd.f32 %v3510, %v4409
        %v4411 = vpop.f32.mrb[0].mxu0
        %v4412 = vadd.f32 %v3506, %v4411
        %v4413 = vpop.f32.mrb[0].mxu0
        %v4414 = vadd.f32 %v3510, %v4413
        %4415 = vmatprep.mubr.bf16.mxu0 0
        %4416 = vmatmul.mubr.bf16.gmra.mrb[0].mxu0 %v3354
        %v4417 = vpop.f32.mrb[0].mxu0
        %v4418 = vadd.f32 %v3506, %v4417
        %v4419 = vpop.f32.mrb[0].mxu0
        %v4420 = vadd.f32 %v3510, %v4419
        %v4421 = vpop.f32.mrb[0].mxu0
        %v4422 = vadd.f32 %v3506, %v4421
        %v4423 = vpop.f32.mrb[0].mxu0
        %v4424 = vadd.f32 %v3510, %v4423
        %4425 = vdwg.mxu0
        %4426 = vmatprep.subr.bf16.mxu0 %v3958
        %4427 = vmatpush1.bf16.msra.mxu0 %v3957
        %4428 = vmatprep.subr.bf16.mxu0 %v3974
        %4429 = vmatpush1.bf16.msra.mxu0 %v3973
        %4430 = vmatprep.subr.bf16.mxu0 %v3990
        %4431 = vmatpush1.bf16.msra.mxu0 %v3989
        %4432 = vmatprep.subr.bf16.mxu0 %v4006
        %4433 = vmatpush1.bf16.msra.mxu0 %v4005
        %4434 = vmatprep.subr.bf16.mxu0 %v4022
        %4435 = vmatpush1.bf16.msra.mxu0 %v4021
        %4436 = vmatprep.subr.bf16.mxu0 %v4038
        %4437 = vmatpush1.bf16.msra.mxu0 %v4037
        %4438 = vmatprep.subr.bf16.mxu0 %v4054
        %4439 = vmatpush1.bf16.msra.mxu0 %v4053
        %4440 = vmatprep.subr.bf16.mxu0 %v4070
        %4441 = vmatpush1.bf16.msra.mxu0 %v4069
        %4442 = vmatprep.subr.bf16.mxu0 0
        %4443 = vmatpush1.bf16.msra.mxu0 0
        %4444 = vmatprep.subr.bf16.mxu0 0
        %4445 = vmatpush1.bf16.msra.mxu0 0
        %4446 = vmatprep.subr.bf16.mxu0 0
        %4447 = vmatpush1.bf16.msra.mxu0 0
        %4448 = vmatprep.subr.bf16.mxu0 0
        %4449 = vmatpush1.bf16.msra.mxu0 0
        %4450 = vmatprep.subr.bf16.mxu0 0
        %4451 = vmatpush1.bf16.msra.mxu0 0
        %4452 = vmatprep.subr.bf16.mxu0 0
        %4453 = vmatpush1.bf16.msra.mxu0 0
        %4454 = vmatprep.subr.bf16.mxu0 0
        %4455 = vmatpush1.bf16.msra.mxu0 0
        %4456 = vmatprep.subr.bf16.mxu0 0
        %4457 = vmatpush1.bf16.msra.mxu0 0
        %4458 = vmatprep.mubr.bf16.mxu0 0
        %4459 = vmatmul.mubr.bf16.gmra.mrb[0].mxu0 %v3351
        %v4460 = vpop.f32.mrb[0].mxu0
        %v4461 = vadd.f32 %v3514, %v4460
        %v4462 = vpop.f32.mrb[0].mxu0
        %v4463 = vadd.f32 %v3518, %v4462
        %v4464 = vpop.f32.mrb[0].mxu0
        %v4465 = vadd.f32 %v3514, %v4464
        %v4466 = vpop.f32.mrb[0].mxu0
        %v4467 = vadd.f32 %v3518, %v4466
        %4468 = vmatprep.mubr.bf16.mxu0 0
        %4469 = vmatmul.mubr.bf16.gmra.mrb[0].mxu0 %v3352
        %v4470 = vpop.f32.mrb[0].mxu0
        %v4471 = vadd.f32 %v3514, %v4470
        %v4472 = vpop.f32.mrb[0].mxu0
        %v4473 = vadd.f32 %v3518, %v4472
        %v4474 = vpop.f32.mrb[0].mxu0
        %v4475 = vadd.f32 %v3514, %v4474
        %v4476 = vpop.f32.mrb[0].mxu0
        %v4477 = vadd.f32 %v3518, %v4476
        %4478 = vmatprep.mubr.bf16.mxu0 0
        %4479 = vmatmul.mubr.bf16.gmra.mrb[0].mxu0 %v3353
        %v4480 = vpop.f32.mrb[0].mxu0
        %v4481 = vadd.f32 %v3514, %v4480
        %v4482 = vpop.f32.mrb[0].mxu0
        %v4483 = vadd.f32 %v3518, %v4482
        %v4484 = vpop.f32.mrb[0].mxu0
        %v4485 = vadd.f32 %v3514, %v4484
        %v4486 = vpop.f32.mrb[0].mxu0
        %v4487 = vadd.f32 %v3518, %v4486
        %4488 = vmatprep.mubr.bf16.mxu0 0
        %4489 = vmatmul.mubr.bf16.gmra.mrb[0].mxu0 %v3354
        %v4490 = vpop.f32.mrb[0].mxu0
        %v4491 = vadd.f32 %v3514, %v4490
        %v4492 = vpop.f32.mrb[0].mxu0
        %v4493 = vadd.f32 %v3518, %v4492
        %v4494 = vpop.f32.mrb[0].mxu0
        %v4495 = vadd.f32 %v3514, %v4494
        %v4496 = vpop.f32.mrb[0].mxu0
        %v4497 = vadd.f32 %v3518, %v4496
        %4498 = vdwg.mxu0
        %4499 = vmatprep.subr.bf16.mxu0 %v3960
        %4500 = vmatpush1.bf16.msra.mxu0 %v3959
        %4501 = vmatprep.subr.bf16.mxu0 %v3976
        %4502 = vmatpush1.bf16.msra.mxu0 %v3975
        %4503 = vmatprep.subr.bf16.mxu0 %v3992
        %4504 = vmatpush1.bf16.msra.mxu0 %v3991
        %4505 = vmatprep.subr.bf16.mxu0 %v4008
        %4506 = vmatpush1.bf16.msra.mxu0 %v4007
        %4507 = vmatprep.subr.bf16.mxu0 %v4024
        %4508 = vmatpush1.bf16.msra.mxu0 %v4023
        %4509 = vmatprep.subr.bf16.mxu0 %v4040
        %4510 = vmatpush1.bf16.msra.mxu0 %v4039
        %4511 = vmatprep.subr.bf16.mxu0 %v4056
        %4512 = vmatpush1.bf16.msra.mxu0 %v4055
        %4513 = vmatprep.subr.bf16.mxu0 %v4072
        %4514 = vmatpush1.bf16.msra.mxu0 %v4071
        %4515 = vmatprep.subr.bf16.mxu0 0
        %4516 = vmatpush1.bf16.msra.mxu0 0
        %4517 = vmatprep.subr.bf16.mxu0 0
        %4518 = vmatpush1.bf16.msra.mxu0 0
        %4519 = vmatprep.subr.bf16.mxu0 0
        %4520 = vmatpush1.bf16.msra.mxu0 0
        %4521 = vmatprep.subr.bf16.mxu0 0
        %4522 = vmatpush1.bf16.msra.mxu0 0
        %4523 = vmatprep.subr.bf16.mxu0 0
        %4524 = vmatpush1.bf16.msra.mxu0 0
        %4525 = vmatprep.subr.bf16.mxu0 0
        %4526 = vmatpush1.bf16.msra.mxu0 0
        %4527 = vmatprep.subr.bf16.mxu0 0
        %4528 = vmatpush1.bf16.msra.mxu0 0
        %4529 = vmatprep.subr.bf16.mxu0 0
        %4530 = vmatpush1.bf16.msra.mxu0 0
        %4531 = vmatprep.mubr.bf16.mxu0 0
        %4532 = vmatmul.mubr.bf16.gmra.mrb[0].mxu0 %v3351
        %v4533 = vpop.f32.mrb[0].mxu0
        %v4534 = vadd.f32 %v3522, %v4533
        %v4535 = vpop.f32.mrb[0].mxu0
        %v4536 = vadd.f32 %v3526, %v4535
        %v4537 = vpop.f32.mrb[0].mxu0
        %v4538 = vadd.f32 %v3522, %v4537
        %v4539 = vpop.f32.mrb[0].mxu0
        %v4540 = vadd.f32 %v3526, %v4539
        %4541 = vmatprep.mubr.bf16.mxu0 0
        %4542 = vmatmul.mubr.bf16.gmra.mrb[0].mxu0 %v3352
        %v4543 = vpop.f32.mrb[0].mxu0
        %v4544 = vadd.f32 %v3522, %v4543
        %v4545 = vpop.f32.mrb[0].mxu0
        %v4546 = vadd.f32 %v3526, %v4545
        %v4547 = vpop.f32.mrb[0].mxu0
        %v4548 = vadd.f32 %v3522, %v4547
        %v4549 = vpop.f32.mrb[0].mxu0
        %v4550 = vadd.f32 %v3526, %v4549
        %4551 = vmatprep.mubr.bf16.mxu0 0
        %4552 = vmatmul.mubr.bf16.gmra.mrb[0].mxu0 %v3353
        %v4553 = vpop.f32.mrb[0].mxu0
        %v4554 = vadd.f32 %v3522, %v4553
        %v4555 = vpop.f32.mrb[0].mxu0
        %v4556 = vadd.f32 %v3526, %v4555
        %v4557 = vpop.f32.mrb[0].mxu0
        %v4558 = vadd.f32 %v3522, %v4557
        %v4559 = vpop.f32.mrb[0].mxu0
        %v4560 = vadd.f32 %v3526, %v4559
        %4561 = vmatprep.mubr.bf16.mxu0 0
        %4562 = vmatmul.mubr.bf16.gmra.mrb[0].mxu0 %v3354
        %v4563 = vpop.f32.mrb[0].mxu0
        %v4564 = vadd.f32 %v3522, %v4563
        %v4565 = vpop.f32.mrb[0].mxu0
        %v4566 = vadd.f32 %v3526, %v4565
        %v4567 = vpop.f32.mrb[0].mxu0
        %v4568 = vadd.f32 %v3522, %v4567
        %v4569 = vpop.f32.mrb[0].mxu0
        %v4570 = vadd.f32 %v3526, %v4569
        %4571 = vdwg.mxu0
        %4572 = vmatprep.subr.bf16.mxu0 %v3962
        %4573 = vmatpush1.bf16.msra.mxu0 %v3961
        %4574 = vmatprep.subr.bf16.mxu0 %v3978
        %4575 = vmatpush1.bf16.msra.mxu0 %v3977
        %4576 = vmatprep.subr.bf16.mxu0 %v3994
        %4577 = vmatpush1.bf16.msra.mxu0 %v3993
        %4578 = vmatprep.subr.bf16.mxu0 %v4010
        %4579 = vmatpush1.bf16.msra.mxu0 %v4009
        %4580 = vmatprep.subr.bf16.mxu0 %v4026
        %4581 = vmatpush1.bf16.msra.mxu0 %v4025
        %4582 = vmatprep.subr.bf16.mxu0 %v4042
        %4583 = vmatpush1.bf16.msra.mxu0 %v4041
        %4584 = vmatprep.subr.bf16.mxu0 %v4058
        %4585 = vmatpush1.bf16.msra.mxu0 %v4057
        %4586 = vmatprep.subr.bf16.mxu0 %v4074
        %4587 = vmatpush1.bf16.msra.mxu0 %v4073
        %4588 = vmatprep.subr.bf16.mxu0 0
        %4589 = vmatpush1.bf16.msra.mxu0 0
        %4590 = vmatprep.subr.bf16.mxu0 0
        %4591 = vmatpush1.bf16.msra.mxu0 0
        %4592 = vmatprep.subr.bf16.mxu0 0
        %4593 = vmatpush1.bf16.msra.mxu0 0
        %4594 = vmatprep.subr.bf16.mxu0 0
        %4595 = vmatpush1.bf16.msra.mxu0 0
        %4596 = vmatprep.subr.bf16.mxu0 0
        %4597 = vmatpush1.bf16.msra.mxu0 0
        %4598 = vmatprep.subr.bf16.mxu0 0
        %4599 = vmatpush1.bf16.msra.mxu0 0
        %4600 = vmatprep.subr.bf16.mxu0 0
        %4601 = vmatpush1.bf16.msra.mxu0 0
        %4602 = vmatprep.subr.bf16.mxu0 0
        %4603 = vmatpush1.bf16.msra.mxu0 0
        %4604 = vmatprep.mubr.bf16.mxu0 0
        %4605 = vmatmul.mubr.bf16.gmra.mrb[0].mxu0 %v3351
        %v4606 = vpop.f32.mrb[0].mxu0
        %v4607 = vadd.f32 %v3530, %v4606
        %v4608 = vpop.f32.mrb[0].mxu0
        %v4609 = vadd.f32 %v3534, %v4608
        %v4610 = vpop.f32.mrb[0].mxu0
        %v4611 = vadd.f32 %v3530, %v4610
        %v4612 = vpop.f32.mrb[0].mxu0
        %v4613 = vadd.f32 %v3534, %v4612
        %4614 = vmatprep.mubr.bf16.mxu0 0
        %4615 = vmatmul.mubr.bf16.gmra.mrb[0].mxu0 %v3352
        %v4616 = vpop.f32.mrb[0].mxu0
        %v4617 = vadd.f32 %v3530, %v4616
        %v4618 = vpop.f32.mrb[0].mxu0
        %v4619 = vadd.f32 %v3534, %v4618
        %v4620 = vpop.f32.mrb[0].mxu0
        %v4621 = vadd.f32 %v3530, %v4620
        %v4622 = vpop.f32.mrb[0].mxu0
        %v4623 = vadd.f32 %v3534, %v4622
        %4624 = vmatprep.mubr.bf16.mxu0 0
        %4625 = vmatmul.mubr.bf16.gmra.mrb[0].mxu0 %v3353
        %v4626 = vpop.f32.mrb[0].mxu0
        %v4627 = vadd.f32 %v3530, %v4626
        %v4628 = vpop.f32.mrb[0].mxu0
        %v4629 = vadd.f32 %v3534, %v4628
        %v4630 = vpop.f32.mrb[0].mxu0
        %v4631 = vadd.f32 %v3530, %v4630
        %v4632 = vpop.f32.mrb[0].mxu0
        %v4633 = vadd.f32 %v3534, %v4632
        %4634 = vmatprep.mubr.bf16.mxu0 0
        %4635 = vmatmul.mubr.bf16.gmra.mrb[0].mxu0 %v3354
        %v4636 = vpop.f32.mrb[0].mxu0
        %v4637 = vadd.f32 %v3530, %v4636
        %v4638 = vpop.f32.mrb[0].mxu0
        %v4639 = vadd.f32 %v3534, %v4638
        %v4640 = vpop.f32.mrb[0].mxu0
        %v4641 = vadd.f32 %v3530, %v4640
        %v4642 = vpop.f32.mrb[0].mxu0
        %v4643 = vadd.f32 %v3534, %v4642
        %4644 = vdwg.mxu0
        %4645 = vmatprep.subr.bf16.mxu0 %v3964
        %4646 = vmatpush1.bf16.msra.mxu0 %v3963
        %4647 = vmatprep.subr.bf16.mxu0 %v3980
        %4648 = vmatpush1.bf16.msra.mxu0 %v3979
        %4649 = vmatprep.subr.bf16.mxu0 %v3996
        %4650 = vmatpush1.bf16.msra.mxu0 %v3995
        %4651 = vmatprep.subr.bf16.mxu0 %v4012
        %4652 = vmatpush1.bf16.msra.mxu0 %v4011
        %4653 = vmatprep.subr.bf16.mxu0 %v4028
        %4654 = vmatpush1.bf16.msra.mxu0 %v4027
        %4655 = vmatprep.subr.bf16.mxu0 %v4044
        %4656 = vmatpush1.bf16.msra.mxu0 %v4043
        %4657 = vmatprep.subr.bf16.mxu0 %v4060
        %4658 = vmatpush1.bf16.msra.mxu0 %v4059
        %4659 = vmatprep.subr.bf16.mxu0 %v4076
        %4660 = vmatpush1.bf16.msra.mxu0 %v4075
        %4661 = vmatprep.subr.bf16.mxu0 0
        %4662 = vmatpush1.bf16.msra.mxu0 0
        %4663 = vmatprep.subr.bf16.mxu0 0
        %4664 = vmatpush1.bf16.msra.mxu0 0
        %4665 = vmatprep.subr.bf16.mxu0 0
        %4666 = vmatpush1.bf16.msra.mxu0 0
        %4667 = vmatprep.subr.bf16.mxu0 0
        %4668 = vmatpush1.bf16.msra.mxu0 0
        %4669 = vmatprep.subr.bf16.mxu0 0
        %4670 = vmatpush1.bf16.msra.mxu0 0
        %4671 = vmatprep.subr.bf16.mxu0 0
        %4672 = vmatpush1.bf16.msra.mxu0 0
        %4673 = vmatprep.subr.bf16.mxu0 0
        %4674 = vmatpush1.bf16.msra.mxu0 0
        %4675 = vmatprep.subr.bf16.mxu0 0
        %4676 = vmatpush1.bf16.msra.mxu0 0
        %4677 = vmatprep.mubr.bf16.mxu0 0
        %4678 = vmatmul.mubr.bf16.gmra.mrb[0].mxu0 %v3351
        %v4679 = vpop.f32.mrb[0].mxu0
        %v4680 = vadd.f32 %v3538, %v4679
        %v4681 = vpop.f32.mrb[0].mxu0
        %v4682 = vadd.f32 %v3542, %v4681
        %v4683 = vpop.f32.mrb[0].mxu0
        %v4684 = vadd.f32 %v3538, %v4683
        %v4685 = vpop.f32.mrb[0].mxu0
        %v4686 = vadd.f32 %v3542, %v4685
        %4687 = vmatprep.mubr.bf16.mxu0 0
        %4688 = vmatmul.mubr.bf16.gmra.mrb[0].mxu0 %v3352
        %v4689 = vpop.f32.mrb[0].mxu0
        %v4690 = vadd.f32 %v3538, %v4689
        %v4691 = vpop.f32.mrb[0].mxu0
        %v4692 = vadd.f32 %v3542, %v4691
        %v4693 = vpop.f32.mrb[0].mxu0
        %v4694 = vadd.f32 %v3538, %v4693
        %v4695 = vpop.f32.mrb[0].mxu0
        %v4696 = vadd.f32 %v3542, %v4695
        %4697 = vmatprep.mubr.bf16.mxu0 0
        %4698 = vmatmul.mubr.bf16.gmra.mrb[0].mxu0 %v3353
        %v4699 = vpop.f32.mrb[0].mxu0
        %v4700 = vadd.f32 %v3538, %v4699
        %v4701 = vpop.f32.mrb[0].mxu0
        %v4702 = vadd.f32 %v3542, %v4701
        %v4703 = vpop.f32.mrb[0].mxu0
        %v4704 = vadd.f32 %v3538, %v4703
        %v4705 = vpop.f32.mrb[0].mxu0
        %v4706 = vadd.f32 %v3542, %v4705
        %4707 = vmatprep.mubr.bf16.mxu0 0
        %4708 = vmatmul.mubr.bf16.gmra.mrb[0].mxu0 %v3354
        %v4709 = vpop.f32.mrb[0].mxu0
        %v4710 = vadd.f32 %v3538, %v4709
        %v4711 = vpop.f32.mrb[0].mxu0
        %v4712 = vadd.f32 %v3542, %v4711
        %v4713 = vpop.f32.mrb[0].mxu0
        %v4714 = vadd.f32 %v3538, %v4713
        %v4715 = vpop.f32.mrb[0].mxu0
        %v4716 = vadd.f32 %v3542, %v4715
        %4717 = vdwg.mxu0
        %4718 = vmatprep.subr.bf16.mxu0 %v3966
        %4719 = vmatpush1.bf16.msra.mxu0 %v3965
        %4720 = vmatprep.subr.bf16.mxu0 %v3982
        %4721 = vmatpush1.bf16.msra.mxu0 %v3981
        %4722 = vmatprep.subr.bf16.mxu0 %v3998
        %4723 = vmatpush1.bf16.msra.mxu0 %v3997
        %4724 = vmatprep.subr.bf16.mxu0 %v4014
        %4725 = vmatpush1.bf16.msra.mxu0 %v4013
        %4726 = vmatprep.subr.bf16.mxu0 %v4030
        %4727 = vmatpush1.bf16.msra.mxu0 %v4029
        %4728 = vmatprep.subr.bf16.mxu0 %v4046
        %4729 = vmatpush1.bf16.msra.mxu0 %v4045
        %4730 = vmatprep.subr.bf16.mxu0 %v4062
        %4731 = vmatpush1.bf16.msra.mxu0 %v4061
        %4732 = vmatprep.subr.bf16.mxu0 %v4078
        %4733 = vmatpush1.bf16.msra.mxu0 %v4077
        %4734 = vmatprep.subr.bf16.mxu0 0
        %4735 = vmatpush1.bf16.msra.mxu0 0
        %4736 = vmatprep.subr.bf16.mxu0 0
        %4737 = vmatpush1.bf16.msra.mxu0 0
        %4738 = vmatprep.subr.bf16.mxu0 0
        %4739 = vmatpush1.bf16.msra.mxu0 0
        %4740 = vmatprep.subr.bf16.mxu0 0
        %4741 = vmatpush1.bf16.msra.mxu0 0
        %4742 = vmatprep.subr.bf16.mxu0 0
        %4743 = vmatpush1.bf16.msra.mxu0 0
        %4744 = vmatprep.subr.bf16.mxu0 0
        %4745 = vmatpush1.bf16.msra.mxu0 0
        %4746 = vmatprep.subr.bf16.mxu0 0
        %4747 = vmatpush1.bf16.msra.mxu0 0
        %4748 = vmatprep.subr.bf16.mxu0 0
        %4749 = vmatpush1.bf16.msra.mxu0 0
        %4750 = vmatprep.mubr.bf16.mxu0 0
        %4751 = vmatmul.mubr.bf16.gmra.mrb[0].mxu0 %v3351
        %v4752 = vpop.f32.mrb[0].mxu0
        %v4753 = vadd.f32 %v3546, %v4752
        %v4754 = vpop.f32.mrb[0].mxu0
        %v4755 = vadd.f32 %v3550, %v4754
        %v4756 = vpop.f32.mrb[0].mxu0
        %v4757 = vadd.f32 %v3546, %v4756
        %v4758 = vpop.f32.mrb[0].mxu0
        %v4759 = vadd.f32 %v3550, %v4758
        %4760 = vmatprep.mubr.bf16.mxu0 0
        %4761 = vmatmul.mubr.bf16.gmra.mrb[0].mxu0 %v3352
        %v4762 = vpop.f32.mrb[0].mxu0
        %v4763 = vadd.f32 %v3546, %v4762
        %v4764 = vpop.f32.mrb[0].mxu0
        %v4765 = vadd.f32 %v3550, %v4764
        %v4766 = vpop.f32.mrb[0].mxu0
        %v4767 = vadd.f32 %v3546, %v4766
        %v4768 = vpop.f32.mrb[0].mxu0
        %v4769 = vadd.f32 %v3550, %v4768
        %4770 = vmatprep.mubr.bf16.mxu0 0
        %4771 = vmatmul.mubr.bf16.gmra.mrb[0].mxu0 %v3353
        %v4772 = vpop.f32.mrb[0].mxu0
        %v4773 = vadd.f32 %v3546, %v4772
        %v4774 = vpop.f32.mrb[0].mxu0
        %v4775 = vadd.f32 %v3550, %v4774
        %v4776 = vpop.f32.mrb[0].mxu0
        %v4777 = vadd.f32 %v3546, %v4776
        %v4778 = vpop.f32.mrb[0].mxu0
        %v4779 = vadd.f32 %v3550, %v4778
        %4780 = vmatprep.mubr.bf16.mxu0 0
        %4781 = vmatmul.mubr.bf16.gmra.mrb[0].mxu0 %v3354
        %v4782 = vpop.f32.mrb[0].mxu0
        %v4783 = vadd.f32 %v3546, %v4782
        %v4784 = vpop.f32.mrb[0].mxu0
        %v4785 = vadd.f32 %v3550, %v4784
        %v4786 = vpop.f32.mrb[0].mxu0
        %v4787 = vadd.f32 %v3546, %v4786
        %v4788 = vpop.f32.mrb[0].mxu0
        %v4789 = vadd.f32 %v3550, %v4788
        %4790 = vdwg.mxu0
        %v4791 = vmax.f32 %v4242, 0.0
        %v4792 = vmax.f32 %v4244, 0.0
        %v4793 = vmax.f32 %v4315, 0.0
        %v4794 = vmax.f32 %v4317, 0.0
        %v4795 = vmax.f32 %v4388, 0.0
        %v4796 = vmax.f32 %v4390, 0.0
        %v4797 = vmax.f32 %v4461, 0.0
        %v4798 = vmax.f32 %v4463, 0.0
        %v4799 = vmax.f32 %v4534, 0.0
        %v4800 = vmax.f32 %v4536, 0.0
        %v4801 = vmax.f32 %v4607, 0.0
        %v4802 = vmax.f32 %v4609, 0.0
        %v4803 = vmax.f32 %v4680, 0.0
        %v4804 = vmax.f32 %v4682, 0.0
        %v4805 = vmax.f32 %v4753, 0.0
        %v4806 = vmax.f32 %v4755, 0.0
        %v4807 = vmax.f32 %v4246, 0.0
        %v4808 = vmax.f32 %v4248, 0.0
        %v4809 = vmax.f32 %v4319, 0.0
        %v4810 = vmax.f32 %v4321, 0.0
        %v4811 = vmax.f32 %v4392, 0.0
        %v4812 = vmax.f32 %v4394, 0.0
        %v4813 = vmax.f32 %v4465, 0.0
        %v4814 = vmax.f32 %v4467, 0.0
        %v4815 = vmax.f32 %v4538, 0.0
        %v4816 = vmax.f32 %v4540, 0.0
        %v4817 = vmax.f32 %v4611, 0.0
        %v4818 = vmax.f32 %v4613, 0.0
        %v4819 = vmax.f32 %v4684, 0.0
        %v4820 = vmax.f32 %v4686, 0.0
        %v4821 = vmax.f32 %v4757, 0.0
        %v4822 = vmax.f32 %v4759, 0.0
        %v4823 = vmax.f32 %v4252, 0.0
        %v4824 = vmax.f32 %v4254, 0.0
        %v4825 = vmax.f32 %v4325, 0.0
        %v4826 = vmax.f32 %v4327, 0.0
        %v4827 = vmax.f32 %v4398, 0.0
        %v4828 = vmax.f32 %v4400, 0.0
        %v4829 = vmax.f32 %v4471, 0.0
        %v4830 = vmax.f32 %v4473, 0.0
        %v4831 = vmax.f32 %v4544, 0.0
        %v4832 = vmax.f32 %v4546, 0.0
        %v4833 = vmax.f32 %v4617, 0.0
        %v4834 = vmax.f32 %v4619, 0.0
        %v4835 = vmax.f32 %v4690, 0.0
        %v4836 = vmax.f32 %v4692, 0.0
        %v4837 = vmax.f32 %v4763, 0.0
        %v4838 = vmax.f32 %v4765, 0.0
        %v4839 = vmax.f32 %v4256, 0.0
        %v4840 = vmax.f32 %v4258, 0.0
        %v4841 = vmax.f32 %v4329, 0.0
        %v4842 = vmax.f32 %v4331, 0.0
        %v4843 = vmax.f32 %v4402, 0.0
        %v4844 = vmax.f32 %v4404, 0.0
        %v4845 = vmax.f32 %v4475, 0.0
        %v4846 = vmax.f32 %v4477, 0.0
        %v4847 = vmax.f32 %v4548, 0.0
        %v4848 = vmax.f32 %v4550, 0.0
        %v4849 = vmax.f32 %v4621, 0.0
        %v4850 = vmax.f32 %v4623, 0.0
        %v4851 = vmax.f32 %v4694, 0.0
        %v4852 = vmax.f32 %v4696, 0.0
        %v4853 = vmax.f32 %v4767, 0.0
        %v4854 = vmax.f32 %v4769, 0.0
        %v4855 = vmax.f32 %v4262, 0.0
        %v4856 = vmax.f32 %v4264, 0.0
        %v4857 = vmax.f32 %v4335, 0.0
        %v4858 = vmax.f32 %v4337, 0.0
        %v4859 = vmax.f32 %v4408, 0.0
        %v4860 = vmax.f32 %v4410, 0.0
        %v4861 = vmax.f32 %v4481, 0.0
        %v4862 = vmax.f32 %v4483, 0.0
        %v4863 = vmax.f32 %v4554, 0.0
        %v4864 = vmax.f32 %v4556, 0.0
        %v4865 = vmax.f32 %v4627, 0.0
        %v4866 = vmax.f32 %v4629, 0.0
        %v4867 = vmax.f32 %v4700, 0.0
        %v4868 = vmax.f32 %v4702, 0.0
        %v4869 = vmax.f32 %v4773, 0.0
        %v4870 = vmax.f32 %v4775, 0.0
        %v4871 = vmax.f32 %v4266, 0.0
        %v4872 = vmax.f32 %v4268, 0.0
        %v4873 = vmax.f32 %v4339, 0.0
        %v4874 = vmax.f32 %v4341, 0.0
        %v4875 = vmax.f32 %v4412, 0.0
        %v4876 = vmax.f32 %v4414, 0.0
        %v4877 = vmax.f32 %v4485, 0.0
        %v4878 = vmax.f32 %v4487, 0.0
        %v4879 = vmax.f32 %v4558, 0.0
        %v4880 = vmax.f32 %v4560, 0.0
        %v4881 = vmax.f32 %v4631, 0.0
        %v4882 = vmax.f32 %v4633, 0.0
        %v4883 = vmax.f32 %v4704, 0.0
        %v4884 = vmax.f32 %v4706, 0.0
        %v4885 = vmax.f32 %v4777, 0.0
        %v4886 = vmax.f32 %v4779, 0.0
        %v4887 = vmax.f32 %v4272, 0.0
        %v4888 = vmax.f32 %v4274, 0.0
        %v4889 = vmax.f32 %v4345, 0.0
        %v4890 = vmax.f32 %v4347, 0.0
        %v4891 = vmax.f32 %v4418, 0.0
        %v4892 = vmax.f32 %v4420, 0.0
        %v4893 = vmax.f32 %v4491, 0.0
        %v4894 = vmax.f32 %v4493, 0.0
        %v4895 = vmax.f32 %v4564, 0.0
        %v4896 = vmax.f32 %v4566, 0.0
        %v4897 = vmax.f32 %v4637, 0.0
        %v4898 = vmax.f32 %v4639, 0.0
        %v4899 = vmax.f32 %v4710, 0.0
        %v4900 = vmax.f32 %v4712, 0.0
        %v4901 = vmax.f32 %v4783, 0.0
        %v4902 = vmax.f32 %v4785, 0.0
        %v4903 = vmax.f32 %v4276, 0.0
        %v4904 = vmax.f32 %v4278, 0.0
        %v4905 = vmax.f32 %v4349, 0.0
        %v4906 = vmax.f32 %v4351, 0.0
        %v4907 = vmax.f32 %v4422, 0.0
        %v4908 = vmax.f32 %v4424, 0.0
        %v4909 = vmax.f32 %v4495, 0.0
        %v4910 = vmax.f32 %v4497, 0.0
        %v4911 = vmax.f32 %v4568, 0.0
        %v4912 = vmax.f32 %v4570, 0.0
        %v4913 = vmax.f32 %v4641, 0.0
        %v4914 = vmax.f32 %v4643, 0.0
        %v4915 = vmax.f32 %v4714, 0.0
        %v4916 = vmax.f32 %v4716, 0.0
        %v4917 = vmax.f32 %v4787, 0.0
        %v4918 = vmax.f32 %v4789, 0.0
        %v4919 = vpack.c.bf16 %v4807, %v4791
        %v4920 = vpack.c.bf16 %v4808, %v4792
        %v4921 = vpack.c.bf16 %v4809, %v4793
        %v4922 = vpack.c.bf16 %v4810, %v4794
        %v4923 = vpack.c.bf16 %v4811, %v4795
        %v4924 = vpack.c.bf16 %v4812, %v4796
        %v4925 = vpack.c.bf16 %v4813, %v4797
        %v4926 = vpack.c.bf16 %v4814, %v4798
        %v4927 = vpack.c.bf16 %v4815, %v4799
        %v4928 = vpack.c.bf16 %v4816, %v4800
        %v4929 = vpack.c.bf16 %v4817, %v4801
        %v4930 = vpack.c.bf16 %v4818, %v4802
        %v4931 = vpack.c.bf16 %v4819, %v4803
        %v4932 = vpack.c.bf16 %v4820, %v4804
        %v4933 = vpack.c.bf16 %v4821, %v4805
        %v4934 = vpack.c.bf16 %v4822, %v4806
        %v4935 = vpack.c.bf16 %v4839, %v4823
        %v4936 = vpack.c.bf16 %v4840, %v4824
        %v4937 = vpack.c.bf16 %v4841, %v4825
        %v4938 = vpack.c.bf16 %v4842, %v4826
        %v4939 = vpack.c.bf16 %v4843, %v4827
        %v4940 = vpack.c.bf16 %v4844, %v4828
        %v4941 = vpack.c.bf16 %v4845, %v4829
        %v4942 = vpack.c.bf16 %v4846, %v4830
        %v4943 = vpack.c.bf16 %v4847, %v4831
        %v4944 = vpack.c.bf16 %v4848, %v4832
        %v4945 = vpack.c.bf16 %v4849, %v4833
        %v4946 = vpack.c.bf16 %v4850, %v4834
        %v4947 = vpack.c.bf16 %v4851, %v4835
        %v4948 = vpack.c.bf16 %v4852, %v4836
        %v4949 = vpack.c.bf16 %v4853, %v4837
        %v4950 = vpack.c.bf16 %v4854, %v4838
        %v4951 = vpack.c.bf16 %v4871, %v4855
        %v4952 = vpack.c.bf16 %v4872, %v4856
        %v4953 = vpack.c.bf16 %v4873, %v4857
        %v4954 = vpack.c.bf16 %v4874, %v4858
        %v4955 = vpack.c.bf16 %v4875, %v4859
        %v4956 = vpack.c.bf16 %v4876, %v4860
        %v4957 = vpack.c.bf16 %v4877, %v4861
        %v4958 = vpack.c.bf16 %v4878, %v4862
        %v4959 = vpack.c.bf16 %v4879, %v4863
        %v4960 = vpack.c.bf16 %v4880, %v4864
        %v4961 = vpack.c.bf16 %v4881, %v4865
        %v4962 = vpack.c.bf16 %v4882, %v4866
        %v4963 = vpack.c.bf16 %v4883, %v4867
        %v4964 = vpack.c.bf16 %v4884, %v4868
        %v4965 = vpack.c.bf16 %v4885, %v4869
        %v4966 = vpack.c.bf16 %v4886, %v4870
        %v4967 = vpack.c.bf16 %v4903, %v4887
        %v4968 = vpack.c.bf16 %v4904, %v4888
        %v4969 = vpack.c.bf16 %v4905, %v4889
        %v4970 = vpack.c.bf16 %v4906, %v4890
        %v4971 = vpack.c.bf16 %v4907, %v4891
        %v4972 = vpack.c.bf16 %v4908, %v4892
        %v4973 = vpack.c.bf16 %v4909, %v4893
        %v4974 = vpack.c.bf16 %v4910, %v4894
        %v4975 = vpack.c.bf16 %v4911, %v4895
        %v4976 = vpack.c.bf16 %v4912, %v4896
        %v4977 = vpack.c.bf16 %v4913, %v4897
        %v4978 = vpack.c.bf16 %v4914, %v4898
        %v4979 = vpack.c.bf16 %v4915, %v4899
        %v4980 = vpack.c.bf16 %v4916, %v4900
        %v4981 = vpack.c.bf16 %v4917, %v4901
        %v4982 = vpack.c.bf16 %v4918, %v4902
        %v4983 = vld [vmem:[#allocation10] sm:$0xf]
        %v4984 = vld [vmem:[#allocation10 + $0x4] sm:$0xf]
        %v4985 = vld [vmem:[#allocation10 + $0x8] sm:$0xf]
        %v4986 = vld [vmem:[#allocation10 + $0xc] sm:$0xf]
        %v4987 = vld [vmem:[#allocation10 + $0x10] sm:$0xf]
        %v4988 = vld [vmem:[#allocation10 + $0x14] sm:$0xf]
        %v4989 = vld [vmem:[#allocation10 + $0x18] sm:$0xf]
        %v4990 = vld [vmem:[#allocation10 + $0x1c] sm:$0xf]
        %v4991 = vld [vmem:[#allocation10 + $0x20] sm:$0xf]
        %v4992 = vld [vmem:[#allocation10 + $0x24] sm:$0xf]
        %v4993 = vld [vmem:[#allocation10 + $0x28] sm:$0xf]
        %v4994 = vld [vmem:[#allocation10 + $0x2c] sm:$0xf]
        %v4995 = vld [vmem:[#allocation10 + $0x30] sm:$0xf]
        %v4996 = vld [vmem:[#allocation10 + $0x34] sm:$0xf]
        %v4997 = vld [vmem:[#allocation10 + $0x38] sm:$0xf]
        %v4998 = vld [vmem:[#allocation10 + $0x3c] sm:$0xf]
        %v4999 = vld [vmem:[#allocation10 + $0x40] sm:$0xf]
        %v5000 = vld [vmem:[#allocation10 + $0x44] sm:$0xf]
        %v5001 = vld [vmem:[#allocation10 + $0x48] sm:$0xf]
        %v5002 = vld [vmem:[#allocation10 + $0x4c] sm:$0xf]
        %v5003 = vld [vmem:[#allocation10 + $0x50] sm:$0xf]
        %v5004 = vld [vmem:[#allocation10 + $0x54] sm:$0xf]
        %v5005 = vld [vmem:[#allocation10 + $0x58] sm:$0xf]
        %v5006 = vld [vmem:[#allocation10 + $0x5c] sm:$0xf]
        %v5007 = vld [vmem:[#allocation10 + $0x60] sm:$0xf]
        %v5008 = vld [vmem:[#allocation10 + $0x64] sm:$0xf]
        %v5009 = vld [vmem:[#allocation10 + $0x68] sm:$0xf]
        %v5010 = vld [vmem:[#allocation10 + $0x6c] sm:$0xf]
        %v5011 = vld [vmem:[#allocation10 + $0x70] sm:$0xf]
        %v5012 = vld [vmem:[#allocation10 + $0x74] sm:$0xf]
        %v5013 = vld [vmem:[#allocation10 + $0x78] sm:$0xf]
        %v5014 = vld [vmem:[#allocation10 + $0x7c] sm:$0xf]
        %v5015 = vld [vmem:[#allocation10 + $0x80] sm:$0xf]
        %v5016 = vld [vmem:[#allocation10 + $0x84] sm:$0xf]
        %v5017 = vld [vmem:[#allocation10 + $0x88] sm:$0xf]
        %v5018 = vld [vmem:[#allocation10 + $0x8c] sm:$0xf]
        %v5019 = vld [vmem:[#allocation10 + $0x90] sm:$0xf]
        %v5020 = vld [vmem:[#allocation10 + $0x94] sm:$0xf]
        %v5021 = vld [vmem:[#allocation10 + $0x98] sm:$0xf]
        %v5022 = vld [vmem:[#allocation10 + $0x9c] sm:$0xf]
        %v5023 = vld [vmem:[#allocation10 + $0xa0] sm:$0xf]
        %v5024 = vld [vmem:[#allocation10 + $0xa4] sm:$0xf]
        %v5025 = vld [vmem:[#allocation10 + $0xa8] sm:$0xf]
        %v5026 = vld [vmem:[#allocation10 + $0xac] sm:$0xf]
        %v5027 = vld [vmem:[#allocation10 + $0xb0] sm:$0xf]
        %v5028 = vld [vmem:[#allocation10 + $0xb4] sm:$0xf]
        %v5029 = vld [vmem:[#allocation10 + $0xb8] sm:$0xf]
        %v5030 = vld [vmem:[#allocation10 + $0xbc] sm:$0xf]
        %v5031 = vld [vmem:[#allocation10 + $0xc0] sm:$0xf]
        %v5032 = vld [vmem:[#allocation10 + $0xc4] sm:$0xf]
        %v5033 = vld [vmem:[#allocation10 + $0xc8] sm:$0xf]
        %v5034 = vld [vmem:[#allocation10 + $0xcc] sm:$0xf]
        %v5035 = vld [vmem:[#allocation10 + $0xd0] sm:$0xf]
        %v5036 = vld [vmem:[#allocation10 + $0xd4] sm:$0xf]
        %v5037 = vld [vmem:[#allocation10 + $0xd8] sm:$0xf]
        %v5038 = vld [vmem:[#allocation10 + $0xdc] sm:$0xf]
        %v5039 = vld [vmem:[#allocation10 + $0xe0] sm:$0xf]
        %v5040 = vld [vmem:[#allocation10 + $0xe4] sm:$0xf]
        %v5041 = vld [vmem:[#allocation10 + $0xe8] sm:$0xf]
        %v5042 = vld [vmem:[#allocation10 + $0xec] sm:$0xf]
        %v5043 = vld [vmem:[#allocation10 + $0xf0] sm:$0xf]
        %v5044 = vld [vmem:[#allocation10 + $0xf4] sm:$0xf]
        %v5045 = vld [vmem:[#allocation10 + $0xf8] sm:$0xf]
        %v5046 = vld [vmem:[#allocation10 + $0xfc] sm:$0xf]
        %v5047 = vld [vmem:[#allocation10 + $0x100] sm:$0xf]
        %v5048 = vld [vmem:[#allocation10 + $0x104] sm:$0xf]
        %v5049 = vld [vmem:[#allocation10 + $0x108] sm:$0xf]
        %v5050 = vld [vmem:[#allocation10 + $0x10c] sm:$0xf]
        %v5051 = vld [vmem:[#allocation10 + $0x110] sm:$0xf]
        %v5052 = vld [vmem:[#allocation10 + $0x114] sm:$0xf]
        %v5053 = vld [vmem:[#allocation10 + $0x118] sm:$0xf]
        %v5054 = vld [vmem:[#allocation10 + $0x11c] sm:$0xf]
        %v5055 = vld [vmem:[#allocation10 + $0x120] sm:$0xf]
        %v5056 = vld [vmem:[#allocation10 + $0x124] sm:$0xf]
        %v5057 = vld [vmem:[#allocation10 + $0x128] sm:$0xf]
        %v5058 = vld [vmem:[#allocation10 + $0x12c] sm:$0xf]
        %v5059 = vld [vmem:[#allocation10 + $0x130] sm:$0xf]
        %v5060 = vld [vmem:[#allocation10 + $0x134] sm:$0xf]
        %v5061 = vld [vmem:[#allocation10 + $0x138] sm:$0xf]
        %v5062 = vld [vmem:[#allocation10 + $0x13c] sm:$0xf]
        %v5063 = vld [vmem:[#allocation10 + $0x140] sm:$0xf]
        %v5064 = vld [vmem:[#allocation10 + $0x144] sm:$0xf]
        %v5065 = vld [vmem:[#allocation10 + $0x148] sm:$0xf]
        %v5066 = vld [vmem:[#allocation10 + $0x14c] sm:$0xf]
        %v5067 = vld [vmem:[#allocation10 + $0x150] sm:$0xf]
        %v5068 = vld [vmem:[#allocation10 + $0x154] sm:$0xf]
        %v5069 = vld [vmem:[#allocation10 + $0x158] sm:$0xf]
        %v5070 = vld [vmem:[#allocation10 + $0x15c] sm:$0xf]
        %v5071 = vld [vmem:[#allocation10 + $0x160] sm:$0xf]
        %v5072 = vld [vmem:[#allocation10 + $0x164] sm:$0xf]
        %v5073 = vld [vmem:[#allocation10 + $0x168] sm:$0xf]
        %v5074 = vld [vmem:[#allocation10 + $0x16c] sm:$0xf]
        %v5075 = vld [vmem:[#allocation10 + $0x170] sm:$0xf]
        %v5076 = vld [vmem:[#allocation10 + $0x174] sm:$0xf]
        %v5077 = vld [vmem:[#allocation10 + $0x178] sm:$0xf]
        %v5078 = vld [vmem:[#allocation10 + $0x17c] sm:$0xf]
        %v5079 = vld [vmem:[#allocation10 + $0x180] sm:$0xf]
        %v5080 = vld [vmem:[#allocation10 + $0x184] sm:$0xf]
        %v5081 = vld [vmem:[#allocation10 + $0x188] sm:$0xf]
        %v5082 = vld [vmem:[#allocation10 + $0x18c] sm:$0xf]
        %v5083 = vld [vmem:[#allocation10 + $0x190] sm:$0xf]
        %v5084 = vld [vmem:[#allocation10 + $0x194] sm:$0xf]
        %v5085 = vld [vmem:[#allocation10 + $0x198] sm:$0xf]
        %v5086 = vld [vmem:[#allocation10 + $0x19c] sm:$0xf]
        %v5087 = vld [vmem:[#allocation10 + $0x1a0] sm:$0xf]
        %v5088 = vld [vmem:[#allocation10 + $0x1a4] sm:$0xf]
        %v5089 = vld [vmem:[#allocation10 + $0x1a8] sm:$0xf]
        %v5090 = vld [vmem:[#allocation10 + $0x1ac] sm:$0xf]
        %v5091 = vld [vmem:[#allocation10 + $0x1b0] sm:$0xf]
        %v5092 = vld [vmem:[#allocation10 + $0x1b4] sm:$0xf]
        %v5093 = vld [vmem:[#allocation10 + $0x1b8] sm:$0xf]
        %v5094 = vld [vmem:[#allocation10 + $0x1bc] sm:$0xf]
        %v5095 = vld [vmem:[#allocation10 + $0x1c0] sm:$0xf]
        %v5096 = vld [vmem:[#allocation10 + $0x1c4] sm:$0xf]
        %v5097 = vld [vmem:[#allocation10 + $0x1c8] sm:$0xf]
        %v5098 = vld [vmem:[#allocation10 + $0x1cc] sm:$0xf]
        %v5099 = vld [vmem:[#allocation10 + $0x1d0] sm:$0xf]
        %v5100 = vld [vmem:[#allocation10 + $0x1d4] sm:$0xf]
        %v5101 = vld [vmem:[#allocation10 + $0x1d8] sm:$0xf]
        %v5102 = vld [vmem:[#allocation10 + $0x1dc] sm:$0xf]
        %v5103 = vld [vmem:[#allocation10 + $0x1e0] sm:$0xf]
        %v5104 = vld [vmem:[#allocation10 + $0x1e4] sm:$0xf]
        %v5105 = vld [vmem:[#allocation10 + $0x1e8] sm:$0xf]
        %v5106 = vld [vmem:[#allocation10 + $0x1ec] sm:$0xf]
        %v5107 = vld [vmem:[#allocation10 + $0x1f0] sm:$0xf]
        %v5108 = vld [vmem:[#allocation10 + $0x1f4] sm:$0xf]
        %v5109 = vld [vmem:[#allocation10 + $0x1f8] sm:$0xf]
        %v5110 = vld [vmem:[#allocation10 + $0x1fc] sm:$0xf]
        %v5111 = vld [vmem:[#allocation10 + $0x200] sm:$0xf]
        %v5112 = vld [vmem:[#allocation10 + $0x204] sm:$0xf]
        %v5113 = vld [vmem:[#allocation10 + $0x208] sm:$0xf]
        %v5114 = vld [vmem:[#allocation10 + $0x20c] sm:$0xf]
        %v5115 = vld [vmem:[#allocation10 + $0x210] sm:$0xf]
        %v5116 = vld [vmem:[#allocation10 + $0x214] sm:$0xf]
        %v5117 = vld [vmem:[#allocation10 + $0x218] sm:$0xf]
        %v5118 = vld [vmem:[#allocation10 + $0x21c] sm:$0xf]
        %v5119 = vld [vmem:[#allocation10 + $0x220] sm:$0xf]
        %v5120 = vld [vmem:[#allocation10 + $0x224] sm:$0xf]
        %v5121 = vld [vmem:[#allocation10 + $0x228] sm:$0xf]
        %v5122 = vld [vmem:[#allocation10 + $0x22c] sm:$0xf]
        %v5123 = vld [vmem:[#allocation10 + $0x230] sm:$0xf]
        %v5124 = vld [vmem:[#allocation10 + $0x234] sm:$0xf]
        %v5125 = vld [vmem:[#allocation10 + $0x238] sm:$0xf]
        %v5126 = vld [vmem:[#allocation10 + $0x23c] sm:$0xf]
        %v5127 = vld [vmem:[#allocation10 + $0x240] sm:$0xf]
        %v5128 = vld [vmem:[#allocation10 + $0x244] sm:$0xf]
        %v5129 = vld [vmem:[#allocation10 + $0x248] sm:$0xf]
        %v5130 = vld [vmem:[#allocation10 + $0x24c] sm:$0xf]
        %v5131 = vld [vmem:[#allocation10 + $0x250] sm:$0xf]
        %v5132 = vld [vmem:[#allocation10 + $0x254] sm:$0xf]
        %v5133 = vld [vmem:[#allocation10 + $0x258] sm:$0xf]
        %v5134 = vld [vmem:[#allocation10 + $0x25c] sm:$0xf]
        %v5135 = vld [vmem:[#allocation10 + $0x260] sm:$0xf]
        %v5136 = vld [vmem:[#allocation10 + $0x264] sm:$0xf]
        %v5137 = vld [vmem:[#allocation10 + $0x268] sm:$0xf]
        %v5138 = vld [vmem:[#allocation10 + $0x26c] sm:$0xf]
        %v5139 = vld [vmem:[#allocation10 + $0x270] sm:$0xf]
        %v5140 = vld [vmem:[#allocation10 + $0x274] sm:$0xf]
        %v5141 = vld [vmem:[#allocation10 + $0x278] sm:$0xf]
        %v5142 = vld [vmem:[#allocation10 + $0x27c] sm:$0xf]
        %v5143 = vld [vmem:[#allocation10 + $0x280] sm:$0xf]
        %v5144 = vld [vmem:[#allocation10 + $0x284] sm:$0xf]
        %v5145 = vld [vmem:[#allocation10 + $0x288] sm:$0xf]
        %v5146 = vld [vmem:[#allocation10 + $0x28c] sm:$0xf]
        %v5147 = vld [vmem:[#allocation10 + $0x290] sm:$0xf]
        %v5148 = vld [vmem:[#allocation10 + $0x294] sm:$0xf]
        %v5149 = vld [vmem:[#allocation10 + $0x298] sm:$0xf]
        %v5150 = vld [vmem:[#allocation10 + $0x29c] sm:$0xf]
        %v5151 = vld [vmem:[#allocation10 + $0x2a0] sm:$0xf]
        %v5152 = vld [vmem:[#allocation10 + $0x2a4] sm:$0xf]
        %v5153 = vld [vmem:[#allocation10 + $0x2a8] sm:$0xf]
        %v5154 = vld [vmem:[#allocation10 + $0x2ac] sm:$0xf]
        %v5155 = vld [vmem:[#allocation10 + $0x2b0] sm:$0xf]
        %v5156 = vld [vmem:[#allocation10 + $0x2b4] sm:$0xf]
        %v5157 = vld [vmem:[#allocation10 + $0x2b8] sm:$0xf]
        %v5158 = vld [vmem:[#allocation10 + $0x2bc] sm:$0xf]
        %v5159 = vld [vmem:[#allocation10 + $0x2c0] sm:$0xf]
        %v5160 = vld [vmem:[#allocation10 + $0x2c4] sm:$0xf]
        %v5161 = vld [vmem:[#allocation10 + $0x2c8] sm:$0xf]
        %v5162 = vld [vmem:[#allocation10 + $0x2cc] sm:$0xf]
        %v5163 = vld [vmem:[#allocation10 + $0x2d0] sm:$0xf]
        %v5164 = vld [vmem:[#allocation10 + $0x2d4] sm:$0xf]
        %v5165 = vld [vmem:[#allocation10 + $0x2d8] sm:$0xf]
        %v5166 = vld [vmem:[#allocation10 + $0x2dc] sm:$0xf]
        %v5167 = vld [vmem:[#allocation10 + $0x2e0] sm:$0xf]
        %v5168 = vld [vmem:[#allocation10 + $0x2e4] sm:$0xf]
        %v5169 = vld [vmem:[#allocation10 + $0x2e8] sm:$0xf]
        %v5170 = vld [vmem:[#allocation10 + $0x2ec] sm:$0xf]
        %v5171 = vld [vmem:[#allocation10 + $0x2f0] sm:$0xf]
        %v5172 = vld [vmem:[#allocation10 + $0x2f4] sm:$0xf]
        %v5173 = vld [vmem:[#allocation10 + $0x2f8] sm:$0xf]
        %v5174 = vld [vmem:[#allocation10 + $0x2fc] sm:$0xf]
        %v5175 = vld [vmem:[#allocation10 + $0x300] sm:$0xf]
        %v5176 = vld [vmem:[#allocation10 + $0x304] sm:$0xf]
        %v5177 = vld [vmem:[#allocation10 + $0x308] sm:$0xf]
        %v5178 = vld [vmem:[#allocation10 + $0x30c] sm:$0xf]
        %v5179 = vld [vmem:[#allocation10 + $0x310] sm:$0xf]
        %v5180 = vld [vmem:[#allocation10 + $0x314] sm:$0xf]
        %v5181 = vld [vmem:[#allocation10 + $0x318] sm:$0xf]
        %v5182 = vld [vmem:[#allocation10 + $0x31c] sm:$0xf]
        %v5183 = vld [vmem:[#allocation10 + $0x320] sm:$0xf]
        %v5184 = vld [vmem:[#allocation10 + $0x324] sm:$0xf]
        %v5185 = vld [vmem:[#allocation10 + $0x328] sm:$0xf]
        %v5186 = vld [vmem:[#allocation10 + $0x32c] sm:$0xf]
        %v5187 = vld [vmem:[#allocation10 + $0x330] sm:$0xf]
        %v5188 = vld [vmem:[#allocation10 + $0x334] sm:$0xf]
        %v5189 = vld [vmem:[#allocation10 + $0x338] sm:$0xf]
        %v5190 = vld [vmem:[#allocation10 + $0x33c] sm:$0xf]
        %v5191 = vld [vmem:[#allocation10 + $0x340] sm:$0xf]
        %v5192 = vld [vmem:[#allocation10 + $0x344] sm:$0xf]
        %v5193 = vld [vmem:[#allocation10 + $0x348] sm:$0xf]
        %v5194 = vld [vmem:[#allocation10 + $0x34c] sm:$0xf]
        %v5195 = vld [vmem:[#allocation10 + $0x350] sm:$0xf]
        %v5196 = vld [vmem:[#allocation10 + $0x354] sm:$0xf]
        %v5197 = vld [vmem:[#allocation10 + $0x358] sm:$0xf]
        %v5198 = vld [vmem:[#allocation10 + $0x35c] sm:$0xf]
        %v5199 = vld [vmem:[#allocation10 + $0x360] sm:$0xf]
        %v5200 = vld [vmem:[#allocation10 + $0x364] sm:$0xf]
        %v5201 = vld [vmem:[#allocation10 + $0x368] sm:$0xf]
        %v5202 = vld [vmem:[#allocation10 + $0x36c] sm:$0xf]
        %v5203 = vld [vmem:[#allocation10 + $0x370] sm:$0xf]
        %v5204 = vld [vmem:[#allocation10 + $0x374] sm:$0xf]
        %v5205 = vld [vmem:[#allocation10 + $0x378] sm:$0xf]
        %v5206 = vld [vmem:[#allocation10 + $0x37c] sm:$0xf]
        %v5207 = vld [vmem:[#allocation10 + $0x380] sm:$0xf]
        %v5208 = vld [vmem:[#allocation10 + $0x384] sm:$0xf]
        %v5209 = vld [vmem:[#allocation10 + $0x388] sm:$0xf]
        %v5210 = vld [vmem:[#allocation10 + $0x38c] sm:$0xf]
        %v5211 = vld [vmem:[#allocation10 + $0x390] sm:$0xf]
        %v5212 = vld [vmem:[#allocation10 + $0x394] sm:$0xf]
        %v5213 = vld [vmem:[#allocation10 + $0x398] sm:$0xf]
        %v5214 = vld [vmem:[#allocation10 + $0x39c] sm:$0xf]
        %v5215 = vld [vmem:[#allocation10 + $0x3a0] sm:$0xf]
        %v5216 = vld [vmem:[#allocation10 + $0x3a4] sm:$0xf]
        %v5217 = vld [vmem:[#allocation10 + $0x3a8] sm:$0xf]
        %v5218 = vld [vmem:[#allocation10 + $0x3ac] sm:$0xf]
        %v5219 = vld [vmem:[#allocation10 + $0x3b0] sm:$0xf]
        %v5220 = vld [vmem:[#allocation10 + $0x3b4] sm:$0xf]
        %v5221 = vld [vmem:[#allocation10 + $0x3b8] sm:$0xf]
        %v5222 = vld [vmem:[#allocation10 + $0x3bc] sm:$0xf]
        %v5223 = vld [vmem:[#allocation10 + $0x3c0] sm:$0xf]
        %v5224 = vld [vmem:[#allocation10 + $0x3c4] sm:$0xf]
        %v5225 = vld [vmem:[#allocation10 + $0x3c8] sm:$0xf]
        %v5226 = vld [vmem:[#allocation10 + $0x3cc] sm:$0xf]
        %v5227 = vld [vmem:[#allocation10 + $0x3d0] sm:$0xf]
        %v5228 = vld [vmem:[#allocation10 + $0x3d4] sm:$0xf]
        %v5229 = vld [vmem:[#allocation10 + $0x3d8] sm:$0xf]
        %v5230 = vld [vmem:[#allocation10 + $0x3dc] sm:$0xf]
        %v5231 = vld [vmem:[#allocation10 + $0x3e0] sm:$0xf]
        %v5232 = vld [vmem:[#allocation10 + $0x3e4] sm:$0xf]
        %v5233 = vld [vmem:[#allocation10 + $0x3e8] sm:$0xf]
        %v5234 = vld [vmem:[#allocation10 + $0x3ec] sm:$0xf]
        %v5235 = vld [vmem:[#allocation10 + $0x3f0] sm:$0xf]
        %v5236 = vld [vmem:[#allocation10 + $0x3f4] sm:$0xf]
        %v5237 = vld [vmem:[#allocation10 + $0x3f8] sm:$0xf]
        %v5238 = vld [vmem:[#allocation10 + $0x3fc] sm:$0xf]
        %v5239 = vld [vmem:[%s10] sm:$0x1]
        %v5241 = vlaneseq
        %v5242 = vshrl.u32 %v5241, 7
        %v5243 = vsub.s32 0, %v5242
        %v5244 = vrot.slane %v5239, %v5243
        %v5502 = vunpack.c.l.b16 %v4983
        %v5503 = vunpack.c.l.b16 %v4984
        %v5504 = vunpack.c.l.b16 %v4985
        %v5505 = vunpack.c.l.b16 %v4986
        %v5506 = vunpack.c.l.b16 %v4987
        %v5507 = vunpack.c.l.b16 %v4988
        %v5508 = vunpack.c.l.b16 %v4989
        %v5509 = vunpack.c.l.b16 %v4990
        %v5510 = vunpack.c.l.b16 %v4991
        %v5511 = vunpack.c.l.b16 %v4992
        %v5512 = vunpack.c.l.b16 %v4993
        %v5513 = vunpack.c.l.b16 %v4994
        %v5514 = vunpack.c.l.b16 %v4995
        %v5515 = vunpack.c.l.b16 %v4996
        %v5516 = vunpack.c.l.b16 %v4997
        %v5517 = vunpack.c.l.b16 %v4998
        %v5518 = vunpack.c.l.b16 %v4999
        %v5519 = vunpack.c.l.b16 %v5000
        %v5520 = vunpack.c.l.b16 %v5001
        %v5521 = vunpack.c.l.b16 %v5002
        %v5522 = vunpack.c.l.b16 %v5003
        %v5523 = vunpack.c.l.b16 %v5004
        %v5524 = vunpack.c.l.b16 %v5005
        %v5525 = vunpack.c.l.b16 %v5006
        %v5526 = vunpack.c.l.b16 %v5007
        %v5527 = vunpack.c.l.b16 %v5008
        %v5528 = vunpack.c.l.b16 %v5009
        %v5529 = vunpack.c.l.b16 %v5010
        %v5530 = vunpack.c.l.b16 %v5011
        %v5531 = vunpack.c.l.b16 %v5012
        %v5532 = vunpack.c.l.b16 %v5013
        %v5533 = vunpack.c.l.b16 %v5014
        %v5534 = vunpack.c.l.b16 %v5015
        %v5535 = vunpack.c.l.b16 %v5016
        %v5536 = vunpack.c.l.b16 %v5017
        %v5537 = vunpack.c.l.b16 %v5018
        %v5538 = vunpack.c.l.b16 %v5019
        %v5539 = vunpack.c.l.b16 %v5020
        %v5540 = vunpack.c.l.b16 %v5021
        %v5541 = vunpack.c.l.b16 %v5022
        %v5542 = vunpack.c.l.b16 %v5023
        %v5543 = vunpack.c.l.b16 %v5024
        %v5544 = vunpack.c.l.b16 %v5025
        %v5545 = vunpack.c.l.b16 %v5026
        %v5546 = vunpack.c.l.b16 %v5027
        %v5547 = vunpack.c.l.b16 %v5028
        %v5548 = vunpack.c.l.b16 %v5029
        %v5549 = vunpack.c.l.b16 %v5030
        %v5550 = vunpack.c.l.b16 %v5031
        %v5551 = vunpack.c.l.b16 %v5032
        %v5552 = vunpack.c.l.b16 %v5033
        %v5553 = vunpack.c.l.b16 %v5034
        %v5554 = vunpack.c.l.b16 %v5035
        %v5555 = vunpack.c.l.b16 %v5036
        %v5556 = vunpack.c.l.b16 %v5037
        %v5557 = vunpack.c.l.b16 %v5038
        %v5558 = vunpack.c.l.b16 %v5039
        %v5559 = vunpack.c.l.b16 %v5040
        %v5560 = vunpack.c.l.b16 %v5041
        %v5561 = vunpack.c.l.b16 %v5042
        %v5562 = vunpack.c.l.b16 %v5043
        %v5563 = vunpack.c.l.b16 %v5044
        %v5564 = vunpack.c.l.b16 %v5045
        %v5565 = vunpack.c.l.b16 %v5046
        %v5566 = vunpack.c.l.b16 %v5047
        %v5567 = vunpack.c.l.b16 %v5048
        %v5568 = vunpack.c.l.b16 %v5049
        %v5569 = vunpack.c.l.b16 %v5050
        %v5570 = vunpack.c.l.b16 %v5051
        %v5571 = vunpack.c.l.b16 %v5052
        %v5572 = vunpack.c.l.b16 %v5053
        %v5573 = vunpack.c.l.b16 %v5054
        %v5574 = vunpack.c.l.b16 %v5055
        %v5575 = vunpack.c.l.b16 %v5056
        %v5576 = vunpack.c.l.b16 %v5057
        %v5577 = vunpack.c.l.b16 %v5058
        %v5578 = vunpack.c.l.b16 %v5059
        %v5579 = vunpack.c.l.b16 %v5060
        %v5580 = vunpack.c.l.b16 %v5061
        %v5581 = vunpack.c.l.b16 %v5062
        %v5582 = vunpack.c.l.b16 %v5063
        %v5583 = vunpack.c.l.b16 %v5064
        %v5584 = vunpack.c.l.b16 %v5065
        %v5585 = vunpack.c.l.b16 %v5066
        %v5586 = vunpack.c.l.b16 %v5067
        %v5587 = vunpack.c.l.b16 %v5068
        %v5588 = vunpack.c.l.b16 %v5069
        %v5589 = vunpack.c.l.b16 %v5070
        %v5590 = vunpack.c.l.b16 %v5071
        %v5591 = vunpack.c.l.b16 %v5072
        %v5592 = vunpack.c.l.b16 %v5073
        %v5593 = vunpack.c.l.b16 %v5074
        %v5594 = vunpack.c.l.b16 %v5075
        %v5595 = vunpack.c.l.b16 %v5076
        %v5596 = vunpack.c.l.b16 %v5077
        %v5597 = vunpack.c.l.b16 %v5078
        %v5598 = vunpack.c.l.b16 %v5079
        %v5599 = vunpack.c.l.b16 %v5080
        %v5600 = vunpack.c.l.b16 %v5081
        %v5601 = vunpack.c.l.b16 %v5082
        %v5602 = vunpack.c.l.b16 %v5083
        %v5603 = vunpack.c.l.b16 %v5084
        %v5604 = vunpack.c.l.b16 %v5085
        %v5605 = vunpack.c.l.b16 %v5086
        %v5606 = vunpack.c.l.b16 %v5087
        %v5607 = vunpack.c.l.b16 %v5088
        %v5608 = vunpack.c.l.b16 %v5089
        %v5609 = vunpack.c.l.b16 %v5090
        %v5610 = vunpack.c.l.b16 %v5091
        %v5611 = vunpack.c.l.b16 %v5092
        %v5612 = vunpack.c.l.b16 %v5093
        %v5613 = vunpack.c.l.b16 %v5094
        %v5614 = vunpack.c.l.b16 %v5095
        %v5615 = vunpack.c.l.b16 %v5096
        %v5616 = vunpack.c.l.b16 %v5097
        %v5617 = vunpack.c.l.b16 %v5098
        %v5618 = vunpack.c.l.b16 %v5099
        %v5619 = vunpack.c.l.b16 %v5100
        %v5620 = vunpack.c.l.b16 %v5101
        %v5621 = vunpack.c.l.b16 %v5102
        %v5622 = vunpack.c.l.b16 %v5103
        %v5623 = vunpack.c.l.b16 %v5104
        %v5624 = vunpack.c.l.b16 %v5105
        %v5625 = vunpack.c.l.b16 %v5106
        %v5626 = vunpack.c.l.b16 %v5107
        %v5627 = vunpack.c.l.b16 %v5108
        %v5628 = vunpack.c.l.b16 %v5109
        %v5629 = vunpack.c.l.b16 %v5110
        %v5630 = vunpack.c.l.b16 %v5111
        %v5631 = vunpack.c.l.b16 %v5112
        %v5632 = vunpack.c.l.b16 %v5113
        %v5633 = vunpack.c.l.b16 %v5114
        %v5634 = vunpack.c.l.b16 %v5115
        %v5635 = vunpack.c.l.b16 %v5116
        %v5636 = vunpack.c.l.b16 %v5117
        %v5637 = vunpack.c.l.b16 %v5118
        %v5638 = vunpack.c.l.b16 %v5119
        %v5639 = vunpack.c.l.b16 %v5120
        %v5640 = vunpack.c.l.b16 %v5121
        %v5641 = vunpack.c.l.b16 %v5122
        %v5642 = vunpack.c.l.b16 %v5123
        %v5643 = vunpack.c.l.b16 %v5124
        %v5644 = vunpack.c.l.b16 %v5125
        %v5645 = vunpack.c.l.b16 %v5126
        %v5646 = vunpack.c.l.b16 %v5127
        %v5647 = vunpack.c.l.b16 %v5128
        %v5648 = vunpack.c.l.b16 %v5129
        %v5649 = vunpack.c.l.b16 %v5130
        %v5650 = vunpack.c.l.b16 %v5131
        %v5651 = vunpack.c.l.b16 %v5132
        %v5652 = vunpack.c.l.b16 %v5133
        %v5653 = vunpack.c.l.b16 %v5134
        %v5654 = vunpack.c.l.b16 %v5135
        %v5655 = vunpack.c.l.b16 %v5136
        %v5656 = vunpack.c.l.b16 %v5137
        %v5657 = vunpack.c.l.b16 %v5138
        %v5658 = vunpack.c.l.b16 %v5139
        %v5659 = vunpack.c.l.b16 %v5140
        %v5660 = vunpack.c.l.b16 %v5141
        %v5661 = vunpack.c.l.b16 %v5142
        %v5662 = vunpack.c.l.b16 %v5143
        %v5663 = vunpack.c.l.b16 %v5144
        %v5664 = vunpack.c.l.b16 %v5145
        %v5665 = vunpack.c.l.b16 %v5146
        %v5666 = vunpack.c.l.b16 %v5147
        %v5667 = vunpack.c.l.b16 %v5148
        %v5668 = vunpack.c.l.b16 %v5149
        %v5669 = vunpack.c.l.b16 %v5150
        %v5670 = vunpack.c.l.b16 %v5151
        %v5671 = vunpack.c.l.b16 %v5152
        %v5672 = vunpack.c.l.b16 %v5153
        %v5673 = vunpack.c.l.b16 %v5154
        %v5674 = vunpack.c.l.b16 %v5155
        %v5675 = vunpack.c.l.b16 %v5156
        %v5676 = vunpack.c.l.b16 %v5157
        %v5677 = vunpack.c.l.b16 %v5158
        %v5678 = vunpack.c.l.b16 %v5159
        %v5679 = vunpack.c.l.b16 %v5160
        %v5680 = vunpack.c.l.b16 %v5161
        %v5681 = vunpack.c.l.b16 %v5162
        %v5682 = vunpack.c.l.b16 %v5163
        %v5683 = vunpack.c.l.b16 %v5164
        %v5684 = vunpack.c.l.b16 %v5165
        %v5685 = vunpack.c.l.b16 %v5166
        %v5686 = vunpack.c.l.b16 %v5167
        %v5687 = vunpack.c.l.b16 %v5168
        %v5688 = vunpack.c.l.b16 %v5169
        %v5689 = vunpack.c.l.b16 %v5170
        %v5690 = vunpack.c.l.b16 %v5171
        %v5691 = vunpack.c.l.b16 %v5172
        %v5692 = vunpack.c.l.b16 %v5173
        %v5693 = vunpack.c.l.b16 %v5174
        %v5694 = vunpack.c.l.b16 %v5175
        %v5695 = vunpack.c.l.b16 %v5176
        %v5696 = vunpack.c.l.b16 %v5177
        %v5697 = vunpack.c.l.b16 %v5178
        %v5698 = vunpack.c.l.b16 %v5179
        %v5699 = vunpack.c.l.b16 %v5180
        %v5700 = vunpack.c.l.b16 %v5181
        %v5701 = vunpack.c.l.b16 %v5182
        %v5702 = vunpack.c.l.b16 %v5183
        %v5703 = vunpack.c.l.b16 %v5184
        %v5704 = vunpack.c.l.b16 %v5185
        %v5705 = vunpack.c.l.b16 %v5186
        %v5706 = vunpack.c.l.b16 %v5187
        %v5707 = vunpack.c.l.b16 %v5188
        %v5708 = vunpack.c.l.b16 %v5189
        %v5709 = vunpack.c.l.b16 %v5190
        %v5710 = vunpack.c.l.b16 %v5191
        %v5711 = vunpack.c.l.b16 %v5192
        %v5712 = vunpack.c.l.b16 %v5193
        %v5713 = vunpack.c.l.b16 %v5194
        %v5714 = vunpack.c.l.b16 %v5195
        %v5715 = vunpack.c.l.b16 %v5196
        %v5716 = vunpack.c.l.b16 %v5197
        %v5717 = vunpack.c.l.b16 %v5198
        %v5718 = vunpack.c.l.b16 %v5199
        %v5719 = vunpack.c.l.b16 %v5200
        %v5720 = vunpack.c.l.b16 %v5201
        %v5721 = vunpack.c.l.b16 %v5202
        %v5722 = vunpack.c.l.b16 %v5203
        %v5723 = vunpack.c.l.b16 %v5204
        %v5724 = vunpack.c.l.b16 %v5205
        %v5725 = vunpack.c.l.b16 %v5206
        %v5726 = vunpack.c.l.b16 %v5207
        %v5727 = vunpack.c.l.b16 %v5208
        %v5728 = vunpack.c.l.b16 %v5209
        %v5729 = vunpack.c.l.b16 %v5210
        %v5730 = vunpack.c.l.b16 %v5211
        %v5731 = vunpack.c.l.b16 %v5212
        %v5732 = vunpack.c.l.b16 %v5213
        %v5733 = vunpack.c.l.b16 %v5214
        %v5734 = vunpack.c.l.b16 %v5215
        %v5735 = vunpack.c.l.b16 %v5216
        %v5736 = vunpack.c.l.b16 %v5217
        %v5737 = vunpack.c.l.b16 %v5218
        %v5738 = vunpack.c.l.b16 %v5219
        %v5739 = vunpack.c.l.b16 %v5220
        %v5740 = vunpack.c.l.b16 %v5221
        %v5741 = vunpack.c.l.b16 %v5222
        %v5742 = vunpack.c.l.b16 %v5223
        %v5743 = vunpack.c.l.b16 %v5224
        %v5744 = vunpack.c.l.b16 %v5225
        %v5745 = vunpack.c.l.b16 %v5226
        %v5746 = vunpack.c.l.b16 %v5227
        %v5747 = vunpack.c.l.b16 %v5228
        %v5748 = vunpack.c.l.b16 %v5229
        %v5749 = vunpack.c.l.b16 %v5230
        %v5750 = vunpack.c.l.b16 %v5231
        %v5751 = vunpack.c.l.b16 %v5232
        %v5752 = vunpack.c.l.b16 %v5233
        %v5753 = vunpack.c.l.b16 %v5234
        %v5754 = vunpack.c.l.b16 %v5235
        %v5755 = vunpack.c.l.b16 %v5236
        %v5756 = vunpack.c.l.b16 %v5237
        %v5757 = vunpack.c.l.b16 %v5238
        %v5758 = vpack.c.b16 %v5503, %v5502
        %v5759 = vpack.c.b16 %v5505, %v5504
        %v5760 = vpack.c.b16 %v5507, %v5506
        %v5761 = vpack.c.b16 %v5509, %v5508
        %v5762 = vpack.c.b16 %v5511, %v5510
        %v5763 = vpack.c.b16 %v5513, %v5512
        %v5764 = vpack.c.b16 %v5515, %v5514
        %v5765 = vpack.c.b16 %v5517, %v5516
        %v5766 = vpack.c.b16 %v5519, %v5518
        %v5767 = vpack.c.b16 %v5521, %v5520
        %v5768 = vpack.c.b16 %v5523, %v5522
        %v5769 = vpack.c.b16 %v5525, %v5524
        %v5770 = vpack.c.b16 %v5527, %v5526
        %v5771 = vpack.c.b16 %v5529, %v5528
        %v5772 = vpack.c.b16 %v5531, %v5530
        %v5773 = vpack.c.b16 %v5533, %v5532
        %v5774 = vpack.c.b16 %v5535, %v5534
        %v5775 = vpack.c.b16 %v5537, %v5536
        %v5776 = vpack.c.b16 %v5539, %v5538
        %v5777 = vpack.c.b16 %v5541, %v5540
        %v5778 = vpack.c.b16 %v5543, %v5542
        %v5779 = vpack.c.b16 %v5545, %v5544
        %v5780 = vpack.c.b16 %v5547, %v5546
        %v5781 = vpack.c.b16 %v5549, %v5548
        %v5782 = vpack.c.b16 %v5551, %v5550
        %v5783 = vpack.c.b16 %v5553, %v5552
        %v5784 = vpack.c.b16 %v5555, %v5554
        %v5785 = vpack.c.b16 %v5557, %v5556
        %v5786 = vpack.c.b16 %v5559, %v5558
        %v5787 = vpack.c.b16 %v5561, %v5560
        %v5788 = vpack.c.b16 %v5563, %v5562
        %v5789 = vpack.c.b16 %v5565, %v5564
        %v5790 = vpack.c.b16 %v5567, %v5566
        %v5791 = vpack.c.b16 %v5569, %v5568
        %v5792 = vpack.c.b16 %v5571, %v5570
        %v5793 = vpack.c.b16 %v5573, %v5572
        %v5794 = vpack.c.b16 %v5575, %v5574
        %v5795 = vpack.c.b16 %v5577, %v5576
        %v5796 = vpack.c.b16 %v5579, %v5578
        %v5797 = vpack.c.b16 %v5581, %v5580
        %v5798 = vpack.c.b16 %v5583, %v5582
        %v5799 = vpack.c.b16 %v5585, %v5584
        %v5800 = vpack.c.b16 %v5587, %v5586
        %v5801 = vpack.c.b16 %v5589, %v5588
        %v5802 = vpack.c.b16 %v5591, %v5590
        %v5803 = vpack.c.b16 %v5593, %v5592
        %v5804 = vpack.c.b16 %v5595, %v5594
        %v5805 = vpack.c.b16 %v5597, %v5596
        %v5806 = vpack.c.b16 %v5599, %v5598
        %v5807 = vpack.c.b16 %v5601, %v5600
        %v5808 = vpack.c.b16 %v5603, %v5602
        %v5809 = vpack.c.b16 %v5605, %v5604
        %v5810 = vpack.c.b16 %v5607, %v5606
        %v5811 = vpack.c.b16 %v5609, %v5608
        %v5812 = vpack.c.b16 %v5611, %v5610
        %v5813 = vpack.c.b16 %v5613, %v5612
        %v5814 = vpack.c.b16 %v5615, %v5614
        %v5815 = vpack.c.b16 %v5617, %v5616
        %v5816 = vpack.c.b16 %v5619, %v5618
        %v5817 = vpack.c.b16 %v5621, %v5620
        %v5818 = vpack.c.b16 %v5623, %v5622
        %v5819 = vpack.c.b16 %v5625, %v5624
        %v5820 = vpack.c.b16 %v5627, %v5626
        %v5821 = vpack.c.b16 %v5629, %v5628
        %v5822 = vpack.c.b16 %v5631, %v5630
        %v5823 = vpack.c.b16 %v5633, %v5632
        %v5824 = vpack.c.b16 %v5635, %v5634
        %v5825 = vpack.c.b16 %v5637, %v5636
        %v5826 = vpack.c.b16 %v5639, %v5638
        %v5827 = vpack.c.b16 %v5641, %v5640
        %v5828 = vpack.c.b16 %v5643, %v5642
        %v5829 = vpack.c.b16 %v5645, %v5644
        %v5830 = vpack.c.b16 %v5647, %v5646
        %v5831 = vpack.c.b16 %v5649, %v5648
        %v5832 = vpack.c.b16 %v5651, %v5650
        %v5833 = vpack.c.b16 %v5653, %v5652
        %v5834 = vpack.c.b16 %v5655, %v5654
        %v5835 = vpack.c.b16 %v5657, %v5656
        %v5836 = vpack.c.b16 %v5659, %v5658
        %v5837 = vpack.c.b16 %v5661, %v5660
        %v5838 = vpack.c.b16 %v5663, %v5662
        %v5839 = vpack.c.b16 %v5665, %v5664
        %v5840 = vpack.c.b16 %v5667, %v5666
        %v5841 = vpack.c.b16 %v5669, %v5668
        %v5842 = vpack.c.b16 %v5671, %v5670
        %v5843 = vpack.c.b16 %v5673, %v5672
        %v5844 = vpack.c.b16 %v5675, %v5674
        %v5845 = vpack.c.b16 %v5677, %v5676
        %v5846 = vpack.c.b16 %v5679, %v5678
        %v5847 = vpack.c.b16 %v5681, %v5680
        %v5848 = vpack.c.b16 %v5683, %v5682
        %v5849 = vpack.c.b16 %v5685, %v5684
        %v5850 = vpack.c.b16 %v5687, %v5686
        %v5851 = vpack.c.b16 %v5689, %v5688
        %v5852 = vpack.c.b16 %v5691, %v5690
        %v5853 = vpack.c.b16 %v5693, %v5692
        %v5854 = vpack.c.b16 %v5695, %v5694
        %v5855 = vpack.c.b16 %v5697, %v5696
        %v5856 = vpack.c.b16 %v5699, %v5698
        %v5857 = vpack.c.b16 %v5701, %v5700
        %v5858 = vpack.c.b16 %v5703, %v5702
        %v5859 = vpack.c.b16 %v5705, %v5704
        %v5860 = vpack.c.b16 %v5707, %v5706
        %v5861 = vpack.c.b16 %v5709, %v5708
        %v5862 = vpack.c.b16 %v5711, %v5710
        %v5863 = vpack.c.b16 %v5713, %v5712
        %v5864 = vpack.c.b16 %v5715, %v5714
        %v5865 = vpack.c.b16 %v5717, %v5716
        %v5866 = vpack.c.b16 %v5719, %v5718
        %v5867 = vpack.c.b16 %v5721, %v5720
        %v5868 = vpack.c.b16 %v5723, %v5722
        %v5869 = vpack.c.b16 %v5725, %v5724
        %v5870 = vpack.c.b16 %v5727, %v5726
        %v5871 = vpack.c.b16 %v5729, %v5728
        %v5872 = vpack.c.b16 %v5731, %v5730
        %v5873 = vpack.c.b16 %v5733, %v5732
        %v5874 = vpack.c.b16 %v5735, %v5734
        %v5875 = vpack.c.b16 %v5737, %v5736
        %v5876 = vpack.c.b16 %v5739, %v5738
        %v5877 = vpack.c.b16 %v5741, %v5740
        %v5878 = vpack.c.b16 %v5743, %v5742
        %v5879 = vpack.c.b16 %v5745, %v5744
        %v5880 = vpack.c.b16 %v5747, %v5746
        %v5881 = vpack.c.b16 %v5749, %v5748
        %v5882 = vpack.c.b16 %v5751, %v5750
        %v5883 = vpack.c.b16 %v5753, %v5752
        %v5884 = vpack.c.b16 %v5755, %v5754
        %v5885 = vpack.c.b16 %v5757, %v5756
        %6014 = vmatprep.subr.bf16.mxu0 0
        %6015 = vmatpush1.bf16.msra.mxu0 %v5758
        %6016 = vmatprep.subr.bf16.mxu0 0
        %6017 = vmatpush1.bf16.msra.mxu0 %v5759
        %6018 = vmatprep.subr.bf16.mxu0 0
        %6019 = vmatpush1.bf16.msra.mxu0 %v5760
        %6020 = vmatprep.subr.bf16.mxu0 0
        %6021 = vmatpush1.bf16.msra.mxu0 %v5761
        %6022 = vmatprep.subr.bf16.mxu0 0
        %6023 = vmatpush1.bf16.msra.mxu0 %v5762
        %6024 = vmatprep.subr.bf16.mxu0 0
        %6025 = vmatpush1.bf16.msra.mxu0 %v5763
        %6026 = vmatprep.subr.bf16.mxu0 0
        %6027 = vmatpush1.bf16.msra.mxu0 %v5764
        %6028 = vmatprep.subr.bf16.mxu0 0
        %6029 = vmatpush1.bf16.msra.mxu0 %v5765
        %6030 = vmatprep.subr.bf16.mxu0 0
        %6031 = vmatpush1.bf16.msra.mxu0 %v5766
        %6032 = vmatprep.subr.bf16.mxu0 0
        %6033 = vmatpush1.bf16.msra.mxu0 %v5767
        %6034 = vmatprep.subr.bf16.mxu0 0
        %6035 = vmatpush1.bf16.msra.mxu0 %v5768
        %6036 = vmatprep.subr.bf16.mxu0 0
        %6037 = vmatpush1.bf16.msra.mxu0 %v5769
        %6038 = vmatprep.subr.bf16.mxu0 0
        %6039 = vmatpush1.bf16.msra.mxu0 %v5770
        %6040 = vmatprep.subr.bf16.mxu0 0
        %6041 = vmatpush1.bf16.msra.mxu0 %v5771
        %6042 = vmatprep.subr.bf16.mxu0 0
        %6043 = vmatpush1.bf16.msra.mxu0 %v5772
        %6044 = vmatprep.subr.bf16.mxu0 0
        %6045 = vmatpush1.bf16.msra.mxu0 %v5773
        %6046 = vmatprep.mubr.bf16.mxu0 %v4920
        %6047 = vmatmul.mubr.bf16.gmra.mrb[0].mxu0 %v4919
        %v6048 = vpop.f32.mrb[0].mxu0
        %v6049 = vadd.f32 %v5244, %v6048
        %v6050 = vpop.f32.mrb[0].mxu0
        %v6051 = vpop.f32.mrb[0].mxu0
        %v6052 = vadd.f32 %v5244, %v6051
        %v6053 = vpop.f32.mrb[0].mxu0
        %6054 = vmatprep.mubr.bf16.mxu0 %v4936
        %6055 = vmatmul.mubr.bf16.gmra.mrb[0].mxu0 %v4935
        %v6056 = vpop.f32.mrb[0].mxu0
        %v6057 = vadd.f32 %v5244, %v6056
        %v6058 = vpop.f32.mrb[0].mxu0
        %v6059 = vpop.f32.mrb[0].mxu0
        %v6060 = vadd.f32 %v5244, %v6059
        %v6061 = vpop.f32.mrb[0].mxu0
        %6062 = vmatprep.mubr.bf16.mxu0 %v4952
        %6063 = vmatmul.mubr.bf16.gmra.mrb[0].mxu0 %v4951
        %v6064 = vpop.f32.mrb[0].mxu0
        %v6065 = vadd.f32 %v5244, %v6064
        %v6066 = vpop.f32.mrb[0].mxu0
        %v6067 = vpop.f32.mrb[0].mxu0
        %v6068 = vadd.f32 %v5244, %v6067
        %v6069 = vpop.f32.mrb[0].mxu0
        %6070 = vmatprep.mubr.bf16.mxu0 %v4968
        %6071 = vmatmul.mubr.bf16.gmra.mrb[0].mxu0 %v4967
        %v6072 = vpop.f32.mrb[0].mxu0
        %v6073 = vadd.f32 %v5244, %v6072
        %v6074 = vpop.f32.mrb[0].mxu0
        %v6075 = vpop.f32.mrb[0].mxu0
        %v6076 = vadd.f32 %v5244, %v6075
        %v6077 = vpop.f32.mrb[0].mxu0
        %6078 = vdwg.mxu0
        %6079 = vmatprep.subr.bf16.mxu0 0
        %6080 = vmatpush1.bf16.msra.mxu0 %v5774
        %6081 = vmatprep.subr.bf16.mxu0 0
        %6082 = vmatpush1.bf16.msra.mxu0 %v5775
        %6083 = vmatprep.subr.bf16.mxu0 0
        %6084 = vmatpush1.bf16.msra.mxu0 %v5776
        %6085 = vmatprep.subr.bf16.mxu0 0
        %6086 = vmatpush1.bf16.msra.mxu0 %v5777
        %6087 = vmatprep.subr.bf16.mxu0 0
        %6088 = vmatpush1.bf16.msra.mxu0 %v5778
        %6089 = vmatprep.subr.bf16.mxu0 0
        %6090 = vmatpush1.bf16.msra.mxu0 %v5779
        %6091 = vmatprep.subr.bf16.mxu0 0
        %6092 = vmatpush1.bf16.msra.mxu0 %v5780
        %6093 = vmatprep.subr.bf16.mxu0 0
        %6094 = vmatpush1.bf16.msra.mxu0 %v5781
        %6095 = vmatprep.subr.bf16.mxu0 0
        %6096 = vmatpush1.bf16.msra.mxu0 %v5782
        %6097 = vmatprep.subr.bf16.mxu0 0
        %6098 = vmatpush1.bf16.msra.mxu0 %v5783
        %6099 = vmatprep.subr.bf16.mxu0 0
        %6100 = vmatpush1.bf16.msra.mxu0 %v5784
        %6101 = vmatprep.subr.bf16.mxu0 0
        %6102 = vmatpush1.bf16.msra.mxu0 %v5785
        %6103 = vmatprep.subr.bf16.mxu0 0
        %6104 = vmatpush1.bf16.msra.mxu0 %v5786
        %6105 = vmatprep.subr.bf16.mxu0 0
        %6106 = vmatpush1.bf16.msra.mxu0 %v5787
        %6107 = vmatprep.subr.bf16.mxu0 0
        %6108 = vmatpush1.bf16.msra.mxu0 %v5788
        %6109 = vmatprep.subr.bf16.mxu0 0
        %6110 = vmatpush1.bf16.msra.mxu0 %v5789
        %6111 = vmatprep.mubr.bf16.mxu0 %v4922
        %6112 = vmatmul.mubr.bf16.gmra.mrb[0].mxu0 %v4921
        %v6113 = vpop.f32.mrb[0].mxu0
        %v6114 = vadd.f32 %v6049, %v6113
        %v6115 = vpop.f32.mrb[0].mxu0
        %v6116 = vpop.f32.mrb[0].mxu0
        %v6117 = vadd.f32 %v6052, %v6116
        %v6118 = vpop.f32.mrb[0].mxu0
        %6119 = vmatprep.mubr.bf16.mxu0 %v4938
        %6120 = vmatmul.mubr.bf16.gmra.mrb[0].mxu0 %v4937
        %v6121 = vpop.f32.mrb[0].mxu0
        %v6122 = vadd.f32 %v6057, %v6121
        %v6123 = vpop.f32.mrb[0].mxu0
        %v6124 = vpop.f32.mrb[0].mxu0
        %v6125 = vadd.f32 %v6060, %v6124
        %v6126 = vpop.f32.mrb[0].mxu0
        %6127 = vmatprep.mubr.bf16.mxu0 %v4954
        %6128 = vmatmul.mubr.bf16.gmra.mrb[0].mxu0 %v4953
        %v6129 = vpop.f32.mrb[0].mxu0
        %v6130 = vadd.f32 %v6065, %v6129
        %v6131 = vpop.f32.mrb[0].mxu0
        %v6132 = vpop.f32.mrb[0].mxu0
        %v6133 = vadd.f32 %v6068, %v6132
        %v6134 = vpop.f32.mrb[0].mxu0
        %6135 = vmatprep.mubr.bf16.mxu0 %v4970
        %6136 = vmatmul.mubr.bf16.gmra.mrb[0].mxu0 %v4969
        %v6137 = vpop.f32.mrb[0].mxu0
        %v6138 = vadd.f32 %v6073, %v6137
        %v6139 = vpop.f32.mrb[0].mxu0
        %v6140 = vpop.f32.mrb[0].mxu0
        %v6141 = vadd.f32 %v6076, %v6140
        %v6142 = vpop.f32.mrb[0].mxu0
        %6143 = vdwg.mxu0
        %6144 = vmatprep.subr.bf16.mxu0 0
        %6145 = vmatpush1.bf16.msra.mxu0 %v5790
        %6146 = vmatprep.subr.bf16.mxu0 0
        %6147 = vmatpush1.bf16.msra.mxu0 %v5791
        %6148 = vmatprep.subr.bf16.mxu0 0
        %6149 = vmatpush1.bf16.msra.mxu0 %v5792
        %6150 = vmatprep.subr.bf16.mxu0 0
        %6151 = vmatpush1.bf16.msra.mxu0 %v5793
        %6152 = vmatprep.subr.bf16.mxu0 0
        %6153 = vmatpush1.bf16.msra.mxu0 %v5794
        %6154 = vmatprep.subr.bf16.mxu0 0
        %6155 = vmatpush1.bf16.msra.mxu0 %v5795
        %6156 = vmatprep.subr.bf16.mxu0 0
        %6157 = vmatpush1.bf16.msra.mxu0 %v5796
        %6158 = vmatprep.subr.bf16.mxu0 0
        %6159 = vmatpush1.bf16.msra.mxu0 %v5797
        %6160 = vmatprep.subr.bf16.mxu0 0
        %6161 = vmatpush1.bf16.msra.mxu0 %v5798
        %6162 = vmatprep.subr.bf16.mxu0 0
        %6163 = vmatpush1.bf16.msra.mxu0 %v5799
        %6164 = vmatprep.subr.bf16.mxu0 0
        %6165 = vmatpush1.bf16.msra.mxu0 %v5800
        %6166 = vmatprep.subr.bf16.mxu0 0
        %6167 = vmatpush1.bf16.msra.mxu0 %v5801
        %6168 = vmatprep.subr.bf16.mxu0 0
        %6169 = vmatpush1.bf16.msra.mxu0 %v5802
        %6170 = vmatprep.subr.bf16.mxu0 0
        %6171 = vmatpush1.bf16.msra.mxu0 %v5803
        %6172 = vmatprep.subr.bf16.mxu0 0
        %6173 = vmatpush1.bf16.msra.mxu0 %v5804
        %6174 = vmatprep.subr.bf16.mxu0 0
        %6175 = vmatpush1.bf16.msra.mxu0 %v5805
        %6176 = vmatprep.mubr.bf16.mxu0 %v4924
        %6177 = vmatmul.mubr.bf16.gmra.mrb[0].mxu0 %v4923
        %v6178 = vpop.f32.mrb[0].mxu0
        %v6179 = vadd.f32 %v6114, %v6178
        %v6180 = vpop.f32.mrb[0].mxu0
        %v6181 = vpop.f32.mrb[0].mxu0
        %v6182 = vadd.f32 %v6117, %v6181
        %v6183 = vpop.f32.mrb[0].mxu0
        %6184 = vmatprep.mubr.bf16.mxu0 %v4940
        %6185 = vmatmul.mubr.bf16.gmra.mrb[0].mxu0 %v4939
        %v6186 = vpop.f32.mrb[0].mxu0
        %v6187 = vadd.f32 %v6122, %v6186
        %v6188 = vpop.f32.mrb[0].mxu0
        %v6189 = vpop.f32.mrb[0].mxu0
        %v6190 = vadd.f32 %v6125, %v6189
        %v6191 = vpop.f32.mrb[0].mxu0
        %6192 = vmatprep.mubr.bf16.mxu0 %v4956
        %6193 = vmatmul.mubr.bf16.gmra.mrb[0].mxu0 %v4955
        %v6194 = vpop.f32.mrb[0].mxu0
        %v6195 = vadd.f32 %v6130, %v6194
        %v6196 = vpop.f32.mrb[0].mxu0
        %v6197 = vpop.f32.mrb[0].mxu0
        %v6198 = vadd.f32 %v6133, %v6197
        %v6199 = vpop.f32.mrb[0].mxu0
        %6200 = vmatprep.mubr.bf16.mxu0 %v4972
        %6201 = vmatmul.mubr.bf16.gmra.mrb[0].mxu0 %v4971
        %v6202 = vpop.f32.mrb[0].mxu0
        %v6203 = vadd.f32 %v6138, %v6202
        %v6204 = vpop.f32.mrb[0].mxu0
        %v6205 = vpop.f32.mrb[0].mxu0
        %v6206 = vadd.f32 %v6141, %v6205
        %v6207 = vpop.f32.mrb[0].mxu0
        %6208 = vdwg.mxu0
        %6209 = vmatprep.subr.bf16.mxu0 0
        %6210 = vmatpush1.bf16.msra.mxu0 %v5806
        %6211 = vmatprep.subr.bf16.mxu0 0
        %6212 = vmatpush1.bf16.msra.mxu0 %v5807
        %6213 = vmatprep.subr.bf16.mxu0 0
        %6214 = vmatpush1.bf16.msra.mxu0 %v5808
        %6215 = vmatprep.subr.bf16.mxu0 0
        %6216 = vmatpush1.bf16.msra.mxu0 %v5809
        %6217 = vmatprep.subr.bf16.mxu0 0
        %6218 = vmatpush1.bf16.msra.mxu0 %v5810
        %6219 = vmatprep.subr.bf16.mxu0 0
        %6220 = vmatpush1.bf16.msra.mxu0 %v5811
        %6221 = vmatprep.subr.bf16.mxu0 0
        %6222 = vmatpush1.bf16.msra.mxu0 %v5812
        %6223 = vmatprep.subr.bf16.mxu0 0
        %6224 = vmatpush1.bf16.msra.mxu0 %v5813
        %6225 = vmatprep.subr.bf16.mxu0 0
        %6226 = vmatpush1.bf16.msra.mxu0 %v5814
        %6227 = vmatprep.subr.bf16.mxu0 0
        %6228 = vmatpush1.bf16.msra.mxu0 %v5815
        %6229 = vmatprep.subr.bf16.mxu0 0
        %6230 = vmatpush1.bf16.msra.mxu0 %v5816
        %6231 = vmatprep.subr.bf16.mxu0 0
        %6232 = vmatpush1.bf16.msra.mxu0 %v5817
        %6233 = vmatprep.subr.bf16.mxu0 0
        %6234 = vmatpush1.bf16.msra.mxu0 %v5818
        %6235 = vmatprep.subr.bf16.mxu0 0
        %6236 = vmatpush1.bf16.msra.mxu0 %v5819
        %6237 = vmatprep.subr.bf16.mxu0 0
        %6238 = vmatpush1.bf16.msra.mxu0 %v5820
        %6239 = vmatprep.subr.bf16.mxu0 0
        %6240 = vmatpush1.bf16.msra.mxu0 %v5821
        %6241 = vmatprep.mubr.bf16.mxu0 %v4926
        %6242 = vmatmul.mubr.bf16.gmra.mrb[0].mxu0 %v4925
        %v6243 = vpop.f32.mrb[0].mxu0
        %v6244 = vadd.f32 %v6179, %v6243
        %v6245 = vpop.f32.mrb[0].mxu0
        %v6246 = vpop.f32.mrb[0].mxu0
        %v6247 = vadd.f32 %v6182, %v6246
        %v6248 = vpop.f32.mrb[0].mxu0
        %6249 = vmatprep.mubr.bf16.mxu0 %v4942
        %6250 = vmatmul.mubr.bf16.gmra.mrb[0].mxu0 %v4941
        %v6251 = vpop.f32.mrb[0].mxu0
        %v6252 = vadd.f32 %v6187, %v6251
        %v6253 = vpop.f32.mrb[0].mxu0
        %v6254 = vpop.f32.mrb[0].mxu0
        %v6255 = vadd.f32 %v6190, %v6254
        %v6256 = vpop.f32.mrb[0].mxu0
        %6257 = vmatprep.mubr.bf16.mxu0 %v4958
        %6258 = vmatmul.mubr.bf16.gmra.mrb[0].mxu0 %v4957
        %v6259 = vpop.f32.mrb[0].mxu0
        %v6260 = vadd.f32 %v6195, %v6259
        %v6261 = vpop.f32.mrb[0].mxu0
        %v6262 = vpop.f32.mrb[0].mxu0
        %v6263 = vadd.f32 %v6198, %v6262
        %v6264 = vpop.f32.mrb[0].mxu0
        %6265 = vmatprep.mubr.bf16.mxu0 %v4974
        %6266 = vmatmul.mubr.bf16.gmra.mrb[0].mxu0 %v4973
        %v6267 = vpop.f32.mrb[0].mxu0
        %v6268 = vadd.f32 %v6203, %v6267
        %v6269 = vpop.f32.mrb[0].mxu0
        %v6270 = vpop.f32.mrb[0].mxu0
        %v6271 = vadd.f32 %v6206, %v6270
        %v6272 = vpop.f32.mrb[0].mxu0
        %6273 = vdwg.mxu0
        %6274 = vmatprep.subr.bf16.mxu0 0
        %6275 = vmatpush1.bf16.msra.mxu0 %v5822
        %6276 = vmatprep.subr.bf16.mxu0 0
        %6277 = vmatpush1.bf16.msra.mxu0 %v5823
        %6278 = vmatprep.subr.bf16.mxu0 0
        %6279 = vmatpush1.bf16.msra.mxu0 %v5824
        %6280 = vmatprep.subr.bf16.mxu0 0
        %6281 = vmatpush1.bf16.msra.mxu0 %v5825
        %6282 = vmatprep.subr.bf16.mxu0 0
        %6283 = vmatpush1.bf16.msra.mxu0 %v5826
        %6284 = vmatprep.subr.bf16.mxu0 0
        %6285 = vmatpush1.bf16.msra.mxu0 %v5827
        %6286 = vmatprep.subr.bf16.mxu0 0
        %6287 = vmatpush1.bf16.msra.mxu0 %v5828
        %6288 = vmatprep.subr.bf16.mxu0 0
        %6289 = vmatpush1.bf16.msra.mxu0 %v5829
        %6290 = vmatprep.subr.bf16.mxu0 0
        %6291 = vmatpush1.bf16.msra.mxu0 %v5830
        %6292 = vmatprep.subr.bf16.mxu0 0
        %6293 = vmatpush1.bf16.msra.mxu0 %v5831
        %6294 = vmatprep.subr.bf16.mxu0 0
        %6295 = vmatpush1.bf16.msra.mxu0 %v5832
        %6296 = vmatprep.subr.bf16.mxu0 0
        %6297 = vmatpush1.bf16.msra.mxu0 %v5833
        %6298 = vmatprep.subr.bf16.mxu0 0
        %6299 = vmatpush1.bf16.msra.mxu0 %v5834
        %6300 = vmatprep.subr.bf16.mxu0 0
        %6301 = vmatpush1.bf16.msra.mxu0 %v5835
        %6302 = vmatprep.subr.bf16.mxu0 0
        %6303 = vmatpush1.bf16.msra.mxu0 %v5836
        %6304 = vmatprep.subr.bf16.mxu0 0
        %6305 = vmatpush1.bf16.msra.mxu0 %v5837
        %6306 = vmatprep.mubr.bf16.mxu0 %v4928
        %6307 = vmatmul.mubr.bf16.gmra.mrb[0].mxu0 %v4927
        %v6308 = vpop.f32.mrb[0].mxu0
        %v6309 = vadd.f32 %v6244, %v6308
        %v6310 = vpop.f32.mrb[0].mxu0
        %v6311 = vpop.f32.mrb[0].mxu0
        %v6312 = vadd.f32 %v6247, %v6311
        %v6313 = vpop.f32.mrb[0].mxu0
        %6314 = vmatprep.mubr.bf16.mxu0 %v4944
        %6315 = vmatmul.mubr.bf16.gmra.mrb[0].mxu0 %v4943
        %v6316 = vpop.f32.mrb[0].mxu0
        %v6317 = vadd.f32 %v6252, %v6316
        %v6318 = vpop.f32.mrb[0].mxu0
        %v6319 = vpop.f32.mrb[0].mxu0
        %v6320 = vadd.f32 %v6255, %v6319
        %v6321 = vpop.f32.mrb[0].mxu0
        %6322 = vmatprep.mubr.bf16.mxu0 %v4960
        %6323 = vmatmul.mubr.bf16.gmra.mrb[0].mxu0 %v4959
        %v6324 = vpop.f32.mrb[0].mxu0
        %v6325 = vadd.f32 %v6260, %v6324
        %v6326 = vpop.f32.mrb[0].mxu0
        %v6327 = vpop.f32.mrb[0].mxu0
        %v6328 = vadd.f32 %v6263, %v6327
        %v6329 = vpop.f32.mrb[0].mxu0
        %6330 = vmatprep.mubr.bf16.mxu0 %v4976
        %6331 = vmatmul.mubr.bf16.gmra.mrb[0].mxu0 %v4975
        %v6332 = vpop.f32.mrb[0].mxu0
        %v6333 = vadd.f32 %v6268, %v6332
        %v6334 = vpop.f32.mrb[0].mxu0
        %v6335 = vpop.f32.mrb[0].mxu0
        %v6336 = vadd.f32 %v6271, %v6335
        %v6337 = vpop.f32.mrb[0].mxu0
        %6338 = vdwg.mxu0
        %6339 = vmatprep.subr.bf16.mxu0 0
        %6340 = vmatpush1.bf16.msra.mxu0 %v5838
        %6341 = vmatprep.subr.bf16.mxu0 0
        %6342 = vmatpush1.bf16.msra.mxu0 %v5839
        %6343 = vmatprep.subr.bf16.mxu0 0
        %6344 = vmatpush1.bf16.msra.mxu0 %v5840
        %6345 = vmatprep.subr.bf16.mxu0 0
        %6346 = vmatpush1.bf16.msra.mxu0 %v5841
        %6347 = vmatprep.subr.bf16.mxu0 0
        %6348 = vmatpush1.bf16.msra.mxu0 %v5842
        %6349 = vmatprep.subr.bf16.mxu0 0
        %6350 = vmatpush1.bf16.msra.mxu0 %v5843
        %6351 = vmatprep.subr.bf16.mxu0 0
        %6352 = vmatpush1.bf16.msra.mxu0 %v5844
        %6353 = vmatprep.subr.bf16.mxu0 0
        %6354 = vmatpush1.bf16.msra.mxu0 %v5845
        %6355 = vmatprep.subr.bf16.mxu0 0
        %6356 = vmatpush1.bf16.msra.mxu0 %v5846
        %6357 = vmatprep.subr.bf16.mxu0 0
        %6358 = vmatpush1.bf16.msra.mxu0 %v5847
        %6359 = vmatprep.subr.bf16.mxu0 0
        %6360 = vmatpush1.bf16.msra.mxu0 %v5848
        %6361 = vmatprep.subr.bf16.mxu0 0
        %6362 = vmatpush1.bf16.msra.mxu0 %v5849
        %6363 = vmatprep.subr.bf16.mxu0 0
        %6364 = vmatpush1.bf16.msra.mxu0 %v5850
        %6365 = vmatprep.subr.bf16.mxu0 0
        %6366 = vmatpush1.bf16.msra.mxu0 %v5851
        %6367 = vmatprep.subr.bf16.mxu0 0
        %6368 = vmatpush1.bf16.msra.mxu0 %v5852
        %6369 = vmatprep.subr.bf16.mxu0 0
        %6370 = vmatpush1.bf16.msra.mxu0 %v5853
        %6371 = vmatprep.mubr.bf16.mxu0 %v4930
        %6372 = vmatmul.mubr.bf16.gmra.mrb[0].mxu0 %v4929
        %v6373 = vpop.f32.mrb[0].mxu0
        %v6374 = vadd.f32 %v6309, %v6373
        %v6375 = vpop.f32.mrb[0].mxu0
        %v6376 = vpop.f32.mrb[0].mxu0
        %v6377 = vadd.f32 %v6312, %v6376
        %v6378 = vpop.f32.mrb[0].mxu0
        %6379 = vmatprep.mubr.bf16.mxu0 %v4946
        %6380 = vmatmul.mubr.bf16.gmra.mrb[0].mxu0 %v4945
        %v6381 = vpop.f32.mrb[0].mxu0
        %v6382 = vadd.f32 %v6317, %v6381
        %v6383 = vpop.f32.mrb[0].mxu0
        %v6384 = vpop.f32.mrb[0].mxu0
        %v6385 = vadd.f32 %v6320, %v6384
        %v6386 = vpop.f32.mrb[0].mxu0
        %6387 = vmatprep.mubr.bf16.mxu0 %v4962
        %6388 = vmatmul.mubr.bf16.gmra.mrb[0].mxu0 %v4961
        %v6389 = vpop.f32.mrb[0].mxu0
        %v6390 = vadd.f32 %v6325, %v6389
        %v6391 = vpop.f32.mrb[0].mxu0
        %v6392 = vpop.f32.mrb[0].mxu0
        %v6393 = vadd.f32 %v6328, %v6392
        %v6394 = vpop.f32.mrb[0].mxu0
        %6395 = vmatprep.mubr.bf16.mxu0 %v4978
        %6396 = vmatmul.mubr.bf16.gmra.mrb[0].mxu0 %v4977
        %v6397 = vpop.f32.mrb[0].mxu0
        %v6398 = vadd.f32 %v6333, %v6397
        %v6399 = vpop.f32.mrb[0].mxu0
        %v6400 = vpop.f32.mrb[0].mxu0
        %v6401 = vadd.f32 %v6336, %v6400
        %v6402 = vpop.f32.mrb[0].mxu0
        %6403 = vdwg.mxu0
        %6404 = vmatprep.subr.bf16.mxu0 0
        %6405 = vmatpush1.bf16.msra.mxu0 %v5854
        %6406 = vmatprep.subr.bf16.mxu0 0
        %6407 = vmatpush1.bf16.msra.mxu0 %v5855
        %6408 = vmatprep.subr.bf16.mxu0 0
        %6409 = vmatpush1.bf16.msra.mxu0 %v5856
        %6410 = vmatprep.subr.bf16.mxu0 0
        %6411 = vmatpush1.bf16.msra.mxu0 %v5857
        %6412 = vmatprep.subr.bf16.mxu0 0
        %6413 = vmatpush1.bf16.msra.mxu0 %v5858
        %6414 = vmatprep.subr.bf16.mxu0 0
        %6415 = vmatpush1.bf16.msra.mxu0 %v5859
        %6416 = vmatprep.subr.bf16.mxu0 0
        %6417 = vmatpush1.bf16.msra.mxu0 %v5860
        %6418 = vmatprep.subr.bf16.mxu0 0
        %6419 = vmatpush1.bf16.msra.mxu0 %v5861
        %6420 = vmatprep.subr.bf16.mxu0 0
        %6421 = vmatpush1.bf16.msra.mxu0 %v5862
        %6422 = vmatprep.subr.bf16.mxu0 0
        %6423 = vmatpush1.bf16.msra.mxu0 %v5863
        %6424 = vmatprep.subr.bf16.mxu0 0
        %6425 = vmatpush1.bf16.msra.mxu0 %v5864
        %6426 = vmatprep.subr.bf16.mxu0 0
        %6427 = vmatpush1.bf16.msra.mxu0 %v5865
        %6428 = vmatprep.subr.bf16.mxu0 0
        %6429 = vmatpush1.bf16.msra.mxu0 %v5866
        %6430 = vmatprep.subr.bf16.mxu0 0
        %6431 = vmatpush1.bf16.msra.mxu0 %v5867
        %6432 = vmatprep.subr.bf16.mxu0 0
        %6433 = vmatpush1.bf16.msra.mxu0 %v5868
        %6434 = vmatprep.subr.bf16.mxu0 0
        %6435 = vmatpush1.bf16.msra.mxu0 %v5869
        %6436 = vmatprep.mubr.bf16.mxu0 %v4932
        %6437 = vmatmul.mubr.bf16.gmra.mrb[0].mxu0 %v4931
        %v6438 = vpop.f32.mrb[0].mxu0
        %v6439 = vadd.f32 %v6374, %v6438
        %v6440 = vpop.f32.mrb[0].mxu0
        %v6441 = vpop.f32.mrb[0].mxu0
        %v6442 = vadd.f32 %v6377, %v6441
        %v6443 = vpop.f32.mrb[0].mxu0
        %6444 = vmatprep.mubr.bf16.mxu0 %v4948
        %6445 = vmatmul.mubr.bf16.gmra.mrb[0].mxu0 %v4947
        %v6446 = vpop.f32.mrb[0].mxu0
        %v6447 = vadd.f32 %v6382, %v6446
        %v6448 = vpop.f32.mrb[0].mxu0
        %v6449 = vpop.f32.mrb[0].mxu0
        %v6450 = vadd.f32 %v6385, %v6449
        %v6451 = vpop.f32.mrb[0].mxu0
        %6452 = vmatprep.mubr.bf16.mxu0 %v4964
        %6453 = vmatmul.mubr.bf16.gmra.mrb[0].mxu0 %v4963
        %v6454 = vpop.f32.mrb[0].mxu0
        %v6455 = vadd.f32 %v6390, %v6454
        %v6456 = vpop.f32.mrb[0].mxu0
        %v6457 = vpop.f32.mrb[0].mxu0
        %v6458 = vadd.f32 %v6393, %v6457
        %v6459 = vpop.f32.mrb[0].mxu0
        %6460 = vmatprep.mubr.bf16.mxu0 %v4980
        %6461 = vmatmul.mubr.bf16.gmra.mrb[0].mxu0 %v4979
        %v6462 = vpop.f32.mrb[0].mxu0
        %v6463 = vadd.f32 %v6398, %v6462
        %v6464 = vpop.f32.mrb[0].mxu0
        %v6465 = vpop.f32.mrb[0].mxu0
        %v6466 = vadd.f32 %v6401, %v6465
        %v6467 = vpop.f32.mrb[0].mxu0
        %6468 = vdwg.mxu0
        %6469 = vmatprep.subr.bf16.mxu0 0
        %6470 = vmatpush1.bf16.msra.mxu0 %v5870
        %6471 = vmatprep.subr.bf16.mxu0 0
        %6472 = vmatpush1.bf16.msra.mxu0 %v5871
        %6473 = vmatprep.subr.bf16.mxu0 0
        %6474 = vmatpush1.bf16.msra.mxu0 %v5872
        %6475 = vmatprep.subr.bf16.mxu0 0
        %6476 = vmatpush1.bf16.msra.mxu0 %v5873
        %6477 = vmatprep.subr.bf16.mxu0 0
        %6478 = vmatpush1.bf16.msra.mxu0 %v5874
        %6479 = vmatprep.subr.bf16.mxu0 0
        %6480 = vmatpush1.bf16.msra.mxu0 %v5875
        %6481 = vmatprep.subr.bf16.mxu0 0
        %6482 = vmatpush1.bf16.msra.mxu0 %v5876
        %6483 = vmatprep.subr.bf16.mxu0 0
        %6484 = vmatpush1.bf16.msra.mxu0 %v5877
        %6485 = vmatprep.subr.bf16.mxu0 0
        %6486 = vmatpush1.bf16.msra.mxu0 %v5878
        %6487 = vmatprep.subr.bf16.mxu0 0
        %6488 = vmatpush1.bf16.msra.mxu0 %v5879
        %6489 = vmatprep.subr.bf16.mxu0 0
        %6490 = vmatpush1.bf16.msra.mxu0 %v5880
        %6491 = vmatprep.subr.bf16.mxu0 0
        %6492 = vmatpush1.bf16.msra.mxu0 %v5881
        %6493 = vmatprep.subr.bf16.mxu0 0
        %6494 = vmatpush1.bf16.msra.mxu0 %v5882
        %6495 = vmatprep.subr.bf16.mxu0 0
        %6496 = vmatpush1.bf16.msra.mxu0 %v5883
        %6497 = vmatprep.subr.bf16.mxu0 0
        %6498 = vmatpush1.bf16.msra.mxu0 %v5884
        %6499 = vmatprep.subr.bf16.mxu0 0
        %6500 = vmatpush1.bf16.msra.mxu0 %v5885
        %6501 = vmatprep.mubr.bf16.mxu0 %v4934
        %6502 = vmatmul.mubr.bf16.gmra.mrb[0].mxu0 %v4933
        %v6503 = vpop.f32.mrb[0].mxu0
        %v6504 = vadd.f32 %v6439, %v6503
        %v6505 = vpop.f32.mrb[0].mxu0
        %v6506 = vpop.f32.mrb[0].mxu0
        %v6507 = vadd.f32 %v6442, %v6506
        %v6508 = vpop.f32.mrb[0].mxu0
        %6509 = vmatprep.mubr.bf16.mxu0 %v4950
        %6510 = vmatmul.mubr.bf16.gmra.mrb[0].mxu0 %v4949
        %v6511 = vpop.f32.mrb[0].mxu0
        %v6512 = vadd.f32 %v6447, %v6511
        %v6513 = vpop.f32.mrb[0].mxu0
        %v6514 = vpop.f32.mrb[0].mxu0
        %v6515 = vadd.f32 %v6450, %v6514
        %v6516 = vpop.f32.mrb[0].mxu0
        %6517 = vmatprep.mubr.bf16.mxu0 %v4966
        %6518 = vmatmul.mubr.bf16.gmra.mrb[0].mxu0 %v4965
        %v6519 = vpop.f32.mrb[0].mxu0
        %v6520 = vadd.f32 %v6455, %v6519
        %v6521 = vpop.f32.mrb[0].mxu0
        %v6522 = vpop.f32.mrb[0].mxu0
        %v6523 = vadd.f32 %v6458, %v6522
        %v6524 = vpop.f32.mrb[0].mxu0
        %6525 = vmatprep.mubr.bf16.mxu0 %v4982
        %6526 = vmatmul.mubr.bf16.gmra.mrb[0].mxu0 %v4981
        %v6527 = vpop.f32.mrb[0].mxu0
        %v6528 = vadd.f32 %v6463, %v6527
        %v6529 = vpop.f32.mrb[0].mxu0
        %v6530 = vpop.f32.mrb[0].mxu0
        %v6531 = vadd.f32 %v6466, %v6530
        %v6532 = vpop.f32.mrb[0].mxu0
        %6533 = vdwg.mxu0
        %v6534 = vadd.f32 %v3343, %v6504
        %v6535 = vadd.f32 %v3344, %v6507
        %v6536 = vadd.f32 %v3345, %v6512
        %v6537 = vadd.f32 %v3346, %v6515
        %v6538 = vadd.f32 %v3347, %v6520
        %v6539 = vadd.f32 %v3348, %v6523
        %v6540 = vadd.f32 %v3349, %v6528
        %v6541 = vadd.f32 %v3350, %v6531
        %v6542 = vld [vmem:[%s11] sm:$0x1]
        %v6543 = vld [vmem:[%s12] sm:$0x1]
        %6544 = vadd.xlane.f32.xlu0 %v6534
        %v6545 = vpop.xlane.xlu0 %6544
        %6546 = vadd.xlane.f32.xlu0 %v6535
        %v6547 = vpop.xlane.xlu0 %6546
        %6548 = vadd.xlane.f32.xlu0 %v6536
        %v6549 = vpop.xlane.xlu0 %6548
        %6550 = vadd.xlane.f32.xlu0 %v6537
        %v6551 = vpop.xlane.xlu0 %6550
        %6552 = vadd.xlane.f32.xlu0 %v6538
        %v6553 = vpop.xlane.xlu0 %6552
        %6554 = vadd.xlane.f32.xlu0 %v6539
        %v6555 = vpop.xlane.xlu0 %6554
        %6556 = vadd.xlane.f32.xlu0 %v6540
        %v6557 = vpop.xlane.xlu0 %6556
        %6558 = vadd.xlane.f32.xlu0 %v6541
        %v6559 = vpop.xlane.xlu0 %6558
        %v6560 = vmul.f32 %v6545, %v3250
        %v6561 = vmul.f32 %v6547, %v3250
        %v6562 = vmul.f32 %v6549, %v3250
        %v6563 = vmul.f32 %v6551, %v3250
        %v6564 = vmul.f32 %v6553, %v3250
        %v6565 = vmul.f32 %v6555, %v3250
        %v6566 = vmul.f32 %v6557, %v3250
        %v6567 = vmul.f32 %v6559, %v3250
        %v6568 = vsub.f32 %v6534, %v6560
        %v6569 = vsub.f32 %v6535, %v6561
        %v6570 = vsub.f32 %v6536, %v6562
        %v6571 = vsub.f32 %v6537, %v6563
        %v6572 = vsub.f32 %v6538, %v6564
        %v6573 = vsub.f32 %v6539, %v6565
        %v6574 = vsub.f32 %v6540, %v6566
        %v6575 = vsub.f32 %v6541, %v6567
        %v6576 = vmul.f32 %v6568, %v6568
        %v6577 = vmul.f32 %v6569, %v6569
        %v6578 = vmul.f32 %v6570, %v6570
        %v6579 = vmul.f32 %v6571, %v6571
        %v6580 = vmul.f32 %v6572, %v6572
        %v6581 = vmul.f32 %v6573, %v6573
        %v6582 = vmul.f32 %v6574, %v6574
        %v6583 = vmul.f32 %v6575, %v6575
        %6584 = vadd.xlane.f32.xlu0 %v6576
        %v6585 = vpop.xlane.xlu0 %6584
        %6586 = vadd.xlane.f32.xlu0 %v6577
        %v6587 = vpop.xlane.xlu0 %6586
        %6588 = vadd.xlane.f32.xlu0 %v6578
        %v6589 = vpop.xlane.xlu0 %6588
        %6590 = vadd.xlane.f32.xlu0 %v6579
        %v6591 = vpop.xlane.xlu0 %6590
        %6592 = vadd.xlane.f32.xlu0 %v6580
        %v6593 = vpop.xlane.xlu0 %6592
        %6594 = vadd.xlane.f32.xlu0 %v6581
        %v6595 = vpop.xlane.xlu0 %6594
        %6596 = vadd.xlane.f32.xlu0 %v6582
        %v6597 = vpop.xlane.xlu0 %6596
        %6598 = vadd.xlane.f32.xlu0 %v6583
        %v6599 = vpop.xlane.xlu0 %6598
        %v6600 = vmul.f32 %v6585, %v3250
        %v6601 = vmul.f32 %v6587, %v3250
        %v6602 = vmul.f32 %v6589, %v3250
        %v6603 = vmul.f32 %v6591, %v3250
        %v6604 = vmul.f32 %v6593, %v3250
        %v6605 = vmul.f32 %v6595, %v3250
        %v6606 = vmul.f32 %v6597, %v3250
        %v6607 = vmul.f32 %v6599, %v3250
        %v6608 = vadd.f32 %v6600, 1e-05
        %v6609 = vadd.f32 %v6601, 1e-05
        %v6610 = vadd.f32 %v6602, 1e-05
        %v6611 = vadd.f32 %v6603, 1e-05
        %v6612 = vadd.f32 %v6604, 1e-05
        %v6613 = vadd.f32 %v6605, 1e-05
        %v6614 = vadd.f32 %v6606, 1e-05
        %v6615 = vadd.f32 %v6607, 1e-05
        %v6616 = vrsqrt.pop %v6608
        %v6617 = vrsqrt.pop %v6609
        %v6618 = vrsqrt.pop %v6610
        %v6619 = vrsqrt.pop %v6611
        %v6620 = vrsqrt.pop %v6612
        %v6621 = vrsqrt.pop %v6613
        %v6622 = vrsqrt.pop %v6614
        %v6623 = vrsqrt.pop %v6615
        %v6624 = vmul.f32 %v6568, %v6616
        %v6625 = vmul.f32 %v6569, %v6617
        %v6626 = vmul.f32 %v6570, %v6618
        %v6627 = vmul.f32 %v6571, %v6619
        %v6628 = vmul.f32 %v6572, %v6620
        %v6629 = vmul.f32 %v6573, %v6621
        %v6630 = vmul.f32 %v6574, %v6622
        %v6631 = vmul.f32 %v6575, %v6623
        %v6633 = vlaneseq
        %v6634 = vshrl.u32 %v6633, 7
        %v6635 = vsub.s32 0, %v6634
        %v6636 = vrot.slane %v6542, %v6635
        %v6638 = vmul.f32 %v6624, %v6636
        %v6639 = vmul.f32 %v6625, %v6636
        %v6640 = vmul.f32 %v6626, %v6636
        %v6641 = vmul.f32 %v6627, %v6636
        %v6642 = vmul.f32 %v6628, %v6636
        %v6643 = vmul.f32 %v6629, %v6636
        %v6644 = vmul.f32 %v6630, %v6636
        %v6645 = vmul.f32 %v6631, %v6636
        %v6647 = vlaneseq
        %v6648 = vshrl.u32 %v6647, 7
        %v6649 = vsub.s32 0, %v6648
        %v6650 = vrot.slane %v6543, %v6649
        %v6652 = vadd.f32 %v6638, %v6650
        %v6653 = vadd.f32 %v6639, %v6650
        %v6654 = vadd.f32 %v6640, %v6650
        %v6655 = vadd.f32 %v6641, %v6650
        %v6656 = vadd.f32 %v6642, %v6650
        %v6657 = vadd.f32 %v6643, %v6650
        %v6658 = vadd.f32 %v6644, %v6650
        %v6659 = vadd.f32 %v6645, %v6650
        %6660 = vst [vmem:[%s517] sm:$0xff] %v6652
        %6661 = vst [vmem:[%s517 + $0x8] sm:$0xff] %v6653
        %6662 = vst [vmem:[%s517 + $0x10] sm:$0xff] %v6654
        %6663 = vst [vmem:[%s517 + $0x18] sm:$0xff] %v6655
        %6664 = vst [vmem:[%s517 + $0x20] sm:$0xff] %v6656
        %6665 = vst [vmem:[%s517 + $0x28] sm:$0xff] %v6657
        %6666 = vst [vmem:[%s517 + $0x30] sm:$0xff] %v6658
        %6667 = vst [vmem:[%s517 + $0x38] sm:$0xff] %v6659
        %s6668 = sand.u32 %s318, 1
        %s6669 = scalar_lea.sflag [#allocation4], %s6668
        %s6670 = sand.u32 %s318, 1
        %s6671 = smul.addr %s6670, 64
        %s6672 = scalar_lea.vmem [#allocation11], %s6671
        // Predicated region
        $region93: #{tpu_custom_call.1} parent=71 // pred_check
          %p6673 = pneg %p328
        $region94: #{tpu_custom_call.1} parent=71 // pred_check_branch
          %6675 = sbr.rel (%p6673) target = $region96
        $region95: #{tpu_custom_call.1} parent=71 // pred_region
          %s6676 = smul.u32 4, %s32
          %s6678 = ssub.s32 1024, 1024
          %6679 = vsyncadd %s6669, %s6678
          %s6680 = smul.addr %s6676, 2
          %s6681 = smul.addr %s6680, 128
          %s6682 = scalar_lea.hbm %s13, %s6681
          %s6683 = sshll.u32 %s6672, 4
          %s6684 = int_to_ptr.vmem [resolvable:$true] %s6683
          %6689 = dma.vmem_to_hbm [thread:$0]  %s6684, 1024, %s6682, %s6669, 128, 128, 8
        $region96: #{tpu_custom_call.1} parent=71 // pred_fallthru
          _
      $region72: #{tpu_custom_call.1} parent=5 // pred_fallthru
        _
      %p6690 = scmp.le.s32.totalorder 2, %s27
      // Predicated region
      $region97: #{tpu_custom_call.1} parent=5 // pred_check
        %p6691 = pneg %p6690
      $region98: #{tpu_custom_call.1} parent=5 // pred_check_branch
        %6693 = sbr.rel (%p6691) target = $region100
      $region99: #{tpu_custom_call.1} parent=5 // pred_region
        %s6694 = ssub.s32 %s27, 2
        // Predicated region
        $region101: #{tpu_custom_call.1} parent=99 // pred_check
          %p6695 = pneg %p334
        $region102: #{tpu_custom_call.1} parent=99 // pred_check_branch
          %6697 = sbr.rel (%p6695) target = $region104
        $region103: #{tpu_custom_call.1} parent=99 // pred_region
          %s6698 = sand.u32 %s319, 1
          %s6699 = scalar_lea.sflag [#allocation4], %s6698
          %s6700 = sand.u32 %s319, 1
          %s6701 = smul.addr %s6700, 64
          %s6702 = scalar_lea.vmem [#allocation11], %s6701
          %6703 = dma.done %s6699, 1024
        $region104: #{tpu_custom_call.1} parent=99 // pred_fallthru
          _
      $region100: #{tpu_custom_call.1} parent=5 // pred_fallthru
        _
    $region6: #{tpu_custom_call.1} parent=1 // loop_footer
      %s31 = sadd.s32 1, %s27
    $region7: #{tpu_custom_call.1} parent=1 // loop_footer_branch
      %26 = sbr.rel target = $region3
    $region8: #{tpu_custom_call.1} parent=1 // loop_exit
      _
    %6704 = vsyncpa [#allocation3], 1
    %s6705 = scalar_lea.sflag [#allocation3], 1
    %6706 = vsyncpa %s6705, 1
    %6707 = vsyncpa [#allocation6], 1
    %6708 = vsyncpa [#allocation9], 1
    %6709 = vsyncpa [#allocation4], 1
    %s6710 = scalar_lea.sflag [#allocation4], 1
    %6711 = vsyncpa %s6710, 1

</llo_original>
